<compile_context>
chip_gen: v7x
topology: tpu7x:2x2x1
jax: 0.10.0
libtpu: 0.0.40
codegen_flags: <defaults>
</compile_context>

<pallas_src>
import functools
import math

import jax
import jax.numpy as jnp
from jax.experimental import pallas as pl
from jax.experimental.pallas import tpu as pltpu


# ---------------------------------------------------------------------------
# Kernel
# ---------------------------------------------------------------------------
def _layer_norm(y, w, b, eps=1e-5):
    mu = jnp.mean(y, axis=-1, keepdims=True)
    yc = y - mu
    var = jnp.mean(yc * yc, axis=-1, keepdims=True)
    return yc * jax.lax.rsqrt(var + eps) * w + b


def make_transformer_kernel(*, b_tile, seq_len, d_model, n_heads, num_layers):
    head_dim = d_model // n_heads
    rows = b_tile * seq_len
    f32 = jnp.float32
    bf16 = jnp.bfloat16

    def kernel(*refs):
        n_in = 10 + 12 * num_layers
        (x_ref, cos_ref, sin_ref,
         win_ref, bin_ref, winr_ref, binr_ref) = refs[:7]
        layer_refs = refs[7:7 + 12 * num_layers]
        pool_ref, wc_ref, bc_ref = refs[n_in - 3:n_in]
        out_ref = refs[n_in]

        # ---- input projection + RoPE (rotation folded into pre-rotated weights)
        x = x_ref[...].astype(bf16)                                  # (rows, D_in)
        proj = jnp.dot(x, win_ref[...], preferred_element_type=f32) + bin_ref[...]
        projr = jnp.dot(x, winr_ref[...], preferred_element_type=f32) + binr_ref[...]
        proj3 = proj.reshape(b_tile, seq_len, d_model)
        projr3 = projr.reshape(b_tile, seq_len, d_model)
        # cos/sin are (S, d_model); broadcast across the batch tile in-kernel.
        h = (proj3 * cos_ref[...][None, :, :] +
             projr3 * sin_ref[...][None, :, :]).reshape(rows, d_model)   # f32

        # ---- transformer encoder layers (post-LN; dropout = identity in eval)
        for l in range(num_layers):
            (wqkv, bqkv, wo, bo, ln1w, ln1b,
             w1, b1, w2, b2, ln2w, ln2b) = layer_refs[12 * l:12 * (l + 1)]

            # stacked QKV projection: one big bf16 MXU matmul, f32 accumulation
            qkv = jnp.dot(h.astype(bf16), wqkv[...],
                          preferred_element_type=f32) + bqkv[...]    # (rows, 3*dm)
            q3 = qkv[:, :d_model].reshape(b_tile, seq_len, d_model)
            k3 = qkv[:, d_model:2 * d_model].reshape(b_tile, seq_len, d_model)
            v3 = qkv[:, 2 * d_model:].reshape(b_tile, seq_len, d_model)

            # per-head attention, batched over the whole batch tile
            # (1/sqrt(head_dim) scale is pre-folded into the Q weights/bias)
            ctx_heads = []
            for hh in range(n_heads):
                c0 = hh * head_dim
                qh = q3[:, :, c0:c0 + head_dim].astype(bf16)          # (b, S, hd)
                kh = k3[:, :, c0:c0 + head_dim].astype(bf16)
                vh = v3[:, :, c0:c0 + head_dim].astype(bf16)
                s = jnp.einsum('bqd,bkd->bqk', qh, kh,
                               preferred_element_type=f32)            # (b, S, S)
                s = s - jnp.max(s, axis=-1, keepdims=True)
                p = jnp.exp(s)
                p = p * pl.reciprocal(jnp.sum(p, axis=-1, keepdims=True),
                                      approx=True)
                ctx_heads.append(
                    jnp.einsum('bqk,bkd->bqd', p.astype(bf16), vh,
                               preferred_element_type=f32))           # (b, S, hd)
            attn = jnp.concatenate(ctx_heads, axis=-1).reshape(rows, d_model)

            attn = jnp.dot(attn.astype(bf16), wo[...],
                           preferred_element_type=f32) + bo[...]
            h = _layer_norm(h + attn, ln1w[...], ln1b[...])

            # feed-forward (ReLU), bf16 MXU matmuls on the flattened activation
            ff = jnp.dot(h.astype(bf16), w1[...],
                         preferred_element_type=f32) + b1[...]
            ff = jnp.maximum(ff, 0.0)
            ff = jnp.dot(ff.astype(bf16), w2[...],
                         preferred_element_type=f32) + b2[...]
            h = _layer_norm(h + ff, ln2w[...], ln2b[...])

        # ---- fused mean-over-time (tiny pooling matmul) + classifier epilogue
        pooled = jnp.dot(pool_ref[...], h, preferred_element_type=f32)  # (b, dm)
        out_ref[...] = jnp.dot(pooled.astype(bf16), wc_ref[...],
                               preferred_element_type=f32) + bc_ref[...]

    return kernel


# ---------------------------------------------------------------------------
# Wrapper
# ---------------------------------------------------------------------------
def _pick_b_tile(B, S, max_rows=512):
    """Largest batch-tile divisor keeping rows <= max_rows and valid tiling."""
    candidates = [d for d in range(1, B + 1)
                  if B % d == 0 and d * S <= max_rows and (d == B or d % 8 == 0)]
    b_tile = max(candidates) if candidates else B
    # v7x megacore: prefer a grid of >= 2 steps when tiles stay MXU-filling.
    if b_tile == B and B % 2 == 0 and (B // 2) % 8 == 0 and (B // 2) * S >= 256:
        b_tile = B // 2
    return b_tile


@functools.partial(jax.jit, static_argnames=("n_heads", "rope_base"))
def fraud_transformer_forward(x, params, *, n_heads, rope_base=10000.0):
    """x: (B, S, input_dim) -> logits (B, num_classes)."""
    B, S, D_in = x.shape
    d_model = params["w_in"].shape[1]
    num_classes = params["w_cls"].shape[1]
    num_layers = len(params["layers"])
    head_dim = d_model // n_heads
    bf16 = jnp.bfloat16

    b_tile = _pick_b_tile(B, S)
    rows = b_tile * S

    # RoPE tables (interleaved-pair convention), shape (S, d_model); broadcast
    # across the batch tile inside the kernel.
    half = head_dim // 2
    inv_freq = rope_base ** (-(jnp.arange(half, dtype=jnp.float32) * 2.0 / head_dim))
    ang = jnp.arange(S, dtype=jnp.float32)[:, None] * inv_freq[None, :]   # (S, hd/2)
    cos = jnp.tile(jnp.repeat(jnp.cos(ang), 2, axis=-1), (1, n_heads))    # (S, d_model)
    sin = jnp.tile(jnp.repeat(jnp.sin(ang), 2, axis=-1), (1, n_heads))

    # mean-over-time pooling matrix (block-diagonal averaging per batch row block)
    pool = jnp.kron(jnp.eye(b_tile, dtype=jnp.float32),
                    jnp.full((1, S), 1.0 / S, jnp.float32))               # (b_tile, rows)

    # fold 1/sqrt(head_dim) into the Q columns of the stacked QKV projection
    scale = 1.0 / math.sqrt(head_dim)

    x_flat = x.reshape(B * S, D_in)

    inputs = [x_flat, cos, sin,
              params["w_in"].astype(bf16), params["b_in"],
              params["w_in_rot"].astype(bf16), params["b_in_rot"]]
    for layer in params["layers"]:
        w_qkv = layer["w_qkv"].at[:, :d_model].multiply(scale)
        b_qkv = layer["b_qkv"].at[:, :d_model].multiply(scale)
        inputs.extend([
            w_qkv.astype(bf16), b_qkv,
            layer["w_o"].astype(bf16), layer["b_o"],
            layer["ln1_w"], layer["ln1_b"],
            layer["w_ff1"].astype(bf16), layer["b_ff1"],
            layer["w_ff2"].astype(bf16), layer["b_ff2"],
            layer["ln2_w"], layer["ln2_b"]])
    inputs.extend([pool, params["w_cls"].astype(bf16), params["b_cls"]])

    in_specs = [pl.BlockSpec((rows, D_in), lambda i: (i, 0))]          # batch-tiled input
    in_specs += [pl.BlockSpec(a.shape, lambda i: (0, 0)) for a in inputs[1:]]
    out_specs = pl.BlockSpec((b_tile, num_classes), lambda i: (i, 0))

    kernel = make_transformer_kernel(
        b_tile=b_tile, seq_len=S, d_model=d_model,
        n_heads=n_heads, num_layers=num_layers)

    return pl.pallas_call(
        kernel,
        out_shape=jax.ShapeDtypeStruct((B, num_classes), jnp.float32),
        grid=(B // b_tile,),
        in_specs=in_specs,
        out_specs=out_specs,
        compiler_params=pltpu.CompilerParams(
            dimension_semantics=("parallel",),
            vmem_limit_bytes=32 * 1024 * 1024),
    )(*inputs)


# ---------------------------------------------------------------------------
# Parameters (deterministic synthetic init, nn.Linear-style uniform)
# ---------------------------------------------------------------------------
def init_params(key, *, input_dim, d_model, n_heads, num_layers, num_classes,
                dim_feedforward=2048):
    def linear(k, fan_in, w_shape, b_shape):
        k1, k2 = jax.random.split(k)
        bound = 1.0 / math.sqrt(fan_in)
        w = jax.random.uniform(k1, w_shape, jnp.float32, -bound, bound)
        b = jax.random.uniform(k2, b_shape, jnp.float32, -bound, bound)
        return w, b

    keys = jax.random.split(key, 3 + num_layers)
    w_in, b_in = linear(keys[0], input_dim, (input_dim, d_model), (1, d_model))

    # Fold the RoPE pair-rotation permutation into a second copy of the input proj:
    # (x @ W) @ P == x @ (W @ P), with P mapping [x0,x1,x2,x3,..] -> [-x1,x0,-x3,x2,..]
    perm = jnp.zeros((d_model, d_model), jnp.float32)
    even = jnp.arange(0, d_model, 2)
    perm = perm.at[even + 1, even].set(-1.0)
    perm = perm.at[even, even + 1].set(1.0)
    w_in_rot = w_in @ perm
    b_in_rot = b_in @ perm

    layers = []
    for l in range(num_layers):
        lk = jax.random.split(keys[1 + l], 4)
        w_qkv, b_qkv = linear(lk[0], d_model, (d_model, 3 * d_model), (1, 3 * d_model))
        w_o, b_o = linear(lk[1], d_model, (d_model, d_model), (1, d_model))
        w_ff1, b_ff1 = linear(lk[2], d_model, (d_model, dim_feedforward), (1, dim_feedforward))
        w_ff2, b_ff2 = linear(lk[3], dim_feedforward, (dim_feedforward, d_model), (1, d_model))
        layers.append(dict(
            w_qkv=w_qkv, b_qkv=b_qkv, w_o=w_o, b_o=b_o,
            ln1_w=jnp.ones((1, d_model), jnp.float32),
            ln1_b=jnp.zeros((1, d_model), jnp.float32),
            w_ff1=w_ff1, b_ff1=b_ff1, w_ff2=w_ff2, b_ff2=b_ff2,
            ln2_w=jnp.ones((1, d_model), jnp.float32),
            ln2_b=jnp.zeros((1, d_model), jnp.float32)))

    w_cls, b_cls = linear(keys[1 + num_layers], d_model, (d_model, num_classes),
                          (1, num_classes))

    # TODO(synk): dropout (p=0.1) layers are identities in eval/inference mode;
    # training-mode stochastic dropout is not implemented.
    return dict(w_in=w_in, b_in=b_in, w_in_rot=w_in_rot, b_in_rot=b_in_rot,
                layers=layers, w_cls=w_cls, b_cls=b_cls)


# ---------------------------------------------------------------------------
if __name__ == "__main__":
    B, S, INPUT_DIM = 2, 8, 16
    D_MODEL, N_HEADS, NUM_LAYERS, NUM_CLASSES = 64, 4, 2, 2

    key = jax.random.PRNGKey(0)
    key, kx = jax.random.split(key)
    x = jax.random.normal(kx, (B, S, INPUT_DIM), jnp.float32)

    params = init_params(key, input_dim=INPUT_DIM, d_model=D_MODEL, n_heads=N_HEADS,
                         num_layers=NUM_LAYERS, num_classes=NUM_CLASSES)

    logits = fraud_transformer_forward(x, params, n_heads=N_HEADS, rope_base=10000.0)
    jax.block_until_ready(logits)
    assert logits.shape == (B, NUM_CLASSES)
    assert bool(jnp.all(jnp.isfinite(logits)))
    print("KERNEL_OK")
</pallas_src>

<mosaic_0001>
module attributes {stable_mosaic.version = 11 : i64} {
  func.func @kernel(%arg0: i32, %arg1: memref<16x16xf32, #tpu.memory_space<vmem>>, %arg2: memref<8x64xf32, #tpu.memory_space<vmem>>, %arg3: memref<8x64xf32, #tpu.memory_space<vmem>>, %arg4: memref<16x64xbf16, #tpu.memory_space<vmem>>, %arg5: memref<1x64xf32, #tpu.memory_space<vmem>>, %arg6: memref<16x64xbf16, #tpu.memory_space<vmem>>, %arg7: memref<1x64xf32, #tpu.memory_space<vmem>>, %arg8: memref<64x192xbf16, #tpu.memory_space<vmem>>, %arg9: memref<1x192xf32, #tpu.memory_space<vmem>>, %arg10: memref<64x64xbf16, #tpu.memory_space<vmem>>, %arg11: memref<1x64xf32, #tpu.memory_space<vmem>>, %arg12: memref<1x64xf32, #tpu.memory_space<vmem>>, %arg13: memref<1x64xf32, #tpu.memory_space<vmem>>, %arg14: memref<64x2048xbf16, #tpu.memory_space<vmem>>, %arg15: memref<1x2048xf32, #tpu.memory_space<vmem>>, %arg16: memref<2048x64xbf16, #tpu.memory_space<vmem>>, %arg17: memref<1x64xf32, #tpu.memory_space<vmem>>, %arg18: memref<1x64xf32, #tpu.memory_space<vmem>>, %arg19: memref<1x64xf32, #tpu.memory_space<vmem>>, %arg20: memref<64x192xbf16, #tpu.memory_space<vmem>>, %arg21: memref<1x192xf32, #tpu.memory_space<vmem>>, %arg22: memref<64x64xbf16, #tpu.memory_space<vmem>>, %arg23: memref<1x64xf32, #tpu.memory_space<vmem>>, %arg24: memref<1x64xf32, #tpu.memory_space<vmem>>, %arg25: memref<1x64xf32, #tpu.memory_space<vmem>>, %arg26: memref<64x2048xbf16, #tpu.memory_space<vmem>>, %arg27: memref<1x2048xf32, #tpu.memory_space<vmem>>, %arg28: memref<2048x64xbf16, #tpu.memory_space<vmem>>, %arg29: memref<1x64xf32, #tpu.memory_space<vmem>>, %arg30: memref<1x64xf32, #tpu.memory_space<vmem>>, %arg31: memref<1x64xf32, #tpu.memory_space<vmem>>, %arg32: memref<2x16xf32, #tpu.memory_space<vmem>>, %arg33: memref<64x2xbf16, #tpu.memory_space<vmem>>, %arg34: memref<1x2xf32, #tpu.memory_space<vmem>>, %arg35: memref<2x2xf32, #tpu.memory_space<vmem>>) attributes {dimension_semantics = [#tpu.dimension_semantics<parallel>], iteration_bounds = array<i64: 1>, scalar_prefetch = 0 : i64, scratch_operands = 0 : i64, tpu.core_type = #tpu.core_type<tc>, window_params = [{transform_indices = @transform_0, window_bounds = array<i64: 16, 16>}, {pipeline_mode = #tpu.pipeline_mode<synchronous>, transform_indices = @transform_1, window_bounds = array<i64: 8, 64>}, {pipeline_mode = #tpu.pipeline_mode<synchronous>, transform_indices = @transform_2, window_bounds = array<i64: 8, 64>}, {pipeline_mode = #tpu.pipeline_mode<synchronous>, transform_indices = @transform_3, window_bounds = array<i64: 16, 64>}, {pipeline_mode = #tpu.pipeline_mode<synchronous>, transform_indices = @transform_4, window_bounds = array<i64: 1, 64>}, {pipeline_mode = #tpu.pipeline_mode<synchronous>, transform_indices = @transform_5, window_bounds = array<i64: 16, 64>}, {pipeline_mode = #tpu.pipeline_mode<synchronous>, transform_indices = @transform_6, window_bounds = array<i64: 1, 64>}, {pipeline_mode = #tpu.pipeline_mode<synchronous>, transform_indices = @transform_7, window_bounds = array<i64: 64, 192>}, {pipeline_mode = #tpu.pipeline_mode<synchronous>, transform_indices = @transform_8, window_bounds = array<i64: 1, 192>}, {pipeline_mode = #tpu.pipeline_mode<synchronous>, transform_indices = @transform_9, window_bounds = array<i64: 64, 64>}, {pipeline_mode = #tpu.pipeline_mode<synchronous>, transform_indices = @transform_10, window_bounds = array<i64: 1, 64>}, {pipeline_mode = #tpu.pipeline_mode<synchronous>, transform_indices = @transform_11, window_bounds = array<i64: 1, 64>}, {pipeline_mode = #tpu.pipeline_mode<synchronous>, transform_indices = @transform_12, window_bounds = array<i64: 1, 64>}, {pipeline_mode = #tpu.pipeline_mode<synchronous>, transform_indices = @transform_13, window_bounds = array<i64: 64, 2048>}, {pipeline_mode = #tpu.pipeline_mode<synchronous>, transform_indices = @transform_14, window_bounds = array<i64: 1, 2048>}, {pipeline_mode = #tpu.pipeline_mode<synchronous>, transform_indices = @transform_15, window_bounds = array<i64: 2048, 64>}, {pipeline_mode = #tpu.pipeline_mode<synchronous>, transform_indices = @transform_16, window_bounds = array<i64: 1, 64>}, {pipeline_mode = #tpu.pipeline_mode<synchronous>, transform_indices = @transform_17, window_bounds = array<i64: 1, 64>}, {pipeline_mode = #tpu.pipeline_mode<synchronous>, transform_indices = @transform_18, window_bounds = array<i64: 1, 64>}, {pipeline_mode = #tpu.pipeline_mode<synchronous>, transform_indices = @transform_19, window_bounds = array<i64: 64, 192>}, {pipeline_mode = #tpu.pipeline_mode<synchronous>, transform_indices = @transform_20, window_bounds = array<i64: 1, 192>}, {pipeline_mode = #tpu.pipeline_mode<synchronous>, transform_indices = @transform_21, window_bounds = array<i64: 64, 64>}, {pipeline_mode = #tpu.pipeline_mode<synchronous>, transform_indices = @transform_22, window_bounds = array<i64: 1, 64>}, {pipeline_mode = #tpu.pipeline_mode<synchronous>, transform_indices = @transform_23, window_bounds = array<i64: 1, 64>}, {pipeline_mode = #tpu.pipeline_mode<synchronous>, transform_indices = @transform_24, window_bounds = array<i64: 1, 64>}, {pipeline_mode = #tpu.pipeline_mode<synchronous>, transform_indices = @transform_25, window_bounds = array<i64: 64, 2048>}, {pipeline_mode = #tpu.pipeline_mode<synchronous>, transform_indices = @transform_26, window_bounds = array<i64: 1, 2048>}, {pipeline_mode = #tpu.pipeline_mode<synchronous>, transform_indices = @transform_27, window_bounds = array<i64: 2048, 64>}, {pipeline_mode = #tpu.pipeline_mode<synchronous>, transform_indices = @transform_28, window_bounds = array<i64: 1, 64>}, {pipeline_mode = #tpu.pipeline_mode<synchronous>, transform_indices = @transform_29, window_bounds = array<i64: 1, 64>}, {pipeline_mode = #tpu.pipeline_mode<synchronous>, transform_indices = @transform_30, window_bounds = array<i64: 1, 64>}, {pipeline_mode = #tpu.pipeline_mode<synchronous>, transform_indices = @transform_31, window_bounds = array<i64: 2, 16>}, {pipeline_mode = #tpu.pipeline_mode<synchronous>, transform_indices = @transform_32, window_bounds = array<i64: 64, 2>}, {pipeline_mode = #tpu.pipeline_mode<synchronous>, transform_indices = @transform_33, window_bounds = array<i64: 1, 2>}, {transform_indices = @transform_34, window_bounds = array<i64: 2, 2>}]} {
    %c0 = arith.constant 0 : index
    %c0_0 = arith.constant 0 : index
    %0 = vector.load %arg1[%c0, %c0_0] : memref<16x16xf32, #tpu.memory_space<vmem>>, vector<16x16xf32>
    %1 = arith.truncf %0 : vector<16x16xf32> to vector<16x16xbf16>
    %c0_1 = arith.constant 0 : index
    %c0_2 = arith.constant 0 : index
    %2 = vector.load %arg4[%c0_1, %c0_2] : memref<16x64xbf16, #tpu.memory_space<vmem>>, vector<16x64xbf16>
    %cst = arith.constant dense<0.000000e+00> : vector<16x64xf32>
    %3 = tpu.matmul %1, %2, %cst {dimension_numbers = #tpu.dot_dimension_numbers<[1], [0], [0], [1], [0, 0, 1, 1], [], []>} : vector<16x16xbf16>, vector<16x64xbf16>, vector<16x64xf32> -> vector<16x64xf32>
    %c0_3 = arith.constant 0 : index
    %c0_4 = arith.constant 0 : index
    %4 = vector.load %arg5[%c0_3, %c0_4] : memref<1x64xf32, #tpu.memory_space<vmem>>, vector<1x64xf32>
    %5 = vector.broadcast %4 : vector<1x64xf32> to vector<16x64xf32>
    %6 = arith.addf %3, %5 : vector<16x64xf32>
    %c0_5 = arith.constant 0 : index
    %c0_6 = arith.constant 0 : index
    %7 = vector.load %arg6[%c0_5, %c0_6] : memref<16x64xbf16, #tpu.memory_space<vmem>>, vector<16x64xbf16>
    %cst_7 = arith.constant dense<0.000000e+00> : vector<16x64xf32>
    %8 = tpu.matmul %1, %7, %cst_7 {dimension_numbers = #tpu.dot_dimension_numbers<[1], [0], [0], [1], [0, 0, 1, 1], [], []>} : vector<16x16xbf16>, vector<16x64xbf16>, vector<16x64xf32> -> vector<16x64xf32>
    %c0_8 = arith.constant 0 : index
    %c0_9 = arith.constant 0 : index
    %9 = vector.load %arg7[%c0_8, %c0_9] : memref<1x64xf32, #tpu.memory_space<vmem>>, vector<1x64xf32>
    %10 = vector.broadcast %9 : vector<1x64xf32> to vector<16x64xf32>
    %11 = arith.addf %8, %10 : vector<16x64xf32>
    %12 = vector.shape_cast %6 : vector<16x64xf32> to vector<2x8x64xf32>
    %13 = vector.shape_cast %11 : vector<16x64xf32> to vector<2x8x64xf32>
    %c0_10 = arith.constant 0 : index
    %c0_11 = arith.constant 0 : index
    %14 = vector.load %arg2[%c0_10, %c0_11] : memref<8x64xf32, #tpu.memory_space<vmem>>, vector<8x64xf32>
    %15 = vector.shape_cast %14 : vector<8x64xf32> to vector<1x8x64xf32>
    %16 = vector.broadcast %15 : vector<1x8x64xf32> to vector<2x8x64xf32>
    %17 = arith.mulf %12, %16 : vector<2x8x64xf32>
    %c0_12 = arith.constant 0 : index
    %c0_13 = arith.constant 0 : index
    %18 = vector.load %arg3[%c0_12, %c0_13] : memref<8x64xf32, #tpu.memory_space<vmem>>, vector<8x64xf32>
    %19 = vector.shape_cast %18 : vector<8x64xf32> to vector<1x8x64xf32>
    %20 = vector.broadcast %19 : vector<1x8x64xf32> to vector<2x8x64xf32>
    %21 = arith.mulf %13, %20 : vector<2x8x64xf32>
    %22 = arith.addf %17, %21 : vector<2x8x64xf32>
    %23 = vector.shape_cast %22 : vector<2x8x64xf32> to vector<16x64xf32>
    %24 = arith.truncf %23 : vector<16x64xf32> to vector<16x64xbf16>
    %c0_14 = arith.constant 0 : index
    %c0_15 = arith.constant 0 : index
    %25 = vector.load %arg8[%c0_14, %c0_15] : memref<64x192xbf16, #tpu.memory_space<vmem>>, vector<64x192xbf16>
    %cst_16 = arith.constant dense<0.000000e+00> : vector<16x192xf32>
    %26 = tpu.matmul %24, %25, %cst_16 {dimension_numbers = #tpu.dot_dimension_numbers<[1], [0], [0], [1], [0, 0, 1, 1], [], []>} : vector<16x64xbf16>, vector<64x192xbf16>, vector<16x192xf32> -> vector<16x192xf32>
    %c0_17 = arith.constant 0 : index
    %c0_18 = arith.constant 0 : index
    %27 = vector.load %arg9[%c0_17, %c0_18] : memref<1x192xf32, #tpu.memory_space<vmem>>, vector<1x192xf32>
    %28 = vector.broadcast %27 : vector<1x192xf32> to vector<16x192xf32>
    %29 = arith.addf %26, %28 : vector<16x192xf32>
    %30 = vector.extract_strided_slice %29 {offsets = [0, 0], sizes = [16, 64], strides = [1, 1]} : vector<16x192xf32> to vector<16x64xf32>
    %31 = vector.shape_cast %30 : vector<16x64xf32> to vector<2x8x64xf32>
    %32 = vector.extract_strided_slice %29 {offsets = [0, 64], sizes = [16, 64], strides = [1, 1]} : vector<16x192xf32> to vector<16x64xf32>
    %33 = vector.shape_cast %32 : vector<16x64xf32> to vector<2x8x64xf32>
    %34 = vector.extract_strided_slice %29 {offsets = [0, 128], sizes = [16, 64], strides = [1, 1]} : vector<16x192xf32> to vector<16x64xf32>
    %35 = vector.shape_cast %34 : vector<16x64xf32> to vector<2x8x64xf32>
    %36 = vector.extract_strided_slice %31 {offsets = [0, 0, 0], sizes = [2, 8, 16], strides = [1, 1, 1]} : vector<2x8x64xf32> to vector<2x8x16xf32>
    %37 = arith.truncf %36 : vector<2x8x16xf32> to vector<2x8x16xbf16>
    %38 = vector.extract_strided_slice %33 {offsets = [0, 0, 0], sizes = [2, 8, 16], strides = [1, 1, 1]} : vector<2x8x64xf32> to vector<2x8x16xf32>
    %39 = arith.truncf %38 : vector<2x8x16xf32> to vector<2x8x16xbf16>
    %40 = vector.extract_strided_slice %35 {offsets = [0, 0, 0], sizes = [2, 8, 16], strides = [1, 1, 1]} : vector<2x8x64xf32> to vector<2x8x16xf32>
    %41 = arith.truncf %40 : vector<2x8x16xf32> to vector<2x8x16xbf16>
    "tpu.trace_start"() <{level = 10 : i32, message = "bqd,bkd->bqk"}> : () -> ()
    %cst_19 = arith.constant dense<0.000000e+00> : vector<2x8x8xf32>
    %42 = tpu.matmul %37, %39, %cst_19 {dimension_numbers = #tpu.dot_dimension_numbers<[2], [2], [1], [1], [0, 0, 0, 1, 1, 1], [0], [0]>} : vector<2x8x16xbf16>, vector<2x8x16xbf16>, vector<2x8x8xf32> -> vector<2x8x8xf32>
    "tpu.trace_stop"() : () -> ()
    %cst_20 = arith.constant dense<0xFF800000> : vector<2x8xf32>
    %43 = vector.multi_reduction <maximumf>, %42, %cst_20 [2] : vector<2x8x8xf32> to vector<2x8xf32>
    %44 = vector.shape_cast %43 : vector<2x8xf32> to vector<2x8x1xf32>
    %45 = vector.broadcast %44 : vector<2x8x1xf32> to vector<2x8x8xf32>
    %46 = arith.subf %42, %45 : vector<2x8x8xf32>
    %47 = math.exp %46 : vector<2x8x8xf32>
    %cst_21 = arith.constant dense<0.000000e+00> : vector<2x8xf32>
    %48 = vector.multi_reduction <add>, %47, %cst_21 [2] : vector<2x8x8xf32> to vector<2x8xf32>
    %49 = vector.shape_cast %48 : vector<2x8xf32> to vector<2x8x1xf32>
    %50 = tpu.reciprocal %49 {approx = true} : vector<2x8x1xf32> -> vector<2x8x1xf32>
    %51 = vector.broadcast %50 : vector<2x8x1xf32> to vector<2x8x8xf32>
    %52 = arith.mulf %47, %51 : vector<2x8x8xf32>
    %53 = arith.truncf %52 : vector<2x8x8xf32> to vector<2x8x8xbf16>
    "tpu.trace_start"() <{level = 10 : i32, message = "bqk,bkd->bqd"}> : () -> ()
    %cst_22 = arith.constant dense<0.000000e+00> : vector<2x8x16xf32>
    %54 = tpu.matmul %53, %41, %cst_22 {dimension_numbers = #tpu.dot_dimension_numbers<[2], [1], [1], [2], [0, 0, 0, 1, 1, 2], [0], [0]>} : vector<2x8x8xbf16>, vector<2x8x16xbf16>, vector<2x8x16xf32> -> vector<2x8x16xf32>
    "tpu.trace_stop"() : () -> ()
    %55 = vector.extract_strided_slice %31 {offsets = [0, 0, 16], sizes = [2, 8, 16], strides = [1, 1, 1]} : vector<2x8x64xf32> to vector<2x8x16xf32>
    %56 = arith.truncf %55 : vector<2x8x16xf32> to vector<2x8x16xbf16>
    %57 = vector.extract_strided_slice %33 {offsets = [0, 0, 16], sizes = [2, 8, 16], strides = [1, 1, 1]} : vector<2x8x64xf32> to vector<2x8x16xf32>
    %58 = arith.truncf %57 : vector<2x8x16xf32> to vector<2x8x16xbf16>
    %59 = vector.extract_strided_slice %35 {offsets = [0, 0, 16], sizes = [2, 8, 16], strides = [1, 1, 1]} : vector<2x8x64xf32> to vector<2x8x16xf32>
    %60 = arith.truncf %59 : vector<2x8x16xf32> to vector<2x8x16xbf16>
    "tpu.trace_start"() <{level = 10 : i32, message = "bqd,bkd->bqk"}> : () -> ()
    %cst_23 = arith.constant dense<0.000000e+00> : vector<2x8x8xf32>
    %61 = tpu.matmul %56, %58, %cst_23 {dimension_numbers = #tpu.dot_dimension_numbers<[2], [2], [1], [1], [0, 0, 0, 1, 1, 1], [0], [0]>} : vector<2x8x16xbf16>, vector<2x8x16xbf16>, vector<2x8x8xf32> -> vector<2x8x8xf32>
    "tpu.trace_stop"() : () -> ()
    %cst_24 = arith.constant dense<0xFF800000> : vector<2x8xf32>
    %62 = vector.multi_reduction <maximumf>, %61, %cst_24 [2] : vector<2x8x8xf32> to vector<2x8xf32>
    %63 = vector.shape_cast %62 : vector<2x8xf32> to vector<2x8x1xf32>
    %64 = vector.broadcast %63 : vector<2x8x1xf32> to vector<2x8x8xf32>
    %65 = arith.subf %61, %64 : vector<2x8x8xf32>
    %66 = math.exp %65 : vector<2x8x8xf32>
    %cst_25 = arith.constant dense<0.000000e+00> : vector<2x8xf32>
    %67 = vector.multi_reduction <add>, %66, %cst_25 [2] : vector<2x8x8xf32> to vector<2x8xf32>
    %68 = vector.shape_cast %67 : vector<2x8xf32> to vector<2x8x1xf32>
    %69 = tpu.reciprocal %68 {approx = true} : vector<2x8x1xf32> -> vector<2x8x1xf32>
    %70 = vector.broadcast %69 : vector<2x8x1xf32> to vector<2x8x8xf32>
    %71 = arith.mulf %66, %70 : vector<2x8x8xf32>
    %72 = arith.truncf %71 : vector<2x8x8xf32> to vector<2x8x8xbf16>
    "tpu.trace_start"() <{level = 10 : i32, message = "bqk,bkd->bqd"}> : () -> ()
    %cst_26 = arith.constant dense<0.000000e+00> : vector<2x8x16xf32>
    %73 = tpu.matmul %72, %60, %cst_26 {dimension_numbers = #tpu.dot_dimension_numbers<[2], [1], [1], [2], [0, 0, 0, 1, 1, 2], [0], [0]>} : vector<2x8x8xbf16>, vector<2x8x16xbf16>, vector<2x8x16xf32> -> vector<2x8x16xf32>
    "tpu.trace_stop"() : () -> ()
    %74 = vector.extract_strided_slice %31 {offsets = [0, 0, 32], sizes = [2, 8, 16], strides = [1, 1, 1]} : vector<2x8x64xf32> to vector<2x8x16xf32>
    %75 = arith.truncf %74 : vector<2x8x16xf32> to vector<2x8x16xbf16>
    %76 = vector.extract_strided_slice %33 {offsets = [0, 0, 32], sizes = [2, 8, 16], strides = [1, 1, 1]} : vector<2x8x64xf32> to vector<2x8x16xf32>
    %77 = arith.truncf %76 : vector<2x8x16xf32> to vector<2x8x16xbf16>
    %78 = vector.extract_strided_slice %35 {offsets = [0, 0, 32], sizes = [2, 8, 16], strides = [1, 1, 1]} : vector<2x8x64xf32> to vector<2x8x16xf32>
    %79 = arith.truncf %78 : vector<2x8x16xf32> to vector<2x8x16xbf16>
    "tpu.trace_start"() <{level = 10 : i32, message = "bqd,bkd->bqk"}> : () -> ()
    %cst_27 = arith.constant dense<0.000000e+00> : vector<2x8x8xf32>
    %80 = tpu.matmul %75, %77, %cst_27 {dimension_numbers = #tpu.dot_dimension_numbers<[2], [2], [1], [1], [0, 0, 0, 1, 1, 1], [0], [0]>} : vector<2x8x16xbf16>, vector<2x8x16xbf16>, vector<2x8x8xf32> -> vector<2x8x8xf32>
    "tpu.trace_stop"() : () -> ()
    %cst_28 = arith.constant dense<0xFF800000> : vector<2x8xf32>
    %81 = vector.multi_reduction <maximumf>, %80, %cst_28 [2] : vector<2x8x8xf32> to vector<2x8xf32>
    %82 = vector.shape_cast %81 : vector<2x8xf32> to vector<2x8x1xf32>
    %83 = vector.broadcast %82 : vector<2x8x1xf32> to vector<2x8x8xf32>
    %84 = arith.subf %80, %83 : vector<2x8x8xf32>
    %85 = math.exp %84 : vector<2x8x8xf32>
    %cst_29 = arith.constant dense<0.000000e+00> : vector<2x8xf32>
    %86 = vector.multi_reduction <add>, %85, %cst_29 [2] : vector<2x8x8xf32> to vector<2x8xf32>
    %87 = vector.shape_cast %86 : vector<2x8xf32> to vector<2x8x1xf32>
    %88 = tpu.reciprocal %87 {approx = true} : vector<2x8x1xf32> -> vector<2x8x1xf32>
    %89 = vector.broadcast %88 : vector<2x8x1xf32> to vector<2x8x8xf32>
    %90 = arith.mulf %85, %89 : vector<2x8x8xf32>
    %91 = arith.truncf %90 : vector<2x8x8xf32> to vector<2x8x8xbf16>
    "tpu.trace_start"() <{level = 10 : i32, message = "bqk,bkd->bqd"}> : () -> ()
    %cst_30 = arith.constant dense<0.000000e+00> : vector<2x8x16xf32>
    %92 = tpu.matmul %91, %79, %cst_30 {dimension_numbers = #tpu.dot_dimension_numbers<[2], [1], [1], [2], [0, 0, 0, 1, 1, 2], [0], [0]>} : vector<2x8x8xbf16>, vector<2x8x16xbf16>, vector<2x8x16xf32> -> vector<2x8x16xf32>
    "tpu.trace_stop"() : () -> ()
    %93 = vector.extract_strided_slice %31 {offsets = [0, 0, 48], sizes = [2, 8, 16], strides = [1, 1, 1]} : vector<2x8x64xf32> to vector<2x8x16xf32>
    %94 = arith.truncf %93 : vector<2x8x16xf32> to vector<2x8x16xbf16>
    %95 = vector.extract_strided_slice %33 {offsets = [0, 0, 48], sizes = [2, 8, 16], strides = [1, 1, 1]} : vector<2x8x64xf32> to vector<2x8x16xf32>
    %96 = arith.truncf %95 : vector<2x8x16xf32> to vector<2x8x16xbf16>
    %97 = vector.extract_strided_slice %35 {offsets = [0, 0, 48], sizes = [2, 8, 16], strides = [1, 1, 1]} : vector<2x8x64xf32> to vector<2x8x16xf32>
    %98 = arith.truncf %97 : vector<2x8x16xf32> to vector<2x8x16xbf16>
    "tpu.trace_start"() <{level = 10 : i32, message = "bqd,bkd->bqk"}> : () -> ()
    %cst_31 = arith.constant dense<0.000000e+00> : vector<2x8x8xf32>
    %99 = tpu.matmul %94, %96, %cst_31 {dimension_numbers = #tpu.dot_dimension_numbers<[2], [2], [1], [1], [0, 0, 0, 1, 1, 1], [0], [0]>} : vector<2x8x16xbf16>, vector<2x8x16xbf16>, vector<2x8x8xf32> -> vector<2x8x8xf32>
    "tpu.trace_stop"() : () -> ()
    %cst_32 = arith.constant dense<0xFF800000> : vector<2x8xf32>
    %100 = vector.multi_reduction <maximumf>, %99, %cst_32 [2] : vector<2x8x8xf32> to vector<2x8xf32>
    %101 = vector.shape_cast %100 : vector<2x8xf32> to vector<2x8x1xf32>
    %102 = vector.broadcast %101 : vector<2x8x1xf32> to vector<2x8x8xf32>
    %103 = arith.subf %99, %102 : vector<2x8x8xf32>
    %104 = math.exp %103 : vector<2x8x8xf32>
    %cst_33 = arith.constant dense<0.000000e+00> : vector<2x8xf32>
    %105 = vector.multi_reduction <add>, %104, %cst_33 [2] : vector<2x8x8xf32> to vector<2x8xf32>
    %106 = vector.shape_cast %105 : vector<2x8xf32> to vector<2x8x1xf32>
    %107 = tpu.reciprocal %106 {approx = true} : vector<2x8x1xf32> -> vector<2x8x1xf32>
    %108 = vector.broadcast %107 : vector<2x8x1xf32> to vector<2x8x8xf32>
    %109 = arith.mulf %104, %108 : vector<2x8x8xf32>
    %110 = arith.truncf %109 : vector<2x8x8xf32> to vector<2x8x8xbf16>
    "tpu.trace_start"() <{level = 10 : i32, message = "bqk,bkd->bqd"}> : () -> ()
    %cst_34 = arith.constant dense<0.000000e+00> : vector<2x8x16xf32>
    %111 = tpu.matmul %110, %98, %cst_34 {dimension_numbers = #tpu.dot_dimension_numbers<[2], [1], [1], [2], [0, 0, 0, 1, 1, 2], [0], [0]>} : vector<2x8x8xbf16>, vector<2x8x16xbf16>, vector<2x8x16xf32> -> vector<2x8x16xf32>
    "tpu.trace_stop"() : () -> ()
    %112 = tpu.concatenate %54, %73, %92, %111 in 2 : vector<2x8x16xf32>, vector<2x8x16xf32>, vector<2x8x16xf32>, vector<2x8x16xf32> -> vector<2x8x64xf32>
    %113 = vector.shape_cast %112 : vector<2x8x64xf32> to vector<16x64xf32>
    %114 = arith.truncf %113 : vector<16x64xf32> to vector<16x64xbf16>
    %c0_35 = arith.constant 0 : index
    %c0_36 = arith.constant 0 : index
    %115 = vector.load %arg10[%c0_35, %c0_36] : memref<64x64xbf16, #tpu.memory_space<vmem>>, vector<64x64xbf16>
    %cst_37 = arith.constant dense<0.000000e+00> : vector<16x64xf32>
    %116 = tpu.matmul %114, %115, %cst_37 {dimension_numbers = #tpu.dot_dimension_numbers<[1], [0], [0], [1], [0, 0, 1, 1], [], []>} : vector<16x64xbf16>, vector<64x64xbf16>, vector<16x64xf32> -> vector<16x64xf32>
    %c0_38 = arith.constant 0 : index
    %c0_39 = arith.constant 0 : index
    %117 = vector.load %arg11[%c0_38, %c0_39] : memref<1x64xf32, #tpu.memory_space<vmem>>, vector<1x64xf32>
    %118 = vector.broadcast %117 : vector<1x64xf32> to vector<16x64xf32>
    %119 = arith.addf %116, %118 : vector<16x64xf32>
    %120 = arith.addf %23, %119 : vector<16x64xf32>
    %c0_40 = arith.constant 0 : index
    %c0_41 = arith.constant 0 : index
    %121 = vector.load %arg12[%c0_40, %c0_41] : memref<1x64xf32, #tpu.memory_space<vmem>>, vector<1x64xf32>
    %c0_42 = arith.constant 0 : index
    %c0_43 = arith.constant 0 : index
    %122 = vector.load %arg13[%c0_42, %c0_43] : memref<1x64xf32, #tpu.memory_space<vmem>>, vector<1x64xf32>
    %cst_44 = arith.constant dense<0.000000e+00> : vector<16xf32>
    %123 = vector.multi_reduction <add>, %120, %cst_44 [1] : vector<16x64xf32> to vector<16xf32>
    %124 = vector.shape_cast %123 : vector<16xf32> to vector<16x1xf32>
    %cst_45 = arith.constant 6.400000e+01 : f32
    %125 = vector.broadcast %cst_45 : f32 to vector<16x1xf32>
    %126 = arith.divf %124, %125 : vector<16x1xf32>
    %127 = vector.broadcast %126 : vector<16x1xf32> to vector<16x64xf32>
    %128 = arith.subf %120, %127 : vector<16x64xf32>
    %129 = arith.mulf %128, %128 : vector<16x64xf32>
    %cst_46 = arith.constant dense<0.000000e+00> : vector<16xf32>
    %130 = vector.multi_reduction <add>, %129, %cst_46 [1] : vector<16x64xf32> to vector<16xf32>
    %131 = vector.shape_cast %130 : vector<16xf32> to vector<16x1xf32>
    %cst_47 = arith.constant 6.400000e+01 : f32
    %132 = vector.broadcast %cst_47 : f32 to vector<16x1xf32>
    %133 = arith.divf %131, %132 : vector<16x1xf32>
    %cst_48 = arith.constant 9.99999974E-6 : f32
    %134 = vector.broadcast %cst_48 : f32 to vector<16x1xf32>
    %135 = arith.addf %133, %134 : vector<16x1xf32>
    %136 = math.rsqrt %135 : vector<16x1xf32>
    %137 = vector.broadcast %136 : vector<16x1xf32> to vector<16x64xf32>
    %138 = arith.mulf %128, %137 : vector<16x64xf32>
    %139 = vector.broadcast %121 : vector<1x64xf32> to vector<16x64xf32>
    %140 = arith.mulf %138, %139 : vector<16x64xf32>
    %141 = vector.broadcast %122 : vector<1x64xf32> to vector<16x64xf32>
    %142 = arith.addf %140, %141 : vector<16x64xf32>
    %143 = arith.truncf %142 : vector<16x64xf32> to vector<16x64xbf16>
    %c0_49 = arith.constant 0 : index
    %c0_50 = arith.constant 0 : index
    %144 = vector.load %arg14[%c0_49, %c0_50] : memref<64x2048xbf16, #tpu.memory_space<vmem>>, vector<64x2048xbf16>
    %cst_51 = arith.constant dense<0.000000e+00> : vector<16x2048xf32>
    %145 = tpu.matmul %143, %144, %cst_51 {dimension_numbers = #tpu.dot_dimension_numbers<[1], [0], [0], [1], [0, 0, 1, 1], [], []>} : vector<16x64xbf16>, vector<64x2048xbf16>, vector<16x2048xf32> -> vector<16x2048xf32>
    %c0_52 = arith.constant 0 : index
    %c0_53 = arith.constant 0 : index
    %146 = vector.load %arg15[%c0_52, %c0_53] : memref<1x2048xf32, #tpu.memory_space<vmem>>, vector<1x2048xf32>
    %147 = vector.broadcast %146 : vector<1x2048xf32> to vector<16x2048xf32>
    %148 = arith.addf %145, %147 : vector<16x2048xf32>
    %cst_54 = arith.constant 0.000000e+00 : f32
    %149 = vector.broadcast %cst_54 : f32 to vector<16x2048xf32>
    %150 = arith.maximumf %148, %149 : vector<16x2048xf32>
    %151 = arith.truncf %150 : vector<16x2048xf32> to vector<16x2048xbf16>
    %c0_55 = arith.constant 0 : index
    %c0_56 = arith.constant 0 : index
    %152 = vector.load %arg16[%c0_55, %c0_56] : memref<2048x64xbf16, #tpu.memory_space<vmem>>, vector<2048x64xbf16>
    %cst_57 = arith.constant dense<0.000000e+00> : vector<16x64xf32>
    %153 = tpu.matmul %151, %152, %cst_57 {dimension_numbers = #tpu.dot_dimension_numbers<[1], [0], [0], [1], [0, 0, 1, 1], [], []>} : vector<16x2048xbf16>, vector<2048x64xbf16>, vector<16x64xf32> -> vector<16x64xf32>
    %c0_58 = arith.constant 0 : index
    %c0_59 = arith.constant 0 : index
    %154 = vector.load %arg17[%c0_58, %c0_59] : memref<1x64xf32, #tpu.memory_space<vmem>>, vector<1x64xf32>
    %155 = vector.broadcast %154 : vector<1x64xf32> to vector<16x64xf32>
    %156 = arith.addf %153, %155 : vector<16x64xf32>
    %157 = arith.addf %142, %156 : vector<16x64xf32>
    %c0_60 = arith.constant 0 : index
    %c0_61 = arith.constant 0 : index
    %158 = vector.load %arg18[%c0_60, %c0_61] : memref<1x64xf32, #tpu.memory_space<vmem>>, vector<1x64xf32>
    %c0_62 = arith.constant 0 : index
    %c0_63 = arith.constant 0 : index
    %159 = vector.load %arg19[%c0_62, %c0_63] : memref<1x64xf32, #tpu.memory_space<vmem>>, vector<1x64xf32>
    %cst_64 = arith.constant dense<0.000000e+00> : vector<16xf32>
    %160 = vector.multi_reduction <add>, %157, %cst_64 [1] : vector<16x64xf32> to vector<16xf32>
    %161 = vector.shape_cast %160 : vector<16xf32> to vector<16x1xf32>
    %cst_65 = arith.constant 6.400000e+01 : f32
    %162 = vector.broadcast %cst_65 : f32 to vector<16x1xf32>
    %163 = arith.divf %161, %162 : vector<16x1xf32>
    %164 = vector.broadcast %163 : vector<16x1xf32> to vector<16x64xf32>
    %165 = arith.subf %157, %164 : vector<16x64xf32>
    %166 = arith.mulf %165, %165 : vector<16x64xf32>
    %cst_66 = arith.constant dense<0.000000e+00> : vector<16xf32>
    %167 = vector.multi_reduction <add>, %166, %cst_66 [1] : vector<16x64xf32> to vector<16xf32>
    %168 = vector.shape_cast %167 : vector<16xf32> to vector<16x1xf32>
    %cst_67 = arith.constant 6.400000e+01 : f32
    %169 = vector.broadcast %cst_67 : f32 to vector<16x1xf32>
    %170 = arith.divf %168, %169 : vector<16x1xf32>
    %cst_68 = arith.constant 9.99999974E-6 : f32
    %171 = vector.broadcast %cst_68 : f32 to vector<16x1xf32>
    %172 = arith.addf %170, %171 : vector<16x1xf32>
    %173 = math.rsqrt %172 : vector<16x1xf32>
    %174 = vector.broadcast %173 : vector<16x1xf32> to vector<16x64xf32>
    %175 = arith.mulf %165, %174 : vector<16x64xf32>
    %176 = vector.broadcast %158 : vector<1x64xf32> to vector<16x64xf32>
    %177 = arith.mulf %175, %176 : vector<16x64xf32>
    %178 = vector.broadcast %159 : vector<1x64xf32> to vector<16x64xf32>
    %179 = arith.addf %177, %178 : vector<16x64xf32>
    %180 = arith.truncf %179 : vector<16x64xf32> to vector<16x64xbf16>
    %c0_69 = arith.constant 0 : index
    %c0_70 = arith.constant 0 : index
    %181 = vector.load %arg20[%c0_69, %c0_70] : memref<64x192xbf16, #tpu.memory_space<vmem>>, vector<64x192xbf16>
    %cst_71 = arith.constant dense<0.000000e+00> : vector<16x192xf32>
    %182 = tpu.matmul %180, %181, %cst_71 {dimension_numbers = #tpu.dot_dimension_numbers<[1], [0], [0], [1], [0, 0, 1, 1], [], []>} : vector<16x64xbf16>, vector<64x192xbf16>, vector<16x192xf32> -> vector<16x192xf32>
    %c0_72 = arith.constant 0 : index
    %c0_73 = arith.constant 0 : index
    %183 = vector.load %arg21[%c0_72, %c0_73] : memref<1x192xf32, #tpu.memory_space<vmem>>, vector<1x192xf32>
    %184 = vector.broadcast %183 : vector<1x192xf32> to vector<16x192xf32>
    %185 = arith.addf %182, %184 : vector<16x192xf32>
    %186 = vector.extract_strided_slice %185 {offsets = [0, 0], sizes = [16, 64], strides = [1, 1]} : vector<16x192xf32> to vector<16x64xf32>
    %187 = vector.shape_cast %186 : vector<16x64xf32> to vector<2x8x64xf32>
    %188 = vector.extract_strided_slice %185 {offsets = [0, 64], sizes = [16, 64], strides = [1, 1]} : vector<16x192xf32> to vector<16x64xf32>
    %189 = vector.shape_cast %188 : vector<16x64xf32> to vector<2x8x64xf32>
    %190 = vector.extract_strided_slice %185 {offsets = [0, 128], sizes = [16, 64], strides = [1, 1]} : vector<16x192xf32> to vector<16x64xf32>
    %191 = vector.shape_cast %190 : vector<16x64xf32> to vector<2x8x64xf32>
    %192 = vector.extract_strided_slice %187 {offsets = [0, 0, 0], sizes = [2, 8, 16], strides = [1, 1, 1]} : vector<2x8x64xf32> to vector<2x8x16xf32>
    %193 = arith.truncf %192 : vector<2x8x16xf32> to vector<2x8x16xbf16>
    %194 = vector.extract_strided_slice %189 {offsets = [0, 0, 0], sizes = [2, 8, 16], strides = [1, 1, 1]} : vector<2x8x64xf32> to vector<2x8x16xf32>
    %195 = arith.truncf %194 : vector<2x8x16xf32> to vector<2x8x16xbf16>
    %196 = vector.extract_strided_slice %191 {offsets = [0, 0, 0], sizes = [2, 8, 16], strides = [1, 1, 1]} : vector<2x8x64xf32> to vector<2x8x16xf32>
    %197 = arith.truncf %196 : vector<2x8x16xf32> to vector<2x8x16xbf16>
    "tpu.trace_start"() <{level = 10 : i32, message = "bqd,bkd->bqk"}> : () -> ()
    %cst_74 = arith.constant dense<0.000000e+00> : vector<2x8x8xf32>
    %198 = tpu.matmul %193, %195, %cst_74 {dimension_numbers = #tpu.dot_dimension_numbers<[2], [2], [1], [1], [0, 0, 0, 1, 1, 1], [0], [0]>} : vector<2x8x16xbf16>, vector<2x8x16xbf16>, vector<2x8x8xf32> -> vector<2x8x8xf32>
    "tpu.trace_stop"() : () -> ()
    %cst_75 = arith.constant dense<0xFF800000> : vector<2x8xf32>
    %199 = vector.multi_reduction <maximumf>, %198, %cst_75 [2] : vector<2x8x8xf32> to vector<2x8xf32>
    %200 = vector.shape_cast %199 : vector<2x8xf32> to vector<2x8x1xf32>
    %201 = vector.broadcast %200 : vector<2x8x1xf32> to vector<2x8x8xf32>
    %202 = arith.subf %198, %201 : vector<2x8x8xf32>
    %203 = math.exp %202 : vector<2x8x8xf32>
    %cst_76 = arith.constant dense<0.000000e+00> : vector<2x8xf32>
    %204 = vector.multi_reduction <add>, %203, %cst_76 [2] : vector<2x8x8xf32> to vector<2x8xf32>
    %205 = vector.shape_cast %204 : vector<2x8xf32> to vector<2x8x1xf32>
    %206 = tpu.reciprocal %205 {approx = true} : vector<2x8x1xf32> -> vector<2x8x1xf32>
    %207 = vector.broadcast %206 : vector<2x8x1xf32> to vector<2x8x8xf32>
    %208 = arith.mulf %203, %207 : vector<2x8x8xf32>
    %209 = arith.truncf %208 : vector<2x8x8xf32> to vector<2x8x8xbf16>
    "tpu.trace_start"() <{level = 10 : i32, message = "bqk,bkd->bqd"}> : () -> ()
    %cst_77 = arith.constant dense<0.000000e+00> : vector<2x8x16xf32>
    %210 = tpu.matmul %209, %197, %cst_77 {dimension_numbers = #tpu.dot_dimension_numbers<[2], [1], [1], [2], [0, 0, 0, 1, 1, 2], [0], [0]>} : vector<2x8x8xbf16>, vector<2x8x16xbf16>, vector<2x8x16xf32> -> vector<2x8x16xf32>
    "tpu.trace_stop"() : () -> ()
    %211 = vector.extract_strided_slice %187 {offsets = [0, 0, 16], sizes = [2, 8, 16], strides = [1, 1, 1]} : vector<2x8x64xf32> to vector<2x8x16xf32>
    %212 = arith.truncf %211 : vector<2x8x16xf32> to vector<2x8x16xbf16>
    %213 = vector.extract_strided_slice %189 {offsets = [0, 0, 16], sizes = [2, 8, 16], strides = [1, 1, 1]} : vector<2x8x64xf32> to vector<2x8x16xf32>
    %214 = arith.truncf %213 : vector<2x8x16xf32> to vector<2x8x16xbf16>
    %215 = vector.extract_strided_slice %191 {offsets = [0, 0, 16], sizes = [2, 8, 16], strides = [1, 1, 1]} : vector<2x8x64xf32> to vector<2x8x16xf32>
    %216 = arith.truncf %215 : vector<2x8x16xf32> to vector<2x8x16xbf16>
    "tpu.trace_start"() <{level = 10 : i32, message = "bqd,bkd->bqk"}> : () -> ()
    %cst_78 = arith.constant dense<0.000000e+00> : vector<2x8x8xf32>
    %217 = tpu.matmul %212, %214, %cst_78 {dimension_numbers = #tpu.dot_dimension_numbers<[2], [2], [1], [1], [0, 0, 0, 1, 1, 1], [0], [0]>} : vector<2x8x16xbf16>, vector<2x8x16xbf16>, vector<2x8x8xf32> -> vector<2x8x8xf32>
    "tpu.trace_stop"() : () -> ()
    %cst_79 = arith.constant dense<0xFF800000> : vector<2x8xf32>
    %218 = vector.multi_reduction <maximumf>, %217, %cst_79 [2] : vector<2x8x8xf32> to vector<2x8xf32>
    %219 = vector.shape_cast %218 : vector<2x8xf32> to vector<2x8x1xf32>
    %220 = vector.broadcast %219 : vector<2x8x1xf32> to vector<2x8x8xf32>
    %221 = arith.subf %217, %220 : vector<2x8x8xf32>
    %222 = math.exp %221 : vector<2x8x8xf32>
    %cst_80 = arith.constant dense<0.000000e+00> : vector<2x8xf32>
    %223 = vector.multi_reduction <add>, %222, %cst_80 [2] : vector<2x8x8xf32> to vector<2x8xf32>
    %224 = vector.shape_cast %223 : vector<2x8xf32> to vector<2x8x1xf32>
    %225 = tpu.reciprocal %224 {approx = true} : vector<2x8x1xf32> -> vector<2x8x1xf32>
    %226 = vector.broadcast %225 : vector<2x8x1xf32> to vector<2x8x8xf32>
    %227 = arith.mulf %222, %226 : vector<2x8x8xf32>
    %228 = arith.truncf %227 : vector<2x8x8xf32> to vector<2x8x8xbf16>
    "tpu.trace_start"() <{level = 10 : i32, message = "bqk,bkd->bqd"}> : () -> ()
    %cst_81 = arith.constant dense<0.000000e+00> : vector<2x8x16xf32>
    %229 = tpu.matmul %228, %216, %cst_81 {dimension_numbers = #tpu.dot_dimension_numbers<[2], [1], [1], [2], [0, 0, 0, 1, 1, 2], [0], [0]>} : vector<2x8x8xbf16>, vector<2x8x16xbf16>, vector<2x8x16xf32> -> vector<2x8x16xf32>
    "tpu.trace_stop"() : () -> ()
    %230 = vector.extract_strided_slice %187 {offsets = [0, 0, 32], sizes = [2, 8, 16], strides = [1, 1, 1]} : vector<2x8x64xf32> to vector<2x8x16xf32>
    %231 = arith.truncf %230 : vector<2x8x16xf32> to vector<2x8x16xbf16>
    %232 = vector.extract_strided_slice %189 {offsets = [0, 0, 32], sizes = [2, 8, 16], strides = [1, 1, 1]} : vector<2x8x64xf32> to vector<2x8x16xf32>
    %233 = arith.truncf %232 : vector<2x8x16xf32> to vector<2x8x16xbf16>
    %234 = vector.extract_strided_slice %191 {offsets = [0, 0, 32], sizes = [2, 8, 16], strides = [1, 1, 1]} : vector<2x8x64xf32> to vector<2x8x16xf32>
    %235 = arith.truncf %234 : vector<2x8x16xf32> to vector<2x8x16xbf16>
    "tpu.trace_start"() <{level = 10 : i32, message = "bqd,bkd->bqk"}> : () -> ()
    %cst_82 = arith.constant dense<0.000000e+00> : vector<2x8x8xf32>
    %236 = tpu.matmul %231, %233, %cst_82 {dimension_numbers = #tpu.dot_dimension_numbers<[2], [2], [1], [1], [0, 0, 0, 1, 1, 1], [0], [0]>} : vector<2x8x16xbf16>, vector<2x8x16xbf16>, vector<2x8x8xf32> -> vector<2x8x8xf32>
    "tpu.trace_stop"() : () -> ()
    %cst_83 = arith.constant dense<0xFF800000> : vector<2x8xf32>
    %237 = vector.multi_reduction <maximumf>, %236, %cst_83 [2] : vector<2x8x8xf32> to vector<2x8xf32>
    %238 = vector.shape_cast %237 : vector<2x8xf32> to vector<2x8x1xf32>
    %239 = vector.broadcast %238 : vector<2x8x1xf32> to vector<2x8x8xf32>
    %240 = arith.subf %236, %239 : vector<2x8x8xf32>
    %241 = math.exp %240 : vector<2x8x8xf32>
    %cst_84 = arith.constant dense<0.000000e+00> : vector<2x8xf32>
    %242 = vector.multi_reduction <add>, %241, %cst_84 [2] : vector<2x8x8xf32> to vector<2x8xf32>
    %243 = vector.shape_cast %242 : vector<2x8xf32> to vector<2x8x1xf32>
    %244 = tpu.reciprocal %243 {approx = true} : vector<2x8x1xf32> -> vector<2x8x1xf32>
    %245 = vector.broadcast %244 : vector<2x8x1xf32> to vector<2x8x8xf32>
    %246 = arith.mulf %241, %245 : vector<2x8x8xf32>
    %247 = arith.truncf %246 : vector<2x8x8xf32> to vector<2x8x8xbf16>
    "tpu.trace_start"() <{level = 10 : i32, message = "bqk,bkd->bqd"}> : () -> ()
    %cst_85 = arith.constant dense<0.000000e+00> : vector<2x8x16xf32>
    %248 = tpu.matmul %247, %235, %cst_85 {dimension_numbers = #tpu.dot_dimension_numbers<[2], [1], [1], [2], [0, 0, 0, 1, 1, 2], [0], [0]>} : vector<2x8x8xbf16>, vector<2x8x16xbf16>, vector<2x8x16xf32> -> vector<2x8x16xf32>
    "tpu.trace_stop"() : () -> ()
    %249 = vector.extract_strided_slice %187 {offsets = [0, 0, 48], sizes = [2, 8, 16], strides = [1, 1, 1]} : vector<2x8x64xf32> to vector<2x8x16xf32>
    %250 = arith.truncf %249 : vector<2x8x16xf32> to vector<2x8x16xbf16>
    %251 = vector.extract_strided_slice %189 {offsets = [0, 0, 48], sizes = [2, 8, 16], strides = [1, 1, 1]} : vector<2x8x64xf32> to vector<2x8x16xf32>
    %252 = arith.truncf %251 : vector<2x8x16xf32> to vector<2x8x16xbf16>
    %253 = vector.extract_strided_slice %191 {offsets = [0, 0, 48], sizes = [2, 8, 16], strides = [1, 1, 1]} : vector<2x8x64xf32> to vector<2x8x16xf32>
    %254 = arith.truncf %253 : vector<2x8x16xf32> to vector<2x8x16xbf16>
    "tpu.trace_start"() <{level = 10 : i32, message = "bqd,bkd->bqk"}> : () -> ()
    %cst_86 = arith.constant dense<0.000000e+00> : vector<2x8x8xf32>
    %255 = tpu.matmul %250, %252, %cst_86 {dimension_numbers = #tpu.dot_dimension_numbers<[2], [2], [1], [1], [0, 0, 0, 1, 1, 1], [0], [0]>} : vector<2x8x16xbf16>, vector<2x8x16xbf16>, vector<2x8x8xf32> -> vector<2x8x8xf32>
    "tpu.trace_stop"() : () -> ()
    %cst_87 = arith.constant dense<0xFF800000> : vector<2x8xf32>
    %256 = vector.multi_reduction <maximumf>, %255, %cst_87 [2] : vector<2x8x8xf32> to vector<2x8xf32>
    %257 = vector.shape_cast %256 : vector<2x8xf32> to vector<2x8x1xf32>
    %258 = vector.broadcast %257 : vector<2x8x1xf32> to vector<2x8x8xf32>
    %259 = arith.subf %255, %258 : vector<2x8x8xf32>
    %260 = math.exp %259 : vector<2x8x8xf32>
    %cst_88 = arith.constant dense<0.000000e+00> : vector<2x8xf32>
    %261 = vector.multi_reduction <add>, %260, %cst_88 [2] : vector<2x8x8xf32> to vector<2x8xf32>
    %262 = vector.shape_cast %261 : vector<2x8xf32> to vector<2x8x1xf32>
    %263 = tpu.reciprocal %262 {approx = true} : vector<2x8x1xf32> -> vector<2x8x1xf32>
    %264 = vector.broadcast %263 : vector<2x8x1xf32> to vector<2x8x8xf32>
    %265 = arith.mulf %260, %264 : vector<2x8x8xf32>
    %266 = arith.truncf %265 : vector<2x8x8xf32> to vector<2x8x8xbf16>
    "tpu.trace_start"() <{level = 10 : i32, message = "bqk,bkd->bqd"}> : () -> ()
    %cst_89 = arith.constant dense<0.000000e+00> : vector<2x8x16xf32>
    %267 = tpu.matmul %266, %254, %cst_89 {dimension_numbers = #tpu.dot_dimension_numbers<[2], [1], [1], [2], [0, 0, 0, 1, 1, 2], [0], [0]>} : vector<2x8x8xbf16>, vector<2x8x16xbf16>, vector<2x8x16xf32> -> vector<2x8x16xf32>
    "tpu.trace_stop"() : () -> ()
    %268 = tpu.concatenate %210, %229, %248, %267 in 2 : vector<2x8x16xf32>, vector<2x8x16xf32>, vector<2x8x16xf32>, vector<2x8x16xf32> -> vector<2x8x64xf32>
    %269 = vector.shape_cast %268 : vector<2x8x64xf32> to vector<16x64xf32>
    %270 = arith.truncf %269 : vector<16x64xf32> to vector<16x64xbf16>
    %c0_90 = arith.constant 0 : index
    %c0_91 = arith.constant 0 : index
    %271 = vector.load %arg22[%c0_90, %c0_91] : memref<64x64xbf16, #tpu.memory_space<vmem>>, vector<64x64xbf16>
    %cst_92 = arith.constant dense<0.000000e+00> : vector<16x64xf32>
    %272 = tpu.matmul %270, %271, %cst_92 {dimension_numbers = #tpu.dot_dimension_numbers<[1], [0], [0], [1], [0, 0, 1, 1], [], []>} : vector<16x64xbf16>, vector<64x64xbf16>, vector<16x64xf32> -> vector<16x64xf32>
    %c0_93 = arith.constant 0 : index
    %c0_94 = arith.constant 0 : index
    %273 = vector.load %arg23[%c0_93, %c0_94] : memref<1x64xf32, #tpu.memory_space<vmem>>, vector<1x64xf32>
    %274 = vector.broadcast %273 : vector<1x64xf32> to vector<16x64xf32>
    %275 = arith.addf %272, %274 : vector<16x64xf32>
    %276 = arith.addf %179, %275 : vector<16x64xf32>
    %c0_95 = arith.constant 0 : index
    %c0_96 = arith.constant 0 : index
    %277 = vector.load %arg24[%c0_95, %c0_96] : memref<1x64xf32, #tpu.memory_space<vmem>>, vector<1x64xf32>
    %c0_97 = arith.constant 0 : index
    %c0_98 = arith.constant 0 : index
    %278 = vector.load %arg25[%c0_97, %c0_98] : memref<1x64xf32, #tpu.memory_space<vmem>>, vector<1x64xf32>
    %cst_99 = arith.constant dense<0.000000e+00> : vector<16xf32>
    %279 = vector.multi_reduction <add>, %276, %cst_99 [1] : vector<16x64xf32> to vector<16xf32>
    %280 = vector.shape_cast %279 : vector<16xf32> to vector<16x1xf32>
    %cst_100 = arith.constant 6.400000e+01 : f32
    %281 = vector.broadcast %cst_100 : f32 to vector<16x1xf32>
    %282 = arith.divf %280, %281 : vector<16x1xf32>
    %283 = vector.broadcast %282 : vector<16x1xf32> to vector<16x64xf32>
    %284 = arith.subf %276, %283 : vector<16x64xf32>
    %285 = arith.mulf %284, %284 : vector<16x64xf32>
    %cst_101 = arith.constant dense<0.000000e+00> : vector<16xf32>
    %286 = vector.multi_reduction <add>, %285, %cst_101 [1] : vector<16x64xf32> to vector<16xf32>
    %287 = vector.shape_cast %286 : vector<16xf32> to vector<16x1xf32>
    %cst_102 = arith.constant 6.400000e+01 : f32
    %288 = vector.broadcast %cst_102 : f32 to vector<16x1xf32>
    %289 = arith.divf %287, %288 : vector<16x1xf32>
    %cst_103 = arith.constant 9.99999974E-6 : f32
    %290 = vector.broadcast %cst_103 : f32 to vector<16x1xf32>
    %291 = arith.addf %289, %290 : vector<16x1xf32>
    %292 = math.rsqrt %291 : vector<16x1xf32>
    %293 = vector.broadcast %292 : vector<16x1xf32> to vector<16x64xf32>
    %294 = arith.mulf %284, %293 : vector<16x64xf32>
    %295 = vector.broadcast %277 : vector<1x64xf32> to vector<16x64xf32>
    %296 = arith.mulf %294, %295 : vector<16x64xf32>
    %297 = vector.broadcast %278 : vector<1x64xf32> to vector<16x64xf32>
    %298 = arith.addf %296, %297 : vector<16x64xf32>
    %299 = arith.truncf %298 : vector<16x64xf32> to vector<16x64xbf16>
    %c0_104 = arith.constant 0 : index
    %c0_105 = arith.constant 0 : index
    %300 = vector.load %arg26[%c0_104, %c0_105] : memref<64x2048xbf16, #tpu.memory_space<vmem>>, vector<64x2048xbf16>
    %cst_106 = arith.constant dense<0.000000e+00> : vector<16x2048xf32>
    %301 = tpu.matmul %299, %300, %cst_106 {dimension_numbers = #tpu.dot_dimension_numbers<[1], [0], [0], [1], [0, 0, 1, 1], [], []>} : vector<16x64xbf16>, vector<64x2048xbf16>, vector<16x2048xf32> -> vector<16x2048xf32>
    %c0_107 = arith.constant 0 : index
    %c0_108 = arith.constant 0 : index
    %302 = vector.load %arg27[%c0_107, %c0_108] : memref<1x2048xf32, #tpu.memory_space<vmem>>, vector<1x2048xf32>
    %303 = vector.broadcast %302 : vector<1x2048xf32> to vector<16x2048xf32>
    %304 = arith.addf %301, %303 : vector<16x2048xf32>
    %cst_109 = arith.constant 0.000000e+00 : f32
    %305 = vector.broadcast %cst_109 : f32 to vector<16x2048xf32>
    %306 = arith.maximumf %304, %305 : vector<16x2048xf32>
    %307 = arith.truncf %306 : vector<16x2048xf32> to vector<16x2048xbf16>
    %c0_110 = arith.constant 0 : index
    %c0_111 = arith.constant 0 : index
    %308 = vector.load %arg28[%c0_110, %c0_111] : memref<2048x64xbf16, #tpu.memory_space<vmem>>, vector<2048x64xbf16>
    %cst_112 = arith.constant dense<0.000000e+00> : vector<16x64xf32>
    %309 = tpu.matmul %307, %308, %cst_112 {dimension_numbers = #tpu.dot_dimension_numbers<[1], [0], [0], [1], [0, 0, 1, 1], [], []>} : vector<16x2048xbf16>, vector<2048x64xbf16>, vector<16x64xf32> -> vector<16x64xf32>
    %c0_113 = arith.constant 0 : index
    %c0_114 = arith.constant 0 : index
    %310 = vector.load %arg29[%c0_113, %c0_114] : memref<1x64xf32, #tpu.memory_space<vmem>>, vector<1x64xf32>
    %311 = vector.broadcast %310 : vector<1x64xf32> to vector<16x64xf32>
    %312 = arith.addf %309, %311 : vector<16x64xf32>
    %313 = arith.addf %298, %312 : vector<16x64xf32>
    %c0_115 = arith.constant 0 : index
    %c0_116 = arith.constant 0 : index
    %314 = vector.load %arg30[%c0_115, %c0_116] : memref<1x64xf32, #tpu.memory_space<vmem>>, vector<1x64xf32>
    %c0_117 = arith.constant 0 : index
    %c0_118 = arith.constant 0 : index
    %315 = vector.load %arg31[%c0_117, %c0_118] : memref<1x64xf32, #tpu.memory_space<vmem>>, vector<1x64xf32>
    %cst_119 = arith.constant dense<0.000000e+00> : vector<16xf32>
    %316 = vector.multi_reduction <add>, %313, %cst_119 [1] : vector<16x64xf32> to vector<16xf32>
    %317 = vector.shape_cast %316 : vector<16xf32> to vector<16x1xf32>
    %cst_120 = arith.constant 6.400000e+01 : f32
    %318 = vector.broadcast %cst_120 : f32 to vector<16x1xf32>
    %319 = arith.divf %317, %318 : vector<16x1xf32>
    %320 = vector.broadcast %319 : vector<16x1xf32> to vector<16x64xf32>
    %321 = arith.subf %313, %320 : vector<16x64xf32>
    %322 = arith.mulf %321, %321 : vector<16x64xf32>
    %cst_121 = arith.constant dense<0.000000e+00> : vector<16xf32>
    %323 = vector.multi_reduction <add>, %322, %cst_121 [1] : vector<16x64xf32> to vector<16xf32>
    %324 = vector.shape_cast %323 : vector<16xf32> to vector<16x1xf32>
    %cst_122 = arith.constant 6.400000e+01 : f32
    %325 = vector.broadcast %cst_122 : f32 to vector<16x1xf32>
    %326 = arith.divf %324, %325 : vector<16x1xf32>
    %cst_123 = arith.constant 9.99999974E-6 : f32
    %327 = vector.broadcast %cst_123 : f32 to vector<16x1xf32>
    %328 = arith.addf %326, %327 : vector<16x1xf32>
    %329 = math.rsqrt %328 : vector<16x1xf32>
    %330 = vector.broadcast %329 : vector<16x1xf32> to vector<16x64xf32>
    %331 = arith.mulf %321, %330 : vector<16x64xf32>
    %332 = vector.broadcast %314 : vector<1x64xf32> to vector<16x64xf32>
    %333 = arith.mulf %331, %332 : vector<16x64xf32>
    %334 = vector.broadcast %315 : vector<1x64xf32> to vector<16x64xf32>
    %335 = arith.addf %333, %334 : vector<16x64xf32>
    %c0_124 = arith.constant 0 : index
    %c0_125 = arith.constant 0 : index
    %336 = vector.load %arg32[%c0_124, %c0_125] : memref<2x16xf32, #tpu.memory_space<vmem>>, vector<2x16xf32>
    %cst_126 = arith.constant dense<0.000000e+00> : vector<2x64xf32>
    %337 = tpu.matmul %336, %335, %cst_126 {dimension_numbers = #tpu.dot_dimension_numbers<[1], [0], [0], [1], [0, 0, 1, 1], [], []>} : vector<2x16xf32>, vector<16x64xf32>, vector<2x64xf32> -> vector<2x64xf32>
    %338 = arith.truncf %337 : vector<2x64xf32> to vector<2x64xbf16>
    %c0_127 = arith.constant 0 : index
    %c0_128 = arith.constant 0 : index
    %339 = vector.load %arg33[%c0_127, %c0_128] : memref<64x2xbf16, #tpu.memory_space<vmem>>, vector<64x2xbf16>
    %cst_129 = arith.constant dense<0.000000e+00> : vector<2x2xf32>
    %340 = tpu.matmul %338, %339, %cst_129 {dimension_numbers = #tpu.dot_dimension_numbers<[1], [0], [0], [1], [0, 0, 1, 1], [], []>} : vector<2x64xbf16>, vector<64x2xbf16>, vector<2x2xf32> -> vector<2x2xf32>
    %c0_130 = arith.constant 0 : index
    %c0_131 = arith.constant 0 : index
    %341 = vector.load %arg34[%c0_130, %c0_131] : memref<1x2xf32, #tpu.memory_space<vmem>>, vector<1x2xf32>
    %342 = vector.broadcast %341 : vector<1x2xf32> to vector<2x2xf32>
    %343 = arith.addf %340, %342 : vector<2x2xf32>
    %c0_132 = arith.constant 0 : index
    %c0_133 = arith.constant 0 : index
    %344 = vector.load %arg35[%c0_132, %c0_133] : memref<2x2xf32, #tpu.memory_space<vmem>>, vector<2x2xf32>
    tpu.vector_store %arg35[%c0_132, %c0_133], %343 {strides = array<i32>} : memref<2x2xf32, #tpu.memory_space<vmem>>, vector<2x2xf32>,
    return
  }
  func.func @transform_0(%arg0: i32) -> (i32, i32) {
    %c0_i32 = arith.constant 0 : i32
    %c0_i32_0 = arith.constant 0 : i32
    return %arg0, %c0_i32 : i32, i32
  }
  func.func @transform_1(%arg0: i32) -> (i32, i32) {
    %c0_i32 = arith.constant 0 : i32
    %c0_i32_0 = arith.constant 0 : i32
    %c0_i32_1 = arith.constant 0 : i32
    return %c0_i32, %c0_i32_0 : i32, i32
  }
  func.func @transform_2(%arg0: i32) -> (i32, i32) {
    %c0_i32 = arith.constant 0 : i32
    %c0_i32_0 = arith.constant 0 : i32
    %c0_i32_1 = arith.constant 0 : i32
    return %c0_i32, %c0_i32_0 : i32, i32
  }
  func.func @transform_3(%arg0: i32) -> (i32, i32) {
    %c0_i32 = arith.constant 0 : i32
    %c0_i32_0 = arith.constant 0 : i32
    %c0_i32_1 = arith.constant 0 : i32
    return %c0_i32, %c0_i32_0 : i32, i32
  }
  func.func @transform_4(%arg0: i32) -> (i32, i32) {
    %c0_i32 = arith.constant 0 : i32
    %c0_i32_0 = arith.constant 0 : i32
    %c0_i32_1 = arith.constant 0 : i32
    return %c0_i32, %c0_i32_0 : i32, i32
  }
  func.func @transform_5(%arg0: i32) -> (i32, i32) {
    %c0_i32 = arith.constant 0 : i32
    %c0_i32_0 = arith.constant 0 : i32
    %c0_i32_1 = arith.constant 0 : i32
    return %c0_i32, %c0_i32_0 : i32, i32
  }
  func.func @transform_6(%arg0: i32) -> (i32, i32) {
    %c0_i32 = arith.constant 0 : i32
    %c0_i32_0 = arith.constant 0 : i32
    %c0_i32_1 = arith.constant 0 : i32
    return %c0_i32, %c0_i32_0 : i32, i32
  }
  func.func @transform_7(%arg0: i32) -> (i32, i32) {
    %c0_i32 = arith.constant 0 : i32
    %c0_i32_0 = arith.constant 0 : i32
    %c0_i32_1 = arith.constant 0 : i32
    return %c0_i32, %c0_i32_0 : i32, i32
  }
  func.func @transform_8(%arg0: i32) -> (i32, i32) {
    %c0_i32 = arith.constant 0 : i32
    %c0_i32_0 = arith.constant 0 : i32
    %c0_i32_1 = arith.constant 0 : i32
    return %c0_i32, %c0_i32_0 : i32, i32
  }
  func.func @transform_9(%arg0: i32) -> (i32, i32) {
    %c0_i32 = arith.constant 0 : i32
    %c0_i32_0 = arith.constant 0 : i32
    %c0_i32_1 = arith.constant 0 : i32
    return %c0_i32, %c0_i32_0 : i32, i32
  }
  func.func @transform_10(%arg0: i32) -> (i32, i32) {
    %c0_i32 = arith.constant 0 : i32
    %c0_i32_0 = arith.constant 0 : i32
    %c0_i32_1 = arith.constant 0 : i32
    return %c0_i32, %c0_i32_0 : i32, i32
  }
  func.func @transform_11(%arg0: i32) -> (i32, i32) {
    %c0_i32 = arith.constant 0 : i32
    %c0_i32_0 = arith.constant 0 : i32
    %c0_i32_1 = arith.constant 0 : i32
    return %c0_i32, %c0_i32_0 : i32, i32
  }
  func.func @transform_12(%arg0: i32) -> (i32, i32) {
    %c0_i32 = arith.constant 0 : i32
    %c0_i32_0 = arith.constant 0 : i32
    %c0_i32_1 = arith.constant 0 : i32
    return %c0_i32, %c0_i32_0 : i32, i32
  }
  func.func @transform_13(%arg0: i32) -> (i32, i32) {
    %c0_i32 = arith.constant 0 : i32
    %c0_i32_0 = arith.constant 0 : i32
    %c0_i32_1 = arith.constant 0 : i32
    return %c0_i32, %c0_i32_0 : i32, i32
  }
  func.func @transform_14(%arg0: i32) -> (i32, i32) {
    %c0_i32 = arith.constant 0 : i32
    %c0_i32_0 = arith.constant 0 : i32
    %c0_i32_1 = arith.constant 0 : i32
    return %c0_i32, %c0_i32_0 : i32, i32
  }
  func.func @transform_15(%arg0: i32) -> (i32, i32) {
    %c0_i32 = arith.constant 0 : i32
    %c0_i32_0 = arith.constant 0 : i32
    %c0_i32_1 = arith.constant 0 : i32
    return %c0_i32, %c0_i32_0 : i32, i32
  }
  func.func @transform_16(%arg0: i32) -> (i32, i32) {
    %c0_i32 = arith.constant 0 : i32
    %c0_i32_0 = arith.constant 0 : i32
    %c0_i32_1 = arith.constant 0 : i32
    return %c0_i32, %c0_i32_0 : i32, i32
  }
  func.func @transform_17(%arg0: i32) -> (i32, i32) {
    %c0_i32 = arith.constant 0 : i32
    %c0_i32_0 = arith.constant 0 : i32
    %c0_i32_1 = arith.constant 0 : i32
    return %c0_i32, %c0_i32_0 : i32, i32
  }
  func.func @transform_18(%arg0: i32) -> (i32, i32) {
    %c0_i32 = arith.constant 0 : i32
    %c0_i32_0 = arith.constant 0 : i32
    %c0_i32_1 = arith.constant 0 : i32
    return %c0_i32, %c0_i32_0 : i32, i32
  }
  func.func @transform_19(%arg0: i32) -> (i32, i32) {
    %c0_i32 = arith.constant 0 : i32
    %c0_i32_0 = arith.constant 0 : i32
    %c0_i32_1 = arith.constant 0 : i32
    return %c0_i32, %c0_i32_0 : i32, i32
  }
  func.func @transform_20(%arg0: i32) -> (i32, i32) {
    %c0_i32 = arith.constant 0 : i32
    %c0_i32_0 = arith.constant 0 : i32
    %c0_i32_1 = arith.constant 0 : i32
    return %c0_i32, %c0_i32_0 : i32, i32
  }
  func.func @transform_21(%arg0: i32) -> (i32, i32) {
    %c0_i32 = arith.constant 0 : i32
    %c0_i32_0 = arith.constant 0 : i32
    %c0_i32_1 = arith.constant 0 : i32
    return %c0_i32, %c0_i32_0 : i32, i32
  }
  func.func @transform_22(%arg0: i32) -> (i32, i32) {
    %c0_i32 = arith.constant 0 : i32
    %c0_i32_0 = arith.constant 0 : i32
    %c0_i32_1 = arith.constant 0 : i32
    return %c0_i32, %c0_i32_0 : i32, i32
  }
  func.func @transform_23(%arg0: i32) -> (i32, i32) {
    %c0_i32 = arith.constant 0 : i32
    %c0_i32_0 = arith.constant 0 : i32
    %c0_i32_1 = arith.constant 0 : i32
    return %c0_i32, %c0_i32_0 : i32, i32
  }
  func.func @transform_24(%arg0: i32) -> (i32, i32) {
    %c0_i32 = arith.constant 0 : i32
    %c0_i32_0 = arith.constant 0 : i32
    %c0_i32_1 = arith.constant 0 : i32
    return %c0_i32, %c0_i32_0 : i32, i32
  }
  func.func @transform_25(%arg0: i32) -> (i32, i32) {
    %c0_i32 = arith.constant 0 : i32
    %c0_i32_0 = arith.constant 0 : i32
    %c0_i32_1 = arith.constant 0 : i32
    return %c0_i32, %c0_i32_0 : i32, i32
  }
  func.func @transform_26(%arg0: i32) -> (i32, i32) {
    %c0_i32 = arith.constant 0 : i32
    %c0_i32_0 = arith.constant 0 : i32
    %c0_i32_1 = arith.constant 0 : i32
    return %c0_i32, %c0_i32_0 : i32, i32
  }
  func.func @transform_27(%arg0: i32) -> (i32, i32) {
    %c0_i32 = arith.constant 0 : i32
    %c0_i32_0 = arith.constant 0 : i32
    %c0_i32_1 = arith.constant 0 : i32
    return %c0_i32, %c0_i32_0 : i32, i32
  }
  func.func @transform_28(%arg0: i32) -> (i32, i32) {
    %c0_i32 = arith.constant 0 : i32
    %c0_i32_0 = arith.constant 0 : i32
    %c0_i32_1 = arith.constant 0 : i32
    return %c0_i32, %c0_i32_0 : i32, i32
  }
  func.func @transform_29(%arg0: i32) -> (i32, i32) {
    %c0_i32 = arith.constant 0 : i32
    %c0_i32_0 = arith.constant 0 : i32
    %c0_i32_1 = arith.constant 0 : i32
    return %c0_i32, %c0_i32_0 : i32, i32
  }
  func.func @transform_30(%arg0: i32) -> (i32, i32) {
    %c0_i32 = arith.constant 0 : i32
    %c0_i32_0 = arith.constant 0 : i32
    %c0_i32_1 = arith.constant 0 : i32
    return %c0_i32, %c0_i32_0 : i32, i32
  }
  func.func @transform_31(%arg0: i32) -> (i32, i32) {
    %c0_i32 = arith.constant 0 : i32
    %c0_i32_0 = arith.constant 0 : i32
    %c0_i32_1 = arith.constant 0 : i32
    return %c0_i32, %c0_i32_0 : i32, i32
  }
  func.func @transform_32(%arg0: i32) -> (i32, i32) {
    %c0_i32 = arith.constant 0 : i32
    %c0_i32_0 = arith.constant 0 : i32
    %c0_i32_1 = arith.constant 0 : i32
    return %c0_i32, %c0_i32_0 : i32, i32
  }
  func.func @transform_33(%arg0: i32) -> (i32, i32) {
    %c0_i32 = arith.constant 0 : i32
    %c0_i32_0 = arith.constant 0 : i32
    %c0_i32_1 = arith.constant 0 : i32
    return %c0_i32, %c0_i32_0 : i32, i32
  }
  func.func @transform_34(%arg0: i32) -> (i32, i32) {
    %c0_i32 = arith.constant 0 : i32
    %c0_i32_0 = arith.constant 0 : i32
    return %arg0, %c0_i32 : i32, i32
  }
}

</mosaic_0001>

<llo_original>
// kernel: tile.11
$region0: #{tile.11}
  %s0 = inlined_call_operand.vmem [shape: f32[8,4,16], index: 0, kind: input, shape index: {}]
  %s1 = inlined_call_operand.vmem [shape: f32[8,64], index: 1, kind: output, shape index: {}]
  $region1: #{tile.11} parent=0
    #allocation0 [shape = 'u8[32768]{0}', space=vmem, size = 0x8000, scoped, tag = 'scoped mem for input reshape']
    %s3 = sshllo.u32 0, 4
    %s4 = smul.addr 4, 7
    %s5 = scalar_lea.vmem %s0, %s4
    %v6 = vld [vmem:[%s5] sm:%s3]
    %s7 = scalar_lea.vmem [#allocation0], 56
    %8 = vst [vmem:[%s7] sm:%s3] %v6
    %s9 = smul.addr 4, 6
    %s10 = scalar_lea.vmem %s0, %s9
    %v11 = vld [vmem:[%s10] sm:%s3]
    %s12 = scalar_lea.vmem [#allocation0], 48
    %13 = vst [vmem:[%s12] sm:%s3] %v11
    %s14 = smul.addr 4, 5
    %s15 = scalar_lea.vmem %s0, %s14
    %v16 = vld [vmem:[%s15] sm:%s3]
    %s17 = scalar_lea.vmem [#allocation0], 40
    %18 = vst [vmem:[%s17] sm:%s3] %v16
    %s19 = smul.addr 4, 4
    %s20 = scalar_lea.vmem %s0, %s19
    %v21 = vld [vmem:[%s20] sm:%s3]
    %s22 = scalar_lea.vmem [#allocation0], 32
    %23 = vst [vmem:[%s22] sm:%s3] %v21
    %s24 = smul.addr 4, 3
    %s25 = scalar_lea.vmem %s0, %s24
    %v26 = vld [vmem:[%s25] sm:%s3]
    %s27 = scalar_lea.vmem [#allocation0], 24
    %28 = vst [vmem:[%s27] sm:%s3] %v26
    %s29 = smul.addr 4, 2
    %s30 = scalar_lea.vmem %s0, %s29
    %v31 = vld [vmem:[%s30] sm:%s3]
    %s32 = scalar_lea.vmem [#allocation0], 16
    %33 = vst [vmem:[%s32] sm:%s3] %v31
    %s34 = scalar_lea.vmem %s0, 4
    %v35 = vld [vmem:[%s34] sm:%s3]
    %s36 = scalar_lea.vmem [#allocation0], 8
    %37 = vst [vmem:[%s36] sm:%s3] %v35
    %v38 = vld [vmem:[%s0] sm:%s3]
    %39 = vst [vmem:[#allocation0] sm:%s3] %v38
    %v40 = vld [vmem:[#allocation0] ss:$8 sm:$0xf]
    %v41 = vld [vmem:[#allocation0] ss:$8 sm:$0xf0]
    %vm42 = vcmask 1047556
    %v43 = vsel %vm42, %v41, %v40
    %vm44 = vcmask 130048
    %45 = vst.msk [vmem:[%s1] sm:$0xff] %vm44, %v43
    %s46 = scalar_lea.vmem [#allocation0], 3
    %v47 = vld [vmem:[%s46] ss:$8 sm:$0xf]
    %s48 = scalar_lea.vmem [#allocation0], 3
    %v49 = vld [vmem:[%s48] ss:$8 sm:$0xf0]
    %vm50 = vcmask 1047556
    %v51 = vsel %vm50, %v49, %v47
    %52 = vrot.lane.b32.xlu0 %v51, 48
    %v53 = vpop.permute.xlu0 %52
    %vm54 = vcmask 523648
    %55 = vst.msk [vmem:[%s1] sm:$0xff] %vm54, %v53
    %s56 = scalar_lea.vmem [#allocation0], 2
    %v57 = vld [vmem:[%s56] ss:$8 sm:$0xf]
    %s58 = scalar_lea.vmem [#allocation0], 2
    %v59 = vld [vmem:[%s58] ss:$8 sm:$0xf0]
    %vm60 = vcmask 1047556
    %v61 = vsel %vm60, %v59, %v57
    %62 = vrot.lane.b32.xlu0 %v61, 32
    %v63 = vpop.permute.xlu0 %62
    %vm64 = vcmask 392448
    %65 = vst.msk [vmem:[%s1] sm:$0xff] %vm64, %v63
    %s66 = scalar_lea.vmem [#allocation0], 1
    %v67 = vld [vmem:[%s66] ss:$8 sm:$0xf]
    %s68 = scalar_lea.vmem [#allocation0], 1
    %v69 = vld [vmem:[%s68] ss:$8 sm:$0xf0]
    %vm70 = vcmask 1047556
    %v71 = vsel %vm70, %v69, %v67
    %72 = vrot.lane.b32.xlu0 %v71, 16
    %v73 = vpop.permute.xlu0 %72
    %vm74 = vcmask 261248
    %75 = vst.msk [vmem:[%s1] sm:$0xff] %vm74, %v73

// kernel: fraud_transformer_forward.1
$region0: #{fraud_transformer_forward.1}
  #allocation0 [shape = 'u32[]', space=smem, size = 0x4, offset = 0x4, fixed_abs, tag = 'smem constant byte address 0x4 - core index']
  #allocation1 [shape = 'u32[144,128]{1,0:T(1,128)}', space=vmem, size = 0x12000, scoped, tag = 'internal scratch']
  %s0 = inlined_call_operand.smem [shape: u32[35], index: -1, kind: input, shape index: {}]
  %s1 = sld [smem:[%s0]]
  %s2 = scalar_lea.smem %s0, 1
  %s3 = sld [smem:[%s2]]
  %s4 = scalar_lea.smem %s0, 2
  %s5 = sld [smem:[%s4]]
  %s6 = scalar_lea.smem %s0, 3
  %s7 = sld [smem:[%s6]]
  %s8 = scalar_lea.smem %s0, 4
  %s9 = sld [smem:[%s8]]
  %s10 = scalar_lea.smem %s0, 5
  %s11 = sld [smem:[%s10]]
  %s12 = scalar_lea.smem %s0, 6
  %s13 = sld [smem:[%s12]]
  %s14 = scalar_lea.smem %s0, 7
  %s15 = sld [smem:[%s14]]
  %s16 = scalar_lea.smem %s0, 8
  %s17 = sld [smem:[%s16]]
  %s18 = scalar_lea.smem %s0, 9
  %s19 = sld [smem:[%s18]]
  %s20 = scalar_lea.smem %s0, 10
  %s21 = sld [smem:[%s20]]
  %s22 = scalar_lea.smem %s0, 11
  %s23 = sld [smem:[%s22]]
  %s24 = scalar_lea.smem %s0, 12
  %s25 = sld [smem:[%s24]]
  %s26 = scalar_lea.smem %s0, 13
  %s27 = sld [smem:[%s26]]
  %s28 = scalar_lea.smem %s0, 14
  %s29 = sld [smem:[%s28]]
  %s30 = scalar_lea.smem %s0, 15
  %s31 = sld [smem:[%s30]]
  %s32 = scalar_lea.smem %s0, 16
  %s33 = sld [smem:[%s32]]
  %s34 = scalar_lea.smem %s0, 17
  %s35 = sld [smem:[%s34]]
  %s36 = scalar_lea.smem %s0, 18
  %s37 = sld [smem:[%s36]]
  %s38 = scalar_lea.smem %s0, 19
  %s39 = sld [smem:[%s38]]
  %s40 = scalar_lea.smem %s0, 20
  %s41 = sld [smem:[%s40]]
  %s42 = scalar_lea.smem %s0, 21
  %s43 = sld [smem:[%s42]]
  %s44 = scalar_lea.smem %s0, 22
  %s45 = sld [smem:[%s44]]
  %s46 = scalar_lea.smem %s0, 23
  %s47 = sld [smem:[%s46]]
  %s48 = scalar_lea.smem %s0, 24
  %s49 = sld [smem:[%s48]]
  %s50 = scalar_lea.smem %s0, 25
  %s51 = sld [smem:[%s50]]
  %s52 = scalar_lea.smem %s0, 26
  %s53 = sld [smem:[%s52]]
  %s54 = scalar_lea.smem %s0, 27
  %s55 = sld [smem:[%s54]]
  %s56 = scalar_lea.smem %s0, 28
  %s57 = sld [smem:[%s56]]
  %s58 = scalar_lea.smem %s0, 29
  %s59 = sld [smem:[%s58]]
  %s60 = scalar_lea.smem %s0, 30
  %s61 = sld [smem:[%s60]]
  %s62 = scalar_lea.smem %s0, 31
  %s63 = sld [smem:[%s62]]
  %s64 = scalar_lea.smem %s0, 32
  %s65 = sld [smem:[%s64]]
  %s66 = scalar_lea.smem %s0, 33
  %s67 = sld [smem:[%s66]]
  %s68 = scalar_lea.smem %s0, 34
  %s69 = sld [smem:[%s68]]
  %s70 = sld [smem:[#allocation0]]
  $region146: #{fraud_transformer_forward.1} parent=0
    _
  %s72 = ssub.s32 1, %s70
  %s73 = scalar_select 0, %s72, %s70
  $region1: #{fraud_transformer_forward.1} parent=0
    #allocation2 [shape = 'u8[1024]{0}', space=vmem, size = 0x400, scoped, tag = 'output window, operand 0, single buffered']
    #allocation3 [shape = 's32[1]{0}', space=sflag, size = 0x4, scoped, tag = 'scoped memory for fraud_transformer_forward.1']
    %74 = vsyncpa [#allocation3], 0
    // Predicated region
    $region2: #{fraud_transformer_forward.1} parent=1 // pred_check
      _
    $region3: #{fraud_transformer_forward.1} parent=1 // pred_check_branch
      %76 = sbr.rel (0) target = $region5
    $region4: #{fraud_transformer_forward.1} parent=1 // pred_region
      _
    $region5: #{fraud_transformer_forward.1} parent=1 // pred_fallthru
      _
    // Predicated region
    $region6: #{fraud_transformer_forward.1} parent=1 // pred_check
      _
    $region7: #{fraud_transformer_forward.1} parent=1 // pred_check_branch
      %78 = sbr.rel (0) target = $region9
    $region8: #{fraud_transformer_forward.1} parent=1 // pred_region
      _
    $region9: #{fraud_transformer_forward.1} parent=1 // pred_fallthru
      _
    // Predicated region
    $region10: #{fraud_transformer_forward.1} parent=1 // pred_check
      _
    $region11: #{fraud_transformer_forward.1} parent=1 // pred_check_branch
      %80 = sbr.rel (0) target = $region13
    $region12: #{fraud_transformer_forward.1} parent=1 // pred_region
      _
    $region13: #{fraud_transformer_forward.1} parent=1 // pred_fallthru
      _
    // Predicated region
    $region14: #{fraud_transformer_forward.1} parent=1 // pred_check
      _
    $region15: #{fraud_transformer_forward.1} parent=1 // pred_check_branch
      %82 = sbr.rel (0) target = $region17
    $region16: #{fraud_transformer_forward.1} parent=1 // pred_region
      _
    $region17: #{fraud_transformer_forward.1} parent=1 // pred_fallthru
      _
    // Predicated region
    $region18: #{fraud_transformer_forward.1} parent=1 // pred_check
      _
    $region19: #{fraud_transformer_forward.1} parent=1 // pred_check_branch
      %84 = sbr.rel (0) target = $region21
    $region20: #{fraud_transformer_forward.1} parent=1 // pred_region
      _
    $region21: #{fraud_transformer_forward.1} parent=1 // pred_fallthru
      _
    // Predicated region
    $region22: #{fraud_transformer_forward.1} parent=1 // pred_check
      _
    $region23: #{fraud_transformer_forward.1} parent=1 // pred_check_branch
      %86 = sbr.rel (0) target = $region25
    $region24: #{fraud_transformer_forward.1} parent=1 // pred_region
      _
    $region25: #{fraud_transformer_forward.1} parent=1 // pred_fallthru
      _
    // Predicated region
    $region26: #{fraud_transformer_forward.1} parent=1 // pred_check
      _
    $region27: #{fraud_transformer_forward.1} parent=1 // pred_check_branch
      %88 = sbr.rel (0) target = $region29
    $region28: #{fraud_transformer_forward.1} parent=1 // pred_region
      _
    $region29: #{fraud_transformer_forward.1} parent=1 // pred_fallthru
      _
    // Predicated region
    $region30: #{fraud_transformer_forward.1} parent=1 // pred_check
      _
    $region31: #{fraud_transformer_forward.1} parent=1 // pred_check_branch
      %90 = sbr.rel (0) target = $region33
    $region32: #{fraud_transformer_forward.1} parent=1 // pred_region
      _
    $region33: #{fraud_transformer_forward.1} parent=1 // pred_fallthru
      _
    // Predicated region
    $region34: #{fraud_transformer_forward.1} parent=1 // pred_check
      _
    $region35: #{fraud_transformer_forward.1} parent=1 // pred_check_branch
      %92 = sbr.rel (0) target = $region37
    $region36: #{fraud_transformer_forward.1} parent=1 // pred_region
      _
    $region37: #{fraud_transformer_forward.1} parent=1 // pred_fallthru
      _
    // Predicated region
    $region38: #{fraud_transformer_forward.1} parent=1 // pred_check
      _
    $region39: #{fraud_transformer_forward.1} parent=1 // pred_check_branch
      %94 = sbr.rel (0) target = $region41
    $region40: #{fraud_transformer_forward.1} parent=1 // pred_region
      _
    $region41: #{fraud_transformer_forward.1} parent=1 // pred_fallthru
      _
    // Predicated region
    $region42: #{fraud_transformer_forward.1} parent=1 // pred_check
      _
    $region43: #{fraud_transformer_forward.1} parent=1 // pred_check_branch
      %96 = sbr.rel (0) target = $region45
    $region44: #{fraud_transformer_forward.1} parent=1 // pred_region
      _
    $region45: #{fraud_transformer_forward.1} parent=1 // pred_fallthru
      _
    // Predicated region
    $region46: #{fraud_transformer_forward.1} parent=1 // pred_check
      _
    $region47: #{fraud_transformer_forward.1} parent=1 // pred_check_branch
      %98 = sbr.rel (0) target = $region49
    $region48: #{fraud_transformer_forward.1} parent=1 // pred_region
      _
    $region49: #{fraud_transformer_forward.1} parent=1 // pred_fallthru
      _
    // Predicated region
    $region50: #{fraud_transformer_forward.1} parent=1 // pred_check
      _
    $region51: #{fraud_transformer_forward.1} parent=1 // pred_check_branch
      %100 = sbr.rel (0) target = $region53
    $region52: #{fraud_transformer_forward.1} parent=1 // pred_region
      _
    $region53: #{fraud_transformer_forward.1} parent=1 // pred_fallthru
      _
    // Predicated region
    $region54: #{fraud_transformer_forward.1} parent=1 // pred_check
      _
    $region55: #{fraud_transformer_forward.1} parent=1 // pred_check_branch
      %102 = sbr.rel (0) target = $region57
    $region56: #{fraud_transformer_forward.1} parent=1 // pred_region
      _
    $region57: #{fraud_transformer_forward.1} parent=1 // pred_fallthru
      _
    // Predicated region
    $region58: #{fraud_transformer_forward.1} parent=1 // pred_check
      _
    $region59: #{fraud_transformer_forward.1} parent=1 // pred_check_branch
      %104 = sbr.rel (0) target = $region61
    $region60: #{fraud_transformer_forward.1} parent=1 // pred_region
      _
    $region61: #{fraud_transformer_forward.1} parent=1 // pred_fallthru
      _
    // Predicated region
    $region62: #{fraud_transformer_forward.1} parent=1 // pred_check
      _
    $region63: #{fraud_transformer_forward.1} parent=1 // pred_check_branch
      %106 = sbr.rel (0) target = $region65
    $region64: #{fraud_transformer_forward.1} parent=1 // pred_region
      _
    $region65: #{fraud_transformer_forward.1} parent=1 // pred_fallthru
      _
    // Predicated region
    $region66: #{fraud_transformer_forward.1} parent=1 // pred_check
      _
    $region67: #{fraud_transformer_forward.1} parent=1 // pred_check_branch
      %108 = sbr.rel (0) target = $region69
    $region68: #{fraud_transformer_forward.1} parent=1 // pred_region
      _
    $region69: #{fraud_transformer_forward.1} parent=1 // pred_fallthru
      _
    // Predicated region
    $region70: #{fraud_transformer_forward.1} parent=1 // pred_check
      _
    $region71: #{fraud_transformer_forward.1} parent=1 // pred_check_branch
      %110 = sbr.rel (0) target = $region73
    $region72: #{fraud_transformer_forward.1} parent=1 // pred_region
      _
    $region73: #{fraud_transformer_forward.1} parent=1 // pred_fallthru
      _
    // Predicated region
    $region74: #{fraud_transformer_forward.1} parent=1 // pred_check
      _
    $region75: #{fraud_transformer_forward.1} parent=1 // pred_check_branch
      %112 = sbr.rel (0) target = $region77
    $region76: #{fraud_transformer_forward.1} parent=1 // pred_region
      _
    $region77: #{fraud_transformer_forward.1} parent=1 // pred_fallthru
      _
    // Predicated region
    $region78: #{fraud_transformer_forward.1} parent=1 // pred_check
      _
    $region79: #{fraud_transformer_forward.1} parent=1 // pred_check_branch
      %114 = sbr.rel (0) target = $region81
    $region80: #{fraud_transformer_forward.1} parent=1 // pred_region
      _
    $region81: #{fraud_transformer_forward.1} parent=1 // pred_fallthru
      _
    // Predicated region
    $region82: #{fraud_transformer_forward.1} parent=1 // pred_check
      _
    $region83: #{fraud_transformer_forward.1} parent=1 // pred_check_branch
      %116 = sbr.rel (0) target = $region85
    $region84: #{fraud_transformer_forward.1} parent=1 // pred_region
      _
    $region85: #{fraud_transformer_forward.1} parent=1 // pred_fallthru
      _
    // Predicated region
    $region86: #{fraud_transformer_forward.1} parent=1 // pred_check
      _
    $region87: #{fraud_transformer_forward.1} parent=1 // pred_check_branch
      %118 = sbr.rel (0) target = $region89
    $region88: #{fraud_transformer_forward.1} parent=1 // pred_region
      _
    $region89: #{fraud_transformer_forward.1} parent=1 // pred_fallthru
      _
    // Predicated region
    $region90: #{fraud_transformer_forward.1} parent=1 // pred_check
      _
    $region91: #{fraud_transformer_forward.1} parent=1 // pred_check_branch
      %120 = sbr.rel (0) target = $region93
    $region92: #{fraud_transformer_forward.1} parent=1 // pred_region
      _
    $region93: #{fraud_transformer_forward.1} parent=1 // pred_fallthru
      _
    // Predicated region
    $region94: #{fraud_transformer_forward.1} parent=1 // pred_check
      _
    $region95: #{fraud_transformer_forward.1} parent=1 // pred_check_branch
      %122 = sbr.rel (0) target = $region97
    $region96: #{fraud_transformer_forward.1} parent=1 // pred_region
      _
    $region97: #{fraud_transformer_forward.1} parent=1 // pred_fallthru
      _
    // Predicated region
    $region98: #{fraud_transformer_forward.1} parent=1 // pred_check
      _
    $region99: #{fraud_transformer_forward.1} parent=1 // pred_check_branch
      %124 = sbr.rel (0) target = $region101
    $region100: #{fraud_transformer_forward.1} parent=1 // pred_region
      _
    $region101: #{fraud_transformer_forward.1} parent=1 // pred_fallthru
      _
    // Predicated region
    $region102: #{fraud_transformer_forward.1} parent=1 // pred_check
      _
    $region103: #{fraud_transformer_forward.1} parent=1 // pred_check_branch
      %126 = sbr.rel (0) target = $region105
    $region104: #{fraud_transformer_forward.1} parent=1 // pred_region
      _
    $region105: #{fraud_transformer_forward.1} parent=1 // pred_fallthru
      _
    // Predicated region
    $region106: #{fraud_transformer_forward.1} parent=1 // pred_check
      _
    $region107: #{fraud_transformer_forward.1} parent=1 // pred_check_branch
      %128 = sbr.rel (0) target = $region109
    $region108: #{fraud_transformer_forward.1} parent=1 // pred_region
      _
    $region109: #{fraud_transformer_forward.1} parent=1 // pred_fallthru
      _
    // Predicated region
    $region110: #{fraud_transformer_forward.1} parent=1 // pred_check
      _
    $region111: #{fraud_transformer_forward.1} parent=1 // pred_check_branch
      %130 = sbr.rel (0) target = $region113
    $region112: #{fraud_transformer_forward.1} parent=1 // pred_region
      _
    $region113: #{fraud_transformer_forward.1} parent=1 // pred_fallthru
      _
    // Predicated region
    $region114: #{fraud_transformer_forward.1} parent=1 // pred_check
      _
    $region115: #{fraud_transformer_forward.1} parent=1 // pred_check_branch
      %132 = sbr.rel (0) target = $region117
    $region116: #{fraud_transformer_forward.1} parent=1 // pred_region
      _
    $region117: #{fraud_transformer_forward.1} parent=1 // pred_fallthru
      _
    // Predicated region
    $region118: #{fraud_transformer_forward.1} parent=1 // pred_check
      _
    $region119: #{fraud_transformer_forward.1} parent=1 // pred_check_branch
      %134 = sbr.rel (0) target = $region121
    $region120: #{fraud_transformer_forward.1} parent=1 // pred_region
      _
    $region121: #{fraud_transformer_forward.1} parent=1 // pred_fallthru
      _
    // Predicated region
    $region122: #{fraud_transformer_forward.1} parent=1 // pred_check
      _
    $region123: #{fraud_transformer_forward.1} parent=1 // pred_check_branch
      %136 = sbr.rel (0) target = $region125
    $region124: #{fraud_transformer_forward.1} parent=1 // pred_region
      _
    $region125: #{fraud_transformer_forward.1} parent=1 // pred_fallthru
      _
    // Predicated region
    $region126: #{fraud_transformer_forward.1} parent=1 // pred_check
      _
    $region127: #{fraud_transformer_forward.1} parent=1 // pred_check_branch
      %138 = sbr.rel (0) target = $region129
    $region128: #{fraud_transformer_forward.1} parent=1 // pred_region
      _
    $region129: #{fraud_transformer_forward.1} parent=1 // pred_fallthru
      _
    // Predicated region
    $region130: #{fraud_transformer_forward.1} parent=1 // pred_check
      _
    $region131: #{fraud_transformer_forward.1} parent=1 // pred_check_branch
      %140 = sbr.rel (0) target = $region133
    $region132: #{fraud_transformer_forward.1} parent=1 // pred_region
      _
    $region133: #{fraud_transformer_forward.1} parent=1 // pred_fallthru
      _
    // Predicated region
    $region134: #{fraud_transformer_forward.1} parent=1 // pred_check
      _
    $region135: #{fraud_transformer_forward.1} parent=1 // pred_check_branch
      %142 = sbr.rel (0) target = $region137
    $region136: #{fraud_transformer_forward.1} parent=1 // pred_region
      _
    $region137: #{fraud_transformer_forward.1} parent=1 // pred_fallthru
      _
    %v144 = vld [vmem:[%s1] sm:$0xff]
    %v145 = vld [vmem:[%s1 + $0x8] sm:$0xff]
    %v146 = vpack.c.bf16 %v145, %v144
    %v147 = vld [vmem:[%s7] sm:$0xf]
    %v148 = vld [vmem:[%s7 + $0x4] sm:$0xf]
    %v149 = vld [vmem:[%s9] sm:$0x1]
    %v151 = vlaneseq
    %v152 = vshrl.u32 %v151, 7
    %v153 = vsub.s32 0, %v152
    %v154 = vrot.slane %v149, %v153
    %v158 = vunpack.c.l.b16 %v147
    %v159 = vunpack.c.l.b16 %v148
    %v160 = vpack.c.b16 %v159, %v158
    %vm162 = vcmask 130048
    %v164 = vsel %vm162, %v146, 0
    %166 = vmatprep.subr.bf16.mxu0 0
    %167 = vmatpush1.bf16.msra.mxu0 %v160
    %168 = vmatprep.subr.bf16.mxu0 0
    %169 = vmatpush1.bf16.msra.mxu0 0
    %170 = vmatprep.subr.bf16.mxu0 0
    %171 = vmatpush1.bf16.msra.mxu0 0
    %172 = vmatprep.subr.bf16.mxu0 0
    %173 = vmatpush1.bf16.msra.mxu0 0
    %174 = vmatprep.subr.bf16.mxu0 0
    %175 = vmatpush1.bf16.msra.mxu0 0
    %176 = vmatprep.subr.bf16.mxu0 0
    %177 = vmatpush1.bf16.msra.mxu0 0
    %178 = vmatprep.subr.bf16.mxu0 0
    %179 = vmatpush1.bf16.msra.mxu0 0
    %180 = vmatprep.subr.bf16.mxu0 0
    %181 = vmatpush1.bf16.msra.mxu0 0
    %182 = vmatprep.subr.bf16.mxu0 0
    %183 = vmatpush1.bf16.msra.mxu0 0
    %184 = vmatprep.subr.bf16.mxu0 0
    %185 = vmatpush1.bf16.msra.mxu0 0
    %186 = vmatprep.subr.bf16.mxu0 0
    %187 = vmatpush1.bf16.msra.mxu0 0
    %188 = vmatprep.subr.bf16.mxu0 0
    %189 = vmatpush1.bf16.msra.mxu0 0
    %190 = vmatprep.subr.bf16.mxu0 0
    %191 = vmatpush1.bf16.msra.mxu0 0
    %192 = vmatprep.subr.bf16.mxu0 0
    %193 = vmatpush1.bf16.msra.mxu0 0
    %194 = vmatprep.subr.bf16.mxu0 0
    %195 = vmatpush1.bf16.msra.mxu0 0
    %196 = vmatprep.subr.bf16.mxu0 0
    %197 = vmatpush1.bf16.msra.mxu0 0
    %198 = vmatprep.mubr.bf16.mxu0 0
    %199 = vmatmul.mubr.bf16.gmra.mrb[0].mxu0 %v164
    %v200 = vpop.f32.mrb[0].mxu0
    %v201 = vadd.f32 %v154, %v200
    %v202 = vpop.f32.mrb[0].mxu0
    %v203 = vpop.f32.mrb[0].mxu0
    %v204 = vadd.f32 %v154, %v203
    %v205 = vpop.f32.mrb[0].mxu0
    %206 = vdwg.mxu0
    %v207 = vld [vmem:[%s11] sm:$0xf]
    %v208 = vld [vmem:[%s11 + $0x4] sm:$0xf]
    %v209 = vld [vmem:[%s13] sm:$0x1]
    %v211 = vlaneseq
    %v212 = vshrl.u32 %v211, 7
    %v213 = vsub.s32 0, %v212
    %v214 = vrot.slane %v209, %v213
    %v218 = vunpack.c.l.b16 %v207
    %v219 = vunpack.c.l.b16 %v208
    %v220 = vpack.c.b16 %v219, %v218
    %222 = vmatprep.subr.bf16.mxu0 0
    %223 = vmatpush1.bf16.msra.mxu0 %v220
    %224 = vmatprep.subr.bf16.mxu0 0
    %225 = vmatpush1.bf16.msra.mxu0 0
    %226 = vmatprep.subr.bf16.mxu0 0
    %227 = vmatpush1.bf16.msra.mxu0 0
    %228 = vmatprep.subr.bf16.mxu0 0
    %229 = vmatpush1.bf16.msra.mxu0 0
    %230 = vmatprep.subr.bf16.mxu0 0
    %231 = vmatpush1.bf16.msra.mxu0 0
    %232 = vmatprep.subr.bf16.mxu0 0
    %233 = vmatpush1.bf16.msra.mxu0 0
    %234 = vmatprep.subr.bf16.mxu0 0
    %235 = vmatpush1.bf16.msra.mxu0 0
    %236 = vmatprep.subr.bf16.mxu0 0
    %237 = vmatpush1.bf16.msra.mxu0 0
    %238 = vmatprep.subr.bf16.mxu0 0
    %239 = vmatpush1.bf16.msra.mxu0 0
    %240 = vmatprep.subr.bf16.mxu0 0
    %241 = vmatpush1.bf16.msra.mxu0 0
    %242 = vmatprep.subr.bf16.mxu0 0
    %243 = vmatpush1.bf16.msra.mxu0 0
    %244 = vmatprep.subr.bf16.mxu0 0
    %245 = vmatpush1.bf16.msra.mxu0 0
    %246 = vmatprep.subr.bf16.mxu0 0
    %247 = vmatpush1.bf16.msra.mxu0 0
    %248 = vmatprep.subr.bf16.mxu0 0
    %249 = vmatpush1.bf16.msra.mxu0 0
    %250 = vmatprep.subr.bf16.mxu0 0
    %251 = vmatpush1.bf16.msra.mxu0 0
    %252 = vmatprep.subr.bf16.mxu0 0
    %253 = vmatpush1.bf16.msra.mxu0 0
    %254 = vmatprep.mubr.bf16.mxu0 0
    %255 = vmatmul.mubr.bf16.gmra.mrb[0].mxu0 %v164
    %v256 = vpop.f32.mrb[0].mxu0
    %v257 = vadd.f32 %v214, %v256
    %v258 = vpop.f32.mrb[0].mxu0
    %v259 = vpop.f32.mrb[0].mxu0
    %v260 = vadd.f32 %v214, %v259
    %v261 = vpop.f32.mrb[0].mxu0
    %262 = vdwg.mxu0
    %v263 = vld [vmem:[%s3] sm:$0xff]
    %v264 = vmul.f32 %v201, %v263
    %v265 = vmul.f32 %v204, %v263
    %v266 = vld [vmem:[%s5] sm:$0xff]
    %v267 = vmul.f32 %v257, %v266
    %v268 = vmul.f32 %v260, %v266
    %v269 = vadd.f32 %v264, %v267
    %v270 = vadd.f32 %v265, %v268
    %v271 = vpack.c.bf16 %v270, %v269
    %v272 = vld [vmem:[%s15] sm:$0xff]
    %v273 = vld [vmem:[%s15 + $0x8] sm:$0xff]
    %v274 = vld [vmem:[%s15 + $0x10] sm:$0xff]
    %v275 = vld [vmem:[%s15 + $0x18] sm:$0xff]
    %v276 = vld [vmem:[%s15 + $0x20] sm:$0xff]
    %v277 = vld [vmem:[%s15 + $0x28] sm:$0xff]
    %v278 = vld [vmem:[%s15 + $0x30] sm:$0xff]
    %v279 = vld [vmem:[%s15 + $0x38] sm:$0xff]
    %v280 = vld [vmem:[%s17] sm:$0x3]
    %v282 = vlaneseq
    %v283 = vshrl.u32 %v282, 7
    %v284 = vsub.s32 0, %v283
    %v285 = vrot.slane %v280, %v284
    %v286 = vlaneseq
    %v287 = vshrl.u32 %v286, 7
    %v288 = vsub.s32 1, %v287
    %v289 = vrot.slane %v280, %v288
    %v300 = vunpack.c.l.b16 %v272
    %v301 = vunpack.c.h.b16 %v272
    %v302 = vunpack.c.l.b16 %v273
    %v303 = vunpack.c.h.b16 %v273
    %v304 = vunpack.c.l.b16 %v274
    %v305 = vunpack.c.h.b16 %v274
    %v306 = vunpack.c.l.b16 %v275
    %v307 = vunpack.c.h.b16 %v275
    %v308 = vunpack.c.l.b16 %v276
    %v309 = vunpack.c.h.b16 %v276
    %v310 = vunpack.c.l.b16 %v277
    %v311 = vunpack.c.h.b16 %v277
    %v312 = vunpack.c.l.b16 %v278
    %v313 = vunpack.c.h.b16 %v278
    %v314 = vunpack.c.l.b16 %v279
    %v315 = vunpack.c.h.b16 %v279
    %v316 = vpack.c.b16 %v302, %v300
    %v317 = vpack.c.b16 %v303, %v301
    %v318 = vpack.c.b16 %v306, %v304
    %v319 = vpack.c.b16 %v307, %v305
    %v320 = vpack.c.b16 %v310, %v308
    %v321 = vpack.c.b16 %v311, %v309
    %v322 = vpack.c.b16 %v314, %v312
    %v323 = vpack.c.b16 %v315, %v313
    %vm332 = vcmask 523264
    %v334 = vsel %vm332, %v271, 0
    %336 = vmatprep.subr.bf16.mxu0 %v317
    %337 = vmatpush1.bf16.msra.mxu0 %v316
    %338 = vmatprep.subr.bf16.mxu0 %v319
    %339 = vmatpush1.bf16.msra.mxu0 %v318
    %340 = vmatprep.subr.bf16.mxu0 %v321
    %341 = vmatpush1.bf16.msra.mxu0 %v320
    %342 = vmatprep.subr.bf16.mxu0 %v323
    %343 = vmatpush1.bf16.msra.mxu0 %v322
    %344 = vmatprep.subr.bf16.mxu0 0
    %345 = vmatpush1.bf16.msra.mxu0 0
    %346 = vmatprep.subr.bf16.mxu0 0
    %347 = vmatpush1.bf16.msra.mxu0 0
    %348 = vmatprep.subr.bf16.mxu0 0
    %349 = vmatpush1.bf16.msra.mxu0 0
    %350 = vmatprep.subr.bf16.mxu0 0
    %351 = vmatpush1.bf16.msra.mxu0 0
    %352 = vmatprep.subr.bf16.mxu0 0
    %353 = vmatpush1.bf16.msra.mxu0 0
    %354 = vmatprep.subr.bf16.mxu0 0
    %355 = vmatpush1.bf16.msra.mxu0 0
    %356 = vmatprep.subr.bf16.mxu0 0
    %357 = vmatpush1.bf16.msra.mxu0 0
    %358 = vmatprep.subr.bf16.mxu0 0
    %359 = vmatpush1.bf16.msra.mxu0 0
    %360 = vmatprep.subr.bf16.mxu0 0
    %361 = vmatpush1.bf16.msra.mxu0 0
    %362 = vmatprep.subr.bf16.mxu0 0
    %363 = vmatpush1.bf16.msra.mxu0 0
    %364 = vmatprep.subr.bf16.mxu0 0
    %365 = vmatpush1.bf16.msra.mxu0 0
    %366 = vmatprep.subr.bf16.mxu0 0
    %367 = vmatpush1.bf16.msra.mxu0 0
    %368 = vmatprep.mubr.bf16.mxu0 0
    %369 = vmatmul.mubr.bf16.gmra.mrb[0].mxu0 %v334
    %v370 = vpop.f32.mrb[0].mxu0
    %v371 = vadd.f32 %v285, %v370
    %v372 = vpop.f32.mrb[0].mxu0
    %v373 = vadd.f32 %v289, %v372
    %v374 = vpop.f32.mrb[0].mxu0
    %v375 = vadd.f32 %v285, %v374
    %v376 = vpop.f32.mrb[0].mxu0
    %v377 = vadd.f32 %v289, %v376
    %378 = vdwg.mxu0
    %v379 = vpack.c.bf16 %v371, %v371
    %v380 = vpack.c.bf16 %v375, %v375
    %v381 = vpack.c.bf16 %v373, %v373
    %v382 = vpack.c.bf16 %v377, %v377
    %384 = vrot.lane.b32.xlu0 %v379, 64
    %v385 = vpop.permute.xlu0 %384
    %v387 = vsel %vm162, %v379, 0
    %v390 = vsel %vm162, %v385, 0
    %392 = vmatprep.subr.bf16.mxu0 0
    %393 = vmatpush1.bf16.xpose.msra.mxu0 %v390
    %394 = vmatprep.subr.bf16.mxu0 0
    %395 = vmatpush1.bf16.xpose.msra.mxu0 0
    %396 = vmatprep.subr.bf16.mxu0 0
    %397 = vmatpush1.bf16.xpose.msra.mxu0 0
    %398 = vmatprep.subr.bf16.mxu0 0
    %399 = vmatpush1.bf16.xpose.msra.mxu0 0
    %400 = vmatprep.subr.bf16.mxu0 0
    %401 = vmatpush1.bf16.xpose.msra.mxu0 0
    %402 = vmatprep.subr.bf16.mxu0 0
    %403 = vmatpush1.bf16.xpose.msra.mxu0 0
    %404 = vmatprep.subr.bf16.mxu0 0
    %405 = vmatpush1.bf16.xpose.msra.mxu0 0
    %406 = vmatprep.subr.bf16.mxu0 0
    %407 = vmatpush1.bf16.xpose.msra.mxu0 0
    %408 = vmatprep.subr.bf16.mxu0 0
    %409 = vmatpush1.bf16.xpose.msra.mxu0 0
    %410 = vmatprep.subr.bf16.mxu0 0
    %411 = vmatpush1.bf16.xpose.msra.mxu0 0
    %412 = vmatprep.subr.bf16.mxu0 0
    %413 = vmatpush1.bf16.xpose.msra.mxu0 0
    %414 = vmatprep.subr.bf16.mxu0 0
    %415 = vmatpush1.bf16.xpose.msra.mxu0 0
    %416 = vmatprep.subr.bf16.mxu0 0
    %417 = vmatpush1.bf16.xpose.msra.mxu0 0
    %418 = vmatprep.subr.bf16.mxu0 0
    %419 = vmatpush1.bf16.xpose.msra.mxu0 0
    %420 = vmatprep.subr.bf16.mxu0 0
    %421 = vmatpush1.bf16.xpose.msra.mxu0 0
    %422 = vmatprep.subr.bf16.mxu0 0
    %423 = vmatpush1.bf16.xpose.msra.mxu0 0
    %424 = vmatprep.mubr.bf16.mxu0 0
    %425 = vmatmul.mubr.bf16.gmra.mrb[0].mxu0 %v387
    %v426 = vpop.f32.mrb[0].mxu0
    %v427 = vadd.f32 0.0, %v426
    %v428 = vpop.f32.mrb[0].mxu0
    %v429 = vpop.f32.mrb[0].mxu0
    %v430 = vpop.f32.mrb[0].mxu0
    %431 = vdwg.mxu0
    %433 = vrot.lane.b32.xlu0 %v380, 64
    %v434 = vpop.permute.xlu0 %433
    %v436 = vsel %vm162, %v380, 0
    %v439 = vsel %vm162, %v434, 0
    %441 = vmatprep.subr.bf16.mxu0 0
    %442 = vmatpush1.bf16.xpose.msra.mxu0 %v439
    %443 = vmatprep.subr.bf16.mxu0 0
    %444 = vmatpush1.bf16.xpose.msra.mxu0 0
    %445 = vmatprep.subr.bf16.mxu0 0
    %446 = vmatpush1.bf16.xpose.msra.mxu0 0
    %447 = vmatprep.subr.bf16.mxu0 0
    %448 = vmatpush1.bf16.xpose.msra.mxu0 0
    %449 = vmatprep.subr.bf16.mxu0 0
    %450 = vmatpush1.bf16.xpose.msra.mxu0 0
    %451 = vmatprep.subr.bf16.mxu0 0
    %452 = vmatpush1.bf16.xpose.msra.mxu0 0
    %453 = vmatprep.subr.bf16.mxu0 0
    %454 = vmatpush1.bf16.xpose.msra.mxu0 0
    %455 = vmatprep.subr.bf16.mxu0 0
    %456 = vmatpush1.bf16.xpose.msra.mxu0 0
    %457 = vmatprep.subr.bf16.mxu0 0
    %458 = vmatpush1.bf16.xpose.msra.mxu0 0
    %459 = vmatprep.subr.bf16.mxu0 0
    %460 = vmatpush1.bf16.xpose.msra.mxu0 0
    %461 = vmatprep.subr.bf16.mxu0 0
    %462 = vmatpush1.bf16.xpose.msra.mxu0 0
    %463 = vmatprep.subr.bf16.mxu0 0
    %464 = vmatpush1.bf16.xpose.msra.mxu0 0
    %465 = vmatprep.subr.bf16.mxu0 0
    %466 = vmatpush1.bf16.xpose.msra.mxu0 0
    %467 = vmatprep.subr.bf16.mxu0 0
    %468 = vmatpush1.bf16.xpose.msra.mxu0 0
    %469 = vmatprep.subr.bf16.mxu0 0
    %470 = vmatpush1.bf16.xpose.msra.mxu0 0
    %471 = vmatprep.subr.bf16.mxu0 0
    %472 = vmatpush1.bf16.xpose.msra.mxu0 0
    %473 = vmatprep.mubr.bf16.mxu0 0
    %474 = vmatmul.mubr.bf16.gmra.mrb[0].mxu0 %v436
    %v475 = vpop.f32.mrb[0].mxu0
    %v476 = vadd.f32 0.0, %v475
    %v477 = vpop.f32.mrb[0].mxu0
    %v478 = vpop.f32.mrb[0].mxu0
    %v479 = vpop.f32.mrb[0].mxu0
    %480 = vdwg.mxu0
    %vm481 = vcmask 64512
    %v482 = vsel %vm481, %v427, -inf
    %483 = vmax.xlane.f32.xlu0 %v482
    %v484 = vpop.xlane.xlu0 %483
    %v485 = vsel %vm481, %v476, -inf
    %486 = vmax.xlane.f32.xlu0 %v485
    %v487 = vpop.xlane.xlu0 %486
    %v488 = vsub.f32 %v427, %v484
    %v489 = vsub.f32 %v476, %v487
    %v490 = vmul.f32 %v488, 1.442695
    %v491 = vpow.pop %v490
    %v492 = vmul.f32 %v489, 1.442695
    %v493 = vpow.pop %v492
    %v494 = vsel %vm481, %v491, 0.0
    %495 = vadd.xlane.f32.xlu0 %v494
    %v496 = vpop.xlane.xlu0 %495
    %v497 = vsel %vm481, %v493, 0.0
    %498 = vadd.xlane.f32.xlu0 %v497
    %v499 = vpop.xlane.xlu0 %498
    %v500 = vrcp.pop %v496
    %v501 = vrcp.pop %v499
    %v502 = vmul.f32 %v491, %v500
    %v503 = vmul.f32 %v493, %v501
    %v504 = vpack.c.bf16 %v502, %v502
    %v505 = vpack.c.bf16 %v503, %v503
    %v507 = vsel %vm481, %v504, 0
    %vm509 = vcmask 1043456
    %v511 = vsel %vm509, %v381, 0
    %513 = vmatprep.subr.bf16.mxu0 0
    %514 = vmatpush1.bf16.msra.mxu0 %v511
    %515 = vmatprep.subr.bf16.mxu0 0
    %516 = vmatpush1.bf16.msra.mxu0 0
    %517 = vmatprep.subr.bf16.mxu0 0
    %518 = vmatpush1.bf16.msra.mxu0 0
    %519 = vmatprep.subr.bf16.mxu0 0
    %520 = vmatpush1.bf16.msra.mxu0 0
    %521 = vmatprep.subr.bf16.mxu0 0
    %522 = vmatpush1.bf16.msra.mxu0 0
    %523 = vmatprep.subr.bf16.mxu0 0
    %524 = vmatpush1.bf16.msra.mxu0 0
    %525 = vmatprep.subr.bf16.mxu0 0
    %526 = vmatpush1.bf16.msra.mxu0 0
    %527 = vmatprep.subr.bf16.mxu0 0
    %528 = vmatpush1.bf16.msra.mxu0 0
    %529 = vmatprep.subr.bf16.mxu0 0
    %530 = vmatpush1.bf16.msra.mxu0 0
    %531 = vmatprep.subr.bf16.mxu0 0
    %532 = vmatpush1.bf16.msra.mxu0 0
    %533 = vmatprep.subr.bf16.mxu0 0
    %534 = vmatpush1.bf16.msra.mxu0 0
    %535 = vmatprep.subr.bf16.mxu0 0
    %536 = vmatpush1.bf16.msra.mxu0 0
    %537 = vmatprep.subr.bf16.mxu0 0
    %538 = vmatpush1.bf16.msra.mxu0 0
    %539 = vmatprep.subr.bf16.mxu0 0
    %540 = vmatpush1.bf16.msra.mxu0 0
    %541 = vmatprep.subr.bf16.mxu0 0
    %542 = vmatpush1.bf16.msra.mxu0 0
    %543 = vmatprep.subr.bf16.mxu0 0
    %544 = vmatpush1.bf16.msra.mxu0 0
    %545 = vmatprep.mubr.bf16.mxu0 0
    %546 = vmatmul.mubr.bf16.gmra.mrb[0].mxu0 %v507
    %v547 = vpop.f32.mrb[0].mxu0
    %v548 = vadd.f32 0.0, %v547
    %v549 = vpop.f32.mrb[0].mxu0
    %v550 = vpop.f32.mrb[0].mxu0
    %v551 = vpop.f32.mrb[0].mxu0
    %552 = vdwg.mxu0
    %v554 = vsel %vm481, %v505, 0
    %v557 = vsel %vm509, %v382, 0
    %559 = vmatprep.subr.bf16.mxu0 0
    %560 = vmatpush1.bf16.msra.mxu0 %v557
    %561 = vmatprep.subr.bf16.mxu0 0
    %562 = vmatpush1.bf16.msra.mxu0 0
    %563 = vmatprep.subr.bf16.mxu0 0
    %564 = vmatpush1.bf16.msra.mxu0 0
    %565 = vmatprep.subr.bf16.mxu0 0
    %566 = vmatpush1.bf16.msra.mxu0 0
    %567 = vmatprep.subr.bf16.mxu0 0
    %568 = vmatpush1.bf16.msra.mxu0 0
    %569 = vmatprep.subr.bf16.mxu0 0
    %570 = vmatpush1.bf16.msra.mxu0 0
    %571 = vmatprep.subr.bf16.mxu0 0
    %572 = vmatpush1.bf16.msra.mxu0 0
    %573 = vmatprep.subr.bf16.mxu0 0
    %574 = vmatpush1.bf16.msra.mxu0 0
    %575 = vmatprep.subr.bf16.mxu0 0
    %576 = vmatpush1.bf16.msra.mxu0 0
    %577 = vmatprep.subr.bf16.mxu0 0
    %578 = vmatpush1.bf16.msra.mxu0 0
    %579 = vmatprep.subr.bf16.mxu0 0
    %580 = vmatpush1.bf16.msra.mxu0 0
    %581 = vmatprep.subr.bf16.mxu0 0
    %582 = vmatpush1.bf16.msra.mxu0 0
    %583 = vmatprep.subr.bf16.mxu0 0
    %584 = vmatpush1.bf16.msra.mxu0 0
    %585 = vmatprep.subr.bf16.mxu0 0
    %586 = vmatpush1.bf16.msra.mxu0 0
    %587 = vmatprep.subr.bf16.mxu0 0
    %588 = vmatpush1.bf16.msra.mxu0 0
    %589 = vmatprep.subr.bf16.mxu0 0
    %590 = vmatpush1.bf16.msra.mxu0 0
    %591 = vmatprep.mubr.bf16.mxu0 0
    %592 = vmatmul.mubr.bf16.gmra.mrb[0].mxu0 %v554
    %v593 = vpop.f32.mrb[0].mxu0
    %v594 = vadd.f32 0.0, %v593
    %v595 = vpop.f32.mrb[0].mxu0
    %v596 = vpop.f32.mrb[0].mxu0
    %v597 = vpop.f32.mrb[0].mxu0
    %598 = vdwg.mxu0
    %599 = vrot.lane.b32.xlu0 %v379, 112
    %v600 = vpop.permute.xlu0 %599
    %601 = vrot.lane.b32.xlu0 %v379, 48
    %v602 = vpop.permute.xlu0 %601
    %v604 = vsel %vm162, %v600, 0
    %v607 = vsel %vm162, %v602, 0
    %609 = vmatprep.subr.bf16.mxu0 0
    %610 = vmatpush1.bf16.xpose.msra.mxu0 %v607
    %611 = vmatprep.subr.bf16.mxu0 0
    %612 = vmatpush1.bf16.xpose.msra.mxu0 0
    %613 = vmatprep.subr.bf16.mxu0 0
    %614 = vmatpush1.bf16.xpose.msra.mxu0 0
    %615 = vmatprep.subr.bf16.mxu0 0
    %616 = vmatpush1.bf16.xpose.msra.mxu0 0
    %617 = vmatprep.subr.bf16.mxu0 0
    %618 = vmatpush1.bf16.xpose.msra.mxu0 0
    %619 = vmatprep.subr.bf16.mxu0 0
    %620 = vmatpush1.bf16.xpose.msra.mxu0 0
    %621 = vmatprep.subr.bf16.mxu0 0
    %622 = vmatpush1.bf16.xpose.msra.mxu0 0
    %623 = vmatprep.subr.bf16.mxu0 0
    %624 = vmatpush1.bf16.xpose.msra.mxu0 0
    %625 = vmatprep.subr.bf16.mxu0 0
    %626 = vmatpush1.bf16.xpose.msra.mxu0 0
    %627 = vmatprep.subr.bf16.mxu0 0
    %628 = vmatpush1.bf16.xpose.msra.mxu0 0
    %629 = vmatprep.subr.bf16.mxu0 0
    %630 = vmatpush1.bf16.xpose.msra.mxu0 0
    %631 = vmatprep.subr.bf16.mxu0 0
    %632 = vmatpush1.bf16.xpose.msra.mxu0 0
    %633 = vmatprep.subr.bf16.mxu0 0
    %634 = vmatpush1.bf16.xpose.msra.mxu0 0
    %635 = vmatprep.subr.bf16.mxu0 0
    %636 = vmatpush1.bf16.xpose.msra.mxu0 0
    %637 = vmatprep.subr.bf16.mxu0 0
    %638 = vmatpush1.bf16.xpose.msra.mxu0 0
    %639 = vmatprep.subr.bf16.mxu0 0
    %640 = vmatpush1.bf16.xpose.msra.mxu0 0
    %641 = vmatprep.mubr.bf16.mxu0 0
    %642 = vmatmul.mubr.bf16.gmra.mrb[0].mxu0 %v604
    %v643 = vpop.f32.mrb[0].mxu0
    %v644 = vadd.f32 0.0, %v643
    %v645 = vpop.f32.mrb[0].mxu0
    %v646 = vpop.f32.mrb[0].mxu0
    %v647 = vpop.f32.mrb[0].mxu0
    %648 = vdwg.mxu0
    %649 = vrot.lane.b32.xlu0 %v380, 112
    %v650 = vpop.permute.xlu0 %649
    %651 = vrot.lane.b32.xlu0 %v380, 48
    %v652 = vpop.permute.xlu0 %651
    %v654 = vsel %vm162, %v650, 0
    %v657 = vsel %vm162, %v652, 0
    %659 = vmatprep.subr.bf16.mxu0 0
    %660 = vmatpush1.bf16.xpose.msra.mxu0 %v657
    %661 = vmatprep.subr.bf16.mxu0 0
    %662 = vmatpush1.bf16.xpose.msra.mxu0 0
    %663 = vmatprep.subr.bf16.mxu0 0
    %664 = vmatpush1.bf16.xpose.msra.mxu0 0
    %665 = vmatprep.subr.bf16.mxu0 0
    %666 = vmatpush1.bf16.xpose.msra.mxu0 0
    %667 = vmatprep.subr.bf16.mxu0 0
    %668 = vmatpush1.bf16.xpose.msra.mxu0 0
    %669 = vmatprep.subr.bf16.mxu0 0
    %670 = vmatpush1.bf16.xpose.msra.mxu0 0
    %671 = vmatprep.subr.bf16.mxu0 0
    %672 = vmatpush1.bf16.xpose.msra.mxu0 0
    %673 = vmatprep.subr.bf16.mxu0 0
    %674 = vmatpush1.bf16.xpose.msra.mxu0 0
    %675 = vmatprep.subr.bf16.mxu0 0
    %676 = vmatpush1.bf16.xpose.msra.mxu0 0
    %677 = vmatprep.subr.bf16.mxu0 0
    %678 = vmatpush1.bf16.xpose.msra.mxu0 0
    %679 = vmatprep.subr.bf16.mxu0 0
    %680 = vmatpush1.bf16.xpose.msra.mxu0 0
    %681 = vmatprep.subr.bf16.mxu0 0
    %682 = vmatpush1.bf16.xpose.msra.mxu0 0
    %683 = vmatprep.subr.bf16.mxu0 0
    %684 = vmatpush1.bf16.xpose.msra.mxu0 0
    %685 = vmatprep.subr.bf16.mxu0 0
    %686 = vmatpush1.bf16.xpose.msra.mxu0 0
    %687 = vmatprep.subr.bf16.mxu0 0
    %688 = vmatpush1.bf16.xpose.msra.mxu0 0
    %689 = vmatprep.subr.bf16.mxu0 0
    %690 = vmatpush1.bf16.xpose.msra.mxu0 0
    %691 = vmatprep.mubr.bf16.mxu0 0
    %692 = vmatmul.mubr.bf16.gmra.mrb[0].mxu0 %v654
    %v693 = vpop.f32.mrb[0].mxu0
    %v694 = vadd.f32 0.0, %v693
    %v695 = vpop.f32.mrb[0].mxu0
    %v696 = vpop.f32.mrb[0].mxu0
    %v697 = vpop.f32.mrb[0].mxu0
    %698 = vdwg.mxu0
    %v699 = vsel %vm481, %v644, -inf
    %700 = vmax.xlane.f32.xlu0 %v699
    %v701 = vpop.xlane.xlu0 %700
    %v702 = vsel %vm481, %v694, -inf
    %703 = vmax.xlane.f32.xlu0 %v702
    %v704 = vpop.xlane.xlu0 %703
    %v705 = vsub.f32 %v644, %v701
    %v706 = vsub.f32 %v694, %v704
    %v707 = vmul.f32 %v705, 1.442695
    %v708 = vpow.pop %v707
    %v709 = vmul.f32 %v706, 1.442695
    %v710 = vpow.pop %v709
    %v711 = vsel %vm481, %v708, 0.0
    %712 = vadd.xlane.f32.xlu0 %v711
    %v713 = vpop.xlane.xlu0 %712
    %v714 = vsel %vm481, %v710, 0.0
    %715 = vadd.xlane.f32.xlu0 %v714
    %v716 = vpop.xlane.xlu0 %715
    %v717 = vrcp.pop %v713
    %v718 = vrcp.pop %v716
    %v719 = vmul.f32 %v708, %v717
    %v720 = vmul.f32 %v710, %v718
    %v721 = vpack.c.bf16 %v719, %v719
    %v722 = vpack.c.bf16 %v720, %v720
    %724 = vrot.lane.b32.xlu0 %v381, 112
    %v725 = vpop.permute.xlu0 %724
    %v727 = vsel %vm481, %v721, 0
    %v730 = vsel %vm509, %v725, 0
    %732 = vmatprep.subr.bf16.mxu0 0
    %733 = vmatpush1.bf16.msra.mxu0 %v730
    %734 = vmatprep.subr.bf16.mxu0 0
    %735 = vmatpush1.bf16.msra.mxu0 0
    %736 = vmatprep.subr.bf16.mxu0 0
    %737 = vmatpush1.bf16.msra.mxu0 0
    %738 = vmatprep.subr.bf16.mxu0 0
    %739 = vmatpush1.bf16.msra.mxu0 0
    %740 = vmatprep.subr.bf16.mxu0 0
    %741 = vmatpush1.bf16.msra.mxu0 0
    %742 = vmatprep.subr.bf16.mxu0 0
    %743 = vmatpush1.bf16.msra.mxu0 0
    %744 = vmatprep.subr.bf16.mxu0 0
    %745 = vmatpush1.bf16.msra.mxu0 0
    %746 = vmatprep.subr.bf16.mxu0 0
    %747 = vmatpush1.bf16.msra.mxu0 0
    %748 = vmatprep.subr.bf16.mxu0 0
    %749 = vmatpush1.bf16.msra.mxu0 0
    %750 = vmatprep.subr.bf16.mxu0 0
    %751 = vmatpush1.bf16.msra.mxu0 0
    %752 = vmatprep.subr.bf16.mxu0 0
    %753 = vmatpush1.bf16.msra.mxu0 0
    %754 = vmatprep.subr.bf16.mxu0 0
    %755 = vmatpush1.bf16.msra.mxu0 0
    %756 = vmatprep.subr.bf16.mxu0 0
    %757 = vmatpush1.bf16.msra.mxu0 0
    %758 = vmatprep.subr.bf16.mxu0 0
    %759 = vmatpush1.bf16.msra.mxu0 0
    %760 = vmatprep.subr.bf16.mxu0 0
    %761 = vmatpush1.bf16.msra.mxu0 0
    %762 = vmatprep.subr.bf16.mxu0 0
    %763 = vmatpush1.bf16.msra.mxu0 0
    %764 = vmatprep.mubr.bf16.mxu0 0
    %765 = vmatmul.mubr.bf16.gmra.mrb[0].mxu0 %v727
    %v766 = vpop.f32.mrb[0].mxu0
    %v767 = vadd.f32 0.0, %v766
    %v768 = vpop.f32.mrb[0].mxu0
    %v769 = vpop.f32.mrb[0].mxu0
    %v770 = vpop.f32.mrb[0].mxu0
    %771 = vdwg.mxu0
    %773 = vrot.lane.b32.xlu0 %v382, 112
    %v774 = vpop.permute.xlu0 %773
    %v776 = vsel %vm481, %v722, 0
    %v779 = vsel %vm509, %v774, 0
    %781 = vmatprep.subr.bf16.mxu0 0
    %782 = vmatpush1.bf16.msra.mxu0 %v779
    %783 = vmatprep.subr.bf16.mxu0 0
    %784 = vmatpush1.bf16.msra.mxu0 0
    %785 = vmatprep.subr.bf16.mxu0 0
    %786 = vmatpush1.bf16.msra.mxu0 0
    %787 = vmatprep.subr.bf16.mxu0 0
    %788 = vmatpush1.bf16.msra.mxu0 0
    %789 = vmatprep.subr.bf16.mxu0 0
    %790 = vmatpush1.bf16.msra.mxu0 0
    %791 = vmatprep.subr.bf16.mxu0 0
    %792 = vmatpush1.bf16.msra.mxu0 0
    %793 = vmatprep.subr.bf16.mxu0 0
    %794 = vmatpush1.bf16.msra.mxu0 0
    %795 = vmatprep.subr.bf16.mxu0 0
    %796 = vmatpush1.bf16.msra.mxu0 0
    %797 = vmatprep.subr.bf16.mxu0 0
    %798 = vmatpush1.bf16.msra.mxu0 0
    %799 = vmatprep.subr.bf16.mxu0 0
    %800 = vmatpush1.bf16.msra.mxu0 0
    %801 = vmatprep.subr.bf16.mxu0 0
    %802 = vmatpush1.bf16.msra.mxu0 0
    %803 = vmatprep.subr.bf16.mxu0 0
    %804 = vmatpush1.bf16.msra.mxu0 0
    %805 = vmatprep.subr.bf16.mxu0 0
    %806 = vmatpush1.bf16.msra.mxu0 0
    %807 = vmatprep.subr.bf16.mxu0 0
    %808 = vmatpush1.bf16.msra.mxu0 0
    %809 = vmatprep.subr.bf16.mxu0 0
    %810 = vmatpush1.bf16.msra.mxu0 0
    %811 = vmatprep.subr.bf16.mxu0 0
    %812 = vmatpush1.bf16.msra.mxu0 0
    %813 = vmatprep.mubr.bf16.mxu0 0
    %814 = vmatmul.mubr.bf16.gmra.mrb[0].mxu0 %v776
    %v815 = vpop.f32.mrb[0].mxu0
    %v816 = vadd.f32 0.0, %v815
    %v817 = vpop.f32.mrb[0].mxu0
    %v818 = vpop.f32.mrb[0].mxu0
    %v819 = vpop.f32.mrb[0].mxu0
    %820 = vdwg.mxu0
    %821 = vrot.lane.b32.xlu0 %v379, 96
    %v822 = vpop.permute.xlu0 %821
    %823 = vrot.lane.b32.xlu0 %v379, 32
    %v824 = vpop.permute.xlu0 %823
    %v826 = vsel %vm162, %v822, 0
    %v829 = vsel %vm162, %v824, 0
    %831 = vmatprep.subr.bf16.mxu0 0
    %832 = vmatpush1.bf16.xpose.msra.mxu0 %v829
    %833 = vmatprep.subr.bf16.mxu0 0
    %834 = vmatpush1.bf16.xpose.msra.mxu0 0
    %835 = vmatprep.subr.bf16.mxu0 0
    %836 = vmatpush1.bf16.xpose.msra.mxu0 0
    %837 = vmatprep.subr.bf16.mxu0 0
    %838 = vmatpush1.bf16.xpose.msra.mxu0 0
    %839 = vmatprep.subr.bf16.mxu0 0
    %840 = vmatpush1.bf16.xpose.msra.mxu0 0
    %841 = vmatprep.subr.bf16.mxu0 0
    %842 = vmatpush1.bf16.xpose.msra.mxu0 0
    %843 = vmatprep.subr.bf16.mxu0 0
    %844 = vmatpush1.bf16.xpose.msra.mxu0 0
    %845 = vmatprep.subr.bf16.mxu0 0
    %846 = vmatpush1.bf16.xpose.msra.mxu0 0
    %847 = vmatprep.subr.bf16.mxu0 0
    %848 = vmatpush1.bf16.xpose.msra.mxu0 0
    %849 = vmatprep.subr.bf16.mxu0 0
    %850 = vmatpush1.bf16.xpose.msra.mxu0 0
    %851 = vmatprep.subr.bf16.mxu0 0
    %852 = vmatpush1.bf16.xpose.msra.mxu0 0
    %853 = vmatprep.subr.bf16.mxu0 0
    %854 = vmatpush1.bf16.xpose.msra.mxu0 0
    %855 = vmatprep.subr.bf16.mxu0 0
    %856 = vmatpush1.bf16.xpose.msra.mxu0 0
    %857 = vmatprep.subr.bf16.mxu0 0
    %858 = vmatpush1.bf16.xpose.msra.mxu0 0
    %859 = vmatprep.subr.bf16.mxu0 0
    %860 = vmatpush1.bf16.xpose.msra.mxu0 0
    %861 = vmatprep.subr.bf16.mxu0 0
    %862 = vmatpush1.bf16.xpose.msra.mxu0 0
    %863 = vmatprep.mubr.bf16.mxu0 0
    %864 = vmatmul.mubr.bf16.gmra.mrb[0].mxu0 %v826
    %v865 = vpop.f32.mrb[0].mxu0
    %v866 = vadd.f32 0.0, %v865
    %v867 = vpop.f32.mrb[0].mxu0
    %v868 = vpop.f32.mrb[0].mxu0
    %v869 = vpop.f32.mrb[0].mxu0
    %870 = vdwg.mxu0
    %871 = vrot.lane.b32.xlu0 %v380, 96
    %v872 = vpop.permute.xlu0 %871
    %873 = vrot.lane.b32.xlu0 %v380, 32
    %v874 = vpop.permute.xlu0 %873
    %v876 = vsel %vm162, %v872, 0
    %v879 = vsel %vm162, %v874, 0
    %881 = vmatprep.subr.bf16.mxu0 0
    %882 = vmatpush1.bf16.xpose.msra.mxu0 %v879
    %883 = vmatprep.subr.bf16.mxu0 0
    %884 = vmatpush1.bf16.xpose.msra.mxu0 0
    %885 = vmatprep.subr.bf16.mxu0 0
    %886 = vmatpush1.bf16.xpose.msra.mxu0 0
    %887 = vmatprep.subr.bf16.mxu0 0
    %888 = vmatpush1.bf16.xpose.msra.mxu0 0
    %889 = vmatprep.subr.bf16.mxu0 0
    %890 = vmatpush1.bf16.xpose.msra.mxu0 0
    %891 = vmatprep.subr.bf16.mxu0 0
    %892 = vmatpush1.bf16.xpose.msra.mxu0 0
    %893 = vmatprep.subr.bf16.mxu0 0
    %894 = vmatpush1.bf16.xpose.msra.mxu0 0
    %895 = vmatprep.subr.bf16.mxu0 0
    %896 = vmatpush1.bf16.xpose.msra.mxu0 0
    %897 = vmatprep.subr.bf16.mxu0 0
    %898 = vmatpush1.bf16.xpose.msra.mxu0 0
    %899 = vmatprep.subr.bf16.mxu0 0
    %900 = vmatpush1.bf16.xpose.msra.mxu0 0
    %901 = vmatprep.subr.bf16.mxu0 0
    %902 = vmatpush1.bf16.xpose.msra.mxu0 0
    %903 = vmatprep.subr.bf16.mxu0 0
    %904 = vmatpush1.bf16.xpose.msra.mxu0 0
    %905 = vmatprep.subr.bf16.mxu0 0
    %906 = vmatpush1.bf16.xpose.msra.mxu0 0
    %907 = vmatprep.subr.bf16.mxu0 0
    %908 = vmatpush1.bf16.xpose.msra.mxu0 0
    %909 = vmatprep.subr.bf16.mxu0 0
    %910 = vmatpush1.bf16.xpose.msra.mxu0 0
    %911 = vmatprep.subr.bf16.mxu0 0
    %912 = vmatpush1.bf16.xpose.msra.mxu0 0
    %913 = vmatprep.mubr.bf16.mxu0 0
    %914 = vmatmul.mubr.bf16.gmra.mrb[0].mxu0 %v876
    %v915 = vpop.f32.mrb[0].mxu0
    %v916 = vadd.f32 0.0, %v915
    %v917 = vpop.f32.mrb[0].mxu0
    %v918 = vpop.f32.mrb[0].mxu0
    %v919 = vpop.f32.mrb[0].mxu0
    %920 = vdwg.mxu0
    %v921 = vsel %vm481, %v866, -inf
    %922 = vmax.xlane.f32.xlu0 %v921
    %v923 = vpop.xlane.xlu0 %922
    %v924 = vsel %vm481, %v916, -inf
    %925 = vmax.xlane.f32.xlu0 %v924
    %v926 = vpop.xlane.xlu0 %925
    %v927 = vsub.f32 %v866, %v923
    %v928 = vsub.f32 %v916, %v926
    %v929 = vmul.f32 %v927, 1.442695
    %v930 = vpow.pop %v929
    %v931 = vmul.f32 %v928, 1.442695
    %v932 = vpow.pop %v931
    %v933 = vsel %vm481, %v930, 0.0
    %934 = vadd.xlane.f32.xlu0 %v933
    %v935 = vpop.xlane.xlu0 %934
    %v936 = vsel %vm481, %v932, 0.0
    %937 = vadd.xlane.f32.xlu0 %v936
    %v938 = vpop.xlane.xlu0 %937
    %v939 = vrcp.pop %v935
    %v940 = vrcp.pop %v938
    %v941 = vmul.f32 %v930, %v939
    %v942 = vmul.f32 %v932, %v940
    %v943 = vpack.c.bf16 %v941, %v941
    %v944 = vpack.c.bf16 %v942, %v942
    %945 = vrot.lane.b32.xlu0 %v381, 96
    %v946 = vpop.permute.xlu0 %945
    %v948 = vsel %vm481, %v943, 0
    %v951 = vsel %vm509, %v946, 0
    %953 = vmatprep.subr.bf16.mxu0 0
    %954 = vmatpush1.bf16.msra.mxu0 %v951
    %955 = vmatprep.subr.bf16.mxu0 0
    %956 = vmatpush1.bf16.msra.mxu0 0
    %957 = vmatprep.subr.bf16.mxu0 0
    %958 = vmatpush1.bf16.msra.mxu0 0
    %959 = vmatprep.subr.bf16.mxu0 0
    %960 = vmatpush1.bf16.msra.mxu0 0
    %961 = vmatprep.subr.bf16.mxu0 0
    %962 = vmatpush1.bf16.msra.mxu0 0
    %963 = vmatprep.subr.bf16.mxu0 0
    %964 = vmatpush1.bf16.msra.mxu0 0
    %965 = vmatprep.subr.bf16.mxu0 0
    %966 = vmatpush1.bf16.msra.mxu0 0
    %967 = vmatprep.subr.bf16.mxu0 0
    %968 = vmatpush1.bf16.msra.mxu0 0
    %969 = vmatprep.subr.bf16.mxu0 0
    %970 = vmatpush1.bf16.msra.mxu0 0
    %971 = vmatprep.subr.bf16.mxu0 0
    %972 = vmatpush1.bf16.msra.mxu0 0
    %973 = vmatprep.subr.bf16.mxu0 0
    %974 = vmatpush1.bf16.msra.mxu0 0
    %975 = vmatprep.subr.bf16.mxu0 0
    %976 = vmatpush1.bf16.msra.mxu0 0
    %977 = vmatprep.subr.bf16.mxu0 0
    %978 = vmatpush1.bf16.msra.mxu0 0
    %979 = vmatprep.subr.bf16.mxu0 0
    %980 = vmatpush1.bf16.msra.mxu0 0
    %981 = vmatprep.subr.bf16.mxu0 0
    %982 = vmatpush1.bf16.msra.mxu0 0
    %983 = vmatprep.subr.bf16.mxu0 0
    %984 = vmatpush1.bf16.msra.mxu0 0
    %985 = vmatprep.mubr.bf16.mxu0 0
    %986 = vmatmul.mubr.bf16.gmra.mrb[0].mxu0 %v948
    %v987 = vpop.f32.mrb[0].mxu0
    %v988 = vadd.f32 0.0, %v987
    %v989 = vpop.f32.mrb[0].mxu0
    %v990 = vpop.f32.mrb[0].mxu0
    %v991 = vpop.f32.mrb[0].mxu0
    %992 = vdwg.mxu0
    %993 = vrot.lane.b32.xlu0 %v382, 96
    %v994 = vpop.permute.xlu0 %993
    %v996 = vsel %vm481, %v944, 0
    %v999 = vsel %vm509, %v994, 0
    %1001 = vmatprep.subr.bf16.mxu0 0
    %1002 = vmatpush1.bf16.msra.mxu0 %v999
    %1003 = vmatprep.subr.bf16.mxu0 0
    %1004 = vmatpush1.bf16.msra.mxu0 0
    %1005 = vmatprep.subr.bf16.mxu0 0
    %1006 = vmatpush1.bf16.msra.mxu0 0
    %1007 = vmatprep.subr.bf16.mxu0 0
    %1008 = vmatpush1.bf16.msra.mxu0 0
    %1009 = vmatprep.subr.bf16.mxu0 0
    %1010 = vmatpush1.bf16.msra.mxu0 0
    %1011 = vmatprep.subr.bf16.mxu0 0
    %1012 = vmatpush1.bf16.msra.mxu0 0
    %1013 = vmatprep.subr.bf16.mxu0 0
    %1014 = vmatpush1.bf16.msra.mxu0 0
    %1015 = vmatprep.subr.bf16.mxu0 0
    %1016 = vmatpush1.bf16.msra.mxu0 0
    %1017 = vmatprep.subr.bf16.mxu0 0
    %1018 = vmatpush1.bf16.msra.mxu0 0
    %1019 = vmatprep.subr.bf16.mxu0 0
    %1020 = vmatpush1.bf16.msra.mxu0 0
    %1021 = vmatprep.subr.bf16.mxu0 0
    %1022 = vmatpush1.bf16.msra.mxu0 0
    %1023 = vmatprep.subr.bf16.mxu0 0
    %1024 = vmatpush1.bf16.msra.mxu0 0
    %1025 = vmatprep.subr.bf16.mxu0 0
    %1026 = vmatpush1.bf16.msra.mxu0 0
    %1027 = vmatprep.subr.bf16.mxu0 0
    %1028 = vmatpush1.bf16.msra.mxu0 0
    %1029 = vmatprep.subr.bf16.mxu0 0
    %1030 = vmatpush1.bf16.msra.mxu0 0
    %1031 = vmatprep.subr.bf16.mxu0 0
    %1032 = vmatpush1.bf16.msra.mxu0 0
    %1033 = vmatprep.mubr.bf16.mxu0 0
    %1034 = vmatmul.mubr.bf16.gmra.mrb[0].mxu0 %v996
    %v1035 = vpop.f32.mrb[0].mxu0
    %v1036 = vadd.f32 0.0, %v1035
    %v1037 = vpop.f32.mrb[0].mxu0
    %v1038 = vpop.f32.mrb[0].mxu0
    %v1039 = vpop.f32.mrb[0].mxu0
    %1040 = vdwg.mxu0
    %1041 = vrot.lane.b32.xlu0 %v379, 80
    %v1042 = vpop.permute.xlu0 %1041
    %1043 = vrot.lane.b32.xlu0 %v379, 16
    %v1044 = vpop.permute.xlu0 %1043
    %v1046 = vsel %vm162, %v1042, 0
    %v1049 = vsel %vm162, %v1044, 0
    %1051 = vmatprep.subr.bf16.mxu0 0
    %1052 = vmatpush1.bf16.xpose.msra.mxu0 %v1049
    %1053 = vmatprep.subr.bf16.mxu0 0
    %1054 = vmatpush1.bf16.xpose.msra.mxu0 0
    %1055 = vmatprep.subr.bf16.mxu0 0
    %1056 = vmatpush1.bf16.xpose.msra.mxu0 0
    %1057 = vmatprep.subr.bf16.mxu0 0
    %1058 = vmatpush1.bf16.xpose.msra.mxu0 0
    %1059 = vmatprep.subr.bf16.mxu0 0
    %1060 = vmatpush1.bf16.xpose.msra.mxu0 0
    %1061 = vmatprep.subr.bf16.mxu0 0
    %1062 = vmatpush1.bf16.xpose.msra.mxu0 0
    %1063 = vmatprep.subr.bf16.mxu0 0
    %1064 = vmatpush1.bf16.xpose.msra.mxu0 0
    %1065 = vmatprep.subr.bf16.mxu0 0
    %1066 = vmatpush1.bf16.xpose.msra.mxu0 0
    %1067 = vmatprep.subr.bf16.mxu0 0
    %1068 = vmatpush1.bf16.xpose.msra.mxu0 0
    %1069 = vmatprep.subr.bf16.mxu0 0
    %1070 = vmatpush1.bf16.xpose.msra.mxu0 0
    %1071 = vmatprep.subr.bf16.mxu0 0
    %1072 = vmatpush1.bf16.xpose.msra.mxu0 0
    %1073 = vmatprep.subr.bf16.mxu0 0
    %1074 = vmatpush1.bf16.xpose.msra.mxu0 0
    %1075 = vmatprep.subr.bf16.mxu0 0
    %1076 = vmatpush1.bf16.xpose.msra.mxu0 0
    %1077 = vmatprep.subr.bf16.mxu0 0
    %1078 = vmatpush1.bf16.xpose.msra.mxu0 0
    %1079 = vmatprep.subr.bf16.mxu0 0
    %1080 = vmatpush1.bf16.xpose.msra.mxu0 0
    %1081 = vmatprep.subr.bf16.mxu0 0
    %1082 = vmatpush1.bf16.xpose.msra.mxu0 0
    %1083 = vmatprep.mubr.bf16.mxu0 0
    %1084 = vmatmul.mubr.bf16.gmra.mrb[0].mxu0 %v1046
    %v1085 = vpop.f32.mrb[0].mxu0
    %v1086 = vadd.f32 0.0, %v1085
    %v1087 = vpop.f32.mrb[0].mxu0
    %v1088 = vpop.f32.mrb[0].mxu0
    %v1089 = vpop.f32.mrb[0].mxu0
    %1090 = vdwg.mxu0
    %1091 = vrot.lane.b32.xlu0 %v380, 80
    %v1092 = vpop.permute.xlu0 %1091
    %1093 = vrot.lane.b32.xlu0 %v380, 16
    %v1094 = vpop.permute.xlu0 %1093
    %v1096 = vsel %vm162, %v1092, 0
    %v1099 = vsel %vm162, %v1094, 0
    %1101 = vmatprep.subr.bf16.mxu0 0
    %1102 = vmatpush1.bf16.xpose.msra.mxu0 %v1099
    %1103 = vmatprep.subr.bf16.mxu0 0
    %1104 = vmatpush1.bf16.xpose.msra.mxu0 0
    %1105 = vmatprep.subr.bf16.mxu0 0
    %1106 = vmatpush1.bf16.xpose.msra.mxu0 0
    %1107 = vmatprep.subr.bf16.mxu0 0
    %1108 = vmatpush1.bf16.xpose.msra.mxu0 0
    %1109 = vmatprep.subr.bf16.mxu0 0
    %1110 = vmatpush1.bf16.xpose.msra.mxu0 0
    %1111 = vmatprep.subr.bf16.mxu0 0
    %1112 = vmatpush1.bf16.xpose.msra.mxu0 0
    %1113 = vmatprep.subr.bf16.mxu0 0
    %1114 = vmatpush1.bf16.xpose.msra.mxu0 0
    %1115 = vmatprep.subr.bf16.mxu0 0
    %1116 = vmatpush1.bf16.xpose.msra.mxu0 0
    %1117 = vmatprep.subr.bf16.mxu0 0
    %1118 = vmatpush1.bf16.xpose.msra.mxu0 0
    %1119 = vmatprep.subr.bf16.mxu0 0
    %1120 = vmatpush1.bf16.xpose.msra.mxu0 0
    %1121 = vmatprep.subr.bf16.mxu0 0
    %1122 = vmatpush1.bf16.xpose.msra.mxu0 0
    %1123 = vmatprep.subr.bf16.mxu0 0
    %1124 = vmatpush1.bf16.xpose.msra.mxu0 0
    %1125 = vmatprep.subr.bf16.mxu0 0
    %1126 = vmatpush1.bf16.xpose.msra.mxu0 0
    %1127 = vmatprep.subr.bf16.mxu0 0
    %1128 = vmatpush1.bf16.xpose.msra.mxu0 0
    %1129 = vmatprep.subr.bf16.mxu0 0
    %1130 = vmatpush1.bf16.xpose.msra.mxu0 0
    %1131 = vmatprep.subr.bf16.mxu0 0
    %1132 = vmatpush1.bf16.xpose.msra.mxu0 0
    %1133 = vmatprep.mubr.bf16.mxu0 0
    %1134 = vmatmul.mubr.bf16.gmra.mrb[0].mxu0 %v1096
    %v1135 = vpop.f32.mrb[0].mxu0
    %v1136 = vadd.f32 0.0, %v1135
    %v1137 = vpop.f32.mrb[0].mxu0
    %v1138 = vpop.f32.mrb[0].mxu0
    %v1139 = vpop.f32.mrb[0].mxu0
    %1140 = vdwg.mxu0
    %v1141 = vsel %vm481, %v1086, -inf
    %1142 = vmax.xlane.f32.xlu0 %v1141
    %v1143 = vpop.xlane.xlu0 %1142
    %v1144 = vsel %vm481, %v1136, -inf
    %1145 = vmax.xlane.f32.xlu0 %v1144
    %v1146 = vpop.xlane.xlu0 %1145
    %v1147 = vsub.f32 %v1086, %v1143
    %v1148 = vsub.f32 %v1136, %v1146
    %v1149 = vmul.f32 %v1147, 1.442695
    %v1150 = vpow.pop %v1149
    %v1151 = vmul.f32 %v1148, 1.442695
    %v1152 = vpow.pop %v1151
    %v1153 = vsel %vm481, %v1150, 0.0
    %1154 = vadd.xlane.f32.xlu0 %v1153
    %v1155 = vpop.xlane.xlu0 %1154
    %v1156 = vsel %vm481, %v1152, 0.0
    %1157 = vadd.xlane.f32.xlu0 %v1156
    %v1158 = vpop.xlane.xlu0 %1157
    %v1159 = vrcp.pop %v1155
    %v1160 = vrcp.pop %v1158
    %v1161 = vmul.f32 %v1150, %v1159
    %v1162 = vmul.f32 %v1152, %v1160
    %v1163 = vpack.c.bf16 %v1161, %v1161
    %v1164 = vpack.c.bf16 %v1162, %v1162
    %1165 = vrot.lane.b32.xlu0 %v381, 80
    %v1166 = vpop.permute.xlu0 %1165
    %v1168 = vsel %vm481, %v1163, 0
    %v1171 = vsel %vm509, %v1166, 0
    %1173 = vmatprep.subr.bf16.mxu0 0
    %1174 = vmatpush1.bf16.msra.mxu0 %v1171
    %1175 = vmatprep.subr.bf16.mxu0 0
    %1176 = vmatpush1.bf16.msra.mxu0 0
    %1177 = vmatprep.subr.bf16.mxu0 0
    %1178 = vmatpush1.bf16.msra.mxu0 0
    %1179 = vmatprep.subr.bf16.mxu0 0
    %1180 = vmatpush1.bf16.msra.mxu0 0
    %1181 = vmatprep.subr.bf16.mxu0 0
    %1182 = vmatpush1.bf16.msra.mxu0 0
    %1183 = vmatprep.subr.bf16.mxu0 0
    %1184 = vmatpush1.bf16.msra.mxu0 0
    %1185 = vmatprep.subr.bf16.mxu0 0
    %1186 = vmatpush1.bf16.msra.mxu0 0
    %1187 = vmatprep.subr.bf16.mxu0 0
    %1188 = vmatpush1.bf16.msra.mxu0 0
    %1189 = vmatprep.subr.bf16.mxu0 0
    %1190 = vmatpush1.bf16.msra.mxu0 0
    %1191 = vmatprep.subr.bf16.mxu0 0
    %1192 = vmatpush1.bf16.msra.mxu0 0
    %1193 = vmatprep.subr.bf16.mxu0 0
    %1194 = vmatpush1.bf16.msra.mxu0 0
    %1195 = vmatprep.subr.bf16.mxu0 0
    %1196 = vmatpush1.bf16.msra.mxu0 0
    %1197 = vmatprep.subr.bf16.mxu0 0
    %1198 = vmatpush1.bf16.msra.mxu0 0
    %1199 = vmatprep.subr.bf16.mxu0 0
    %1200 = vmatpush1.bf16.msra.mxu0 0
    %1201 = vmatprep.subr.bf16.mxu0 0
    %1202 = vmatpush1.bf16.msra.mxu0 0
    %1203 = vmatprep.subr.bf16.mxu0 0
    %1204 = vmatpush1.bf16.msra.mxu0 0
    %1205 = vmatprep.mubr.bf16.mxu0 0
    %1206 = vmatmul.mubr.bf16.gmra.mrb[0].mxu0 %v1168
    %v1207 = vpop.f32.mrb[0].mxu0
    %v1208 = vadd.f32 0.0, %v1207
    %v1209 = vpop.f32.mrb[0].mxu0
    %v1210 = vpop.f32.mrb[0].mxu0
    %v1211 = vpop.f32.mrb[0].mxu0
    %1212 = vdwg.mxu0
    %1213 = vrot.lane.b32.xlu0 %v382, 80
    %v1214 = vpop.permute.xlu0 %1213
    %v1216 = vsel %vm481, %v1164, 0
    %v1219 = vsel %vm509, %v1214, 0
    %1221 = vmatprep.subr.bf16.mxu0 0
    %1222 = vmatpush1.bf16.msra.mxu0 %v1219
    %1223 = vmatprep.subr.bf16.mxu0 0
    %1224 = vmatpush1.bf16.msra.mxu0 0
    %1225 = vmatprep.subr.bf16.mxu0 0
    %1226 = vmatpush1.bf16.msra.mxu0 0
    %1227 = vmatprep.subr.bf16.mxu0 0
    %1228 = vmatpush1.bf16.msra.mxu0 0
    %1229 = vmatprep.subr.bf16.mxu0 0
    %1230 = vmatpush1.bf16.msra.mxu0 0
    %1231 = vmatprep.subr.bf16.mxu0 0
    %1232 = vmatpush1.bf16.msra.mxu0 0
    %1233 = vmatprep.subr.bf16.mxu0 0
    %1234 = vmatpush1.bf16.msra.mxu0 0
    %1235 = vmatprep.subr.bf16.mxu0 0
    %1236 = vmatpush1.bf16.msra.mxu0 0
    %1237 = vmatprep.subr.bf16.mxu0 0
    %1238 = vmatpush1.bf16.msra.mxu0 0
    %1239 = vmatprep.subr.bf16.mxu0 0
    %1240 = vmatpush1.bf16.msra.mxu0 0
    %1241 = vmatprep.subr.bf16.mxu0 0
    %1242 = vmatpush1.bf16.msra.mxu0 0
    %1243 = vmatprep.subr.bf16.mxu0 0
    %1244 = vmatpush1.bf16.msra.mxu0 0
    %1245 = vmatprep.subr.bf16.mxu0 0
    %1246 = vmatpush1.bf16.msra.mxu0 0
    %1247 = vmatprep.subr.bf16.mxu0 0
    %1248 = vmatpush1.bf16.msra.mxu0 0
    %1249 = vmatprep.subr.bf16.mxu0 0
    %1250 = vmatpush1.bf16.msra.mxu0 0
    %1251 = vmatprep.subr.bf16.mxu0 0
    %1252 = vmatpush1.bf16.msra.mxu0 0
    %1253 = vmatprep.mubr.bf16.mxu0 0
    %1254 = vmatmul.mubr.bf16.gmra.mrb[0].mxu0 %v1216
    %v1255 = vpop.f32.mrb[0].mxu0
    %v1256 = vadd.f32 0.0, %v1255
    %v1257 = vpop.f32.mrb[0].mxu0
    %v1258 = vpop.f32.mrb[0].mxu0
    %v1259 = vpop.f32.mrb[0].mxu0
    %1260 = vdwg.mxu0
    %1263 = vrot.lane.b32.xlu0 %v767, 16
    %v1264 = vpop.permute.xlu0 %1263
    %1265 = vrot.lane.b32.xlu0 %v816, 16
    %v1266 = vpop.permute.xlu0 %1265
    %1271 = vrot.lane.b32.xlu0 %v988, 32
    %v1272 = vpop.permute.xlu0 %1271
    %1273 = vrot.lane.b32.xlu0 %v1036, 32
    %v1274 = vpop.permute.xlu0 %1273
    %1279 = vrot.lane.b32.xlu0 %v1208, 48
    %v1280 = vpop.permute.xlu0 %1279
    %1281 = vrot.lane.b32.xlu0 %v1256, 48
    %v1282 = vpop.permute.xlu0 %1281
    %v1285 = vsel %vm162, %v548, %v1264
    %v1286 = vsel %vm162, %v594, %v1266
    %vm1287 = vcmask 261120
    %v1288 = vsel %vm1287, %v1285, %v1272
    %v1289 = vsel %vm1287, %v1286, %v1274
    %vm1290 = vcmask 392192
    %v1291 = vsel %vm1290, %v1288, %v1280
    %v1292 = vsel %vm1290, %v1289, %v1282
    %v1293 = vpack.c.bf16 %v1292, %v1291
    %v1294 = vld [vmem:[%s19] sm:$0xf]
    %v1295 = vld [vmem:[%s19 + $0x4] sm:$0xf]
    %v1296 = vld [vmem:[%s19 + $0x8] sm:$0xf]
    %v1297 = vld [vmem:[%s19 + $0xc] sm:$0xf]
    %v1298 = vld [vmem:[%s19 + $0x10] sm:$0xf]
    %v1299 = vld [vmem:[%s19 + $0x14] sm:$0xf]
    %v1300 = vld [vmem:[%s19 + $0x18] sm:$0xf]
    %v1301 = vld [vmem:[%s19 + $0x1c] sm:$0xf]
    %v1302 = vld [vmem:[%s21] sm:$0x1]
    %v1304 = vlaneseq
    %v1305 = vshrl.u32 %v1304, 7
    %v1306 = vsub.s32 0, %v1305
    %v1307 = vrot.slane %v1302, %v1306
    %v1317 = vunpack.c.l.b16 %v1294
    %v1318 = vunpack.c.l.b16 %v1295
    %v1319 = vunpack.c.l.b16 %v1296
    %v1320 = vunpack.c.l.b16 %v1297
    %v1321 = vunpack.c.l.b16 %v1298
    %v1322 = vunpack.c.l.b16 %v1299
    %v1323 = vunpack.c.l.b16 %v1300
    %v1324 = vunpack.c.l.b16 %v1301
    %v1325 = vpack.c.b16 %v1318, %v1317
    %v1326 = vpack.c.b16 %v1320, %v1319
    %v1327 = vpack.c.b16 %v1322, %v1321
    %v1328 = vpack.c.b16 %v1324, %v1323
    %v1334 = vsel %vm332, %v1293, 0
    %1336 = vmatprep.subr.bf16.mxu0 0
    %1337 = vmatpush1.bf16.msra.mxu0 %v1325
    %1338 = vmatprep.subr.bf16.mxu0 0
    %1339 = vmatpush1.bf16.msra.mxu0 %v1326
    %1340 = vmatprep.subr.bf16.mxu0 0
    %1341 = vmatpush1.bf16.msra.mxu0 %v1327
    %1342 = vmatprep.subr.bf16.mxu0 0
    %1343 = vmatpush1.bf16.msra.mxu0 %v1328
    %1344 = vmatprep.subr.bf16.mxu0 0
    %1345 = vmatpush1.bf16.msra.mxu0 0
    %1346 = vmatprep.subr.bf16.mxu0 0
    %1347 = vmatpush1.bf16.msra.mxu0 0
    %1348 = vmatprep.subr.bf16.mxu0 0
    %1349 = vmatpush1.bf16.msra.mxu0 0
    %1350 = vmatprep.subr.bf16.mxu0 0
    %1351 = vmatpush1.bf16.msra.mxu0 0
    %1352 = vmatprep.subr.bf16.mxu0 0
    %1353 = vmatpush1.bf16.msra.mxu0 0
    %1354 = vmatprep.subr.bf16.mxu0 0
    %1355 = vmatpush1.bf16.msra.mxu0 0
    %1356 = vmatprep.subr.bf16.mxu0 0
    %1357 = vmatpush1.bf16.msra.mxu0 0
    %1358 = vmatprep.subr.bf16.mxu0 0
    %1359 = vmatpush1.bf16.msra.mxu0 0
    %1360 = vmatprep.subr.bf16.mxu0 0
    %1361 = vmatpush1.bf16.msra.mxu0 0
    %1362 = vmatprep.subr.bf16.mxu0 0
    %1363 = vmatpush1.bf16.msra.mxu0 0
    %1364 = vmatprep.subr.bf16.mxu0 0
    %1365 = vmatpush1.bf16.msra.mxu0 0
    %1366 = vmatprep.subr.bf16.mxu0 0
    %1367 = vmatpush1.bf16.msra.mxu0 0
    %1368 = vmatprep.mubr.bf16.mxu0 0
    %1369 = vmatmul.mubr.bf16.gmra.mrb[0].mxu0 %v1334
    %v1370 = vpop.f32.mrb[0].mxu0
    %v1371 = vadd.f32 %v1307, %v1370
    %v1372 = vpop.f32.mrb[0].mxu0
    %v1373 = vpop.f32.mrb[0].mxu0
    %v1374 = vadd.f32 %v1307, %v1373
    %v1375 = vpop.f32.mrb[0].mxu0
    %1376 = vdwg.mxu0
    %v1377 = vadd.f32 %v269, %v1371
    %v1378 = vadd.f32 %v270, %v1374
    %v1379 = vld [vmem:[%s23] sm:$0x1]
    %v1380 = vld [vmem:[%s25] sm:$0x1]
    %v1381 = vsel %vm332, %v1377, 0.0
    %1382 = vadd.xlane.f32.xlu0 %v1381
    %v1383 = vpop.xlane.xlu0 %1382
    %v1384 = vsel %vm332, %v1378, 0.0
    %1385 = vadd.xlane.f32.xlu0 %v1384
    %v1386 = vpop.xlane.xlu0 %1385
    %v1387 = vrcp.pop 64.0
    %v1388 = vmul.f32 %v1383, %v1387
    %v1389 = vmul.f32 %v1386, %v1387
    %v1390 = vsub.f32 %v1377, %v1388
    %v1391 = vsub.f32 %v1378, %v1389
    %v1392 = vmul.f32 %v1390, %v1390
    %v1393 = vmul.f32 %v1391, %v1391
    %v1394 = vsel %vm332, %v1392, 0.0
    %1395 = vadd.xlane.f32.xlu0 %v1394
    %v1396 = vpop.xlane.xlu0 %1395
    %v1397 = vsel %vm332, %v1393, 0.0
    %1398 = vadd.xlane.f32.xlu0 %v1397
    %v1399 = vpop.xlane.xlu0 %1398
    %v1400 = vmul.f32 %v1396, %v1387
    %v1401 = vmul.f32 %v1399, %v1387
    %v1402 = vadd.f32 %v1400, 1e-05
    %v1403 = vadd.f32 %v1401, 1e-05
    %v1404 = vrsqrt.pop %v1402
    %v1405 = vrsqrt.pop %v1403
    %v1406 = vmul.f32 %v1390, %v1404
    %v1407 = vmul.f32 %v1391, %v1405
    %v1409 = vlaneseq
    %v1410 = vshrl.u32 %v1409, 7
    %v1411 = vsub.s32 0, %v1410
    %v1412 = vrot.slane %v1379, %v1411
    %v1414 = vmul.f32 %v1406, %v1412
    %v1415 = vmul.f32 %v1407, %v1412
    %v1417 = vlaneseq
    %v1418 = vshrl.u32 %v1417, 7
    %v1419 = vsub.s32 0, %v1418
    %v1420 = vrot.slane %v1380, %v1419
    %v1422 = vadd.f32 %v1414, %v1420
    %v1423 = vadd.f32 %v1415, %v1420
    %v1424 = vpack.c.bf16 %v1423, %v1422
    %v1425 = vld [vmem:[%s27] sm:$0xff]
    %v1426 = vld [vmem:[%s27 + $0x8] sm:$0xff]
    %v1427 = vld [vmem:[%s27 + $0x10] sm:$0xff]
    %v1428 = vld [vmem:[%s27 + $0x18] sm:$0xff]
    %v1429 = vld [vmem:[%s27 + $0x20] sm:$0xff]
    %v1430 = vld [vmem:[%s27 + $0x28] sm:$0xff]
    %v1431 = vld [vmem:[%s27 + $0x30] sm:$0xff]
    %v1432 = vld [vmem:[%s27 + $0x38] sm:$0xff]
    %v1433 = vld [vmem:[%s27 + $0x40] sm:$0xff]
    %v1434 = vld [vmem:[%s27 + $0x48] sm:$0xff]
    %v1435 = vld [vmem:[%s27 + $0x50] sm:$0xff]
    %v1436 = vld [vmem:[%s27 + $0x58] sm:$0xff]
    %v1437 = vld [vmem:[%s27 + $0x60] sm:$0xff]
    %v1438 = vld [vmem:[%s27 + $0x68] sm:$0xff]
    %v1439 = vld [vmem:[%s27 + $0x70] sm:$0xff]
    %v1440 = vld [vmem:[%s27 + $0x78] sm:$0xff]
    %v1441 = vld [vmem:[%s27 + $0x80] sm:$0xff]
    %v1442 = vld [vmem:[%s27 + $0x88] sm:$0xff]
    %v1443 = vld [vmem:[%s27 + $0x90] sm:$0xff]
    %v1444 = vld [vmem:[%s27 + $0x98] sm:$0xff]
    %v1445 = vld [vmem:[%s27 + $0xa0] sm:$0xff]
    %v1446 = vld [vmem:[%s27 + $0xa8] sm:$0xff]
    %v1447 = vld [vmem:[%s27 + $0xb0] sm:$0xff]
    %v1448 = vld [vmem:[%s27 + $0xb8] sm:$0xff]
    %v1449 = vld [vmem:[%s27 + $0xc0] sm:$0xff]
    %v1450 = vld [vmem:[%s27 + $0xc8] sm:$0xff]
    %v1451 = vld [vmem:[%s27 + $0xd0] sm:$0xff]
    %v1452 = vld [vmem:[%s27 + $0xd8] sm:$0xff]
    %v1453 = vld [vmem:[%s27 + $0xe0] sm:$0xff]
    %v1454 = vld [vmem:[%s27 + $0xe8] sm:$0xff]
    %v1455 = vld [vmem:[%s27 + $0xf0] sm:$0xff]
    %v1456 = vld [vmem:[%s27 + $0xf8] sm:$0xff]
    %v1457 = vld [vmem:[%s27 + $0x100] sm:$0xff]
    %v1458 = vld [vmem:[%s27 + $0x108] sm:$0xff]
    %v1459 = vld [vmem:[%s27 + $0x110] sm:$0xff]
    %v1460 = vld [vmem:[%s27 + $0x118] sm:$0xff]
    %v1461 = vld [vmem:[%s27 + $0x120] sm:$0xff]
    %v1462 = vld [vmem:[%s27 + $0x128] sm:$0xff]
    %v1463 = vld [vmem:[%s27 + $0x130] sm:$0xff]
    %v1464 = vld [vmem:[%s27 + $0x138] sm:$0xff]
    %v1465 = vld [vmem:[%s27 + $0x140] sm:$0xff]
    %v1466 = vld [vmem:[%s27 + $0x148] sm:$0xff]
    %v1467 = vld [vmem:[%s27 + $0x150] sm:$0xff]
    %v1468 = vld [vmem:[%s27 + $0x158] sm:$0xff]
    %v1469 = vld [vmem:[%s27 + $0x160] sm:$0xff]
    %v1470 = vld [vmem:[%s27 + $0x168] sm:$0xff]
    %v1471 = vld [vmem:[%s27 + $0x170] sm:$0xff]
    %v1472 = vld [vmem:[%s27 + $0x178] sm:$0xff]
    %v1473 = vld [vmem:[%s27 + $0x180] sm:$0xff]
    %v1474 = vld [vmem:[%s27 + $0x188] sm:$0xff]
    %v1475 = vld [vmem:[%s27 + $0x190] sm:$0xff]
    %v1476 = vld [vmem:[%s27 + $0x198] sm:$0xff]
    %v1477 = vld [vmem:[%s27 + $0x1a0] sm:$0xff]
    %v1478 = vld [vmem:[%s27 + $0x1a8] sm:$0xff]
    %v1479 = vld [vmem:[%s27 + $0x1b0] sm:$0xff]
    %v1480 = vld [vmem:[%s27 + $0x1b8] sm:$0xff]
    %v1481 = vld [vmem:[%s27 + $0x1c0] sm:$0xff]
    %v1482 = vld [vmem:[%s27 + $0x1c8] sm:$0xff]
    %v1483 = vld [vmem:[%s27 + $0x1d0] sm:$0xff]
    %v1484 = vld [vmem:[%s27 + $0x1d8] sm:$0xff]
    %v1485 = vld [vmem:[%s27 + $0x1e0] sm:$0xff]
    %v1486 = vld [vmem:[%s27 + $0x1e8] sm:$0xff]
    %v1487 = vld [vmem:[%s27 + $0x1f0] sm:$0xff]
    %v1488 = vld [vmem:[%s27 + $0x1f8] sm:$0xff]
    %v1489 = vld [vmem:[%s29] sm:$0xff]
    %v1490 = vld [vmem:[%s29 + $0x8] sm:$0xff]
    %v1493 = vlaneseq
    %v1494 = vshrl.u32 %v1493, 7
    %v1495 = vsub.s32 0, %v1494
    %v1496 = vrot.slane %v1489, %v1495
    %v1497 = vlaneseq
    %v1498 = vshrl.u32 %v1497, 7
    %v1499 = vsub.s32 1, %v1498
    %v1500 = vrot.slane %v1489, %v1499
    %v1501 = vlaneseq
    %v1502 = vshrl.u32 %v1501, 7
    %v1503 = vsub.s32 2, %v1502
    %v1504 = vrot.slane %v1489, %v1503
    %v1505 = vlaneseq
    %v1506 = vshrl.u32 %v1505, 7
    %v1507 = vsub.s32 3, %v1506
    %v1508 = vrot.slane %v1489, %v1507
    %v1509 = vlaneseq
    %v1510 = vshrl.u32 %v1509, 7
    %v1511 = vsub.s32 4, %v1510
    %v1512 = vrot.slane %v1489, %v1511
    %v1513 = vlaneseq
    %v1514 = vshrl.u32 %v1513, 7
    %v1515 = vsub.s32 5, %v1514
    %v1516 = vrot.slane %v1489, %v1515
    %v1517 = vlaneseq
    %v1518 = vshrl.u32 %v1517, 7
    %v1519 = vsub.s32 6, %v1518
    %v1520 = vrot.slane %v1489, %v1519
    %v1521 = vlaneseq
    %v1522 = vshrl.u32 %v1521, 7
    %v1523 = vsub.s32 7, %v1522
    %v1524 = vrot.slane %v1489, %v1523
    %v1525 = vlaneseq
    %v1526 = vshrl.u32 %v1525, 7
    %v1527 = vsub.s32 0, %v1526
    %v1528 = vrot.slane %v1490, %v1527
    %v1529 = vlaneseq
    %v1530 = vshrl.u32 %v1529, 7
    %v1531 = vsub.s32 1, %v1530
    %v1532 = vrot.slane %v1490, %v1531
    %v1533 = vlaneseq
    %v1534 = vshrl.u32 %v1533, 7
    %v1535 = vsub.s32 2, %v1534
    %v1536 = vrot.slane %v1490, %v1535
    %v1537 = vlaneseq
    %v1538 = vshrl.u32 %v1537, 7
    %v1539 = vsub.s32 3, %v1538
    %v1540 = vrot.slane %v1490, %v1539
    %v1541 = vlaneseq
    %v1542 = vshrl.u32 %v1541, 7
    %v1543 = vsub.s32 4, %v1542
    %v1544 = vrot.slane %v1490, %v1543
    %v1545 = vlaneseq
    %v1546 = vshrl.u32 %v1545, 7
    %v1547 = vsub.s32 5, %v1546
    %v1548 = vrot.slane %v1490, %v1547
    %v1549 = vlaneseq
    %v1550 = vshrl.u32 %v1549, 7
    %v1551 = vsub.s32 6, %v1550
    %v1552 = vrot.slane %v1490, %v1551
    %v1553 = vlaneseq
    %v1554 = vshrl.u32 %v1553, 7
    %v1555 = vsub.s32 7, %v1554
    %v1556 = vrot.slane %v1490, %v1555
    %v1637 = vunpack.c.l.b16 %v1425
    %v1638 = vunpack.c.h.b16 %v1425
    %v1639 = vunpack.c.l.b16 %v1426
    %v1640 = vunpack.c.h.b16 %v1426
    %v1641 = vunpack.c.l.b16 %v1427
    %v1642 = vunpack.c.h.b16 %v1427
    %v1643 = vunpack.c.l.b16 %v1428
    %v1644 = vunpack.c.h.b16 %v1428
    %v1645 = vunpack.c.l.b16 %v1429
    %v1646 = vunpack.c.h.b16 %v1429
    %v1647 = vunpack.c.l.b16 %v1430
    %v1648 = vunpack.c.h.b16 %v1430
    %v1649 = vunpack.c.l.b16 %v1431
    %v1650 = vunpack.c.h.b16 %v1431
    %v1651 = vunpack.c.l.b16 %v1432
    %v1652 = vunpack.c.h.b16 %v1432
    %v1653 = vunpack.c.l.b16 %v1433
    %v1654 = vunpack.c.h.b16 %v1433
    %v1655 = vunpack.c.l.b16 %v1434
    %v1656 = vunpack.c.h.b16 %v1434
    %v1657 = vunpack.c.l.b16 %v1435
    %v1658 = vunpack.c.h.b16 %v1435
    %v1659 = vunpack.c.l.b16 %v1436
    %v1660 = vunpack.c.h.b16 %v1436
    %v1661 = vunpack.c.l.b16 %v1437
    %v1662 = vunpack.c.h.b16 %v1437
    %v1663 = vunpack.c.l.b16 %v1438
    %v1664 = vunpack.c.h.b16 %v1438
    %v1665 = vunpack.c.l.b16 %v1439
    %v1666 = vunpack.c.h.b16 %v1439
    %v1667 = vunpack.c.l.b16 %v1440
    %v1668 = vunpack.c.h.b16 %v1440
    %v1669 = vunpack.c.l.b16 %v1441
    %v1670 = vunpack.c.h.b16 %v1441
    %v1671 = vunpack.c.l.b16 %v1442
    %v1672 = vunpack.c.h.b16 %v1442
    %v1673 = vunpack.c.l.b16 %v1443
    %v1674 = vunpack.c.h.b16 %v1443
    %v1675 = vunpack.c.l.b16 %v1444
    %v1676 = vunpack.c.h.b16 %v1444
    %v1677 = vunpack.c.l.b16 %v1445
    %v1678 = vunpack.c.h.b16 %v1445
    %v1679 = vunpack.c.l.b16 %v1446
    %v1680 = vunpack.c.h.b16 %v1446
    %v1681 = vunpack.c.l.b16 %v1447
    %v1682 = vunpack.c.h.b16 %v1447
    %v1683 = vunpack.c.l.b16 %v1448
    %v1684 = vunpack.c.h.b16 %v1448
    %v1685 = vunpack.c.l.b16 %v1449
    %v1686 = vunpack.c.h.b16 %v1449
    %v1687 = vunpack.c.l.b16 %v1450
    %v1688 = vunpack.c.h.b16 %v1450
    %v1689 = vunpack.c.l.b16 %v1451
    %v1690 = vunpack.c.h.b16 %v1451
    %v1691 = vunpack.c.l.b16 %v1452
    %v1692 = vunpack.c.h.b16 %v1452
    %v1693 = vunpack.c.l.b16 %v1453
    %v1694 = vunpack.c.h.b16 %v1453
    %v1695 = vunpack.c.l.b16 %v1454
    %v1696 = vunpack.c.h.b16 %v1454
    %v1697 = vunpack.c.l.b16 %v1455
    %v1698 = vunpack.c.h.b16 %v1455
    %v1699 = vunpack.c.l.b16 %v1456
    %v1700 = vunpack.c.h.b16 %v1456
    %v1701 = vunpack.c.l.b16 %v1457
    %v1702 = vunpack.c.h.b16 %v1457
    %v1703 = vunpack.c.l.b16 %v1458
    %v1704 = vunpack.c.h.b16 %v1458
    %v1705 = vunpack.c.l.b16 %v1459
    %v1706 = vunpack.c.h.b16 %v1459
    %v1707 = vunpack.c.l.b16 %v1460
    %v1708 = vunpack.c.h.b16 %v1460
    %v1709 = vunpack.c.l.b16 %v1461
    %v1710 = vunpack.c.h.b16 %v1461
    %v1711 = vunpack.c.l.b16 %v1462
    %v1712 = vunpack.c.h.b16 %v1462
    %v1713 = vunpack.c.l.b16 %v1463
    %v1714 = vunpack.c.h.b16 %v1463
    %v1715 = vunpack.c.l.b16 %v1464
    %v1716 = vunpack.c.h.b16 %v1464
    %v1717 = vunpack.c.l.b16 %v1465
    %v1718 = vunpack.c.h.b16 %v1465
    %v1719 = vunpack.c.l.b16 %v1466
    %v1720 = vunpack.c.h.b16 %v1466
    %v1721 = vunpack.c.l.b16 %v1467
    %v1722 = vunpack.c.h.b16 %v1467
    %v1723 = vunpack.c.l.b16 %v1468
    %v1724 = vunpack.c.h.b16 %v1468
    %v1725 = vunpack.c.l.b16 %v1469
    %v1726 = vunpack.c.h.b16 %v1469
    %v1727 = vunpack.c.l.b16 %v1470
    %v1728 = vunpack.c.h.b16 %v1470
    %v1729 = vunpack.c.l.b16 %v1471
    %v1730 = vunpack.c.h.b16 %v1471
    %v1731 = vunpack.c.l.b16 %v1472
    %v1732 = vunpack.c.h.b16 %v1472
    %v1733 = vunpack.c.l.b16 %v1473
    %v1734 = vunpack.c.h.b16 %v1473
    %v1735 = vunpack.c.l.b16 %v1474
    %v1736 = vunpack.c.h.b16 %v1474
    %v1737 = vunpack.c.l.b16 %v1475
    %v1738 = vunpack.c.h.b16 %v1475
    %v1739 = vunpack.c.l.b16 %v1476
    %v1740 = vunpack.c.h.b16 %v1476
    %v1741 = vunpack.c.l.b16 %v1477
    %v1742 = vunpack.c.h.b16 %v1477
    %v1743 = vunpack.c.l.b16 %v1478
    %v1744 = vunpack.c.h.b16 %v1478
    %v1745 = vunpack.c.l.b16 %v1479
    %v1746 = vunpack.c.h.b16 %v1479
    %v1747 = vunpack.c.l.b16 %v1480
    %v1748 = vunpack.c.h.b16 %v1480
    %v1749 = vunpack.c.l.b16 %v1481
    %v1750 = vunpack.c.h.b16 %v1481
    %v1751 = vunpack.c.l.b16 %v1482
    %v1752 = vunpack.c.h.b16 %v1482
    %v1753 = vunpack.c.l.b16 %v1483
    %v1754 = vunpack.c.h.b16 %v1483
    %v1755 = vunpack.c.l.b16 %v1484
    %v1756 = vunpack.c.h.b16 %v1484
    %v1757 = vunpack.c.l.b16 %v1485
    %v1758 = vunpack.c.h.b16 %v1485
    %v1759 = vunpack.c.l.b16 %v1486
    %v1760 = vunpack.c.h.b16 %v1486
    %v1761 = vunpack.c.l.b16 %v1487
    %v1762 = vunpack.c.h.b16 %v1487
    %v1763 = vunpack.c.l.b16 %v1488
    %v1764 = vunpack.c.h.b16 %v1488
    %v1765 = vpack.c.b16 %v1653, %v1637
    %v1766 = vpack.c.b16 %v1654, %v1638
    %v1767 = vpack.c.b16 %v1655, %v1639
    %v1768 = vpack.c.b16 %v1656, %v1640
    %v1769 = vpack.c.b16 %v1657, %v1641
    %v1770 = vpack.c.b16 %v1658, %v1642
    %v1771 = vpack.c.b16 %v1659, %v1643
    %v1772 = vpack.c.b16 %v1660, %v1644
    %v1773 = vpack.c.b16 %v1661, %v1645
    %v1774 = vpack.c.b16 %v1662, %v1646
    %v1775 = vpack.c.b16 %v1663, %v1647
    %v1776 = vpack.c.b16 %v1664, %v1648
    %v1777 = vpack.c.b16 %v1665, %v1649
    %v1778 = vpack.c.b16 %v1666, %v1650
    %v1779 = vpack.c.b16 %v1667, %v1651
    %v1780 = vpack.c.b16 %v1668, %v1652
    %v1781 = vpack.c.b16 %v1685, %v1669
    %v1782 = vpack.c.b16 %v1686, %v1670
    %v1783 = vpack.c.b16 %v1687, %v1671
    %v1784 = vpack.c.b16 %v1688, %v1672
    %v1785 = vpack.c.b16 %v1689, %v1673
    %v1786 = vpack.c.b16 %v1690, %v1674
    %v1787 = vpack.c.b16 %v1691, %v1675
    %v1788 = vpack.c.b16 %v1692, %v1676
    %v1789 = vpack.c.b16 %v1693, %v1677
    %v1790 = vpack.c.b16 %v1694, %v1678
    %v1791 = vpack.c.b16 %v1695, %v1679
    %v1792 = vpack.c.b16 %v1696, %v1680
    %v1793 = vpack.c.b16 %v1697, %v1681
    %v1794 = vpack.c.b16 %v1698, %v1682
    %v1795 = vpack.c.b16 %v1699, %v1683
    %v1796 = vpack.c.b16 %v1700, %v1684
    %v1797 = vpack.c.b16 %v1717, %v1701
    %v1798 = vpack.c.b16 %v1718, %v1702
    %v1799 = vpack.c.b16 %v1719, %v1703
    %v1800 = vpack.c.b16 %v1720, %v1704
    %v1801 = vpack.c.b16 %v1721, %v1705
    %v1802 = vpack.c.b16 %v1722, %v1706
    %v1803 = vpack.c.b16 %v1723, %v1707
    %v1804 = vpack.c.b16 %v1724, %v1708
    %v1805 = vpack.c.b16 %v1725, %v1709
    %v1806 = vpack.c.b16 %v1726, %v1710
    %v1807 = vpack.c.b16 %v1727, %v1711
    %v1808 = vpack.c.b16 %v1728, %v1712
    %v1809 = vpack.c.b16 %v1729, %v1713
    %v1810 = vpack.c.b16 %v1730, %v1714
    %v1811 = vpack.c.b16 %v1731, %v1715
    %v1812 = vpack.c.b16 %v1732, %v1716
    %v1813 = vpack.c.b16 %v1749, %v1733
    %v1814 = vpack.c.b16 %v1750, %v1734
    %v1815 = vpack.c.b16 %v1751, %v1735
    %v1816 = vpack.c.b16 %v1752, %v1736
    %v1817 = vpack.c.b16 %v1753, %v1737
    %v1818 = vpack.c.b16 %v1754, %v1738
    %v1819 = vpack.c.b16 %v1755, %v1739
    %v1820 = vpack.c.b16 %v1756, %v1740
    %v1821 = vpack.c.b16 %v1757, %v1741
    %v1822 = vpack.c.b16 %v1758, %v1742
    %v1823 = vpack.c.b16 %v1759, %v1743
    %v1824 = vpack.c.b16 %v1760, %v1744
    %v1825 = vpack.c.b16 %v1761, %v1745
    %v1826 = vpack.c.b16 %v1762, %v1746
    %v1827 = vpack.c.b16 %v1763, %v1747
    %v1828 = vpack.c.b16 %v1764, %v1748
    %v1894 = vsel %vm332, %v1424, 0
    %1896 = vmatprep.subr.bf16.mxu0 %v1766
    %1897 = vmatpush1.bf16.msra.mxu0 %v1765
    %1898 = vmatprep.subr.bf16.mxu0 %v1782
    %1899 = vmatpush1.bf16.msra.mxu0 %v1781
    %1900 = vmatprep.subr.bf16.mxu0 %v1798
    %1901 = vmatpush1.bf16.msra.mxu0 %v1797
    %1902 = vmatprep.subr.bf16.mxu0 %v1814
    %1903 = vmatpush1.bf16.msra.mxu0 %v1813
    %1904 = vmatprep.subr.bf16.mxu0 0
    %1905 = vmatpush1.bf16.msra.mxu0 0
    %1906 = vmatprep.subr.bf16.mxu0 0
    %1907 = vmatpush1.bf16.msra.mxu0 0
    %1908 = vmatprep.subr.bf16.mxu0 0
    %1909 = vmatpush1.bf16.msra.mxu0 0
    %1910 = vmatprep.subr.bf16.mxu0 0
    %1911 = vmatpush1.bf16.msra.mxu0 0
    %1912 = vmatprep.subr.bf16.mxu0 0
    %1913 = vmatpush1.bf16.msra.mxu0 0
    %1914 = vmatprep.subr.bf16.mxu0 0
    %1915 = vmatpush1.bf16.msra.mxu0 0
    %1916 = vmatprep.subr.bf16.mxu0 0
    %1917 = vmatpush1.bf16.msra.mxu0 0
    %1918 = vmatprep.subr.bf16.mxu0 0
    %1919 = vmatpush1.bf16.msra.mxu0 0
    %1920 = vmatprep.subr.bf16.mxu0 0
    %1921 = vmatpush1.bf16.msra.mxu0 0
    %1922 = vmatprep.subr.bf16.mxu0 0
    %1923 = vmatpush1.bf16.msra.mxu0 0
    %1924 = vmatprep.subr.bf16.mxu0 0
    %1925 = vmatpush1.bf16.msra.mxu0 0
    %1926 = vmatprep.subr.bf16.mxu0 0
    %1927 = vmatpush1.bf16.msra.mxu0 0
    %1928 = vmatprep.mubr.bf16.mxu0 0
    %1929 = vmatmul.mubr.bf16.gmra.mrb[0].mxu0 %v1894
    %v1930 = vpop.f32.mrb[0].mxu0
    %v1931 = vadd.f32 %v1496, %v1930
    %v1932 = vpop.f32.mrb[0].mxu0
    %v1933 = vadd.f32 %v1500, %v1932
    %v1934 = vpop.f32.mrb[0].mxu0
    %v1935 = vadd.f32 %v1496, %v1934
    %v1936 = vpop.f32.mrb[0].mxu0
    %v1937 = vadd.f32 %v1500, %v1936
    %1938 = vdwg.mxu0
    %1939 = vmatprep.subr.bf16.mxu0 %v1768
    %1940 = vmatpush1.bf16.msra.mxu0 %v1767
    %1941 = vmatprep.subr.bf16.mxu0 %v1784
    %1942 = vmatpush1.bf16.msra.mxu0 %v1783
    %1943 = vmatprep.subr.bf16.mxu0 %v1800
    %1944 = vmatpush1.bf16.msra.mxu0 %v1799
    %1945 = vmatprep.subr.bf16.mxu0 %v1816
    %1946 = vmatpush1.bf16.msra.mxu0 %v1815
    %1947 = vmatprep.subr.bf16.mxu0 0
    %1948 = vmatpush1.bf16.msra.mxu0 0
    %1949 = vmatprep.subr.bf16.mxu0 0
    %1950 = vmatpush1.bf16.msra.mxu0 0
    %1951 = vmatprep.subr.bf16.mxu0 0
    %1952 = vmatpush1.bf16.msra.mxu0 0
    %1953 = vmatprep.subr.bf16.mxu0 0
    %1954 = vmatpush1.bf16.msra.mxu0 0
    %1955 = vmatprep.subr.bf16.mxu0 0
    %1956 = vmatpush1.bf16.msra.mxu0 0
    %1957 = vmatprep.subr.bf16.mxu0 0
    %1958 = vmatpush1.bf16.msra.mxu0 0
    %1959 = vmatprep.subr.bf16.mxu0 0
    %1960 = vmatpush1.bf16.msra.mxu0 0
    %1961 = vmatprep.subr.bf16.mxu0 0
    %1962 = vmatpush1.bf16.msra.mxu0 0
    %1963 = vmatprep.subr.bf16.mxu0 0
    %1964 = vmatpush1.bf16.msra.mxu0 0
    %1965 = vmatprep.subr.bf16.mxu0 0
    %1966 = vmatpush1.bf16.msra.mxu0 0
    %1967 = vmatprep.subr.bf16.mxu0 0
    %1968 = vmatpush1.bf16.msra.mxu0 0
    %1969 = vmatprep.subr.bf16.mxu0 0
    %1970 = vmatpush1.bf16.msra.mxu0 0
    %1971 = vmatprep.mubr.bf16.mxu0 0
    %1972 = vmatmul.mubr.bf16.gmra.mrb[0].mxu0 %v1894
    %v1973 = vpop.f32.mrb[0].mxu0
    %v1974 = vadd.f32 %v1504, %v1973
    %v1975 = vpop.f32.mrb[0].mxu0
    %v1976 = vadd.f32 %v1508, %v1975
    %v1977 = vpop.f32.mrb[0].mxu0
    %v1978 = vadd.f32 %v1504, %v1977
    %v1979 = vpop.f32.mrb[0].mxu0
    %v1980 = vadd.f32 %v1508, %v1979
    %1981 = vdwg.mxu0
    %1982 = vmatprep.subr.bf16.mxu0 %v1770
    %1983 = vmatpush1.bf16.msra.mxu0 %v1769
    %1984 = vmatprep.subr.bf16.mxu0 %v1786
    %1985 = vmatpush1.bf16.msra.mxu0 %v1785
    %1986 = vmatprep.subr.bf16.mxu0 %v1802
    %1987 = vmatpush1.bf16.msra.mxu0 %v1801
    %1988 = vmatprep.subr.bf16.mxu0 %v1818
    %1989 = vmatpush1.bf16.msra.mxu0 %v1817
    %1990 = vmatprep.subr.bf16.mxu0 0
    %1991 = vmatpush1.bf16.msra.mxu0 0
    %1992 = vmatprep.subr.bf16.mxu0 0
    %1993 = vmatpush1.bf16.msra.mxu0 0
    %1994 = vmatprep.subr.bf16.mxu0 0
    %1995 = vmatpush1.bf16.msra.mxu0 0
    %1996 = vmatprep.subr.bf16.mxu0 0
    %1997 = vmatpush1.bf16.msra.mxu0 0
    %1998 = vmatprep.subr.bf16.mxu0 0
    %1999 = vmatpush1.bf16.msra.mxu0 0
    %2000 = vmatprep.subr.bf16.mxu0 0
    %2001 = vmatpush1.bf16.msra.mxu0 0
    %2002 = vmatprep.subr.bf16.mxu0 0
    %2003 = vmatpush1.bf16.msra.mxu0 0
    %2004 = vmatprep.subr.bf16.mxu0 0
    %2005 = vmatpush1.bf16.msra.mxu0 0
    %2006 = vmatprep.subr.bf16.mxu0 0
    %2007 = vmatpush1.bf16.msra.mxu0 0
    %2008 = vmatprep.subr.bf16.mxu0 0
    %2009 = vmatpush1.bf16.msra.mxu0 0
    %2010 = vmatprep.subr.bf16.mxu0 0
    %2011 = vmatpush1.bf16.msra.mxu0 0
    %2012 = vmatprep.subr.bf16.mxu0 0
    %2013 = vmatpush1.bf16.msra.mxu0 0
    %2014 = vmatprep.mubr.bf16.mxu0 0
    %2015 = vmatmul.mubr.bf16.gmra.mrb[0].mxu0 %v1894
    %v2016 = vpop.f32.mrb[0].mxu0
    %v2017 = vadd.f32 %v1512, %v2016
    %v2018 = vpop.f32.mrb[0].mxu0
    %v2019 = vadd.f32 %v1516, %v2018
    %v2020 = vpop.f32.mrb[0].mxu0
    %v2021 = vadd.f32 %v1512, %v2020
    %v2022 = vpop.f32.mrb[0].mxu0
    %v2023 = vadd.f32 %v1516, %v2022
    %2024 = vdwg.mxu0
    %2025 = vmatprep.subr.bf16.mxu0 %v1772
    %2026 = vmatpush1.bf16.msra.mxu0 %v1771
    %2027 = vmatprep.subr.bf16.mxu0 %v1788
    %2028 = vmatpush1.bf16.msra.mxu0 %v1787
    %2029 = vmatprep.subr.bf16.mxu0 %v1804
    %2030 = vmatpush1.bf16.msra.mxu0 %v1803
    %2031 = vmatprep.subr.bf16.mxu0 %v1820
    %2032 = vmatpush1.bf16.msra.mxu0 %v1819
    %2033 = vmatprep.subr.bf16.mxu0 0
    %2034 = vmatpush1.bf16.msra.mxu0 0
    %2035 = vmatprep.subr.bf16.mxu0 0
    %2036 = vmatpush1.bf16.msra.mxu0 0
    %2037 = vmatprep.subr.bf16.mxu0 0
    %2038 = vmatpush1.bf16.msra.mxu0 0
    %2039 = vmatprep.subr.bf16.mxu0 0
    %2040 = vmatpush1.bf16.msra.mxu0 0
    %2041 = vmatprep.subr.bf16.mxu0 0
    %2042 = vmatpush1.bf16.msra.mxu0 0
    %2043 = vmatprep.subr.bf16.mxu0 0
    %2044 = vmatpush1.bf16.msra.mxu0 0
    %2045 = vmatprep.subr.bf16.mxu0 0
    %2046 = vmatpush1.bf16.msra.mxu0 0
    %2047 = vmatprep.subr.bf16.mxu0 0
    %2048 = vmatpush1.bf16.msra.mxu0 0
    %2049 = vmatprep.subr.bf16.mxu0 0
    %2050 = vmatpush1.bf16.msra.mxu0 0
    %2051 = vmatprep.subr.bf16.mxu0 0
    %2052 = vmatpush1.bf16.msra.mxu0 0
    %2053 = vmatprep.subr.bf16.mxu0 0
    %2054 = vmatpush1.bf16.msra.mxu0 0
    %2055 = vmatprep.subr.bf16.mxu0 0
    %2056 = vmatpush1.bf16.msra.mxu0 0
    %2057 = vmatprep.mubr.bf16.mxu0 0
    %2058 = vmatmul.mubr.bf16.gmra.mrb[0].mxu0 %v1894
    %v2059 = vpop.f32.mrb[0].mxu0
    %v2060 = vadd.f32 %v1520, %v2059
    %v2061 = vpop.f32.mrb[0].mxu0
    %v2062 = vadd.f32 %v1524, %v2061
    %v2063 = vpop.f32.mrb[0].mxu0
    %v2064 = vadd.f32 %v1520, %v2063
    %v2065 = vpop.f32.mrb[0].mxu0
    %v2066 = vadd.f32 %v1524, %v2065
    %2067 = vdwg.mxu0
    %2068 = vmatprep.subr.bf16.mxu0 %v1774
    %2069 = vmatpush1.bf16.msra.mxu0 %v1773
    %2070 = vmatprep.subr.bf16.mxu0 %v1790
    %2071 = vmatpush1.bf16.msra.mxu0 %v1789
    %2072 = vmatprep.subr.bf16.mxu0 %v1806
    %2073 = vmatpush1.bf16.msra.mxu0 %v1805
    %2074 = vmatprep.subr.bf16.mxu0 %v1822
    %2075 = vmatpush1.bf16.msra.mxu0 %v1821
    %2076 = vmatprep.subr.bf16.mxu0 0
    %2077 = vmatpush1.bf16.msra.mxu0 0
    %2078 = vmatprep.subr.bf16.mxu0 0
    %2079 = vmatpush1.bf16.msra.mxu0 0
    %2080 = vmatprep.subr.bf16.mxu0 0
    %2081 = vmatpush1.bf16.msra.mxu0 0
    %2082 = vmatprep.subr.bf16.mxu0 0
    %2083 = vmatpush1.bf16.msra.mxu0 0
    %2084 = vmatprep.subr.bf16.mxu0 0
    %2085 = vmatpush1.bf16.msra.mxu0 0
    %2086 = vmatprep.subr.bf16.mxu0 0
    %2087 = vmatpush1.bf16.msra.mxu0 0
    %2088 = vmatprep.subr.bf16.mxu0 0
    %2089 = vmatpush1.bf16.msra.mxu0 0
    %2090 = vmatprep.subr.bf16.mxu0 0
    %2091 = vmatpush1.bf16.msra.mxu0 0
    %2092 = vmatprep.subr.bf16.mxu0 0
    %2093 = vmatpush1.bf16.msra.mxu0 0
    %2094 = vmatprep.subr.bf16.mxu0 0
    %2095 = vmatpush1.bf16.msra.mxu0 0
    %2096 = vmatprep.subr.bf16.mxu0 0
    %2097 = vmatpush1.bf16.msra.mxu0 0
    %2098 = vmatprep.subr.bf16.mxu0 0
    %2099 = vmatpush1.bf16.msra.mxu0 0
    %2100 = vmatprep.mubr.bf16.mxu0 0
    %2101 = vmatmul.mubr.bf16.gmra.mrb[0].mxu0 %v1894
    %v2102 = vpop.f32.mrb[0].mxu0
    %v2103 = vadd.f32 %v1528, %v2102
    %v2104 = vpop.f32.mrb[0].mxu0
    %v2105 = vadd.f32 %v1532, %v2104
    %v2106 = vpop.f32.mrb[0].mxu0
    %v2107 = vadd.f32 %v1528, %v2106
    %v2108 = vpop.f32.mrb[0].mxu0
    %v2109 = vadd.f32 %v1532, %v2108
    %2110 = vdwg.mxu0
    %2111 = vmatprep.subr.bf16.mxu0 %v1776
    %2112 = vmatpush1.bf16.msra.mxu0 %v1775
    %2113 = vmatprep.subr.bf16.mxu0 %v1792
    %2114 = vmatpush1.bf16.msra.mxu0 %v1791
    %2115 = vmatprep.subr.bf16.mxu0 %v1808
    %2116 = vmatpush1.bf16.msra.mxu0 %v1807
    %2117 = vmatprep.subr.bf16.mxu0 %v1824
    %2118 = vmatpush1.bf16.msra.mxu0 %v1823
    %2119 = vmatprep.subr.bf16.mxu0 0
    %2120 = vmatpush1.bf16.msra.mxu0 0
    %2121 = vmatprep.subr.bf16.mxu0 0
    %2122 = vmatpush1.bf16.msra.mxu0 0
    %2123 = vmatprep.subr.bf16.mxu0 0
    %2124 = vmatpush1.bf16.msra.mxu0 0
    %2125 = vmatprep.subr.bf16.mxu0 0
    %2126 = vmatpush1.bf16.msra.mxu0 0
    %2127 = vmatprep.subr.bf16.mxu0 0
    %2128 = vmatpush1.bf16.msra.mxu0 0
    %2129 = vmatprep.subr.bf16.mxu0 0
    %2130 = vmatpush1.bf16.msra.mxu0 0
    %2131 = vmatprep.subr.bf16.mxu0 0
    %2132 = vmatpush1.bf16.msra.mxu0 0
    %2133 = vmatprep.subr.bf16.mxu0 0
    %2134 = vmatpush1.bf16.msra.mxu0 0
    %2135 = vmatprep.subr.bf16.mxu0 0
    %2136 = vmatpush1.bf16.msra.mxu0 0
    %2137 = vmatprep.subr.bf16.mxu0 0
    %2138 = vmatpush1.bf16.msra.mxu0 0
    %2139 = vmatprep.subr.bf16.mxu0 0
    %2140 = vmatpush1.bf16.msra.mxu0 0
    %2141 = vmatprep.subr.bf16.mxu0 0
    %2142 = vmatpush1.bf16.msra.mxu0 0
    %2143 = vmatprep.mubr.bf16.mxu0 0
    %2144 = vmatmul.mubr.bf16.gmra.mrb[0].mxu0 %v1894
    %v2145 = vpop.f32.mrb[0].mxu0
    %v2146 = vadd.f32 %v1536, %v2145
    %v2147 = vpop.f32.mrb[0].mxu0
    %v2148 = vadd.f32 %v1540, %v2147
    %v2149 = vpop.f32.mrb[0].mxu0
    %v2150 = vadd.f32 %v1536, %v2149
    %v2151 = vpop.f32.mrb[0].mxu0
    %v2152 = vadd.f32 %v1540, %v2151
    %2153 = vdwg.mxu0
    %2154 = vmatprep.subr.bf16.mxu0 %v1778
    %2155 = vmatpush1.bf16.msra.mxu0 %v1777
    %2156 = vmatprep.subr.bf16.mxu0 %v1794
    %2157 = vmatpush1.bf16.msra.mxu0 %v1793
    %2158 = vmatprep.subr.bf16.mxu0 %v1810
    %2159 = vmatpush1.bf16.msra.mxu0 %v1809
    %2160 = vmatprep.subr.bf16.mxu0 %v1826
    %2161 = vmatpush1.bf16.msra.mxu0 %v1825
    %2162 = vmatprep.subr.bf16.mxu0 0
    %2163 = vmatpush1.bf16.msra.mxu0 0
    %2164 = vmatprep.subr.bf16.mxu0 0
    %2165 = vmatpush1.bf16.msra.mxu0 0
    %2166 = vmatprep.subr.bf16.mxu0 0
    %2167 = vmatpush1.bf16.msra.mxu0 0
    %2168 = vmatprep.subr.bf16.mxu0 0
    %2169 = vmatpush1.bf16.msra.mxu0 0
    %2170 = vmatprep.subr.bf16.mxu0 0
    %2171 = vmatpush1.bf16.msra.mxu0 0
    %2172 = vmatprep.subr.bf16.mxu0 0
    %2173 = vmatpush1.bf16.msra.mxu0 0
    %2174 = vmatprep.subr.bf16.mxu0 0
    %2175 = vmatpush1.bf16.msra.mxu0 0
    %2176 = vmatprep.subr.bf16.mxu0 0
    %2177 = vmatpush1.bf16.msra.mxu0 0
    %2178 = vmatprep.subr.bf16.mxu0 0
    %2179 = vmatpush1.bf16.msra.mxu0 0
    %2180 = vmatprep.subr.bf16.mxu0 0
    %2181 = vmatpush1.bf16.msra.mxu0 0
    %2182 = vmatprep.subr.bf16.mxu0 0
    %2183 = vmatpush1.bf16.msra.mxu0 0
    %2184 = vmatprep.subr.bf16.mxu0 0
    %2185 = vmatpush1.bf16.msra.mxu0 0
    %2186 = vmatprep.mubr.bf16.mxu0 0
    %2187 = vmatmul.mubr.bf16.gmra.mrb[0].mxu0 %v1894
    %v2188 = vpop.f32.mrb[0].mxu0
    %v2189 = vadd.f32 %v1544, %v2188
    %v2190 = vpop.f32.mrb[0].mxu0
    %v2191 = vadd.f32 %v1548, %v2190
    %v2192 = vpop.f32.mrb[0].mxu0
    %v2193 = vadd.f32 %v1544, %v2192
    %v2194 = vpop.f32.mrb[0].mxu0
    %v2195 = vadd.f32 %v1548, %v2194
    %2196 = vdwg.mxu0
    %2197 = vmatprep.subr.bf16.mxu0 %v1780
    %2198 = vmatpush1.bf16.msra.mxu0 %v1779
    %2199 = vmatprep.subr.bf16.mxu0 %v1796
    %2200 = vmatpush1.bf16.msra.mxu0 %v1795
    %2201 = vmatprep.subr.bf16.mxu0 %v1812
    %2202 = vmatpush1.bf16.msra.mxu0 %v1811
    %2203 = vmatprep.subr.bf16.mxu0 %v1828
    %2204 = vmatpush1.bf16.msra.mxu0 %v1827
    %2205 = vmatprep.subr.bf16.mxu0 0
    %2206 = vmatpush1.bf16.msra.mxu0 0
    %2207 = vmatprep.subr.bf16.mxu0 0
    %2208 = vmatpush1.bf16.msra.mxu0 0
    %2209 = vmatprep.subr.bf16.mxu0 0
    %2210 = vmatpush1.bf16.msra.mxu0 0
    %2211 = vmatprep.subr.bf16.mxu0 0
    %2212 = vmatpush1.bf16.msra.mxu0 0
    %2213 = vmatprep.subr.bf16.mxu0 0
    %2214 = vmatpush1.bf16.msra.mxu0 0
    %2215 = vmatprep.subr.bf16.mxu0 0
    %2216 = vmatpush1.bf16.msra.mxu0 0
    %2217 = vmatprep.subr.bf16.mxu0 0
    %2218 = vmatpush1.bf16.msra.mxu0 0
    %2219 = vmatprep.subr.bf16.mxu0 0
    %2220 = vmatpush1.bf16.msra.mxu0 0
    %2221 = vmatprep.subr.bf16.mxu0 0
    %2222 = vmatpush1.bf16.msra.mxu0 0
    %2223 = vmatprep.subr.bf16.mxu0 0
    %2224 = vmatpush1.bf16.msra.mxu0 0
    %2225 = vmatprep.subr.bf16.mxu0 0
    %2226 = vmatpush1.bf16.msra.mxu0 0
    %2227 = vmatprep.subr.bf16.mxu0 0
    %2228 = vmatpush1.bf16.msra.mxu0 0
    %2229 = vmatprep.mubr.bf16.mxu0 0
    %2230 = vmatmul.mubr.bf16.gmra.mrb[0].mxu0 %v1894
    %v2231 = vpop.f32.mrb[0].mxu0
    %v2232 = vadd.f32 %v1552, %v2231
    %v2233 = vpop.f32.mrb[0].mxu0
    %v2234 = vadd.f32 %v1556, %v2233
    %v2235 = vpop.f32.mrb[0].mxu0
    %v2236 = vadd.f32 %v1552, %v2235
    %v2237 = vpop.f32.mrb[0].mxu0
    %v2238 = vadd.f32 %v1556, %v2237
    %2239 = vdwg.mxu0
    %v2240 = vmax.f32 %v1931, 0.0
    %v2241 = vmax.f32 %v1933, 0.0
    %v2242 = vmax.f32 %v1974, 0.0
    %v2243 = vmax.f32 %v1976, 0.0
    %v2244 = vmax.f32 %v2017, 0.0
    %v2245 = vmax.f32 %v2019, 0.0
    %v2246 = vmax.f32 %v2060, 0.0
    %v2247 = vmax.f32 %v2062, 0.0
    %v2248 = vmax.f32 %v2103, 0.0
    %v2249 = vmax.f32 %v2105, 0.0
    %v2250 = vmax.f32 %v2146, 0.0
    %v2251 = vmax.f32 %v2148, 0.0
    %v2252 = vmax.f32 %v2189, 0.0
    %v2253 = vmax.f32 %v2191, 0.0
    %v2254 = vmax.f32 %v2232, 0.0
    %v2255 = vmax.f32 %v2234, 0.0
    %v2256 = vmax.f32 %v1935, 0.0
    %v2257 = vmax.f32 %v1937, 0.0
    %v2258 = vmax.f32 %v1978, 0.0
    %v2259 = vmax.f32 %v1980, 0.0
    %v2260 = vmax.f32 %v2021, 0.0
    %v2261 = vmax.f32 %v2023, 0.0
    %v2262 = vmax.f32 %v2064, 0.0
    %v2263 = vmax.f32 %v2066, 0.0
    %v2264 = vmax.f32 %v2107, 0.0
    %v2265 = vmax.f32 %v2109, 0.0
    %v2266 = vmax.f32 %v2150, 0.0
    %v2267 = vmax.f32 %v2152, 0.0
    %v2268 = vmax.f32 %v2193, 0.0
    %v2269 = vmax.f32 %v2195, 0.0
    %v2270 = vmax.f32 %v2236, 0.0
    %v2271 = vmax.f32 %v2238, 0.0
    %v2272 = vpack.c.bf16 %v2256, %v2240
    %v2273 = vpack.c.bf16 %v2257, %v2241
    %v2274 = vpack.c.bf16 %v2258, %v2242
    %v2275 = vpack.c.bf16 %v2259, %v2243
    %v2276 = vpack.c.bf16 %v2260, %v2244
    %v2277 = vpack.c.bf16 %v2261, %v2245
    %v2278 = vpack.c.bf16 %v2262, %v2246
    %v2279 = vpack.c.bf16 %v2263, %v2247
    %v2280 = vpack.c.bf16 %v2264, %v2248
    %v2281 = vpack.c.bf16 %v2265, %v2249
    %v2282 = vpack.c.bf16 %v2266, %v2250
    %v2283 = vpack.c.bf16 %v2267, %v2251
    %v2284 = vpack.c.bf16 %v2268, %v2252
    %v2285 = vpack.c.bf16 %v2269, %v2253
    %v2286 = vpack.c.bf16 %v2270, %v2254
    %v2287 = vpack.c.bf16 %v2271, %v2255
    %v2288 = vld [vmem:[%s31] sm:$0xf]
    %v2289 = vld [vmem:[%s31 + $0x4] sm:$0xf]
    %v2290 = vld [vmem:[%s31 + $0x8] sm:$0xf]
    %v2291 = vld [vmem:[%s31 + $0xc] sm:$0xf]
    %v2292 = vld [vmem:[%s31 + $0x10] sm:$0xf]
    %v2293 = vld [vmem:[%s31 + $0x14] sm:$0xf]
    %v2294 = vld [vmem:[%s31 + $0x18] sm:$0xf]
    %v2295 = vld [vmem:[%s31 + $0x1c] sm:$0xf]
    %v2296 = vld [vmem:[%s31 + $0x20] sm:$0xf]
    %v2297 = vld [vmem:[%s31 + $0x24] sm:$0xf]
    %v2298 = vld [vmem:[%s31 + $0x28] sm:$0xf]
    %v2299 = vld [vmem:[%s31 + $0x2c] sm:$0xf]
    %v2300 = vld [vmem:[%s31 + $0x30] sm:$0xf]
    %v2301 = vld [vmem:[%s31 + $0x34] sm:$0xf]
    %v2302 = vld [vmem:[%s31 + $0x38] sm:$0xf]
    %v2303 = vld [vmem:[%s31 + $0x3c] sm:$0xf]
    %v2304 = vld [vmem:[%s31 + $0x40] sm:$0xf]
    %v2305 = vld [vmem:[%s31 + $0x44] sm:$0xf]
    %v2306 = vld [vmem:[%s31 + $0x48] sm:$0xf]
    %v2307 = vld [vmem:[%s31 + $0x4c] sm:$0xf]
    %v2308 = vld [vmem:[%s31 + $0x50] sm:$0xf]
    %v2309 = vld [vmem:[%s31 + $0x54] sm:$0xf]
    %v2310 = vld [vmem:[%s31 + $0x58] sm:$0xf]
    %v2311 = vld [vmem:[%s31 + $0x5c] sm:$0xf]
    %v2312 = vld [vmem:[%s31 + $0x60] sm:$0xf]
    %v2313 = vld [vmem:[%s31 + $0x64] sm:$0xf]
    %v2314 = vld [vmem:[%s31 + $0x68] sm:$0xf]
    %v2315 = vld [vmem:[%s31 + $0x6c] sm:$0xf]
    %v2316 = vld [vmem:[%s31 + $0x70] sm:$0xf]
    %v2317 = vld [vmem:[%s31 + $0x74] sm:$0xf]
    %v2318 = vld [vmem:[%s31 + $0x78] sm:$0xf]
    %v2319 = vld [vmem:[%s31 + $0x7c] sm:$0xf]
    %v2320 = vld [vmem:[%s31 + $0x80] sm:$0xf]
    %v2321 = vld [vmem:[%s31 + $0x84] sm:$0xf]
    %v2322 = vld [vmem:[%s31 + $0x88] sm:$0xf]
    %v2323 = vld [vmem:[%s31 + $0x8c] sm:$0xf]
    %v2324 = vld [vmem:[%s31 + $0x90] sm:$0xf]
    %v2325 = vld [vmem:[%s31 + $0x94] sm:$0xf]
    %v2326 = vld [vmem:[%s31 + $0x98] sm:$0xf]
    %v2327 = vld [vmem:[%s31 + $0x9c] sm:$0xf]
    %v2328 = vld [vmem:[%s31 + $0xa0] sm:$0xf]
    %v2329 = vld [vmem:[%s31 + $0xa4] sm:$0xf]
    %v2330 = vld [vmem:[%s31 + $0xa8] sm:$0xf]
    %v2331 = vld [vmem:[%s31 + $0xac] sm:$0xf]
    %v2332 = vld [vmem:[%s31 + $0xb0] sm:$0xf]
    %v2333 = vld [vmem:[%s31 + $0xb4] sm:$0xf]
    %v2334 = vld [vmem:[%s31 + $0xb8] sm:$0xf]
    %v2335 = vld [vmem:[%s31 + $0xbc] sm:$0xf]
    %v2336 = vld [vmem:[%s31 + $0xc0] sm:$0xf]
    %v2337 = vld [vmem:[%s31 + $0xc4] sm:$0xf]
    %v2338 = vld [vmem:[%s31 + $0xc8] sm:$0xf]
    %v2339 = vld [vmem:[%s31 + $0xcc] sm:$0xf]
    %v2340 = vld [vmem:[%s31 + $0xd0] sm:$0xf]
    %v2341 = vld [vmem:[%s31 + $0xd4] sm:$0xf]
    %v2342 = vld [vmem:[%s31 + $0xd8] sm:$0xf]
    %v2343 = vld [vmem:[%s31 + $0xdc] sm:$0xf]
    %v2344 = vld [vmem:[%s31 + $0xe0] sm:$0xf]
    %v2345 = vld [vmem:[%s31 + $0xe4] sm:$0xf]
    %v2346 = vld [vmem:[%s31 + $0xe8] sm:$0xf]
    %v2347 = vld [vmem:[%s31 + $0xec] sm:$0xf]
    %v2348 = vld [vmem:[%s31 + $0xf0] sm:$0xf]
    %v2349 = vld [vmem:[%s31 + $0xf4] sm:$0xf]
    %v2350 = vld [vmem:[%s31 + $0xf8] sm:$0xf]
    %v2351 = vld [vmem:[%s31 + $0xfc] sm:$0xf]
    %v2352 = vld [vmem:[%s31 + $0x100] sm:$0xf]
    %v2353 = vld [vmem:[%s31 + $0x104] sm:$0xf]
    %v2354 = vld [vmem:[%s31 + $0x108] sm:$0xf]
    %v2355 = vld [vmem:[%s31 + $0x10c] sm:$0xf]
    %v2356 = vld [vmem:[%s31 + $0x110] sm:$0xf]
    %v2357 = vld [vmem:[%s31 + $0x114] sm:$0xf]
    %v2358 = vld [vmem:[%s31 + $0x118] sm:$0xf]
    %v2359 = vld [vmem:[%s31 + $0x11c] sm:$0xf]
    %v2360 = vld [vmem:[%s31 + $0x120] sm:$0xf]
    %v2361 = vld [vmem:[%s31 + $0x124] sm:$0xf]
    %v2362 = vld [vmem:[%s31 + $0x128] sm:$0xf]
    %v2363 = vld [vmem:[%s31 + $0x12c] sm:$0xf]
    %v2364 = vld [vmem:[%s31 + $0x130] sm:$0xf]
    %v2365 = vld [vmem:[%s31 + $0x134] sm:$0xf]
    %v2366 = vld [vmem:[%s31 + $0x138] sm:$0xf]
    %v2367 = vld [vmem:[%s31 + $0x13c] sm:$0xf]
    %v2368 = vld [vmem:[%s31 + $0x140] sm:$0xf]
    %v2369 = vld [vmem:[%s31 + $0x144] sm:$0xf]
    %v2370 = vld [vmem:[%s31 + $0x148] sm:$0xf]
    %v2371 = vld [vmem:[%s31 + $0x14c] sm:$0xf]
    %v2372 = vld [vmem:[%s31 + $0x150] sm:$0xf]
    %v2373 = vld [vmem:[%s31 + $0x154] sm:$0xf]
    %v2374 = vld [vmem:[%s31 + $0x158] sm:$0xf]
    %v2375 = vld [vmem:[%s31 + $0x15c] sm:$0xf]
    %v2376 = vld [vmem:[%s31 + $0x160] sm:$0xf]
    %v2377 = vld [vmem:[%s31 + $0x164] sm:$0xf]
    %v2378 = vld [vmem:[%s31 + $0x168] sm:$0xf]
    %v2379 = vld [vmem:[%s31 + $0x16c] sm:$0xf]
    %v2380 = vld [vmem:[%s31 + $0x170] sm:$0xf]
    %v2381 = vld [vmem:[%s31 + $0x174] sm:$0xf]
    %v2382 = vld [vmem:[%s31 + $0x178] sm:$0xf]
    %v2383 = vld [vmem:[%s31 + $0x17c] sm:$0xf]
    %v2384 = vld [vmem:[%s31 + $0x180] sm:$0xf]
    %v2385 = vld [vmem:[%s31 + $0x184] sm:$0xf]
    %v2386 = vld [vmem:[%s31 + $0x188] sm:$0xf]
    %v2387 = vld [vmem:[%s31 + $0x18c] sm:$0xf]
    %v2388 = vld [vmem:[%s31 + $0x190] sm:$0xf]
    %v2389 = vld [vmem:[%s31 + $0x194] sm:$0xf]
    %v2390 = vld [vmem:[%s31 + $0x198] sm:$0xf]
    %v2391 = vld [vmem:[%s31 + $0x19c] sm:$0xf]
    %v2392 = vld [vmem:[%s31 + $0x1a0] sm:$0xf]
    %v2393 = vld [vmem:[%s31 + $0x1a4] sm:$0xf]
    %v2394 = vld [vmem:[%s31 + $0x1a8] sm:$0xf]
    %v2395 = vld [vmem:[%s31 + $0x1ac] sm:$0xf]
    %v2396 = vld [vmem:[%s31 + $0x1b0] sm:$0xf]
    %v2397 = vld [vmem:[%s31 + $0x1b4] sm:$0xf]
    %v2398 = vld [vmem:[%s31 + $0x1b8] sm:$0xf]
    %v2399 = vld [vmem:[%s31 + $0x1bc] sm:$0xf]
    %v2400 = vld [vmem:[%s31 + $0x1c0] sm:$0xf]
    %v2401 = vld [vmem:[%s31 + $0x1c4] sm:$0xf]
    %v2402 = vld [vmem:[%s31 + $0x1c8] sm:$0xf]
    %v2403 = vld [vmem:[%s31 + $0x1cc] sm:$0xf]
    %v2404 = vld [vmem:[%s31 + $0x1d0] sm:$0xf]
    %v2405 = vld [vmem:[%s31 + $0x1d4] sm:$0xf]
    %v2406 = vld [vmem:[%s31 + $0x1d8] sm:$0xf]
    %v2407 = vld [vmem:[%s31 + $0x1dc] sm:$0xf]
    %v2408 = vld [vmem:[%s31 + $0x1e0] sm:$0xf]
    %v2409 = vld [vmem:[%s31 + $0x1e4] sm:$0xf]
    %v2410 = vld [vmem:[%s31 + $0x1e8] sm:$0xf]
    %v2411 = vld [vmem:[%s31 + $0x1ec] sm:$0xf]
    %v2412 = vld [vmem:[%s31 + $0x1f0] sm:$0xf]
    %v2413 = vld [vmem:[%s31 + $0x1f4] sm:$0xf]
    %v2414 = vld [vmem:[%s31 + $0x1f8] sm:$0xf]
    %v2415 = vld [vmem:[%s31 + $0x1fc] sm:$0xf]
    %v2416 = vld [vmem:[%s31 + $0x200] sm:$0xf]
    %v2417 = vld [vmem:[%s31 + $0x204] sm:$0xf]
    %v2418 = vld [vmem:[%s31 + $0x208] sm:$0xf]
    %v2419 = vld [vmem:[%s31 + $0x20c] sm:$0xf]
    %v2420 = vld [vmem:[%s31 + $0x210] sm:$0xf]
    %v2421 = vld [vmem:[%s31 + $0x214] sm:$0xf]
    %v2422 = vld [vmem:[%s31 + $0x218] sm:$0xf]
    %v2423 = vld [vmem:[%s31 + $0x21c] sm:$0xf]
    %v2424 = vld [vmem:[%s31 + $0x220] sm:$0xf]
    %v2425 = vld [vmem:[%s31 + $0x224] sm:$0xf]
    %v2426 = vld [vmem:[%s31 + $0x228] sm:$0xf]
    %v2427 = vld [vmem:[%s31 + $0x22c] sm:$0xf]
    %v2428 = vld [vmem:[%s31 + $0x230] sm:$0xf]
    %v2429 = vld [vmem:[%s31 + $0x234] sm:$0xf]
    %v2430 = vld [vmem:[%s31 + $0x238] sm:$0xf]
    %v2431 = vld [vmem:[%s31 + $0x23c] sm:$0xf]
    %v2432 = vld [vmem:[%s31 + $0x240] sm:$0xf]
    %v2433 = vld [vmem:[%s31 + $0x244] sm:$0xf]
    %v2434 = vld [vmem:[%s31 + $0x248] sm:$0xf]
    %v2435 = vld [vmem:[%s31 + $0x24c] sm:$0xf]
    %v2436 = vld [vmem:[%s31 + $0x250] sm:$0xf]
    %v2437 = vld [vmem:[%s31 + $0x254] sm:$0xf]
    %v2438 = vld [vmem:[%s31 + $0x258] sm:$0xf]
    %v2439 = vld [vmem:[%s31 + $0x25c] sm:$0xf]
    %v2440 = vld [vmem:[%s31 + $0x260] sm:$0xf]
    %v2441 = vld [vmem:[%s31 + $0x264] sm:$0xf]
    %v2442 = vld [vmem:[%s31 + $0x268] sm:$0xf]
    %v2443 = vld [vmem:[%s31 + $0x26c] sm:$0xf]
    %v2444 = vld [vmem:[%s31 + $0x270] sm:$0xf]
    %v2445 = vld [vmem:[%s31 + $0x274] sm:$0xf]
    %v2446 = vld [vmem:[%s31 + $0x278] sm:$0xf]
    %v2447 = vld [vmem:[%s31 + $0x27c] sm:$0xf]
    %v2448 = vld [vmem:[%s31 + $0x280] sm:$0xf]
    %v2449 = vld [vmem:[%s31 + $0x284] sm:$0xf]
    %v2450 = vld [vmem:[%s31 + $0x288] sm:$0xf]
    %v2451 = vld [vmem:[%s31 + $0x28c] sm:$0xf]
    %v2452 = vld [vmem:[%s31 + $0x290] sm:$0xf]
    %v2453 = vld [vmem:[%s31 + $0x294] sm:$0xf]
    %v2454 = vld [vmem:[%s31 + $0x298] sm:$0xf]
    %v2455 = vld [vmem:[%s31 + $0x29c] sm:$0xf]
    %v2456 = vld [vmem:[%s31 + $0x2a0] sm:$0xf]
    %v2457 = vld [vmem:[%s31 + $0x2a4] sm:$0xf]
    %v2458 = vld [vmem:[%s31 + $0x2a8] sm:$0xf]
    %v2459 = vld [vmem:[%s31 + $0x2ac] sm:$0xf]
    %v2460 = vld [vmem:[%s31 + $0x2b0] sm:$0xf]
    %v2461 = vld [vmem:[%s31 + $0x2b4] sm:$0xf]
    %v2462 = vld [vmem:[%s31 + $0x2b8] sm:$0xf]
    %v2463 = vld [vmem:[%s31 + $0x2bc] sm:$0xf]
    %v2464 = vld [vmem:[%s31 + $0x2c0] sm:$0xf]
    %v2465 = vld [vmem:[%s31 + $0x2c4] sm:$0xf]
    %v2466 = vld [vmem:[%s31 + $0x2c8] sm:$0xf]
    %v2467 = vld [vmem:[%s31 + $0x2cc] sm:$0xf]
    %v2468 = vld [vmem:[%s31 + $0x2d0] sm:$0xf]
    %v2469 = vld [vmem:[%s31 + $0x2d4] sm:$0xf]
    %v2470 = vld [vmem:[%s31 + $0x2d8] sm:$0xf]
    %v2471 = vld [vmem:[%s31 + $0x2dc] sm:$0xf]
    %v2472 = vld [vmem:[%s31 + $0x2e0] sm:$0xf]
    %v2473 = vld [vmem:[%s31 + $0x2e4] sm:$0xf]
    %v2474 = vld [vmem:[%s31 + $0x2e8] sm:$0xf]
    %v2475 = vld [vmem:[%s31 + $0x2ec] sm:$0xf]
    %v2476 = vld [vmem:[%s31 + $0x2f0] sm:$0xf]
    %v2477 = vld [vmem:[%s31 + $0x2f4] sm:$0xf]
    %v2478 = vld [vmem:[%s31 + $0x2f8] sm:$0xf]
    %v2479 = vld [vmem:[%s31 + $0x2fc] sm:$0xf]
    %v2480 = vld [vmem:[%s31 + $0x300] sm:$0xf]
    %v2481 = vld [vmem:[%s31 + $0x304] sm:$0xf]
    %v2482 = vld [vmem:[%s31 + $0x308] sm:$0xf]
    %v2483 = vld [vmem:[%s31 + $0x30c] sm:$0xf]
    %v2484 = vld [vmem:[%s31 + $0x310] sm:$0xf]
    %v2485 = vld [vmem:[%s31 + $0x314] sm:$0xf]
    %v2486 = vld [vmem:[%s31 + $0x318] sm:$0xf]
    %v2487 = vld [vmem:[%s31 + $0x31c] sm:$0xf]
    %v2488 = vld [vmem:[%s31 + $0x320] sm:$0xf]
    %v2489 = vld [vmem:[%s31 + $0x324] sm:$0xf]
    %v2490 = vld [vmem:[%s31 + $0x328] sm:$0xf]
    %v2491 = vld [vmem:[%s31 + $0x32c] sm:$0xf]
    %v2492 = vld [vmem:[%s31 + $0x330] sm:$0xf]
    %v2493 = vld [vmem:[%s31 + $0x334] sm:$0xf]
    %v2494 = vld [vmem:[%s31 + $0x338] sm:$0xf]
    %v2495 = vld [vmem:[%s31 + $0x33c] sm:$0xf]
    %v2496 = vld [vmem:[%s31 + $0x340] sm:$0xf]
    %v2497 = vld [vmem:[%s31 + $0x344] sm:$0xf]
    %v2498 = vld [vmem:[%s31 + $0x348] sm:$0xf]
    %v2499 = vld [vmem:[%s31 + $0x34c] sm:$0xf]
    %v2500 = vld [vmem:[%s31 + $0x350] sm:$0xf]
    %v2501 = vld [vmem:[%s31 + $0x354] sm:$0xf]
    %v2502 = vld [vmem:[%s31 + $0x358] sm:$0xf]
    %v2503 = vld [vmem:[%s31 + $0x35c] sm:$0xf]
    %v2504 = vld [vmem:[%s31 + $0x360] sm:$0xf]
    %v2505 = vld [vmem:[%s31 + $0x364] sm:$0xf]
    %v2506 = vld [vmem:[%s31 + $0x368] sm:$0xf]
    %v2507 = vld [vmem:[%s31 + $0x36c] sm:$0xf]
    %v2508 = vld [vmem:[%s31 + $0x370] sm:$0xf]
    %v2509 = vld [vmem:[%s31 + $0x374] sm:$0xf]
    %v2510 = vld [vmem:[%s31 + $0x378] sm:$0xf]
    %v2511 = vld [vmem:[%s31 + $0x37c] sm:$0xf]
    %v2512 = vld [vmem:[%s31 + $0x380] sm:$0xf]
    %v2513 = vld [vmem:[%s31 + $0x384] sm:$0xf]
    %v2514 = vld [vmem:[%s31 + $0x388] sm:$0xf]
    %v2515 = vld [vmem:[%s31 + $0x38c] sm:$0xf]
    %v2516 = vld [vmem:[%s31 + $0x390] sm:$0xf]
    %v2517 = vld [vmem:[%s31 + $0x394] sm:$0xf]
    %v2518 = vld [vmem:[%s31 + $0x398] sm:$0xf]
    %v2519 = vld [vmem:[%s31 + $0x39c] sm:$0xf]
    %v2520 = vld [vmem:[%s31 + $0x3a0] sm:$0xf]
    %v2521 = vld [vmem:[%s31 + $0x3a4] sm:$0xf]
    %v2522 = vld [vmem:[%s31 + $0x3a8] sm:$0xf]
    %v2523 = vld [vmem:[%s31 + $0x3ac] sm:$0xf]
    %v2524 = vld [vmem:[%s31 + $0x3b0] sm:$0xf]
    %v2525 = vld [vmem:[%s31 + $0x3b4] sm:$0xf]
    %v2526 = vld [vmem:[%s31 + $0x3b8] sm:$0xf]
    %v2527 = vld [vmem:[%s31 + $0x3bc] sm:$0xf]
    %v2528 = vld [vmem:[%s31 + $0x3c0] sm:$0xf]
    %v2529 = vld [vmem:[%s31 + $0x3c4] sm:$0xf]
    %v2530 = vld [vmem:[%s31 + $0x3c8] sm:$0xf]
    %v2531 = vld [vmem:[%s31 + $0x3cc] sm:$0xf]
    %v2532 = vld [vmem:[%s31 + $0x3d0] sm:$0xf]
    %v2533 = vld [vmem:[%s31 + $0x3d4] sm:$0xf]
    %v2534 = vld [vmem:[%s31 + $0x3d8] sm:$0xf]
    %v2535 = vld [vmem:[%s31 + $0x3dc] sm:$0xf]
    %v2536 = vld [vmem:[%s31 + $0x3e0] sm:$0xf]
    %v2537 = vld [vmem:[%s31 + $0x3e4] sm:$0xf]
    %v2538 = vld [vmem:[%s31 + $0x3e8] sm:$0xf]
    %v2539 = vld [vmem:[%s31 + $0x3ec] sm:$0xf]
    %v2540 = vld [vmem:[%s31 + $0x3f0] sm:$0xf]
    %v2541 = vld [vmem:[%s31 + $0x3f4] sm:$0xf]
    %v2542 = vld [vmem:[%s31 + $0x3f8] sm:$0xf]
    %v2543 = vld [vmem:[%s31 + $0x3fc] sm:$0xf]
    %v2544 = vld [vmem:[%s33] sm:$0x1]
    %v2546 = vlaneseq
    %v2547 = vshrl.u32 %v2546, 7
    %v2548 = vsub.s32 0, %v2547
    %v2549 = vrot.slane %v2544, %v2548
    %v2807 = vunpack.c.l.b16 %v2288
    %v2808 = vunpack.c.l.b16 %v2289
    %v2809 = vunpack.c.l.b16 %v2290
    %v2810 = vunpack.c.l.b16 %v2291
    %v2811 = vunpack.c.l.b16 %v2292
    %v2812 = vunpack.c.l.b16 %v2293
    %v2813 = vunpack.c.l.b16 %v2294
    %v2814 = vunpack.c.l.b16 %v2295
    %v2815 = vunpack.c.l.b16 %v2296
    %v2816 = vunpack.c.l.b16 %v2297
    %v2817 = vunpack.c.l.b16 %v2298
    %v2818 = vunpack.c.l.b16 %v2299
    %v2819 = vunpack.c.l.b16 %v2300
    %v2820 = vunpack.c.l.b16 %v2301
    %v2821 = vunpack.c.l.b16 %v2302
    %v2822 = vunpack.c.l.b16 %v2303
    %v2823 = vunpack.c.l.b16 %v2304
    %v2824 = vunpack.c.l.b16 %v2305
    %v2825 = vunpack.c.l.b16 %v2306
    %v2826 = vunpack.c.l.b16 %v2307
    %v2827 = vunpack.c.l.b16 %v2308
    %v2828 = vunpack.c.l.b16 %v2309
    %v2829 = vunpack.c.l.b16 %v2310
    %v2830 = vunpack.c.l.b16 %v2311
    %v2831 = vunpack.c.l.b16 %v2312
    %v2832 = vunpack.c.l.b16 %v2313
    %v2833 = vunpack.c.l.b16 %v2314
    %v2834 = vunpack.c.l.b16 %v2315
    %v2835 = vunpack.c.l.b16 %v2316
    %v2836 = vunpack.c.l.b16 %v2317
    %v2837 = vunpack.c.l.b16 %v2318
    %v2838 = vunpack.c.l.b16 %v2319
    %v2839 = vunpack.c.l.b16 %v2320
    %v2840 = vunpack.c.l.b16 %v2321
    %v2841 = vunpack.c.l.b16 %v2322
    %v2842 = vunpack.c.l.b16 %v2323
    %v2843 = vunpack.c.l.b16 %v2324
    %v2844 = vunpack.c.l.b16 %v2325
    %v2845 = vunpack.c.l.b16 %v2326
    %v2846 = vunpack.c.l.b16 %v2327
    %v2847 = vunpack.c.l.b16 %v2328
    %v2848 = vunpack.c.l.b16 %v2329
    %v2849 = vunpack.c.l.b16 %v2330
    %v2850 = vunpack.c.l.b16 %v2331
    %v2851 = vunpack.c.l.b16 %v2332
    %v2852 = vunpack.c.l.b16 %v2333
    %v2853 = vunpack.c.l.b16 %v2334
    %v2854 = vunpack.c.l.b16 %v2335
    %v2855 = vunpack.c.l.b16 %v2336
    %v2856 = vunpack.c.l.b16 %v2337
    %v2857 = vunpack.c.l.b16 %v2338
    %v2858 = vunpack.c.l.b16 %v2339
    %v2859 = vunpack.c.l.b16 %v2340
    %v2860 = vunpack.c.l.b16 %v2341
    %v2861 = vunpack.c.l.b16 %v2342
    %v2862 = vunpack.c.l.b16 %v2343
    %v2863 = vunpack.c.l.b16 %v2344
    %v2864 = vunpack.c.l.b16 %v2345
    %v2865 = vunpack.c.l.b16 %v2346
    %v2866 = vunpack.c.l.b16 %v2347
    %v2867 = vunpack.c.l.b16 %v2348
    %v2868 = vunpack.c.l.b16 %v2349
    %v2869 = vunpack.c.l.b16 %v2350
    %v2870 = vunpack.c.l.b16 %v2351
    %v2871 = vunpack.c.l.b16 %v2352
    %v2872 = vunpack.c.l.b16 %v2353
    %v2873 = vunpack.c.l.b16 %v2354
    %v2874 = vunpack.c.l.b16 %v2355
    %v2875 = vunpack.c.l.b16 %v2356
    %v2876 = vunpack.c.l.b16 %v2357
    %v2877 = vunpack.c.l.b16 %v2358
    %v2878 = vunpack.c.l.b16 %v2359
    %v2879 = vunpack.c.l.b16 %v2360
    %v2880 = vunpack.c.l.b16 %v2361
    %v2881 = vunpack.c.l.b16 %v2362
    %v2882 = vunpack.c.l.b16 %v2363
    %v2883 = vunpack.c.l.b16 %v2364
    %v2884 = vunpack.c.l.b16 %v2365
    %v2885 = vunpack.c.l.b16 %v2366
    %v2886 = vunpack.c.l.b16 %v2367
    %v2887 = vunpack.c.l.b16 %v2368
    %v2888 = vunpack.c.l.b16 %v2369
    %v2889 = vunpack.c.l.b16 %v2370
    %v2890 = vunpack.c.l.b16 %v2371
    %v2891 = vunpack.c.l.b16 %v2372
    %v2892 = vunpack.c.l.b16 %v2373
    %v2893 = vunpack.c.l.b16 %v2374
    %v2894 = vunpack.c.l.b16 %v2375
    %v2895 = vunpack.c.l.b16 %v2376
    %v2896 = vunpack.c.l.b16 %v2377
    %v2897 = vunpack.c.l.b16 %v2378
    %v2898 = vunpack.c.l.b16 %v2379
    %v2899 = vunpack.c.l.b16 %v2380
    %v2900 = vunpack.c.l.b16 %v2381
    %v2901 = vunpack.c.l.b16 %v2382
    %v2902 = vunpack.c.l.b16 %v2383
    %v2903 = vunpack.c.l.b16 %v2384
    %v2904 = vunpack.c.l.b16 %v2385
    %v2905 = vunpack.c.l.b16 %v2386
    %v2906 = vunpack.c.l.b16 %v2387
    %v2907 = vunpack.c.l.b16 %v2388
    %v2908 = vunpack.c.l.b16 %v2389
    %v2909 = vunpack.c.l.b16 %v2390
    %v2910 = vunpack.c.l.b16 %v2391
    %v2911 = vunpack.c.l.b16 %v2392
    %v2912 = vunpack.c.l.b16 %v2393
    %v2913 = vunpack.c.l.b16 %v2394
    %v2914 = vunpack.c.l.b16 %v2395
    %v2915 = vunpack.c.l.b16 %v2396
    %v2916 = vunpack.c.l.b16 %v2397
    %v2917 = vunpack.c.l.b16 %v2398
    %v2918 = vunpack.c.l.b16 %v2399
    %v2919 = vunpack.c.l.b16 %v2400
    %v2920 = vunpack.c.l.b16 %v2401
    %v2921 = vunpack.c.l.b16 %v2402
    %v2922 = vunpack.c.l.b16 %v2403
    %v2923 = vunpack.c.l.b16 %v2404
    %v2924 = vunpack.c.l.b16 %v2405
    %v2925 = vunpack.c.l.b16 %v2406
    %v2926 = vunpack.c.l.b16 %v2407
    %v2927 = vunpack.c.l.b16 %v2408
    %v2928 = vunpack.c.l.b16 %v2409
    %v2929 = vunpack.c.l.b16 %v2410
    %v2930 = vunpack.c.l.b16 %v2411
    %v2931 = vunpack.c.l.b16 %v2412
    %v2932 = vunpack.c.l.b16 %v2413
    %v2933 = vunpack.c.l.b16 %v2414
    %v2934 = vunpack.c.l.b16 %v2415
    %v2935 = vunpack.c.l.b16 %v2416
    %v2936 = vunpack.c.l.b16 %v2417
    %v2937 = vunpack.c.l.b16 %v2418
    %v2938 = vunpack.c.l.b16 %v2419
    %v2939 = vunpack.c.l.b16 %v2420
    %v2940 = vunpack.c.l.b16 %v2421
    %v2941 = vunpack.c.l.b16 %v2422
    %v2942 = vunpack.c.l.b16 %v2423
    %v2943 = vunpack.c.l.b16 %v2424
    %v2944 = vunpack.c.l.b16 %v2425
    %v2945 = vunpack.c.l.b16 %v2426
    %v2946 = vunpack.c.l.b16 %v2427
    %v2947 = vunpack.c.l.b16 %v2428
    %v2948 = vunpack.c.l.b16 %v2429
    %v2949 = vunpack.c.l.b16 %v2430
    %v2950 = vunpack.c.l.b16 %v2431
    %v2951 = vunpack.c.l.b16 %v2432
    %v2952 = vunpack.c.l.b16 %v2433
    %v2953 = vunpack.c.l.b16 %v2434
    %v2954 = vunpack.c.l.b16 %v2435
    %v2955 = vunpack.c.l.b16 %v2436
    %v2956 = vunpack.c.l.b16 %v2437
    %v2957 = vunpack.c.l.b16 %v2438
    %v2958 = vunpack.c.l.b16 %v2439
    %v2959 = vunpack.c.l.b16 %v2440
    %v2960 = vunpack.c.l.b16 %v2441
    %v2961 = vunpack.c.l.b16 %v2442
    %v2962 = vunpack.c.l.b16 %v2443
    %v2963 = vunpack.c.l.b16 %v2444
    %v2964 = vunpack.c.l.b16 %v2445
    %v2965 = vunpack.c.l.b16 %v2446
    %v2966 = vunpack.c.l.b16 %v2447
    %v2967 = vunpack.c.l.b16 %v2448
    %v2968 = vunpack.c.l.b16 %v2449
    %v2969 = vunpack.c.l.b16 %v2450
    %v2970 = vunpack.c.l.b16 %v2451
    %v2971 = vunpack.c.l.b16 %v2452
    %v2972 = vunpack.c.l.b16 %v2453
    %v2973 = vunpack.c.l.b16 %v2454
    %v2974 = vunpack.c.l.b16 %v2455
    %v2975 = vunpack.c.l.b16 %v2456
    %v2976 = vunpack.c.l.b16 %v2457
    %v2977 = vunpack.c.l.b16 %v2458
    %v2978 = vunpack.c.l.b16 %v2459
    %v2979 = vunpack.c.l.b16 %v2460
    %v2980 = vunpack.c.l.b16 %v2461
    %v2981 = vunpack.c.l.b16 %v2462
    %v2982 = vunpack.c.l.b16 %v2463
    %v2983 = vunpack.c.l.b16 %v2464
    %v2984 = vunpack.c.l.b16 %v2465
    %v2985 = vunpack.c.l.b16 %v2466
    %v2986 = vunpack.c.l.b16 %v2467
    %v2987 = vunpack.c.l.b16 %v2468
    %v2988 = vunpack.c.l.b16 %v2469
    %v2989 = vunpack.c.l.b16 %v2470
    %v2990 = vunpack.c.l.b16 %v2471
    %v2991 = vunpack.c.l.b16 %v2472
    %v2992 = vunpack.c.l.b16 %v2473
    %v2993 = vunpack.c.l.b16 %v2474
    %v2994 = vunpack.c.l.b16 %v2475
    %v2995 = vunpack.c.l.b16 %v2476
    %v2996 = vunpack.c.l.b16 %v2477
    %v2997 = vunpack.c.l.b16 %v2478
    %v2998 = vunpack.c.l.b16 %v2479
    %v2999 = vunpack.c.l.b16 %v2480
    %v3000 = vunpack.c.l.b16 %v2481
    %v3001 = vunpack.c.l.b16 %v2482
    %v3002 = vunpack.c.l.b16 %v2483
    %v3003 = vunpack.c.l.b16 %v2484
    %v3004 = vunpack.c.l.b16 %v2485
    %v3005 = vunpack.c.l.b16 %v2486
    %v3006 = vunpack.c.l.b16 %v2487
    %v3007 = vunpack.c.l.b16 %v2488
    %v3008 = vunpack.c.l.b16 %v2489
    %v3009 = vunpack.c.l.b16 %v2490
    %v3010 = vunpack.c.l.b16 %v2491
    %v3011 = vunpack.c.l.b16 %v2492
    %v3012 = vunpack.c.l.b16 %v2493
    %v3013 = vunpack.c.l.b16 %v2494
    %v3014 = vunpack.c.l.b16 %v2495
    %v3015 = vunpack.c.l.b16 %v2496
    %v3016 = vunpack.c.l.b16 %v2497
    %v3017 = vunpack.c.l.b16 %v2498
    %v3018 = vunpack.c.l.b16 %v2499
    %v3019 = vunpack.c.l.b16 %v2500
    %v3020 = vunpack.c.l.b16 %v2501
    %v3021 = vunpack.c.l.b16 %v2502
    %v3022 = vunpack.c.l.b16 %v2503
    %v3023 = vunpack.c.l.b16 %v2504
    %v3024 = vunpack.c.l.b16 %v2505
    %v3025 = vunpack.c.l.b16 %v2506
    %v3026 = vunpack.c.l.b16 %v2507
    %v3027 = vunpack.c.l.b16 %v2508
    %v3028 = vunpack.c.l.b16 %v2509
    %v3029 = vunpack.c.l.b16 %v2510
    %v3030 = vunpack.c.l.b16 %v2511
    %v3031 = vunpack.c.l.b16 %v2512
    %v3032 = vunpack.c.l.b16 %v2513
    %v3033 = vunpack.c.l.b16 %v2514
    %v3034 = vunpack.c.l.b16 %v2515
    %v3035 = vunpack.c.l.b16 %v2516
    %v3036 = vunpack.c.l.b16 %v2517
    %v3037 = vunpack.c.l.b16 %v2518
    %v3038 = vunpack.c.l.b16 %v2519
    %v3039 = vunpack.c.l.b16 %v2520
    %v3040 = vunpack.c.l.b16 %v2521
    %v3041 = vunpack.c.l.b16 %v2522
    %v3042 = vunpack.c.l.b16 %v2523
    %v3043 = vunpack.c.l.b16 %v2524
    %v3044 = vunpack.c.l.b16 %v2525
    %v3045 = vunpack.c.l.b16 %v2526
    %v3046 = vunpack.c.l.b16 %v2527
    %v3047 = vunpack.c.l.b16 %v2528
    %v3048 = vunpack.c.l.b16 %v2529
    %v3049 = vunpack.c.l.b16 %v2530
    %v3050 = vunpack.c.l.b16 %v2531
    %v3051 = vunpack.c.l.b16 %v2532
    %v3052 = vunpack.c.l.b16 %v2533
    %v3053 = vunpack.c.l.b16 %v2534
    %v3054 = vunpack.c.l.b16 %v2535
    %v3055 = vunpack.c.l.b16 %v2536
    %v3056 = vunpack.c.l.b16 %v2537
    %v3057 = vunpack.c.l.b16 %v2538
    %v3058 = vunpack.c.l.b16 %v2539
    %v3059 = vunpack.c.l.b16 %v2540
    %v3060 = vunpack.c.l.b16 %v2541
    %v3061 = vunpack.c.l.b16 %v2542
    %v3062 = vunpack.c.l.b16 %v2543
    %v3063 = vpack.c.b16 %v2808, %v2807
    %v3064 = vpack.c.b16 %v2810, %v2809
    %v3065 = vpack.c.b16 %v2812, %v2811
    %v3066 = vpack.c.b16 %v2814, %v2813
    %v3067 = vpack.c.b16 %v2816, %v2815
    %v3068 = vpack.c.b16 %v2818, %v2817
    %v3069 = vpack.c.b16 %v2820, %v2819
    %v3070 = vpack.c.b16 %v2822, %v2821
    %v3071 = vpack.c.b16 %v2824, %v2823
    %v3072 = vpack.c.b16 %v2826, %v2825
    %v3073 = vpack.c.b16 %v2828, %v2827
    %v3074 = vpack.c.b16 %v2830, %v2829
    %v3075 = vpack.c.b16 %v2832, %v2831
    %v3076 = vpack.c.b16 %v2834, %v2833
    %v3077 = vpack.c.b16 %v2836, %v2835
    %v3078 = vpack.c.b16 %v2838, %v2837
    %v3079 = vpack.c.b16 %v2840, %v2839
    %v3080 = vpack.c.b16 %v2842, %v2841
    %v3081 = vpack.c.b16 %v2844, %v2843
    %v3082 = vpack.c.b16 %v2846, %v2845
    %v3083 = vpack.c.b16 %v2848, %v2847
    %v3084 = vpack.c.b16 %v2850, %v2849
    %v3085 = vpack.c.b16 %v2852, %v2851
    %v3086 = vpack.c.b16 %v2854, %v2853
    %v3087 = vpack.c.b16 %v2856, %v2855
    %v3088 = vpack.c.b16 %v2858, %v2857
    %v3089 = vpack.c.b16 %v2860, %v2859
    %v3090 = vpack.c.b16 %v2862, %v2861
    %v3091 = vpack.c.b16 %v2864, %v2863
    %v3092 = vpack.c.b16 %v2866, %v2865
    %v3093 = vpack.c.b16 %v2868, %v2867
    %v3094 = vpack.c.b16 %v2870, %v2869
    %v3095 = vpack.c.b16 %v2872, %v2871
    %v3096 = vpack.c.b16 %v2874, %v2873
    %v3097 = vpack.c.b16 %v2876, %v2875
    %v3098 = vpack.c.b16 %v2878, %v2877
    %v3099 = vpack.c.b16 %v2880, %v2879
    %v3100 = vpack.c.b16 %v2882, %v2881
    %v3101 = vpack.c.b16 %v2884, %v2883
    %v3102 = vpack.c.b16 %v2886, %v2885
    %v3103 = vpack.c.b16 %v2888, %v2887
    %v3104 = vpack.c.b16 %v2890, %v2889
    %v3105 = vpack.c.b16 %v2892, %v2891
    %v3106 = vpack.c.b16 %v2894, %v2893
    %v3107 = vpack.c.b16 %v2896, %v2895
    %v3108 = vpack.c.b16 %v2898, %v2897
    %v3109 = vpack.c.b16 %v2900, %v2899
    %v3110 = vpack.c.b16 %v2902, %v2901
    %v3111 = vpack.c.b16 %v2904, %v2903
    %v3112 = vpack.c.b16 %v2906, %v2905
    %v3113 = vpack.c.b16 %v2908, %v2907
    %v3114 = vpack.c.b16 %v2910, %v2909
    %v3115 = vpack.c.b16 %v2912, %v2911
    %v3116 = vpack.c.b16 %v2914, %v2913
    %v3117 = vpack.c.b16 %v2916, %v2915
    %v3118 = vpack.c.b16 %v2918, %v2917
    %v3119 = vpack.c.b16 %v2920, %v2919
    %v3120 = vpack.c.b16 %v2922, %v2921
    %v3121 = vpack.c.b16 %v2924, %v2923
    %v3122 = vpack.c.b16 %v2926, %v2925
    %v3123 = vpack.c.b16 %v2928, %v2927
    %v3124 = vpack.c.b16 %v2930, %v2929
    %v3125 = vpack.c.b16 %v2932, %v2931
    %v3126 = vpack.c.b16 %v2934, %v2933
    %v3127 = vpack.c.b16 %v2936, %v2935
    %v3128 = vpack.c.b16 %v2938, %v2937
    %v3129 = vpack.c.b16 %v2940, %v2939
    %v3130 = vpack.c.b16 %v2942, %v2941
    %v3131 = vpack.c.b16 %v2944, %v2943
    %v3132 = vpack.c.b16 %v2946, %v2945
    %v3133 = vpack.c.b16 %v2948, %v2947
    %v3134 = vpack.c.b16 %v2950, %v2949
    %v3135 = vpack.c.b16 %v2952, %v2951
    %v3136 = vpack.c.b16 %v2954, %v2953
    %v3137 = vpack.c.b16 %v2956, %v2955
    %v3138 = vpack.c.b16 %v2958, %v2957
    %v3139 = vpack.c.b16 %v2960, %v2959
    %v3140 = vpack.c.b16 %v2962, %v2961
    %v3141 = vpack.c.b16 %v2964, %v2963
    %v3142 = vpack.c.b16 %v2966, %v2965
    %v3143 = vpack.c.b16 %v2968, %v2967
    %v3144 = vpack.c.b16 %v2970, %v2969
    %v3145 = vpack.c.b16 %v2972, %v2971
    %v3146 = vpack.c.b16 %v2974, %v2973
    %v3147 = vpack.c.b16 %v2976, %v2975
    %v3148 = vpack.c.b16 %v2978, %v2977
    %v3149 = vpack.c.b16 %v2980, %v2979
    %v3150 = vpack.c.b16 %v2982, %v2981
    %v3151 = vpack.c.b16 %v2984, %v2983
    %v3152 = vpack.c.b16 %v2986, %v2985
    %v3153 = vpack.c.b16 %v2988, %v2987
    %v3154 = vpack.c.b16 %v2990, %v2989
    %v3155 = vpack.c.b16 %v2992, %v2991
    %v3156 = vpack.c.b16 %v2994, %v2993
    %v3157 = vpack.c.b16 %v2996, %v2995
    %v3158 = vpack.c.b16 %v2998, %v2997
    %v3159 = vpack.c.b16 %v3000, %v2999
    %v3160 = vpack.c.b16 %v3002, %v3001
    %v3161 = vpack.c.b16 %v3004, %v3003
    %v3162 = vpack.c.b16 %v3006, %v3005
    %v3163 = vpack.c.b16 %v3008, %v3007
    %v3164 = vpack.c.b16 %v3010, %v3009
    %v3165 = vpack.c.b16 %v3012, %v3011
    %v3166 = vpack.c.b16 %v3014, %v3013
    %v3167 = vpack.c.b16 %v3016, %v3015
    %v3168 = vpack.c.b16 %v3018, %v3017
    %v3169 = vpack.c.b16 %v3020, %v3019
    %v3170 = vpack.c.b16 %v3022, %v3021
    %v3171 = vpack.c.b16 %v3024, %v3023
    %v3172 = vpack.c.b16 %v3026, %v3025
    %v3173 = vpack.c.b16 %v3028, %v3027
    %v3174 = vpack.c.b16 %v3030, %v3029
    %v3175 = vpack.c.b16 %v3032, %v3031
    %v3176 = vpack.c.b16 %v3034, %v3033
    %v3177 = vpack.c.b16 %v3036, %v3035
    %v3178 = vpack.c.b16 %v3038, %v3037
    %v3179 = vpack.c.b16 %v3040, %v3039
    %v3180 = vpack.c.b16 %v3042, %v3041
    %v3181 = vpack.c.b16 %v3044, %v3043
    %v3182 = vpack.c.b16 %v3046, %v3045
    %v3183 = vpack.c.b16 %v3048, %v3047
    %v3184 = vpack.c.b16 %v3050, %v3049
    %v3185 = vpack.c.b16 %v3052, %v3051
    %v3186 = vpack.c.b16 %v3054, %v3053
    %v3187 = vpack.c.b16 %v3056, %v3055
    %v3188 = vpack.c.b16 %v3058, %v3057
    %v3189 = vpack.c.b16 %v3060, %v3059
    %v3190 = vpack.c.b16 %v3062, %v3061
    %3319 = vmatprep.subr.bf16.mxu0 0
    %3320 = vmatpush1.bf16.msra.mxu0 %v3063
    %3321 = vmatprep.subr.bf16.mxu0 0
    %3322 = vmatpush1.bf16.msra.mxu0 %v3064
    %3323 = vmatprep.subr.bf16.mxu0 0
    %3324 = vmatpush1.bf16.msra.mxu0 %v3065
    %3325 = vmatprep.subr.bf16.mxu0 0
    %3326 = vmatpush1.bf16.msra.mxu0 %v3066
    %3327 = vmatprep.subr.bf16.mxu0 0
    %3328 = vmatpush1.bf16.msra.mxu0 %v3067
    %3329 = vmatprep.subr.bf16.mxu0 0
    %3330 = vmatpush1.bf16.msra.mxu0 %v3068
    %3331 = vmatprep.subr.bf16.mxu0 0
    %3332 = vmatpush1.bf16.msra.mxu0 %v3069
    %3333 = vmatprep.subr.bf16.mxu0 0
    %3334 = vmatpush1.bf16.msra.mxu0 %v3070
    %3335 = vmatprep.subr.bf16.mxu0 0
    %3336 = vmatpush1.bf16.msra.mxu0 %v3071
    %3337 = vmatprep.subr.bf16.mxu0 0
    %3338 = vmatpush1.bf16.msra.mxu0 %v3072
    %3339 = vmatprep.subr.bf16.mxu0 0
    %3340 = vmatpush1.bf16.msra.mxu0 %v3073
    %3341 = vmatprep.subr.bf16.mxu0 0
    %3342 = vmatpush1.bf16.msra.mxu0 %v3074
    %3343 = vmatprep.subr.bf16.mxu0 0
    %3344 = vmatpush1.bf16.msra.mxu0 %v3075
    %3345 = vmatprep.subr.bf16.mxu0 0
    %3346 = vmatpush1.bf16.msra.mxu0 %v3076
    %3347 = vmatprep.subr.bf16.mxu0 0
    %3348 = vmatpush1.bf16.msra.mxu0 %v3077
    %3349 = vmatprep.subr.bf16.mxu0 0
    %3350 = vmatpush1.bf16.msra.mxu0 %v3078
    %3351 = vmatprep.mubr.bf16.mxu0 %v2273
    %3352 = vmatmul.mubr.bf16.gmra.mrb[0].mxu0 %v2272
    %v3353 = vpop.f32.mrb[0].mxu0
    %v3354 = vadd.f32 %v2549, %v3353
    %v3355 = vpop.f32.mrb[0].mxu0
    %v3356 = vpop.f32.mrb[0].mxu0
    %v3357 = vadd.f32 %v2549, %v3356
    %v3358 = vpop.f32.mrb[0].mxu0
    %3359 = vdwg.mxu0
    %3360 = vmatprep.subr.bf16.mxu0 0
    %3361 = vmatpush1.bf16.msra.mxu0 %v3079
    %3362 = vmatprep.subr.bf16.mxu0 0
    %3363 = vmatpush1.bf16.msra.mxu0 %v3080
    %3364 = vmatprep.subr.bf16.mxu0 0
    %3365 = vmatpush1.bf16.msra.mxu0 %v3081
    %3366 = vmatprep.subr.bf16.mxu0 0
    %3367 = vmatpush1.bf16.msra.mxu0 %v3082
    %3368 = vmatprep.subr.bf16.mxu0 0
    %3369 = vmatpush1.bf16.msra.mxu0 %v3083
    %3370 = vmatprep.subr.bf16.mxu0 0
    %3371 = vmatpush1.bf16.msra.mxu0 %v3084
    %3372 = vmatprep.subr.bf16.mxu0 0
    %3373 = vmatpush1.bf16.msra.mxu0 %v3085
    %3374 = vmatprep.subr.bf16.mxu0 0
    %3375 = vmatpush1.bf16.msra.mxu0 %v3086
    %3376 = vmatprep.subr.bf16.mxu0 0
    %3377 = vmatpush1.bf16.msra.mxu0 %v3087
    %3378 = vmatprep.subr.bf16.mxu0 0
    %3379 = vmatpush1.bf16.msra.mxu0 %v3088
    %3380 = vmatprep.subr.bf16.mxu0 0
    %3381 = vmatpush1.bf16.msra.mxu0 %v3089
    %3382 = vmatprep.subr.bf16.mxu0 0
    %3383 = vmatpush1.bf16.msra.mxu0 %v3090
    %3384 = vmatprep.subr.bf16.mxu0 0
    %3385 = vmatpush1.bf16.msra.mxu0 %v3091
    %3386 = vmatprep.subr.bf16.mxu0 0
    %3387 = vmatpush1.bf16.msra.mxu0 %v3092
    %3388 = vmatprep.subr.bf16.mxu0 0
    %3389 = vmatpush1.bf16.msra.mxu0 %v3093
    %3390 = vmatprep.subr.bf16.mxu0 0
    %3391 = vmatpush1.bf16.msra.mxu0 %v3094
    %3392 = vmatprep.mubr.bf16.mxu0 %v2275
    %3393 = vmatmul.mubr.bf16.gmra.mrb[0].mxu0 %v2274
    %v3394 = vpop.f32.mrb[0].mxu0
    %v3395 = vadd.f32 %v3354, %v3394
    %v3396 = vpop.f32.mrb[0].mxu0
    %v3397 = vpop.f32.mrb[0].mxu0
    %v3398 = vadd.f32 %v3357, %v3397
    %v3399 = vpop.f32.mrb[0].mxu0
    %3400 = vdwg.mxu0
    %3401 = vmatprep.subr.bf16.mxu0 0
    %3402 = vmatpush1.bf16.msra.mxu0 %v3095
    %3403 = vmatprep.subr.bf16.mxu0 0
    %3404 = vmatpush1.bf16.msra.mxu0 %v3096
    %3405 = vmatprep.subr.bf16.mxu0 0
    %3406 = vmatpush1.bf16.msra.mxu0 %v3097
    %3407 = vmatprep.subr.bf16.mxu0 0
    %3408 = vmatpush1.bf16.msra.mxu0 %v3098
    %3409 = vmatprep.subr.bf16.mxu0 0
    %3410 = vmatpush1.bf16.msra.mxu0 %v3099
    %3411 = vmatprep.subr.bf16.mxu0 0
    %3412 = vmatpush1.bf16.msra.mxu0 %v3100
    %3413 = vmatprep.subr.bf16.mxu0 0
    %3414 = vmatpush1.bf16.msra.mxu0 %v3101
    %3415 = vmatprep.subr.bf16.mxu0 0
    %3416 = vmatpush1.bf16.msra.mxu0 %v3102
    %3417 = vmatprep.subr.bf16.mxu0 0
    %3418 = vmatpush1.bf16.msra.mxu0 %v3103
    %3419 = vmatprep.subr.bf16.mxu0 0
    %3420 = vmatpush1.bf16.msra.mxu0 %v3104
    %3421 = vmatprep.subr.bf16.mxu0 0
    %3422 = vmatpush1.bf16.msra.mxu0 %v3105
    %3423 = vmatprep.subr.bf16.mxu0 0
    %3424 = vmatpush1.bf16.msra.mxu0 %v3106
    %3425 = vmatprep.subr.bf16.mxu0 0
    %3426 = vmatpush1.bf16.msra.mxu0 %v3107
    %3427 = vmatprep.subr.bf16.mxu0 0
    %3428 = vmatpush1.bf16.msra.mxu0 %v3108
    %3429 = vmatprep.subr.bf16.mxu0 0
    %3430 = vmatpush1.bf16.msra.mxu0 %v3109
    %3431 = vmatprep.subr.bf16.mxu0 0
    %3432 = vmatpush1.bf16.msra.mxu0 %v3110
    %3433 = vmatprep.mubr.bf16.mxu0 %v2277
    %3434 = vmatmul.mubr.bf16.gmra.mrb[0].mxu0 %v2276
    %v3435 = vpop.f32.mrb[0].mxu0
    %v3436 = vadd.f32 %v3395, %v3435
    %v3437 = vpop.f32.mrb[0].mxu0
    %v3438 = vpop.f32.mrb[0].mxu0
    %v3439 = vadd.f32 %v3398, %v3438
    %v3440 = vpop.f32.mrb[0].mxu0
    %3441 = vdwg.mxu0
    %3442 = vmatprep.subr.bf16.mxu0 0
    %3443 = vmatpush1.bf16.msra.mxu0 %v3111
    %3444 = vmatprep.subr.bf16.mxu0 0
    %3445 = vmatpush1.bf16.msra.mxu0 %v3112
    %3446 = vmatprep.subr.bf16.mxu0 0
    %3447 = vmatpush1.bf16.msra.mxu0 %v3113
    %3448 = vmatprep.subr.bf16.mxu0 0
    %3449 = vmatpush1.bf16.msra.mxu0 %v3114
    %3450 = vmatprep.subr.bf16.mxu0 0
    %3451 = vmatpush1.bf16.msra.mxu0 %v3115
    %3452 = vmatprep.subr.bf16.mxu0 0
    %3453 = vmatpush1.bf16.msra.mxu0 %v3116
    %3454 = vmatprep.subr.bf16.mxu0 0
    %3455 = vmatpush1.bf16.msra.mxu0 %v3117
    %3456 = vmatprep.subr.bf16.mxu0 0
    %3457 = vmatpush1.bf16.msra.mxu0 %v3118
    %3458 = vmatprep.subr.bf16.mxu0 0
    %3459 = vmatpush1.bf16.msra.mxu0 %v3119
    %3460 = vmatprep.subr.bf16.mxu0 0
    %3461 = vmatpush1.bf16.msra.mxu0 %v3120
    %3462 = vmatprep.subr.bf16.mxu0 0
    %3463 = vmatpush1.bf16.msra.mxu0 %v3121
    %3464 = vmatprep.subr.bf16.mxu0 0
    %3465 = vmatpush1.bf16.msra.mxu0 %v3122
    %3466 = vmatprep.subr.bf16.mxu0 0
    %3467 = vmatpush1.bf16.msra.mxu0 %v3123
    %3468 = vmatprep.subr.bf16.mxu0 0
    %3469 = vmatpush1.bf16.msra.mxu0 %v3124
    %3470 = vmatprep.subr.bf16.mxu0 0
    %3471 = vmatpush1.bf16.msra.mxu0 %v3125
    %3472 = vmatprep.subr.bf16.mxu0 0
    %3473 = vmatpush1.bf16.msra.mxu0 %v3126
    %3474 = vmatprep.mubr.bf16.mxu0 %v2279
    %3475 = vmatmul.mubr.bf16.gmra.mrb[0].mxu0 %v2278
    %v3476 = vpop.f32.mrb[0].mxu0
    %v3477 = vadd.f32 %v3436, %v3476
    %v3478 = vpop.f32.mrb[0].mxu0
    %v3479 = vpop.f32.mrb[0].mxu0
    %v3480 = vadd.f32 %v3439, %v3479
    %v3481 = vpop.f32.mrb[0].mxu0
    %3482 = vdwg.mxu0
    %3483 = vmatprep.subr.bf16.mxu0 0
    %3484 = vmatpush1.bf16.msra.mxu0 %v3127
    %3485 = vmatprep.subr.bf16.mxu0 0
    %3486 = vmatpush1.bf16.msra.mxu0 %v3128
    %3487 = vmatprep.subr.bf16.mxu0 0
    %3488 = vmatpush1.bf16.msra.mxu0 %v3129
    %3489 = vmatprep.subr.bf16.mxu0 0
    %3490 = vmatpush1.bf16.msra.mxu0 %v3130
    %3491 = vmatprep.subr.bf16.mxu0 0
    %3492 = vmatpush1.bf16.msra.mxu0 %v3131
    %3493 = vmatprep.subr.bf16.mxu0 0
    %3494 = vmatpush1.bf16.msra.mxu0 %v3132
    %3495 = vmatprep.subr.bf16.mxu0 0
    %3496 = vmatpush1.bf16.msra.mxu0 %v3133
    %3497 = vmatprep.subr.bf16.mxu0 0
    %3498 = vmatpush1.bf16.msra.mxu0 %v3134
    %3499 = vmatprep.subr.bf16.mxu0 0
    %3500 = vmatpush1.bf16.msra.mxu0 %v3135
    %3501 = vmatprep.subr.bf16.mxu0 0
    %3502 = vmatpush1.bf16.msra.mxu0 %v3136
    %3503 = vmatprep.subr.bf16.mxu0 0
    %3504 = vmatpush1.bf16.msra.mxu0 %v3137
    %3505 = vmatprep.subr.bf16.mxu0 0
    %3506 = vmatpush1.bf16.msra.mxu0 %v3138
    %3507 = vmatprep.subr.bf16.mxu0 0
    %3508 = vmatpush1.bf16.msra.mxu0 %v3139
    %3509 = vmatprep.subr.bf16.mxu0 0
    %3510 = vmatpush1.bf16.msra.mxu0 %v3140
    %3511 = vmatprep.subr.bf16.mxu0 0
    %3512 = vmatpush1.bf16.msra.mxu0 %v3141
    %3513 = vmatprep.subr.bf16.mxu0 0
    %3514 = vmatpush1.bf16.msra.mxu0 %v3142
    %3515 = vmatprep.mubr.bf16.mxu0 %v2281
    %3516 = vmatmul.mubr.bf16.gmra.mrb[0].mxu0 %v2280
    %v3517 = vpop.f32.mrb[0].mxu0
    %v3518 = vadd.f32 %v3477, %v3517
    %v3519 = vpop.f32.mrb[0].mxu0
    %v3520 = vpop.f32.mrb[0].mxu0
    %v3521 = vadd.f32 %v3480, %v3520
    %v3522 = vpop.f32.mrb[0].mxu0
    %3523 = vdwg.mxu0
    %3524 = vmatprep.subr.bf16.mxu0 0
    %3525 = vmatpush1.bf16.msra.mxu0 %v3143
    %3526 = vmatprep.subr.bf16.mxu0 0
    %3527 = vmatpush1.bf16.msra.mxu0 %v3144
    %3528 = vmatprep.subr.bf16.mxu0 0
    %3529 = vmatpush1.bf16.msra.mxu0 %v3145
    %3530 = vmatprep.subr.bf16.mxu0 0
    %3531 = vmatpush1.bf16.msra.mxu0 %v3146
    %3532 = vmatprep.subr.bf16.mxu0 0
    %3533 = vmatpush1.bf16.msra.mxu0 %v3147
    %3534 = vmatprep.subr.bf16.mxu0 0
    %3535 = vmatpush1.bf16.msra.mxu0 %v3148
    %3536 = vmatprep.subr.bf16.mxu0 0
    %3537 = vmatpush1.bf16.msra.mxu0 %v3149
    %3538 = vmatprep.subr.bf16.mxu0 0
    %3539 = vmatpush1.bf16.msra.mxu0 %v3150
    %3540 = vmatprep.subr.bf16.mxu0 0
    %3541 = vmatpush1.bf16.msra.mxu0 %v3151
    %3542 = vmatprep.subr.bf16.mxu0 0
    %3543 = vmatpush1.bf16.msra.mxu0 %v3152
    %3544 = vmatprep.subr.bf16.mxu0 0
    %3545 = vmatpush1.bf16.msra.mxu0 %v3153
    %3546 = vmatprep.subr.bf16.mxu0 0
    %3547 = vmatpush1.bf16.msra.mxu0 %v3154
    %3548 = vmatprep.subr.bf16.mxu0 0
    %3549 = vmatpush1.bf16.msra.mxu0 %v3155
    %3550 = vmatprep.subr.bf16.mxu0 0
    %3551 = vmatpush1.bf16.msra.mxu0 %v3156
    %3552 = vmatprep.subr.bf16.mxu0 0
    %3553 = vmatpush1.bf16.msra.mxu0 %v3157
    %3554 = vmatprep.subr.bf16.mxu0 0
    %3555 = vmatpush1.bf16.msra.mxu0 %v3158
    %3556 = vmatprep.mubr.bf16.mxu0 %v2283
    %3557 = vmatmul.mubr.bf16.gmra.mrb[0].mxu0 %v2282
    %v3558 = vpop.f32.mrb[0].mxu0
    %v3559 = vadd.f32 %v3518, %v3558
    %v3560 = vpop.f32.mrb[0].mxu0
    %v3561 = vpop.f32.mrb[0].mxu0
    %v3562 = vadd.f32 %v3521, %v3561
    %v3563 = vpop.f32.mrb[0].mxu0
    %3564 = vdwg.mxu0
    %3565 = vmatprep.subr.bf16.mxu0 0
    %3566 = vmatpush1.bf16.msra.mxu0 %v3159
    %3567 = vmatprep.subr.bf16.mxu0 0
    %3568 = vmatpush1.bf16.msra.mxu0 %v3160
    %3569 = vmatprep.subr.bf16.mxu0 0
    %3570 = vmatpush1.bf16.msra.mxu0 %v3161
    %3571 = vmatprep.subr.bf16.mxu0 0
    %3572 = vmatpush1.bf16.msra.mxu0 %v3162
    %3573 = vmatprep.subr.bf16.mxu0 0
    %3574 = vmatpush1.bf16.msra.mxu0 %v3163
    %3575 = vmatprep.subr.bf16.mxu0 0
    %3576 = vmatpush1.bf16.msra.mxu0 %v3164
    %3577 = vmatprep.subr.bf16.mxu0 0
    %3578 = vmatpush1.bf16.msra.mxu0 %v3165
    %3579 = vmatprep.subr.bf16.mxu0 0
    %3580 = vmatpush1.bf16.msra.mxu0 %v3166
    %3581 = vmatprep.subr.bf16.mxu0 0
    %3582 = vmatpush1.bf16.msra.mxu0 %v3167
    %3583 = vmatprep.subr.bf16.mxu0 0
    %3584 = vmatpush1.bf16.msra.mxu0 %v3168
    %3585 = vmatprep.subr.bf16.mxu0 0
    %3586 = vmatpush1.bf16.msra.mxu0 %v3169
    %3587 = vmatprep.subr.bf16.mxu0 0
    %3588 = vmatpush1.bf16.msra.mxu0 %v3170
    %3589 = vmatprep.subr.bf16.mxu0 0
    %3590 = vmatpush1.bf16.msra.mxu0 %v3171
    %3591 = vmatprep.subr.bf16.mxu0 0
    %3592 = vmatpush1.bf16.msra.mxu0 %v3172
    %3593 = vmatprep.subr.bf16.mxu0 0
    %3594 = vmatpush1.bf16.msra.mxu0 %v3173
    %3595 = vmatprep.subr.bf16.mxu0 0
    %3596 = vmatpush1.bf16.msra.mxu0 %v3174
    %3597 = vmatprep.mubr.bf16.mxu0 %v2285
    %3598 = vmatmul.mubr.bf16.gmra.mrb[0].mxu0 %v2284
    %v3599 = vpop.f32.mrb[0].mxu0
    %v3600 = vadd.f32 %v3559, %v3599
    %v3601 = vpop.f32.mrb[0].mxu0
    %v3602 = vpop.f32.mrb[0].mxu0
    %v3603 = vadd.f32 %v3562, %v3602
    %v3604 = vpop.f32.mrb[0].mxu0
    %3605 = vdwg.mxu0
    %3606 = vmatprep.subr.bf16.mxu0 0
    %3607 = vmatpush1.bf16.msra.mxu0 %v3175
    %3608 = vmatprep.subr.bf16.mxu0 0
    %3609 = vmatpush1.bf16.msra.mxu0 %v3176
    %3610 = vmatprep.subr.bf16.mxu0 0
    %3611 = vmatpush1.bf16.msra.mxu0 %v3177
    %3612 = vmatprep.subr.bf16.mxu0 0
    %3613 = vmatpush1.bf16.msra.mxu0 %v3178
    %3614 = vmatprep.subr.bf16.mxu0 0
    %3615 = vmatpush1.bf16.msra.mxu0 %v3179
    %3616 = vmatprep.subr.bf16.mxu0 0
    %3617 = vmatpush1.bf16.msra.mxu0 %v3180
    %3618 = vmatprep.subr.bf16.mxu0 0
    %3619 = vmatpush1.bf16.msra.mxu0 %v3181
    %3620 = vmatprep.subr.bf16.mxu0 0
    %3621 = vmatpush1.bf16.msra.mxu0 %v3182
    %3622 = vmatprep.subr.bf16.mxu0 0
    %3623 = vmatpush1.bf16.msra.mxu0 %v3183
    %3624 = vmatprep.subr.bf16.mxu0 0
    %3625 = vmatpush1.bf16.msra.mxu0 %v3184
    %3626 = vmatprep.subr.bf16.mxu0 0
    %3627 = vmatpush1.bf16.msra.mxu0 %v3185
    %3628 = vmatprep.subr.bf16.mxu0 0
    %3629 = vmatpush1.bf16.msra.mxu0 %v3186
    %3630 = vmatprep.subr.bf16.mxu0 0
    %3631 = vmatpush1.bf16.msra.mxu0 %v3187
    %3632 = vmatprep.subr.bf16.mxu0 0
    %3633 = vmatpush1.bf16.msra.mxu0 %v3188
    %3634 = vmatprep.subr.bf16.mxu0 0
    %3635 = vmatpush1.bf16.msra.mxu0 %v3189
    %3636 = vmatprep.subr.bf16.mxu0 0
    %3637 = vmatpush1.bf16.msra.mxu0 %v3190
    %3638 = vmatprep.mubr.bf16.mxu0 %v2287
    %3639 = vmatmul.mubr.bf16.gmra.mrb[0].mxu0 %v2286
    %v3640 = vpop.f32.mrb[0].mxu0
    %v3641 = vadd.f32 %v3600, %v3640
    %v3642 = vpop.f32.mrb[0].mxu0
    %v3643 = vpop.f32.mrb[0].mxu0
    %v3644 = vadd.f32 %v3603, %v3643
    %v3645 = vpop.f32.mrb[0].mxu0
    %3646 = vdwg.mxu0
    %v3647 = vadd.f32 %v1422, %v3641
    %v3648 = vadd.f32 %v1423, %v3644
    %v3649 = vld [vmem:[%s35] sm:$0x1]
    %v3650 = vld [vmem:[%s37] sm:$0x1]
    %v3651 = vsel %vm332, %v3647, 0.0
    %3652 = vadd.xlane.f32.xlu0 %v3651
    %v3653 = vpop.xlane.xlu0 %3652
    %v3654 = vsel %vm332, %v3648, 0.0
    %3655 = vadd.xlane.f32.xlu0 %v3654
    %v3656 = vpop.xlane.xlu0 %3655
    %v3657 = vmul.f32 %v3653, %v1387
    %v3658 = vmul.f32 %v3656, %v1387
    %v3659 = vsub.f32 %v3647, %v3657
    %v3660 = vsub.f32 %v3648, %v3658
    %v3661 = vmul.f32 %v3659, %v3659
    %v3662 = vmul.f32 %v3660, %v3660
    %v3663 = vsel %vm332, %v3661, 0.0
    %3664 = vadd.xlane.f32.xlu0 %v3663
    %v3665 = vpop.xlane.xlu0 %3664
    %v3666 = vsel %vm332, %v3662, 0.0
    %3667 = vadd.xlane.f32.xlu0 %v3666
    %v3668 = vpop.xlane.xlu0 %3667
    %v3669 = vmul.f32 %v3665, %v1387
    %v3670 = vmul.f32 %v3668, %v1387
    %v3671 = vadd.f32 %v3669, 1e-05
    %v3672 = vadd.f32 %v3670, 1e-05
    %v3673 = vrsqrt.pop %v3671
    %v3674 = vrsqrt.pop %v3672
    %v3675 = vmul.f32 %v3659, %v3673
    %v3676 = vmul.f32 %v3660, %v3674
    %v3678 = vlaneseq
    %v3679 = vshrl.u32 %v3678, 7
    %v3680 = vsub.s32 0, %v3679
    %v3681 = vrot.slane %v3649, %v3680
    %v3683 = vmul.f32 %v3675, %v3681
    %v3684 = vmul.f32 %v3676, %v3681
    %v3686 = vlaneseq
    %v3687 = vshrl.u32 %v3686, 7
    %v3688 = vsub.s32 0, %v3687
    %v3689 = vrot.slane %v3650, %v3688
    %v3691 = vadd.f32 %v3683, %v3689
    %v3692 = vadd.f32 %v3684, %v3689
    %v3693 = vpack.c.bf16 %v3692, %v3691
    %v3694 = vld [vmem:[%s39] sm:$0xff]
    %v3695 = vld [vmem:[%s39 + $0x8] sm:$0xff]
    %v3696 = vld [vmem:[%s39 + $0x10] sm:$0xff]
    %v3697 = vld [vmem:[%s39 + $0x18] sm:$0xff]
    %v3698 = vld [vmem:[%s39 + $0x20] sm:$0xff]
    %v3699 = vld [vmem:[%s39 + $0x28] sm:$0xff]
    %v3700 = vld [vmem:[%s39 + $0x30] sm:$0xff]
    %v3701 = vld [vmem:[%s39 + $0x38] sm:$0xff]
    %v3702 = vld [vmem:[%s41] sm:$0x3]
    %v3704 = vlaneseq
    %v3705 = vshrl.u32 %v3704, 7
    %v3706 = vsub.s32 0, %v3705
    %v3707 = vrot.slane %v3702, %v3706
    %v3708 = vlaneseq
    %v3709 = vshrl.u32 %v3708, 7
    %v3710 = vsub.s32 1, %v3709
    %v3711 = vrot.slane %v3702, %v3710
    %v3722 = vunpack.c.l.b16 %v3694
    %v3723 = vunpack.c.h.b16 %v3694
    %v3724 = vunpack.c.l.b16 %v3695
    %v3725 = vunpack.c.h.b16 %v3695
    %v3726 = vunpack.c.l.b16 %v3696
    %v3727 = vunpack.c.h.b16 %v3696
    %v3728 = vunpack.c.l.b16 %v3697
    %v3729 = vunpack.c.h.b16 %v3697
    %v3730 = vunpack.c.l.b16 %v3698
    %v3731 = vunpack.c.h.b16 %v3698
    %v3732 = vunpack.c.l.b16 %v3699
    %v3733 = vunpack.c.h.b16 %v3699
    %v3734 = vunpack.c.l.b16 %v3700
    %v3735 = vunpack.c.h.b16 %v3700
    %v3736 = vunpack.c.l.b16 %v3701
    %v3737 = vunpack.c.h.b16 %v3701
    %v3738 = vpack.c.b16 %v3724, %v3722
    %v3739 = vpack.c.b16 %v3725, %v3723
    %v3740 = vpack.c.b16 %v3728, %v3726
    %v3741 = vpack.c.b16 %v3729, %v3727
    %v3742 = vpack.c.b16 %v3732, %v3730
    %v3743 = vpack.c.b16 %v3733, %v3731
    %v3744 = vpack.c.b16 %v3736, %v3734
    %v3745 = vpack.c.b16 %v3737, %v3735
    %v3755 = vsel %vm332, %v3693, 0
    %3757 = vmatprep.subr.bf16.mxu0 %v3739
    %3758 = vmatpush1.bf16.msra.mxu0 %v3738
    %3759 = vmatprep.subr.bf16.mxu0 %v3741
    %3760 = vmatpush1.bf16.msra.mxu0 %v3740
    %3761 = vmatprep.subr.bf16.mxu0 %v3743
    %3762 = vmatpush1.bf16.msra.mxu0 %v3742
    %3763 = vmatprep.subr.bf16.mxu0 %v3745
    %3764 = vmatpush1.bf16.msra.mxu0 %v3744
    %3765 = vmatprep.subr.bf16.mxu0 0
    %3766 = vmatpush1.bf16.msra.mxu0 0
    %3767 = vmatprep.subr.bf16.mxu0 0
    %3768 = vmatpush1.bf16.msra.mxu0 0
    %3769 = vmatprep.subr.bf16.mxu0 0
    %3770 = vmatpush1.bf16.msra.mxu0 0
    %3771 = vmatprep.subr.bf16.mxu0 0
    %3772 = vmatpush1.bf16.msra.mxu0 0
    %3773 = vmatprep.subr.bf16.mxu0 0
    %3774 = vmatpush1.bf16.msra.mxu0 0
    %3775 = vmatprep.subr.bf16.mxu0 0
    %3776 = vmatpush1.bf16.msra.mxu0 0
    %3777 = vmatprep.subr.bf16.mxu0 0
    %3778 = vmatpush1.bf16.msra.mxu0 0
    %3779 = vmatprep.subr.bf16.mxu0 0
    %3780 = vmatpush1.bf16.msra.mxu0 0
    %3781 = vmatprep.subr.bf16.mxu0 0
    %3782 = vmatpush1.bf16.msra.mxu0 0
    %3783 = vmatprep.subr.bf16.mxu0 0
    %3784 = vmatpush1.bf16.msra.mxu0 0
    %3785 = vmatprep.subr.bf16.mxu0 0
    %3786 = vmatpush1.bf16.msra.mxu0 0
    %3787 = vmatprep.subr.bf16.mxu0 0
    %3788 = vmatpush1.bf16.msra.mxu0 0
    %3789 = vmatprep.mubr.bf16.mxu0 0
    %3790 = vmatmul.mubr.bf16.gmra.mrb[0].mxu0 %v3755
    %v3791 = vpop.f32.mrb[0].mxu0
    %v3792 = vadd.f32 %v3707, %v3791
    %v3793 = vpop.f32.mrb[0].mxu0
    %v3794 = vadd.f32 %v3711, %v3793
    %v3795 = vpop.f32.mrb[0].mxu0
    %v3796 = vadd.f32 %v3707, %v3795
    %v3797 = vpop.f32.mrb[0].mxu0
    %v3798 = vadd.f32 %v3711, %v3797
    %3799 = vdwg.mxu0
    %v3800 = vpack.c.bf16 %v3792, %v3792
    %v3801 = vpack.c.bf16 %v3796, %v3796
    %v3802 = vpack.c.bf16 %v3794, %v3794
    %v3803 = vpack.c.bf16 %v3798, %v3798
    %3805 = vrot.lane.b32.xlu0 %v3800, 64
    %v3806 = vpop.permute.xlu0 %3805
    %v3808 = vsel %vm162, %v3800, 0
    %v3811 = vsel %vm162, %v3806, 0
    %3813 = vmatprep.subr.bf16.mxu0 0
    %3814 = vmatpush1.bf16.xpose.msra.mxu0 %v3811
    %3815 = vmatprep.subr.bf16.mxu0 0
    %3816 = vmatpush1.bf16.xpose.msra.mxu0 0
    %3817 = vmatprep.subr.bf16.mxu0 0
    %3818 = vmatpush1.bf16.xpose.msra.mxu0 0
    %3819 = vmatprep.subr.bf16.mxu0 0
    %3820 = vmatpush1.bf16.xpose.msra.mxu0 0
    %3821 = vmatprep.subr.bf16.mxu0 0
    %3822 = vmatpush1.bf16.xpose.msra.mxu0 0
    %3823 = vmatprep.subr.bf16.mxu0 0
    %3824 = vmatpush1.bf16.xpose.msra.mxu0 0
    %3825 = vmatprep.subr.bf16.mxu0 0
    %3826 = vmatpush1.bf16.xpose.msra.mxu0 0
    %3827 = vmatprep.subr.bf16.mxu0 0
    %3828 = vmatpush1.bf16.xpose.msra.mxu0 0
    %3829 = vmatprep.subr.bf16.mxu0 0
    %3830 = vmatpush1.bf16.xpose.msra.mxu0 0
    %3831 = vmatprep.subr.bf16.mxu0 0
    %3832 = vmatpush1.bf16.xpose.msra.mxu0 0
    %3833 = vmatprep.subr.bf16.mxu0 0
    %3834 = vmatpush1.bf16.xpose.msra.mxu0 0
    %3835 = vmatprep.subr.bf16.mxu0 0
    %3836 = vmatpush1.bf16.xpose.msra.mxu0 0
    %3837 = vmatprep.subr.bf16.mxu0 0
    %3838 = vmatpush1.bf16.xpose.msra.mxu0 0
    %3839 = vmatprep.subr.bf16.mxu0 0
    %3840 = vmatpush1.bf16.xpose.msra.mxu0 0
    %3841 = vmatprep.subr.bf16.mxu0 0
    %3842 = vmatpush1.bf16.xpose.msra.mxu0 0
    %3843 = vmatprep.subr.bf16.mxu0 0
    %3844 = vmatpush1.bf16.xpose.msra.mxu0 0
    %3845 = vmatprep.mubr.bf16.mxu0 0
    %3846 = vmatmul.mubr.bf16.gmra.mrb[0].mxu0 %v3808
    %v3847 = vpop.f32.mrb[0].mxu0
    %v3848 = vadd.f32 0.0, %v3847
    %v3849 = vpop.f32.mrb[0].mxu0
    %v3850 = vpop.f32.mrb[0].mxu0
    %v3851 = vpop.f32.mrb[0].mxu0
    %3852 = vdwg.mxu0
    %3854 = vrot.lane.b32.xlu0 %v3801, 64
    %v3855 = vpop.permute.xlu0 %3854
    %v3857 = vsel %vm162, %v3801, 0
    %v3860 = vsel %vm162, %v3855, 0
    %3862 = vmatprep.subr.bf16.mxu0 0
    %3863 = vmatpush1.bf16.xpose.msra.mxu0 %v3860
    %3864 = vmatprep.subr.bf16.mxu0 0
    %3865 = vmatpush1.bf16.xpose.msra.mxu0 0
    %3866 = vmatprep.subr.bf16.mxu0 0
    %3867 = vmatpush1.bf16.xpose.msra.mxu0 0
    %3868 = vmatprep.subr.bf16.mxu0 0
    %3869 = vmatpush1.bf16.xpose.msra.mxu0 0
    %3870 = vmatprep.subr.bf16.mxu0 0
    %3871 = vmatpush1.bf16.xpose.msra.mxu0 0
    %3872 = vmatprep.subr.bf16.mxu0 0
    %3873 = vmatpush1.bf16.xpose.msra.mxu0 0
    %3874 = vmatprep.subr.bf16.mxu0 0
    %3875 = vmatpush1.bf16.xpose.msra.mxu0 0
    %3876 = vmatprep.subr.bf16.mxu0 0
    %3877 = vmatpush1.bf16.xpose.msra.mxu0 0
    %3878 = vmatprep.subr.bf16.mxu0 0
    %3879 = vmatpush1.bf16.xpose.msra.mxu0 0
    %3880 = vmatprep.subr.bf16.mxu0 0
    %3881 = vmatpush1.bf16.xpose.msra.mxu0 0
    %3882 = vmatprep.subr.bf16.mxu0 0
    %3883 = vmatpush1.bf16.xpose.msra.mxu0 0
    %3884 = vmatprep.subr.bf16.mxu0 0
    %3885 = vmatpush1.bf16.xpose.msra.mxu0 0
    %3886 = vmatprep.subr.bf16.mxu0 0
    %3887 = vmatpush1.bf16.xpose.msra.mxu0 0
    %3888 = vmatprep.subr.bf16.mxu0 0
    %3889 = vmatpush1.bf16.xpose.msra.mxu0 0
    %3890 = vmatprep.subr.bf16.mxu0 0
    %3891 = vmatpush1.bf16.xpose.msra.mxu0 0
    %3892 = vmatprep.subr.bf16.mxu0 0
    %3893 = vmatpush1.bf16.xpose.msra.mxu0 0
    %3894 = vmatprep.mubr.bf16.mxu0 0
    %3895 = vmatmul.mubr.bf16.gmra.mrb[0].mxu0 %v3857
    %v3896 = vpop.f32.mrb[0].mxu0
    %v3897 = vadd.f32 0.0, %v3896
    %v3898 = vpop.f32.mrb[0].mxu0
    %v3899 = vpop.f32.mrb[0].mxu0
    %v3900 = vpop.f32.mrb[0].mxu0
    %3901 = vdwg.mxu0
    %v3902 = vsel %vm481, %v3848, -inf
    %3903 = vmax.xlane.f32.xlu0 %v3902
    %v3904 = vpop.xlane.xlu0 %3903
    %v3905 = vsel %vm481, %v3897, -inf
    %3906 = vmax.xlane.f32.xlu0 %v3905
    %v3907 = vpop.xlane.xlu0 %3906
    %v3908 = vsub.f32 %v3848, %v3904
    %v3909 = vsub.f32 %v3897, %v3907
    %v3910 = vmul.f32 %v3908, 1.442695
    %v3911 = vpow.pop %v3910
    %v3912 = vmul.f32 %v3909, 1.442695
    %v3913 = vpow.pop %v3912
    %v3914 = vsel %vm481, %v3911, 0.0
    %3915 = vadd.xlane.f32.xlu0 %v3914
    %v3916 = vpop.xlane.xlu0 %3915
    %v3917 = vsel %vm481, %v3913, 0.0
    %3918 = vadd.xlane.f32.xlu0 %v3917
    %v3919 = vpop.xlane.xlu0 %3918
    %v3920 = vrcp.pop %v3916
    %v3921 = vrcp.pop %v3919
    %v3922 = vmul.f32 %v3911, %v3920
    %v3923 = vmul.f32 %v3913, %v3921
    %v3924 = vpack.c.bf16 %v3922, %v3922
    %v3925 = vpack.c.bf16 %v3923, %v3923
    %v3927 = vsel %vm481, %v3924, 0
    %v3930 = vsel %vm509, %v3802, 0
    %3932 = vmatprep.subr.bf16.mxu0 0
    %3933 = vmatpush1.bf16.msra.mxu0 %v3930
    %3934 = vmatprep.subr.bf16.mxu0 0
    %3935 = vmatpush1.bf16.msra.mxu0 0
    %3936 = vmatprep.subr.bf16.mxu0 0
    %3937 = vmatpush1.bf16.msra.mxu0 0
    %3938 = vmatprep.subr.bf16.mxu0 0
    %3939 = vmatpush1.bf16.msra.mxu0 0
    %3940 = vmatprep.subr.bf16.mxu0 0
    %3941 = vmatpush1.bf16.msra.mxu0 0
    %3942 = vmatprep.subr.bf16.mxu0 0
    %3943 = vmatpush1.bf16.msra.mxu0 0
    %3944 = vmatprep.subr.bf16.mxu0 0
    %3945 = vmatpush1.bf16.msra.mxu0 0
    %3946 = vmatprep.subr.bf16.mxu0 0
    %3947 = vmatpush1.bf16.msra.mxu0 0
    %3948 = vmatprep.subr.bf16.mxu0 0
    %3949 = vmatpush1.bf16.msra.mxu0 0
    %3950 = vmatprep.subr.bf16.mxu0 0
    %3951 = vmatpush1.bf16.msra.mxu0 0
    %3952 = vmatprep.subr.bf16.mxu0 0
    %3953 = vmatpush1.bf16.msra.mxu0 0
    %3954 = vmatprep.subr.bf16.mxu0 0
    %3955 = vmatpush1.bf16.msra.mxu0 0
    %3956 = vmatprep.subr.bf16.mxu0 0
    %3957 = vmatpush1.bf16.msra.mxu0 0
    %3958 = vmatprep.subr.bf16.mxu0 0
    %3959 = vmatpush1.bf16.msra.mxu0 0
    %3960 = vmatprep.subr.bf16.mxu0 0
    %3961 = vmatpush1.bf16.msra.mxu0 0
    %3962 = vmatprep.subr.bf16.mxu0 0
    %3963 = vmatpush1.bf16.msra.mxu0 0
    %3964 = vmatprep.mubr.bf16.mxu0 0
    %3965 = vmatmul.mubr.bf16.gmra.mrb[0].mxu0 %v3927
    %v3966 = vpop.f32.mrb[0].mxu0
    %v3967 = vadd.f32 0.0, %v3966
    %v3968 = vpop.f32.mrb[0].mxu0
    %v3969 = vpop.f32.mrb[0].mxu0
    %v3970 = vpop.f32.mrb[0].mxu0
    %3971 = vdwg.mxu0
    %v3973 = vsel %vm481, %v3925, 0
    %v3976 = vsel %vm509, %v3803, 0
    %3978 = vmatprep.subr.bf16.mxu0 0
    %3979 = vmatpush1.bf16.msra.mxu0 %v3976
    %3980 = vmatprep.subr.bf16.mxu0 0
    %3981 = vmatpush1.bf16.msra.mxu0 0
    %3982 = vmatprep.subr.bf16.mxu0 0
    %3983 = vmatpush1.bf16.msra.mxu0 0
    %3984 = vmatprep.subr.bf16.mxu0 0
    %3985 = vmatpush1.bf16.msra.mxu0 0
    %3986 = vmatprep.subr.bf16.mxu0 0
    %3987 = vmatpush1.bf16.msra.mxu0 0
    %3988 = vmatprep.subr.bf16.mxu0 0
    %3989 = vmatpush1.bf16.msra.mxu0 0
    %3990 = vmatprep.subr.bf16.mxu0 0
    %3991 = vmatpush1.bf16.msra.mxu0 0
    %3992 = vmatprep.subr.bf16.mxu0 0
    %3993 = vmatpush1.bf16.msra.mxu0 0
    %3994 = vmatprep.subr.bf16.mxu0 0
    %3995 = vmatpush1.bf16.msra.mxu0 0
    %3996 = vmatprep.subr.bf16.mxu0 0
    %3997 = vmatpush1.bf16.msra.mxu0 0
    %3998 = vmatprep.subr.bf16.mxu0 0
    %3999 = vmatpush1.bf16.msra.mxu0 0
    %4000 = vmatprep.subr.bf16.mxu0 0
    %4001 = vmatpush1.bf16.msra.mxu0 0
    %4002 = vmatprep.subr.bf16.mxu0 0
    %4003 = vmatpush1.bf16.msra.mxu0 0
    %4004 = vmatprep.subr.bf16.mxu0 0
    %4005 = vmatpush1.bf16.msra.mxu0 0
    %4006 = vmatprep.subr.bf16.mxu0 0
    %4007 = vmatpush1.bf16.msra.mxu0 0
    %4008 = vmatprep.subr.bf16.mxu0 0
    %4009 = vmatpush1.bf16.msra.mxu0 0
    %4010 = vmatprep.mubr.bf16.mxu0 0
    %4011 = vmatmul.mubr.bf16.gmra.mrb[0].mxu0 %v3973
    %v4012 = vpop.f32.mrb[0].mxu0
    %v4013 = vadd.f32 0.0, %v4012
    %v4014 = vpop.f32.mrb[0].mxu0
    %v4015 = vpop.f32.mrb[0].mxu0
    %v4016 = vpop.f32.mrb[0].mxu0
    %4017 = vdwg.mxu0
    %4018 = vrot.lane.b32.xlu0 %v3800, 112
    %v4019 = vpop.permute.xlu0 %4018
    %4020 = vrot.lane.b32.xlu0 %v3800, 48
    %v4021 = vpop.permute.xlu0 %4020
    %v4023 = vsel %vm162, %v4019, 0
    %v4026 = vsel %vm162, %v4021, 0
    %4028 = vmatprep.subr.bf16.mxu0 0
    %4029 = vmatpush1.bf16.xpose.msra.mxu0 %v4026
    %4030 = vmatprep.subr.bf16.mxu0 0
    %4031 = vmatpush1.bf16.xpose.msra.mxu0 0
    %4032 = vmatprep.subr.bf16.mxu0 0
    %4033 = vmatpush1.bf16.xpose.msra.mxu0 0
    %4034 = vmatprep.subr.bf16.mxu0 0
    %4035 = vmatpush1.bf16.xpose.msra.mxu0 0
    %4036 = vmatprep.subr.bf16.mxu0 0
    %4037 = vmatpush1.bf16.xpose.msra.mxu0 0
    %4038 = vmatprep.subr.bf16.mxu0 0
    %4039 = vmatpush1.bf16.xpose.msra.mxu0 0
    %4040 = vmatprep.subr.bf16.mxu0 0
    %4041 = vmatpush1.bf16.xpose.msra.mxu0 0
    %4042 = vmatprep.subr.bf16.mxu0 0
    %4043 = vmatpush1.bf16.xpose.msra.mxu0 0
    %4044 = vmatprep.subr.bf16.mxu0 0
    %4045 = vmatpush1.bf16.xpose.msra.mxu0 0
    %4046 = vmatprep.subr.bf16.mxu0 0
    %4047 = vmatpush1.bf16.xpose.msra.mxu0 0
    %4048 = vmatprep.subr.bf16.mxu0 0
    %4049 = vmatpush1.bf16.xpose.msra.mxu0 0
    %4050 = vmatprep.subr.bf16.mxu0 0
    %4051 = vmatpush1.bf16.xpose.msra.mxu0 0
    %4052 = vmatprep.subr.bf16.mxu0 0
    %4053 = vmatpush1.bf16.xpose.msra.mxu0 0
    %4054 = vmatprep.subr.bf16.mxu0 0
    %4055 = vmatpush1.bf16.xpose.msra.mxu0 0
    %4056 = vmatprep.subr.bf16.mxu0 0
    %4057 = vmatpush1.bf16.xpose.msra.mxu0 0
    %4058 = vmatprep.subr.bf16.mxu0 0
    %4059 = vmatpush1.bf16.xpose.msra.mxu0 0
    %4060 = vmatprep.mubr.bf16.mxu0 0
    %4061 = vmatmul.mubr.bf16.gmra.mrb[0].mxu0 %v4023
    %v4062 = vpop.f32.mrb[0].mxu0
    %v4063 = vadd.f32 0.0, %v4062
    %v4064 = vpop.f32.mrb[0].mxu0
    %v4065 = vpop.f32.mrb[0].mxu0
    %v4066 = vpop.f32.mrb[0].mxu0
    %4067 = vdwg.mxu0
    %4068 = vrot.lane.b32.xlu0 %v3801, 112
    %v4069 = vpop.permute.xlu0 %4068
    %4070 = vrot.lane.b32.xlu0 %v3801, 48
    %v4071 = vpop.permute.xlu0 %4070
    %v4073 = vsel %vm162, %v4069, 0
    %v4076 = vsel %vm162, %v4071, 0
    %4078 = vmatprep.subr.bf16.mxu0 0
    %4079 = vmatpush1.bf16.xpose.msra.mxu0 %v4076
    %4080 = vmatprep.subr.bf16.mxu0 0
    %4081 = vmatpush1.bf16.xpose.msra.mxu0 0
    %4082 = vmatprep.subr.bf16.mxu0 0
    %4083 = vmatpush1.bf16.xpose.msra.mxu0 0
    %4084 = vmatprep.subr.bf16.mxu0 0
    %4085 = vmatpush1.bf16.xpose.msra.mxu0 0
    %4086 = vmatprep.subr.bf16.mxu0 0
    %4087 = vmatpush1.bf16.xpose.msra.mxu0 0
    %4088 = vmatprep.subr.bf16.mxu0 0
    %4089 = vmatpush1.bf16.xpose.msra.mxu0 0
    %4090 = vmatprep.subr.bf16.mxu0 0
    %4091 = vmatpush1.bf16.xpose.msra.mxu0 0
    %4092 = vmatprep.subr.bf16.mxu0 0
    %4093 = vmatpush1.bf16.xpose.msra.mxu0 0
    %4094 = vmatprep.subr.bf16.mxu0 0
    %4095 = vmatpush1.bf16.xpose.msra.mxu0 0
    %4096 = vmatprep.subr.bf16.mxu0 0
    %4097 = vmatpush1.bf16.xpose.msra.mxu0 0
    %4098 = vmatprep.subr.bf16.mxu0 0
    %4099 = vmatpush1.bf16.xpose.msra.mxu0 0
    %4100 = vmatprep.subr.bf16.mxu0 0
    %4101 = vmatpush1.bf16.xpose.msra.mxu0 0
    %4102 = vmatprep.subr.bf16.mxu0 0
    %4103 = vmatpush1.bf16.xpose.msra.mxu0 0
    %4104 = vmatprep.subr.bf16.mxu0 0
    %4105 = vmatpush1.bf16.xpose.msra.mxu0 0
    %4106 = vmatprep.subr.bf16.mxu0 0
    %4107 = vmatpush1.bf16.xpose.msra.mxu0 0
    %4108 = vmatprep.subr.bf16.mxu0 0
    %4109 = vmatpush1.bf16.xpose.msra.mxu0 0
    %4110 = vmatprep.mubr.bf16.mxu0 0
    %4111 = vmatmul.mubr.bf16.gmra.mrb[0].mxu0 %v4073
    %v4112 = vpop.f32.mrb[0].mxu0
    %v4113 = vadd.f32 0.0, %v4112
    %v4114 = vpop.f32.mrb[0].mxu0
    %v4115 = vpop.f32.mrb[0].mxu0
    %v4116 = vpop.f32.mrb[0].mxu0
    %4117 = vdwg.mxu0
    %v4118 = vsel %vm481, %v4063, -inf
    %4119 = vmax.xlane.f32.xlu0 %v4118
    %v4120 = vpop.xlane.xlu0 %4119
    %v4121 = vsel %vm481, %v4113, -inf
    %4122 = vmax.xlane.f32.xlu0 %v4121
    %v4123 = vpop.xlane.xlu0 %4122
    %v4124 = vsub.f32 %v4063, %v4120
    %v4125 = vsub.f32 %v4113, %v4123
    %v4126 = vmul.f32 %v4124, 1.442695
    %v4127 = vpow.pop %v4126
    %v4128 = vmul.f32 %v4125, 1.442695
    %v4129 = vpow.pop %v4128
    %v4130 = vsel %vm481, %v4127, 0.0
    %4131 = vadd.xlane.f32.xlu0 %v4130
    %v4132 = vpop.xlane.xlu0 %4131
    %v4133 = vsel %vm481, %v4129, 0.0
    %4134 = vadd.xlane.f32.xlu0 %v4133
    %v4135 = vpop.xlane.xlu0 %4134
    %v4136 = vrcp.pop %v4132
    %v4137 = vrcp.pop %v4135
    %v4138 = vmul.f32 %v4127, %v4136
    %v4139 = vmul.f32 %v4129, %v4137
    %v4140 = vpack.c.bf16 %v4138, %v4138
    %v4141 = vpack.c.bf16 %v4139, %v4139
    %4143 = vrot.lane.b32.xlu0 %v3802, 112
    %v4144 = vpop.permute.xlu0 %4143
    %v4146 = vsel %vm481, %v4140, 0
    %v4149 = vsel %vm509, %v4144, 0
    %4151 = vmatprep.subr.bf16.mxu0 0
    %4152 = vmatpush1.bf16.msra.mxu0 %v4149
    %4153 = vmatprep.subr.bf16.mxu0 0
    %4154 = vmatpush1.bf16.msra.mxu0 0
    %4155 = vmatprep.subr.bf16.mxu0 0
    %4156 = vmatpush1.bf16.msra.mxu0 0
    %4157 = vmatprep.subr.bf16.mxu0 0
    %4158 = vmatpush1.bf16.msra.mxu0 0
    %4159 = vmatprep.subr.bf16.mxu0 0
    %4160 = vmatpush1.bf16.msra.mxu0 0
    %4161 = vmatprep.subr.bf16.mxu0 0
    %4162 = vmatpush1.bf16.msra.mxu0 0
    %4163 = vmatprep.subr.bf16.mxu0 0
    %4164 = vmatpush1.bf16.msra.mxu0 0
    %4165 = vmatprep.subr.bf16.mxu0 0
    %4166 = vmatpush1.bf16.msra.mxu0 0
    %4167 = vmatprep.subr.bf16.mxu0 0
    %4168 = vmatpush1.bf16.msra.mxu0 0
    %4169 = vmatprep.subr.bf16.mxu0 0
    %4170 = vmatpush1.bf16.msra.mxu0 0
    %4171 = vmatprep.subr.bf16.mxu0 0
    %4172 = vmatpush1.bf16.msra.mxu0 0
    %4173 = vmatprep.subr.bf16.mxu0 0
    %4174 = vmatpush1.bf16.msra.mxu0 0
    %4175 = vmatprep.subr.bf16.mxu0 0
    %4176 = vmatpush1.bf16.msra.mxu0 0
    %4177 = vmatprep.subr.bf16.mxu0 0
    %4178 = vmatpush1.bf16.msra.mxu0 0
    %4179 = vmatprep.subr.bf16.mxu0 0
    %4180 = vmatpush1.bf16.msra.mxu0 0
    %4181 = vmatprep.subr.bf16.mxu0 0
    %4182 = vmatpush1.bf16.msra.mxu0 0
    %4183 = vmatprep.mubr.bf16.mxu0 0
    %4184 = vmatmul.mubr.bf16.gmra.mrb[0].mxu0 %v4146
    %v4185 = vpop.f32.mrb[0].mxu0
    %v4186 = vadd.f32 0.0, %v4185
    %v4187 = vpop.f32.mrb[0].mxu0
    %v4188 = vpop.f32.mrb[0].mxu0
    %v4189 = vpop.f32.mrb[0].mxu0
    %4190 = vdwg.mxu0
    %4192 = vrot.lane.b32.xlu0 %v3803, 112
    %v4193 = vpop.permute.xlu0 %4192
    %v4195 = vsel %vm481, %v4141, 0
    %v4198 = vsel %vm509, %v4193, 0
    %4200 = vmatprep.subr.bf16.mxu0 0
    %4201 = vmatpush1.bf16.msra.mxu0 %v4198
    %4202 = vmatprep.subr.bf16.mxu0 0
    %4203 = vmatpush1.bf16.msra.mxu0 0
    %4204 = vmatprep.subr.bf16.mxu0 0
    %4205 = vmatpush1.bf16.msra.mxu0 0
    %4206 = vmatprep.subr.bf16.mxu0 0
    %4207 = vmatpush1.bf16.msra.mxu0 0
    %4208 = vmatprep.subr.bf16.mxu0 0
    %4209 = vmatpush1.bf16.msra.mxu0 0
    %4210 = vmatprep.subr.bf16.mxu0 0
    %4211 = vmatpush1.bf16.msra.mxu0 0
    %4212 = vmatprep.subr.bf16.mxu0 0
    %4213 = vmatpush1.bf16.msra.mxu0 0
    %4214 = vmatprep.subr.bf16.mxu0 0
    %4215 = vmatpush1.bf16.msra.mxu0 0
    %4216 = vmatprep.subr.bf16.mxu0 0
    %4217 = vmatpush1.bf16.msra.mxu0 0
    %4218 = vmatprep.subr.bf16.mxu0 0
    %4219 = vmatpush1.bf16.msra.mxu0 0
    %4220 = vmatprep.subr.bf16.mxu0 0
    %4221 = vmatpush1.bf16.msra.mxu0 0
    %4222 = vmatprep.subr.bf16.mxu0 0
    %4223 = vmatpush1.bf16.msra.mxu0 0
    %4224 = vmatprep.subr.bf16.mxu0 0
    %4225 = vmatpush1.bf16.msra.mxu0 0
    %4226 = vmatprep.subr.bf16.mxu0 0
    %4227 = vmatpush1.bf16.msra.mxu0 0
    %4228 = vmatprep.subr.bf16.mxu0 0
    %4229 = vmatpush1.bf16.msra.mxu0 0
    %4230 = vmatprep.subr.bf16.mxu0 0
    %4231 = vmatpush1.bf16.msra.mxu0 0
    %4232 = vmatprep.mubr.bf16.mxu0 0
    %4233 = vmatmul.mubr.bf16.gmra.mrb[0].mxu0 %v4195
    %v4234 = vpop.f32.mrb[0].mxu0
    %v4235 = vadd.f32 0.0, %v4234
    %v4236 = vpop.f32.mrb[0].mxu0
    %v4237 = vpop.f32.mrb[0].mxu0
    %v4238 = vpop.f32.mrb[0].mxu0
    %4239 = vdwg.mxu0
    %4240 = vrot.lane.b32.xlu0 %v3800, 96
    %v4241 = vpop.permute.xlu0 %4240
    %4242 = vrot.lane.b32.xlu0 %v3800, 32
    %v4243 = vpop.permute.xlu0 %4242
    %v4245 = vsel %vm162, %v4241, 0
    %v4248 = vsel %vm162, %v4243, 0
    %4250 = vmatprep.subr.bf16.mxu0 0
    %4251 = vmatpush1.bf16.xpose.msra.mxu0 %v4248
    %4252 = vmatprep.subr.bf16.mxu0 0
    %4253 = vmatpush1.bf16.xpose.msra.mxu0 0
    %4254 = vmatprep.subr.bf16.mxu0 0
    %4255 = vmatpush1.bf16.xpose.msra.mxu0 0
    %4256 = vmatprep.subr.bf16.mxu0 0
    %4257 = vmatpush1.bf16.xpose.msra.mxu0 0
    %4258 = vmatprep.subr.bf16.mxu0 0
    %4259 = vmatpush1.bf16.xpose.msra.mxu0 0
    %4260 = vmatprep.subr.bf16.mxu0 0
    %4261 = vmatpush1.bf16.xpose.msra.mxu0 0
    %4262 = vmatprep.subr.bf16.mxu0 0
    %4263 = vmatpush1.bf16.xpose.msra.mxu0 0
    %4264 = vmatprep.subr.bf16.mxu0 0
    %4265 = vmatpush1.bf16.xpose.msra.mxu0 0
    %4266 = vmatprep.subr.bf16.mxu0 0
    %4267 = vmatpush1.bf16.xpose.msra.mxu0 0
    %4268 = vmatprep.subr.bf16.mxu0 0
    %4269 = vmatpush1.bf16.xpose.msra.mxu0 0
    %4270 = vmatprep.subr.bf16.mxu0 0
    %4271 = vmatpush1.bf16.xpose.msra.mxu0 0
    %4272 = vmatprep.subr.bf16.mxu0 0
    %4273 = vmatpush1.bf16.xpose.msra.mxu0 0
    %4274 = vmatprep.subr.bf16.mxu0 0
    %4275 = vmatpush1.bf16.xpose.msra.mxu0 0
    %4276 = vmatprep.subr.bf16.mxu0 0
    %4277 = vmatpush1.bf16.xpose.msra.mxu0 0
    %4278 = vmatprep.subr.bf16.mxu0 0
    %4279 = vmatpush1.bf16.xpose.msra.mxu0 0
    %4280 = vmatprep.subr.bf16.mxu0 0
    %4281 = vmatpush1.bf16.xpose.msra.mxu0 0
    %4282 = vmatprep.mubr.bf16.mxu0 0
    %4283 = vmatmul.mubr.bf16.gmra.mrb[0].mxu0 %v4245
    %v4284 = vpop.f32.mrb[0].mxu0
    %v4285 = vadd.f32 0.0, %v4284
    %v4286 = vpop.f32.mrb[0].mxu0
    %v4287 = vpop.f32.mrb[0].mxu0
    %v4288 = vpop.f32.mrb[0].mxu0
    %4289 = vdwg.mxu0
    %4290 = vrot.lane.b32.xlu0 %v3801, 96
    %v4291 = vpop.permute.xlu0 %4290
    %4292 = vrot.lane.b32.xlu0 %v3801, 32
    %v4293 = vpop.permute.xlu0 %4292
    %v4295 = vsel %vm162, %v4291, 0
    %v4298 = vsel %vm162, %v4293, 0
    %4300 = vmatprep.subr.bf16.mxu0 0
    %4301 = vmatpush1.bf16.xpose.msra.mxu0 %v4298
    %4302 = vmatprep.subr.bf16.mxu0 0
    %4303 = vmatpush1.bf16.xpose.msra.mxu0 0
    %4304 = vmatprep.subr.bf16.mxu0 0
    %4305 = vmatpush1.bf16.xpose.msra.mxu0 0
    %4306 = vmatprep.subr.bf16.mxu0 0
    %4307 = vmatpush1.bf16.xpose.msra.mxu0 0
    %4308 = vmatprep.subr.bf16.mxu0 0
    %4309 = vmatpush1.bf16.xpose.msra.mxu0 0
    %4310 = vmatprep.subr.bf16.mxu0 0
    %4311 = vmatpush1.bf16.xpose.msra.mxu0 0
    %4312 = vmatprep.subr.bf16.mxu0 0
    %4313 = vmatpush1.bf16.xpose.msra.mxu0 0
    %4314 = vmatprep.subr.bf16.mxu0 0
    %4315 = vmatpush1.bf16.xpose.msra.mxu0 0
    %4316 = vmatprep.subr.bf16.mxu0 0
    %4317 = vmatpush1.bf16.xpose.msra.mxu0 0
    %4318 = vmatprep.subr.bf16.mxu0 0
    %4319 = vmatpush1.bf16.xpose.msra.mxu0 0
    %4320 = vmatprep.subr.bf16.mxu0 0
    %4321 = vmatpush1.bf16.xpose.msra.mxu0 0
    %4322 = vmatprep.subr.bf16.mxu0 0
    %4323 = vmatpush1.bf16.xpose.msra.mxu0 0
    %4324 = vmatprep.subr.bf16.mxu0 0
    %4325 = vmatpush1.bf16.xpose.msra.mxu0 0
    %4326 = vmatprep.subr.bf16.mxu0 0
    %4327 = vmatpush1.bf16.xpose.msra.mxu0 0
    %4328 = vmatprep.subr.bf16.mxu0 0
    %4329 = vmatpush1.bf16.xpose.msra.mxu0 0
    %4330 = vmatprep.subr.bf16.mxu0 0
    %4331 = vmatpush1.bf16.xpose.msra.mxu0 0
    %4332 = vmatprep.mubr.bf16.mxu0 0
    %4333 = vmatmul.mubr.bf16.gmra.mrb[0].mxu0 %v4295
    %v4334 = vpop.f32.mrb[0].mxu0
    %v4335 = vadd.f32 0.0, %v4334
    %v4336 = vpop.f32.mrb[0].mxu0
    %v4337 = vpop.f32.mrb[0].mxu0
    %v4338 = vpop.f32.mrb[0].mxu0
    %4339 = vdwg.mxu0
    %v4340 = vsel %vm481, %v4285, -inf
    %4341 = vmax.xlane.f32.xlu0 %v4340
    %v4342 = vpop.xlane.xlu0 %4341
    %v4343 = vsel %vm481, %v4335, -inf
    %4344 = vmax.xlane.f32.xlu0 %v4343
    %v4345 = vpop.xlane.xlu0 %4344
    %v4346 = vsub.f32 %v4285, %v4342
    %v4347 = vsub.f32 %v4335, %v4345
    %v4348 = vmul.f32 %v4346, 1.442695
    %v4349 = vpow.pop %v4348
    %v4350 = vmul.f32 %v4347, 1.442695
    %v4351 = vpow.pop %v4350
    %v4352 = vsel %vm481, %v4349, 0.0
    %4353 = vadd.xlane.f32.xlu0 %v4352
    %v4354 = vpop.xlane.xlu0 %4353
    %v4355 = vsel %vm481, %v4351, 0.0
    %4356 = vadd.xlane.f32.xlu0 %v4355
    %v4357 = vpop.xlane.xlu0 %4356
    %v4358 = vrcp.pop %v4354
    %v4359 = vrcp.pop %v4357
    %v4360 = vmul.f32 %v4349, %v4358
    %v4361 = vmul.f32 %v4351, %v4359
    %v4362 = vpack.c.bf16 %v4360, %v4360
    %v4363 = vpack.c.bf16 %v4361, %v4361
    %4364 = vrot.lane.b32.xlu0 %v3802, 96
    %v4365 = vpop.permute.xlu0 %4364
    %v4367 = vsel %vm481, %v4362, 0
    %v4370 = vsel %vm509, %v4365, 0
    %4372 = vmatprep.subr.bf16.mxu0 0
    %4373 = vmatpush1.bf16.msra.mxu0 %v4370
    %4374 = vmatprep.subr.bf16.mxu0 0
    %4375 = vmatpush1.bf16.msra.mxu0 0
    %4376 = vmatprep.subr.bf16.mxu0 0
    %4377 = vmatpush1.bf16.msra.mxu0 0
    %4378 = vmatprep.subr.bf16.mxu0 0
    %4379 = vmatpush1.bf16.msra.mxu0 0
    %4380 = vmatprep.subr.bf16.mxu0 0
    %4381 = vmatpush1.bf16.msra.mxu0 0
    %4382 = vmatprep.subr.bf16.mxu0 0
    %4383 = vmatpush1.bf16.msra.mxu0 0
    %4384 = vmatprep.subr.bf16.mxu0 0
    %4385 = vmatpush1.bf16.msra.mxu0 0
    %4386 = vmatprep.subr.bf16.mxu0 0
    %4387 = vmatpush1.bf16.msra.mxu0 0
    %4388 = vmatprep.subr.bf16.mxu0 0
    %4389 = vmatpush1.bf16.msra.mxu0 0
    %4390 = vmatprep.subr.bf16.mxu0 0
    %4391 = vmatpush1.bf16.msra.mxu0 0
    %4392 = vmatprep.subr.bf16.mxu0 0
    %4393 = vmatpush1.bf16.msra.mxu0 0
    %4394 = vmatprep.subr.bf16.mxu0 0
    %4395 = vmatpush1.bf16.msra.mxu0 0
    %4396 = vmatprep.subr.bf16.mxu0 0
    %4397 = vmatpush1.bf16.msra.mxu0 0
    %4398 = vmatprep.subr.bf16.mxu0 0
    %4399 = vmatpush1.bf16.msra.mxu0 0
    %4400 = vmatprep.subr.bf16.mxu0 0
    %4401 = vmatpush1.bf16.msra.mxu0 0
    %4402 = vmatprep.subr.bf16.mxu0 0
    %4403 = vmatpush1.bf16.msra.mxu0 0
    %4404 = vmatprep.mubr.bf16.mxu0 0
    %4405 = vmatmul.mubr.bf16.gmra.mrb[0].mxu0 %v4367
    %v4406 = vpop.f32.mrb[0].mxu0
    %v4407 = vadd.f32 0.0, %v4406
    %v4408 = vpop.f32.mrb[0].mxu0
    %v4409 = vpop.f32.mrb[0].mxu0
    %v4410 = vpop.f32.mrb[0].mxu0
    %4411 = vdwg.mxu0
    %4412 = vrot.lane.b32.xlu0 %v3803, 96
    %v4413 = vpop.permute.xlu0 %4412
    %v4415 = vsel %vm481, %v4363, 0
    %v4418 = vsel %vm509, %v4413, 0
    %4420 = vmatprep.subr.bf16.mxu0 0
    %4421 = vmatpush1.bf16.msra.mxu0 %v4418
    %4422 = vmatprep.subr.bf16.mxu0 0
    %4423 = vmatpush1.bf16.msra.mxu0 0
    %4424 = vmatprep.subr.bf16.mxu0 0
    %4425 = vmatpush1.bf16.msra.mxu0 0
    %4426 = vmatprep.subr.bf16.mxu0 0
    %4427 = vmatpush1.bf16.msra.mxu0 0
    %4428 = vmatprep.subr.bf16.mxu0 0
    %4429 = vmatpush1.bf16.msra.mxu0 0
    %4430 = vmatprep.subr.bf16.mxu0 0
    %4431 = vmatpush1.bf16.msra.mxu0 0
    %4432 = vmatprep.subr.bf16.mxu0 0
    %4433 = vmatpush1.bf16.msra.mxu0 0
    %4434 = vmatprep.subr.bf16.mxu0 0
    %4435 = vmatpush1.bf16.msra.mxu0 0
    %4436 = vmatprep.subr.bf16.mxu0 0
    %4437 = vmatpush1.bf16.msra.mxu0 0
    %4438 = vmatprep.subr.bf16.mxu0 0
    %4439 = vmatpush1.bf16.msra.mxu0 0
    %4440 = vmatprep.subr.bf16.mxu0 0
    %4441 = vmatpush1.bf16.msra.mxu0 0
    %4442 = vmatprep.subr.bf16.mxu0 0
    %4443 = vmatpush1.bf16.msra.mxu0 0
    %4444 = vmatprep.subr.bf16.mxu0 0
    %4445 = vmatpush1.bf16.msra.mxu0 0
    %4446 = vmatprep.subr.bf16.mxu0 0
    %4447 = vmatpush1.bf16.msra.mxu0 0
    %4448 = vmatprep.subr.bf16.mxu0 0
    %4449 = vmatpush1.bf16.msra.mxu0 0
    %4450 = vmatprep.subr.bf16.mxu0 0
    %4451 = vmatpush1.bf16.msra.mxu0 0
    %4452 = vmatprep.mubr.bf16.mxu0 0
    %4453 = vmatmul.mubr.bf16.gmra.mrb[0].mxu0 %v4415
    %v4454 = vpop.f32.mrb[0].mxu0
    %v4455 = vadd.f32 0.0, %v4454
    %v4456 = vpop.f32.mrb[0].mxu0
    %v4457 = vpop.f32.mrb[0].mxu0
    %v4458 = vpop.f32.mrb[0].mxu0
    %4459 = vdwg.mxu0
    %4460 = vrot.lane.b32.xlu0 %v3800, 80
    %v4461 = vpop.permute.xlu0 %4460
    %4462 = vrot.lane.b32.xlu0 %v3800, 16
    %v4463 = vpop.permute.xlu0 %4462
    %v4465 = vsel %vm162, %v4461, 0
    %v4468 = vsel %vm162, %v4463, 0
    %4470 = vmatprep.subr.bf16.mxu0 0
    %4471 = vmatpush1.bf16.xpose.msra.mxu0 %v4468
    %4472 = vmatprep.subr.bf16.mxu0 0
    %4473 = vmatpush1.bf16.xpose.msra.mxu0 0
    %4474 = vmatprep.subr.bf16.mxu0 0
    %4475 = vmatpush1.bf16.xpose.msra.mxu0 0
    %4476 = vmatprep.subr.bf16.mxu0 0
    %4477 = vmatpush1.bf16.xpose.msra.mxu0 0
    %4478 = vmatprep.subr.bf16.mxu0 0
    %4479 = vmatpush1.bf16.xpose.msra.mxu0 0
    %4480 = vmatprep.subr.bf16.mxu0 0
    %4481 = vmatpush1.bf16.xpose.msra.mxu0 0
    %4482 = vmatprep.subr.bf16.mxu0 0
    %4483 = vmatpush1.bf16.xpose.msra.mxu0 0
    %4484 = vmatprep.subr.bf16.mxu0 0
    %4485 = vmatpush1.bf16.xpose.msra.mxu0 0
    %4486 = vmatprep.subr.bf16.mxu0 0
    %4487 = vmatpush1.bf16.xpose.msra.mxu0 0
    %4488 = vmatprep.subr.bf16.mxu0 0
    %4489 = vmatpush1.bf16.xpose.msra.mxu0 0
    %4490 = vmatprep.subr.bf16.mxu0 0
    %4491 = vmatpush1.bf16.xpose.msra.mxu0 0
    %4492 = vmatprep.subr.bf16.mxu0 0
    %4493 = vmatpush1.bf16.xpose.msra.mxu0 0
    %4494 = vmatprep.subr.bf16.mxu0 0
    %4495 = vmatpush1.bf16.xpose.msra.mxu0 0
    %4496 = vmatprep.subr.bf16.mxu0 0
    %4497 = vmatpush1.bf16.xpose.msra.mxu0 0
    %4498 = vmatprep.subr.bf16.mxu0 0
    %4499 = vmatpush1.bf16.xpose.msra.mxu0 0
    %4500 = vmatprep.subr.bf16.mxu0 0
    %4501 = vmatpush1.bf16.xpose.msra.mxu0 0
    %4502 = vmatprep.mubr.bf16.mxu0 0
    %4503 = vmatmul.mubr.bf16.gmra.mrb[0].mxu0 %v4465
    %v4504 = vpop.f32.mrb[0].mxu0
    %v4505 = vadd.f32 0.0, %v4504
    %v4506 = vpop.f32.mrb[0].mxu0
    %v4507 = vpop.f32.mrb[0].mxu0
    %v4508 = vpop.f32.mrb[0].mxu0
    %4509 = vdwg.mxu0
    %4510 = vrot.lane.b32.xlu0 %v3801, 80
    %v4511 = vpop.permute.xlu0 %4510
    %4512 = vrot.lane.b32.xlu0 %v3801, 16
    %v4513 = vpop.permute.xlu0 %4512
    %v4515 = vsel %vm162, %v4511, 0
    %v4518 = vsel %vm162, %v4513, 0
    %4520 = vmatprep.subr.bf16.mxu0 0
    %4521 = vmatpush1.bf16.xpose.msra.mxu0 %v4518
    %4522 = vmatprep.subr.bf16.mxu0 0
    %4523 = vmatpush1.bf16.xpose.msra.mxu0 0
    %4524 = vmatprep.subr.bf16.mxu0 0
    %4525 = vmatpush1.bf16.xpose.msra.mxu0 0
    %4526 = vmatprep.subr.bf16.mxu0 0
    %4527 = vmatpush1.bf16.xpose.msra.mxu0 0
    %4528 = vmatprep.subr.bf16.mxu0 0
    %4529 = vmatpush1.bf16.xpose.msra.mxu0 0
    %4530 = vmatprep.subr.bf16.mxu0 0
    %4531 = vmatpush1.bf16.xpose.msra.mxu0 0
    %4532 = vmatprep.subr.bf16.mxu0 0
    %4533 = vmatpush1.bf16.xpose.msra.mxu0 0
    %4534 = vmatprep.subr.bf16.mxu0 0
    %4535 = vmatpush1.bf16.xpose.msra.mxu0 0
    %4536 = vmatprep.subr.bf16.mxu0 0
    %4537 = vmatpush1.bf16.xpose.msra.mxu0 0
    %4538 = vmatprep.subr.bf16.mxu0 0
    %4539 = vmatpush1.bf16.xpose.msra.mxu0 0
    %4540 = vmatprep.subr.bf16.mxu0 0
    %4541 = vmatpush1.bf16.xpose.msra.mxu0 0
    %4542 = vmatprep.subr.bf16.mxu0 0
    %4543 = vmatpush1.bf16.xpose.msra.mxu0 0
    %4544 = vmatprep.subr.bf16.mxu0 0
    %4545 = vmatpush1.bf16.xpose.msra.mxu0 0
    %4546 = vmatprep.subr.bf16.mxu0 0
    %4547 = vmatpush1.bf16.xpose.msra.mxu0 0
    %4548 = vmatprep.subr.bf16.mxu0 0
    %4549 = vmatpush1.bf16.xpose.msra.mxu0 0
    %4550 = vmatprep.subr.bf16.mxu0 0
    %4551 = vmatpush1.bf16.xpose.msra.mxu0 0
    %4552 = vmatprep.mubr.bf16.mxu0 0
    %4553 = vmatmul.mubr.bf16.gmra.mrb[0].mxu0 %v4515
    %v4554 = vpop.f32.mrb[0].mxu0
    %v4555 = vadd.f32 0.0, %v4554
    %v4556 = vpop.f32.mrb[0].mxu0
    %v4557 = vpop.f32.mrb[0].mxu0
    %v4558 = vpop.f32.mrb[0].mxu0
    %4559 = vdwg.mxu0
    %v4560 = vsel %vm481, %v4505, -inf
    %4561 = vmax.xlane.f32.xlu0 %v4560
    %v4562 = vpop.xlane.xlu0 %4561
    %v4563 = vsel %vm481, %v4555, -inf
    %4564 = vmax.xlane.f32.xlu0 %v4563
    %v4565 = vpop.xlane.xlu0 %4564
    %v4566 = vsub.f32 %v4505, %v4562
    %v4567 = vsub.f32 %v4555, %v4565
    %v4568 = vmul.f32 %v4566, 1.442695
    %v4569 = vpow.pop %v4568
    %v4570 = vmul.f32 %v4567, 1.442695
    %v4571 = vpow.pop %v4570
    %v4572 = vsel %vm481, %v4569, 0.0
    %4573 = vadd.xlane.f32.xlu0 %v4572
    %v4574 = vpop.xlane.xlu0 %4573
    %v4575 = vsel %vm481, %v4571, 0.0
    %4576 = vadd.xlane.f32.xlu0 %v4575
    %v4577 = vpop.xlane.xlu0 %4576
    %v4578 = vrcp.pop %v4574
    %v4579 = vrcp.pop %v4577
    %v4580 = vmul.f32 %v4569, %v4578
    %v4581 = vmul.f32 %v4571, %v4579
    %v4582 = vpack.c.bf16 %v4580, %v4580
    %v4583 = vpack.c.bf16 %v4581, %v4581
    %4584 = vrot.lane.b32.xlu0 %v3802, 80
    %v4585 = vpop.permute.xlu0 %4584
    %v4587 = vsel %vm481, %v4582, 0
    %v4590 = vsel %vm509, %v4585, 0
    %4592 = vmatprep.subr.bf16.mxu0 0
    %4593 = vmatpush1.bf16.msra.mxu0 %v4590
    %4594 = vmatprep.subr.bf16.mxu0 0
    %4595 = vmatpush1.bf16.msra.mxu0 0
    %4596 = vmatprep.subr.bf16.mxu0 0
    %4597 = vmatpush1.bf16.msra.mxu0 0
    %4598 = vmatprep.subr.bf16.mxu0 0
    %4599 = vmatpush1.bf16.msra.mxu0 0
    %4600 = vmatprep.subr.bf16.mxu0 0
    %4601 = vmatpush1.bf16.msra.mxu0 0
    %4602 = vmatprep.subr.bf16.mxu0 0
    %4603 = vmatpush1.bf16.msra.mxu0 0
    %4604 = vmatprep.subr.bf16.mxu0 0
    %4605 = vmatpush1.bf16.msra.mxu0 0
    %4606 = vmatprep.subr.bf16.mxu0 0
    %4607 = vmatpush1.bf16.msra.mxu0 0
    %4608 = vmatprep.subr.bf16.mxu0 0
    %4609 = vmatpush1.bf16.msra.mxu0 0
    %4610 = vmatprep.subr.bf16.mxu0 0
    %4611 = vmatpush1.bf16.msra.mxu0 0
    %4612 = vmatprep.subr.bf16.mxu0 0
    %4613 = vmatpush1.bf16.msra.mxu0 0
    %4614 = vmatprep.subr.bf16.mxu0 0
    %4615 = vmatpush1.bf16.msra.mxu0 0
    %4616 = vmatprep.subr.bf16.mxu0 0
    %4617 = vmatpush1.bf16.msra.mxu0 0
    %4618 = vmatprep.subr.bf16.mxu0 0
    %4619 = vmatpush1.bf16.msra.mxu0 0
    %4620 = vmatprep.subr.bf16.mxu0 0
    %4621 = vmatpush1.bf16.msra.mxu0 0
    %4622 = vmatprep.subr.bf16.mxu0 0
    %4623 = vmatpush1.bf16.msra.mxu0 0
    %4624 = vmatprep.mubr.bf16.mxu0 0
    %4625 = vmatmul.mubr.bf16.gmra.mrb[0].mxu0 %v4587
    %v4626 = vpop.f32.mrb[0].mxu0
    %v4627 = vadd.f32 0.0, %v4626
    %v4628 = vpop.f32.mrb[0].mxu0
    %v4629 = vpop.f32.mrb[0].mxu0
    %v4630 = vpop.f32.mrb[0].mxu0
    %4631 = vdwg.mxu0
    %4632 = vrot.lane.b32.xlu0 %v3803, 80
    %v4633 = vpop.permute.xlu0 %4632
    %v4635 = vsel %vm481, %v4583, 0
    %v4638 = vsel %vm509, %v4633, 0
    %4640 = vmatprep.subr.bf16.mxu0 0
    %4641 = vmatpush1.bf16.msra.mxu0 %v4638
    %4642 = vmatprep.subr.bf16.mxu0 0
    %4643 = vmatpush1.bf16.msra.mxu0 0
    %4644 = vmatprep.subr.bf16.mxu0 0
    %4645 = vmatpush1.bf16.msra.mxu0 0
    %4646 = vmatprep.subr.bf16.mxu0 0
    %4647 = vmatpush1.bf16.msra.mxu0 0
    %4648 = vmatprep.subr.bf16.mxu0 0
    %4649 = vmatpush1.bf16.msra.mxu0 0
    %4650 = vmatprep.subr.bf16.mxu0 0
    %4651 = vmatpush1.bf16.msra.mxu0 0
    %4652 = vmatprep.subr.bf16.mxu0 0
    %4653 = vmatpush1.bf16.msra.mxu0 0
    %4654 = vmatprep.subr.bf16.mxu0 0
    %4655 = vmatpush1.bf16.msra.mxu0 0
    %4656 = vmatprep.subr.bf16.mxu0 0
    %4657 = vmatpush1.bf16.msra.mxu0 0
    %4658 = vmatprep.subr.bf16.mxu0 0
    %4659 = vmatpush1.bf16.msra.mxu0 0
    %4660 = vmatprep.subr.bf16.mxu0 0
    %4661 = vmatpush1.bf16.msra.mxu0 0
    %4662 = vmatprep.subr.bf16.mxu0 0
    %4663 = vmatpush1.bf16.msra.mxu0 0
    %4664 = vmatprep.subr.bf16.mxu0 0
    %4665 = vmatpush1.bf16.msra.mxu0 0
    %4666 = vmatprep.subr.bf16.mxu0 0
    %4667 = vmatpush1.bf16.msra.mxu0 0
    %4668 = vmatprep.subr.bf16.mxu0 0
    %4669 = vmatpush1.bf16.msra.mxu0 0
    %4670 = vmatprep.subr.bf16.mxu0 0
    %4671 = vmatpush1.bf16.msra.mxu0 0
    %4672 = vmatprep.mubr.bf16.mxu0 0
    %4673 = vmatmul.mubr.bf16.gmra.mrb[0].mxu0 %v4635
    %v4674 = vpop.f32.mrb[0].mxu0
    %v4675 = vadd.f32 0.0, %v4674
    %v4676 = vpop.f32.mrb[0].mxu0
    %v4677 = vpop.f32.mrb[0].mxu0
    %v4678 = vpop.f32.mrb[0].mxu0
    %4679 = vdwg.mxu0
    %4682 = vrot.lane.b32.xlu0 %v4186, 16
    %v4683 = vpop.permute.xlu0 %4682
    %4684 = vrot.lane.b32.xlu0 %v4235, 16
    %v4685 = vpop.permute.xlu0 %4684
    %4690 = vrot.lane.b32.xlu0 %v4407, 32
    %v4691 = vpop.permute.xlu0 %4690
    %4692 = vrot.lane.b32.xlu0 %v4455, 32
    %v4693 = vpop.permute.xlu0 %4692
    %4698 = vrot.lane.b32.xlu0 %v4627, 48
    %v4699 = vpop.permute.xlu0 %4698
    %4700 = vrot.lane.b32.xlu0 %v4675, 48
    %v4701 = vpop.permute.xlu0 %4700
    %v4704 = vsel %vm162, %v3967, %v4683
    %v4705 = vsel %vm162, %v4013, %v4685
    %v4706 = vsel %vm1287, %v4704, %v4691
    %v4707 = vsel %vm1287, %v4705, %v4693
    %v4708 = vsel %vm1290, %v4706, %v4699
    %v4709 = vsel %vm1290, %v4707, %v4701
    %v4710 = vpack.c.bf16 %v4709, %v4708
    %v4711 = vld [vmem:[%s43] sm:$0xf]
    %v4712 = vld [vmem:[%s43 + $0x4] sm:$0xf]
    %v4713 = vld [vmem:[%s43 + $0x8] sm:$0xf]
    %v4714 = vld [vmem:[%s43 + $0xc] sm:$0xf]
    %v4715 = vld [vmem:[%s43 + $0x10] sm:$0xf]
    %v4716 = vld [vmem:[%s43 + $0x14] sm:$0xf]
    %v4717 = vld [vmem:[%s43 + $0x18] sm:$0xf]
    %v4718 = vld [vmem:[%s43 + $0x1c] sm:$0xf]
    %v4719 = vld [vmem:[%s45] sm:$0x1]
    %v4721 = vlaneseq
    %v4722 = vshrl.u32 %v4721, 7
    %v4723 = vsub.s32 0, %v4722
    %v4724 = vrot.slane %v4719, %v4723
    %v4734 = vunpack.c.l.b16 %v4711
    %v4735 = vunpack.c.l.b16 %v4712
    %v4736 = vunpack.c.l.b16 %v4713
    %v4737 = vunpack.c.l.b16 %v4714
    %v4738 = vunpack.c.l.b16 %v4715
    %v4739 = vunpack.c.l.b16 %v4716
    %v4740 = vunpack.c.l.b16 %v4717
    %v4741 = vunpack.c.l.b16 %v4718
    %v4742 = vpack.c.b16 %v4735, %v4734
    %v4743 = vpack.c.b16 %v4737, %v4736
    %v4744 = vpack.c.b16 %v4739, %v4738
    %v4745 = vpack.c.b16 %v4741, %v4740
    %v4751 = vsel %vm332, %v4710, 0
    %4753 = vmatprep.subr.bf16.mxu0 0
    %4754 = vmatpush1.bf16.msra.mxu0 %v4742
    %4755 = vmatprep.subr.bf16.mxu0 0
    %4756 = vmatpush1.bf16.msra.mxu0 %v4743
    %4757 = vmatprep.subr.bf16.mxu0 0
    %4758 = vmatpush1.bf16.msra.mxu0 %v4744
    %4759 = vmatprep.subr.bf16.mxu0 0
    %4760 = vmatpush1.bf16.msra.mxu0 %v4745
    %4761 = vmatprep.subr.bf16.mxu0 0
    %4762 = vmatpush1.bf16.msra.mxu0 0
    %4763 = vmatprep.subr.bf16.mxu0 0
    %4764 = vmatpush1.bf16.msra.mxu0 0
    %4765 = vmatprep.subr.bf16.mxu0 0
    %4766 = vmatpush1.bf16.msra.mxu0 0
    %4767 = vmatprep.subr.bf16.mxu0 0
    %4768 = vmatpush1.bf16.msra.mxu0 0
    %4769 = vmatprep.subr.bf16.mxu0 0
    %4770 = vmatpush1.bf16.msra.mxu0 0
    %4771 = vmatprep.subr.bf16.mxu0 0
    %4772 = vmatpush1.bf16.msra.mxu0 0
    %4773 = vmatprep.subr.bf16.mxu0 0
    %4774 = vmatpush1.bf16.msra.mxu0 0
    %4775 = vmatprep.subr.bf16.mxu0 0
    %4776 = vmatpush1.bf16.msra.mxu0 0
    %4777 = vmatprep.subr.bf16.mxu0 0
    %4778 = vmatpush1.bf16.msra.mxu0 0
    %4779 = vmatprep.subr.bf16.mxu0 0
    %4780 = vmatpush1.bf16.msra.mxu0 0
    %4781 = vmatprep.subr.bf16.mxu0 0
    %4782 = vmatpush1.bf16.msra.mxu0 0
    %4783 = vmatprep.subr.bf16.mxu0 0
    %4784 = vmatpush1.bf16.msra.mxu0 0
    %4785 = vmatprep.mubr.bf16.mxu0 0
    %4786 = vmatmul.mubr.bf16.gmra.mrb[0].mxu0 %v4751
    %v4787 = vpop.f32.mrb[0].mxu0
    %v4788 = vadd.f32 %v4724, %v4787
    %v4789 = vpop.f32.mrb[0].mxu0
    %v4790 = vpop.f32.mrb[0].mxu0
    %v4791 = vadd.f32 %v4724, %v4790
    %v4792 = vpop.f32.mrb[0].mxu0
    %4793 = vdwg.mxu0
    %v4794 = vadd.f32 %v3691, %v4788
    %v4795 = vadd.f32 %v3692, %v4791
    %v4796 = vld [vmem:[%s47] sm:$0x1]
    %v4797 = vld [vmem:[%s49] sm:$0x1]
    %v4798 = vsel %vm332, %v4794, 0.0
    %4799 = vadd.xlane.f32.xlu0 %v4798
    %v4800 = vpop.xlane.xlu0 %4799
    %v4801 = vsel %vm332, %v4795, 0.0
    %4802 = vadd.xlane.f32.xlu0 %v4801
    %v4803 = vpop.xlane.xlu0 %4802
    %v4804 = vmul.f32 %v4800, %v1387
    %v4805 = vmul.f32 %v4803, %v1387
    %v4806 = vsub.f32 %v4794, %v4804
    %v4807 = vsub.f32 %v4795, %v4805
    %v4808 = vmul.f32 %v4806, %v4806
    %v4809 = vmul.f32 %v4807, %v4807
    %v4810 = vsel %vm332, %v4808, 0.0
    %4811 = vadd.xlane.f32.xlu0 %v4810
    %v4812 = vpop.xlane.xlu0 %4811
    %v4813 = vsel %vm332, %v4809, 0.0
    %4814 = vadd.xlane.f32.xlu0 %v4813
    %v4815 = vpop.xlane.xlu0 %4814
    %v4816 = vmul.f32 %v4812, %v1387
    %v4817 = vmul.f32 %v4815, %v1387
    %v4818 = vadd.f32 %v4816, 1e-05
    %v4819 = vadd.f32 %v4817, 1e-05
    %v4820 = vrsqrt.pop %v4818
    %v4821 = vrsqrt.pop %v4819
    %v4822 = vmul.f32 %v4806, %v4820
    %v4823 = vmul.f32 %v4807, %v4821
    %v4825 = vlaneseq
    %v4826 = vshrl.u32 %v4825, 7
    %v4827 = vsub.s32 0, %v4826
    %v4828 = vrot.slane %v4796, %v4827
    %v4830 = vmul.f32 %v4822, %v4828
    %v4831 = vmul.f32 %v4823, %v4828
    %v4833 = vlaneseq
    %v4834 = vshrl.u32 %v4833, 7
    %v4835 = vsub.s32 0, %v4834
    %v4836 = vrot.slane %v4797, %v4835
    %v4838 = vadd.f32 %v4830, %v4836
    %v4839 = vadd.f32 %v4831, %v4836
    %v4840 = vpack.c.bf16 %v4839, %v4838
    %v4841 = vld [vmem:[%s51] sm:$0xff]
    %v4842 = vld [vmem:[%s51 + $0x8] sm:$0xff]
    %v4843 = vld [vmem:[%s51 + $0x10] sm:$0xff]
    %v4844 = vld [vmem:[%s51 + $0x18] sm:$0xff]
    %v4845 = vld [vmem:[%s51 + $0x20] sm:$0xff]
    %v4846 = vld [vmem:[%s51 + $0x28] sm:$0xff]
    %v4847 = vld [vmem:[%s51 + $0x30] sm:$0xff]
    %v4848 = vld [vmem:[%s51 + $0x38] sm:$0xff]
    %v4849 = vld [vmem:[%s51 + $0x40] sm:$0xff]
    %v4850 = vld [vmem:[%s51 + $0x48] sm:$0xff]
    %v4851 = vld [vmem:[%s51 + $0x50] sm:$0xff]
    %v4852 = vld [vmem:[%s51 + $0x58] sm:$0xff]
    %v4853 = vld [vmem:[%s51 + $0x60] sm:$0xff]
    %v4854 = vld [vmem:[%s51 + $0x68] sm:$0xff]
    %v4855 = vld [vmem:[%s51 + $0x70] sm:$0xff]
    %v4856 = vld [vmem:[%s51 + $0x78] sm:$0xff]
    %v4857 = vld [vmem:[%s51 + $0x80] sm:$0xff]
    %v4858 = vld [vmem:[%s51 + $0x88] sm:$0xff]
    %v4859 = vld [vmem:[%s51 + $0x90] sm:$0xff]
    %v4860 = vld [vmem:[%s51 + $0x98] sm:$0xff]
    %v4861 = vld [vmem:[%s51 + $0xa0] sm:$0xff]
    %v4862 = vld [vmem:[%s51 + $0xa8] sm:$0xff]
    %v4863 = vld [vmem:[%s51 + $0xb0] sm:$0xff]
    %v4864 = vld [vmem:[%s51 + $0xb8] sm:$0xff]
    %v4865 = vld [vmem:[%s51 + $0xc0] sm:$0xff]
    %v4866 = vld [vmem:[%s51 + $0xc8] sm:$0xff]
    %v4867 = vld [vmem:[%s51 + $0xd0] sm:$0xff]
    %v4868 = vld [vmem:[%s51 + $0xd8] sm:$0xff]
    %v4869 = vld [vmem:[%s51 + $0xe0] sm:$0xff]
    %v4870 = vld [vmem:[%s51 + $0xe8] sm:$0xff]
    %v4871 = vld [vmem:[%s51 + $0xf0] sm:$0xff]
    %v4872 = vld [vmem:[%s51 + $0xf8] sm:$0xff]
    %v4873 = vld [vmem:[%s51 + $0x100] sm:$0xff]
    %v4874 = vld [vmem:[%s51 + $0x108] sm:$0xff]
    %v4875 = vld [vmem:[%s51 + $0x110] sm:$0xff]
    %v4876 = vld [vmem:[%s51 + $0x118] sm:$0xff]
    %v4877 = vld [vmem:[%s51 + $0x120] sm:$0xff]
    %v4878 = vld [vmem:[%s51 + $0x128] sm:$0xff]
    %v4879 = vld [vmem:[%s51 + $0x130] sm:$0xff]
    %v4880 = vld [vmem:[%s51 + $0x138] sm:$0xff]
    %v4881 = vld [vmem:[%s51 + $0x140] sm:$0xff]
    %v4882 = vld [vmem:[%s51 + $0x148] sm:$0xff]
    %v4883 = vld [vmem:[%s51 + $0x150] sm:$0xff]
    %v4884 = vld [vmem:[%s51 + $0x158] sm:$0xff]
    %v4885 = vld [vmem:[%s51 + $0x160] sm:$0xff]
    %v4886 = vld [vmem:[%s51 + $0x168] sm:$0xff]
    %v4887 = vld [vmem:[%s51 + $0x170] sm:$0xff]
    %v4888 = vld [vmem:[%s51 + $0x178] sm:$0xff]
    %v4889 = vld [vmem:[%s51 + $0x180] sm:$0xff]
    %v4890 = vld [vmem:[%s51 + $0x188] sm:$0xff]
    %v4891 = vld [vmem:[%s51 + $0x190] sm:$0xff]
    %v4892 = vld [vmem:[%s51 + $0x198] sm:$0xff]
    %v4893 = vld [vmem:[%s51 + $0x1a0] sm:$0xff]
    %v4894 = vld [vmem:[%s51 + $0x1a8] sm:$0xff]
    %v4895 = vld [vmem:[%s51 + $0x1b0] sm:$0xff]
    %v4896 = vld [vmem:[%s51 + $0x1b8] sm:$0xff]
    %v4897 = vld [vmem:[%s51 + $0x1c0] sm:$0xff]
    %v4898 = vld [vmem:[%s51 + $0x1c8] sm:$0xff]
    %v4899 = vld [vmem:[%s51 + $0x1d0] sm:$0xff]
    %v4900 = vld [vmem:[%s51 + $0x1d8] sm:$0xff]
    %v4901 = vld [vmem:[%s51 + $0x1e0] sm:$0xff]
    %v4902 = vld [vmem:[%s51 + $0x1e8] sm:$0xff]
    %v4903 = vld [vmem:[%s51 + $0x1f0] sm:$0xff]
    %v4904 = vld [vmem:[%s51 + $0x1f8] sm:$0xff]
    %v4905 = vld [vmem:[%s53] sm:$0xff]
    %v4906 = vld [vmem:[%s53 + $0x8] sm:$0xff]
    %v4909 = vlaneseq
    %v4910 = vshrl.u32 %v4909, 7
    %v4911 = vsub.s32 0, %v4910
    %v4912 = vrot.slane %v4905, %v4911
    %v4913 = vlaneseq
    %v4914 = vshrl.u32 %v4913, 7
    %v4915 = vsub.s32 1, %v4914
    %v4916 = vrot.slane %v4905, %v4915
    %v4917 = vlaneseq
    %v4918 = vshrl.u32 %v4917, 7
    %v4919 = vsub.s32 2, %v4918
    %v4920 = vrot.slane %v4905, %v4919
    %v4921 = vlaneseq
    %v4922 = vshrl.u32 %v4921, 7
    %v4923 = vsub.s32 3, %v4922
    %v4924 = vrot.slane %v4905, %v4923
    %v4925 = vlaneseq
    %v4926 = vshrl.u32 %v4925, 7
    %v4927 = vsub.s32 4, %v4926
    %v4928 = vrot.slane %v4905, %v4927
    %v4929 = vlaneseq
    %v4930 = vshrl.u32 %v4929, 7
    %v4931 = vsub.s32 5, %v4930
    %v4932 = vrot.slane %v4905, %v4931
    %v4933 = vlaneseq
    %v4934 = vshrl.u32 %v4933, 7
    %v4935 = vsub.s32 6, %v4934
    %v4936 = vrot.slane %v4905, %v4935
    %v4937 = vlaneseq
    %v4938 = vshrl.u32 %v4937, 7
    %v4939 = vsub.s32 7, %v4938
    %v4940 = vrot.slane %v4905, %v4939
    %v4941 = vlaneseq
    %v4942 = vshrl.u32 %v4941, 7
    %v4943 = vsub.s32 0, %v4942
    %v4944 = vrot.slane %v4906, %v4943
    %v4945 = vlaneseq
    %v4946 = vshrl.u32 %v4945, 7
    %v4947 = vsub.s32 1, %v4946
    %v4948 = vrot.slane %v4906, %v4947
    %v4949 = vlaneseq
    %v4950 = vshrl.u32 %v4949, 7
    %v4951 = vsub.s32 2, %v4950
    %v4952 = vrot.slane %v4906, %v4951
    %v4953 = vlaneseq
    %v4954 = vshrl.u32 %v4953, 7
    %v4955 = vsub.s32 3, %v4954
    %v4956 = vrot.slane %v4906, %v4955
    %v4957 = vlaneseq
    %v4958 = vshrl.u32 %v4957, 7
    %v4959 = vsub.s32 4, %v4958
    %v4960 = vrot.slane %v4906, %v4959
    %v4961 = vlaneseq
    %v4962 = vshrl.u32 %v4961, 7
    %v4963 = vsub.s32 5, %v4962
    %v4964 = vrot.slane %v4906, %v4963
    %v4965 = vlaneseq
    %v4966 = vshrl.u32 %v4965, 7
    %v4967 = vsub.s32 6, %v4966
    %v4968 = vrot.slane %v4906, %v4967
    %v4969 = vlaneseq
    %v4970 = vshrl.u32 %v4969, 7
    %v4971 = vsub.s32 7, %v4970
    %v4972 = vrot.slane %v4906, %v4971
    %v5053 = vunpack.c.l.b16 %v4841
    %v5054 = vunpack.c.h.b16 %v4841
    %v5055 = vunpack.c.l.b16 %v4842
    %v5056 = vunpack.c.h.b16 %v4842
    %v5057 = vunpack.c.l.b16 %v4843
    %v5058 = vunpack.c.h.b16 %v4843
    %v5059 = vunpack.c.l.b16 %v4844
    %v5060 = vunpack.c.h.b16 %v4844
    %v5061 = vunpack.c.l.b16 %v4845
    %v5062 = vunpack.c.h.b16 %v4845
    %v5063 = vunpack.c.l.b16 %v4846
    %v5064 = vunpack.c.h.b16 %v4846
    %v5065 = vunpack.c.l.b16 %v4847
    %v5066 = vunpack.c.h.b16 %v4847
    %v5067 = vunpack.c.l.b16 %v4848
    %v5068 = vunpack.c.h.b16 %v4848
    %v5069 = vunpack.c.l.b16 %v4849
    %v5070 = vunpack.c.h.b16 %v4849
    %v5071 = vunpack.c.l.b16 %v4850
    %v5072 = vunpack.c.h.b16 %v4850
    %v5073 = vunpack.c.l.b16 %v4851
    %v5074 = vunpack.c.h.b16 %v4851
    %v5075 = vunpack.c.l.b16 %v4852
    %v5076 = vunpack.c.h.b16 %v4852
    %v5077 = vunpack.c.l.b16 %v4853
    %v5078 = vunpack.c.h.b16 %v4853
    %v5079 = vunpack.c.l.b16 %v4854
    %v5080 = vunpack.c.h.b16 %v4854
    %v5081 = vunpack.c.l.b16 %v4855
    %v5082 = vunpack.c.h.b16 %v4855
    %v5083 = vunpack.c.l.b16 %v4856
    %v5084 = vunpack.c.h.b16 %v4856
    %v5085 = vunpack.c.l.b16 %v4857
    %v5086 = vunpack.c.h.b16 %v4857
    %v5087 = vunpack.c.l.b16 %v4858
    %v5088 = vunpack.c.h.b16 %v4858
    %v5089 = vunpack.c.l.b16 %v4859
    %v5090 = vunpack.c.h.b16 %v4859
    %v5091 = vunpack.c.l.b16 %v4860
    %v5092 = vunpack.c.h.b16 %v4860
    %v5093 = vunpack.c.l.b16 %v4861
    %v5094 = vunpack.c.h.b16 %v4861
    %v5095 = vunpack.c.l.b16 %v4862
    %v5096 = vunpack.c.h.b16 %v4862
    %v5097 = vunpack.c.l.b16 %v4863
    %v5098 = vunpack.c.h.b16 %v4863
    %v5099 = vunpack.c.l.b16 %v4864
    %v5100 = vunpack.c.h.b16 %v4864
    %v5101 = vunpack.c.l.b16 %v4865
    %v5102 = vunpack.c.h.b16 %v4865
    %v5103 = vunpack.c.l.b16 %v4866
    %v5104 = vunpack.c.h.b16 %v4866
    %v5105 = vunpack.c.l.b16 %v4867
    %v5106 = vunpack.c.h.b16 %v4867
    %v5107 = vunpack.c.l.b16 %v4868
    %v5108 = vunpack.c.h.b16 %v4868
    %v5109 = vunpack.c.l.b16 %v4869
    %v5110 = vunpack.c.h.b16 %v4869
    %v5111 = vunpack.c.l.b16 %v4870
    %v5112 = vunpack.c.h.b16 %v4870
    %v5113 = vunpack.c.l.b16 %v4871
    %v5114 = vunpack.c.h.b16 %v4871
    %v5115 = vunpack.c.l.b16 %v4872
    %v5116 = vunpack.c.h.b16 %v4872
    %v5117 = vunpack.c.l.b16 %v4873
    %v5118 = vunpack.c.h.b16 %v4873
    %v5119 = vunpack.c.l.b16 %v4874
    %v5120 = vunpack.c.h.b16 %v4874
    %v5121 = vunpack.c.l.b16 %v4875
    %v5122 = vunpack.c.h.b16 %v4875
    %v5123 = vunpack.c.l.b16 %v4876
    %v5124 = vunpack.c.h.b16 %v4876
    %v5125 = vunpack.c.l.b16 %v4877
    %v5126 = vunpack.c.h.b16 %v4877
    %v5127 = vunpack.c.l.b16 %v4878
    %v5128 = vunpack.c.h.b16 %v4878
    %v5129 = vunpack.c.l.b16 %v4879
    %v5130 = vunpack.c.h.b16 %v4879
    %v5131 = vunpack.c.l.b16 %v4880
    %v5132 = vunpack.c.h.b16 %v4880
    %v5133 = vunpack.c.l.b16 %v4881
    %v5134 = vunpack.c.h.b16 %v4881
    %v5135 = vunpack.c.l.b16 %v4882
    %v5136 = vunpack.c.h.b16 %v4882
    %v5137 = vunpack.c.l.b16 %v4883
    %v5138 = vunpack.c.h.b16 %v4883
    %v5139 = vunpack.c.l.b16 %v4884
    %v5140 = vunpack.c.h.b16 %v4884
    %v5141 = vunpack.c.l.b16 %v4885
    %v5142 = vunpack.c.h.b16 %v4885
    %v5143 = vunpack.c.l.b16 %v4886
    %v5144 = vunpack.c.h.b16 %v4886
    %v5145 = vunpack.c.l.b16 %v4887
    %v5146 = vunpack.c.h.b16 %v4887
    %v5147 = vunpack.c.l.b16 %v4888
    %v5148 = vunpack.c.h.b16 %v4888
    %v5149 = vunpack.c.l.b16 %v4889
    %v5150 = vunpack.c.h.b16 %v4889
    %v5151 = vunpack.c.l.b16 %v4890
    %v5152 = vunpack.c.h.b16 %v4890
    %v5153 = vunpack.c.l.b16 %v4891
    %v5154 = vunpack.c.h.b16 %v4891
    %v5155 = vunpack.c.l.b16 %v4892
    %v5156 = vunpack.c.h.b16 %v4892
    %v5157 = vunpack.c.l.b16 %v4893
    %v5158 = vunpack.c.h.b16 %v4893
    %v5159 = vunpack.c.l.b16 %v4894
    %v5160 = vunpack.c.h.b16 %v4894
    %v5161 = vunpack.c.l.b16 %v4895
    %v5162 = vunpack.c.h.b16 %v4895
    %v5163 = vunpack.c.l.b16 %v4896
    %v5164 = vunpack.c.h.b16 %v4896
    %v5165 = vunpack.c.l.b16 %v4897
    %v5166 = vunpack.c.h.b16 %v4897
    %v5167 = vunpack.c.l.b16 %v4898
    %v5168 = vunpack.c.h.b16 %v4898
    %v5169 = vunpack.c.l.b16 %v4899
    %v5170 = vunpack.c.h.b16 %v4899
    %v5171 = vunpack.c.l.b16 %v4900
    %v5172 = vunpack.c.h.b16 %v4900
    %v5173 = vunpack.c.l.b16 %v4901
    %v5174 = vunpack.c.h.b16 %v4901
    %v5175 = vunpack.c.l.b16 %v4902
    %v5176 = vunpack.c.h.b16 %v4902
    %v5177 = vunpack.c.l.b16 %v4903
    %v5178 = vunpack.c.h.b16 %v4903
    %v5179 = vunpack.c.l.b16 %v4904
    %v5180 = vunpack.c.h.b16 %v4904
    %v5181 = vpack.c.b16 %v5069, %v5053
    %v5182 = vpack.c.b16 %v5070, %v5054
    %v5183 = vpack.c.b16 %v5071, %v5055
    %v5184 = vpack.c.b16 %v5072, %v5056
    %v5185 = vpack.c.b16 %v5073, %v5057
    %v5186 = vpack.c.b16 %v5074, %v5058
    %v5187 = vpack.c.b16 %v5075, %v5059
    %v5188 = vpack.c.b16 %v5076, %v5060
    %v5189 = vpack.c.b16 %v5077, %v5061
    %v5190 = vpack.c.b16 %v5078, %v5062
    %v5191 = vpack.c.b16 %v5079, %v5063
    %v5192 = vpack.c.b16 %v5080, %v5064
    %v5193 = vpack.c.b16 %v5081, %v5065
    %v5194 = vpack.c.b16 %v5082, %v5066
    %v5195 = vpack.c.b16 %v5083, %v5067
    %v5196 = vpack.c.b16 %v5084, %v5068
    %v5197 = vpack.c.b16 %v5101, %v5085
    %v5198 = vpack.c.b16 %v5102, %v5086
    %v5199 = vpack.c.b16 %v5103, %v5087
    %v5200 = vpack.c.b16 %v5104, %v5088
    %v5201 = vpack.c.b16 %v5105, %v5089
    %v5202 = vpack.c.b16 %v5106, %v5090
    %v5203 = vpack.c.b16 %v5107, %v5091
    %v5204 = vpack.c.b16 %v5108, %v5092
    %v5205 = vpack.c.b16 %v5109, %v5093
    %v5206 = vpack.c.b16 %v5110, %v5094
    %v5207 = vpack.c.b16 %v5111, %v5095
    %v5208 = vpack.c.b16 %v5112, %v5096
    %v5209 = vpack.c.b16 %v5113, %v5097
    %v5210 = vpack.c.b16 %v5114, %v5098
    %v5211 = vpack.c.b16 %v5115, %v5099
    %v5212 = vpack.c.b16 %v5116, %v5100
    %v5213 = vpack.c.b16 %v5133, %v5117
    %v5214 = vpack.c.b16 %v5134, %v5118
    %v5215 = vpack.c.b16 %v5135, %v5119
    %v5216 = vpack.c.b16 %v5136, %v5120
    %v5217 = vpack.c.b16 %v5137, %v5121
    %v5218 = vpack.c.b16 %v5138, %v5122
    %v5219 = vpack.c.b16 %v5139, %v5123
    %v5220 = vpack.c.b16 %v5140, %v5124
    %v5221 = vpack.c.b16 %v5141, %v5125
    %v5222 = vpack.c.b16 %v5142, %v5126
    %v5223 = vpack.c.b16 %v5143, %v5127
    %v5224 = vpack.c.b16 %v5144, %v5128
    %v5225 = vpack.c.b16 %v5145, %v5129
    %v5226 = vpack.c.b16 %v5146, %v5130
    %v5227 = vpack.c.b16 %v5147, %v5131
    %v5228 = vpack.c.b16 %v5148, %v5132
    %v5229 = vpack.c.b16 %v5165, %v5149
    %v5230 = vpack.c.b16 %v5166, %v5150
    %v5231 = vpack.c.b16 %v5167, %v5151
    %v5232 = vpack.c.b16 %v5168, %v5152
    %v5233 = vpack.c.b16 %v5169, %v5153
    %v5234 = vpack.c.b16 %v5170, %v5154
    %v5235 = vpack.c.b16 %v5171, %v5155
    %v5236 = vpack.c.b16 %v5172, %v5156
    %v5237 = vpack.c.b16 %v5173, %v5157
    %v5238 = vpack.c.b16 %v5174, %v5158
    %v5239 = vpack.c.b16 %v5175, %v5159
    %v5240 = vpack.c.b16 %v5176, %v5160
    %v5241 = vpack.c.b16 %v5177, %v5161
    %v5242 = vpack.c.b16 %v5178, %v5162
    %v5243 = vpack.c.b16 %v5179, %v5163
    %v5244 = vpack.c.b16 %v5180, %v5164
    %v5310 = vsel %vm332, %v4840, 0
    %5312 = vmatprep.subr.bf16.mxu0 %v5182
    %5313 = vmatpush1.bf16.msra.mxu0 %v5181
    %5314 = vmatprep.subr.bf16.mxu0 %v5198
    %5315 = vmatpush1.bf16.msra.mxu0 %v5197
    %5316 = vmatprep.subr.bf16.mxu0 %v5214
    %5317 = vmatpush1.bf16.msra.mxu0 %v5213
    %5318 = vmatprep.subr.bf16.mxu0 %v5230
    %5319 = vmatpush1.bf16.msra.mxu0 %v5229
    %5320 = vmatprep.subr.bf16.mxu0 0
    %5321 = vmatpush1.bf16.msra.mxu0 0
    %5322 = vmatprep.subr.bf16.mxu0 0
    %5323 = vmatpush1.bf16.msra.mxu0 0
    %5324 = vmatprep.subr.bf16.mxu0 0
    %5325 = vmatpush1.bf16.msra.mxu0 0
    %5326 = vmatprep.subr.bf16.mxu0 0
    %5327 = vmatpush1.bf16.msra.mxu0 0
    %5328 = vmatprep.subr.bf16.mxu0 0
    %5329 = vmatpush1.bf16.msra.mxu0 0
    %5330 = vmatprep.subr.bf16.mxu0 0
    %5331 = vmatpush1.bf16.msra.mxu0 0
    %5332 = vmatprep.subr.bf16.mxu0 0
    %5333 = vmatpush1.bf16.msra.mxu0 0
    %5334 = vmatprep.subr.bf16.mxu0 0
    %5335 = vmatpush1.bf16.msra.mxu0 0
    %5336 = vmatprep.subr.bf16.mxu0 0
    %5337 = vmatpush1.bf16.msra.mxu0 0
    %5338 = vmatprep.subr.bf16.mxu0 0
    %5339 = vmatpush1.bf16.msra.mxu0 0
    %5340 = vmatprep.subr.bf16.mxu0 0
    %5341 = vmatpush1.bf16.msra.mxu0 0
    %5342 = vmatprep.subr.bf16.mxu0 0
    %5343 = vmatpush1.bf16.msra.mxu0 0
    %5344 = vmatprep.mubr.bf16.mxu0 0
    %5345 = vmatmul.mubr.bf16.gmra.mrb[0].mxu0 %v5310
    %v5346 = vpop.f32.mrb[0].mxu0
    %v5347 = vadd.f32 %v4912, %v5346
    %v5348 = vpop.f32.mrb[0].mxu0
    %v5349 = vadd.f32 %v4916, %v5348
    %v5350 = vpop.f32.mrb[0].mxu0
    %v5351 = vadd.f32 %v4912, %v5350
    %v5352 = vpop.f32.mrb[0].mxu0
    %v5353 = vadd.f32 %v4916, %v5352
    %5354 = vdwg.mxu0
    %5355 = vmatprep.subr.bf16.mxu0 %v5184
    %5356 = vmatpush1.bf16.msra.mxu0 %v5183
    %5357 = vmatprep.subr.bf16.mxu0 %v5200
    %5358 = vmatpush1.bf16.msra.mxu0 %v5199
    %5359 = vmatprep.subr.bf16.mxu0 %v5216
    %5360 = vmatpush1.bf16.msra.mxu0 %v5215
    %5361 = vmatprep.subr.bf16.mxu0 %v5232
    %5362 = vmatpush1.bf16.msra.mxu0 %v5231
    %5363 = vmatprep.subr.bf16.mxu0 0
    %5364 = vmatpush1.bf16.msra.mxu0 0
    %5365 = vmatprep.subr.bf16.mxu0 0
    %5366 = vmatpush1.bf16.msra.mxu0 0
    %5367 = vmatprep.subr.bf16.mxu0 0
    %5368 = vmatpush1.bf16.msra.mxu0 0
    %5369 = vmatprep.subr.bf16.mxu0 0
    %5370 = vmatpush1.bf16.msra.mxu0 0
    %5371 = vmatprep.subr.bf16.mxu0 0
    %5372 = vmatpush1.bf16.msra.mxu0 0
    %5373 = vmatprep.subr.bf16.mxu0 0
    %5374 = vmatpush1.bf16.msra.mxu0 0
    %5375 = vmatprep.subr.bf16.mxu0 0
    %5376 = vmatpush1.bf16.msra.mxu0 0
    %5377 = vmatprep.subr.bf16.mxu0 0
    %5378 = vmatpush1.bf16.msra.mxu0 0
    %5379 = vmatprep.subr.bf16.mxu0 0
    %5380 = vmatpush1.bf16.msra.mxu0 0
    %5381 = vmatprep.subr.bf16.mxu0 0
    %5382 = vmatpush1.bf16.msra.mxu0 0
    %5383 = vmatprep.subr.bf16.mxu0 0
    %5384 = vmatpush1.bf16.msra.mxu0 0
    %5385 = vmatprep.subr.bf16.mxu0 0
    %5386 = vmatpush1.bf16.msra.mxu0 0
    %5387 = vmatprep.mubr.bf16.mxu0 0
    %5388 = vmatmul.mubr.bf16.gmra.mrb[0].mxu0 %v5310
    %v5389 = vpop.f32.mrb[0].mxu0
    %v5390 = vadd.f32 %v4920, %v5389
    %v5391 = vpop.f32.mrb[0].mxu0
    %v5392 = vadd.f32 %v4924, %v5391
    %v5393 = vpop.f32.mrb[0].mxu0
    %v5394 = vadd.f32 %v4920, %v5393
    %v5395 = vpop.f32.mrb[0].mxu0
    %v5396 = vadd.f32 %v4924, %v5395
    %5397 = vdwg.mxu0
    %5398 = vmatprep.subr.bf16.mxu0 %v5186
    %5399 = vmatpush1.bf16.msra.mxu0 %v5185
    %5400 = vmatprep.subr.bf16.mxu0 %v5202
    %5401 = vmatpush1.bf16.msra.mxu0 %v5201
    %5402 = vmatprep.subr.bf16.mxu0 %v5218
    %5403 = vmatpush1.bf16.msra.mxu0 %v5217
    %5404 = vmatprep.subr.bf16.mxu0 %v5234
    %5405 = vmatpush1.bf16.msra.mxu0 %v5233
    %5406 = vmatprep.subr.bf16.mxu0 0
    %5407 = vmatpush1.bf16.msra.mxu0 0
    %5408 = vmatprep.subr.bf16.mxu0 0
    %5409 = vmatpush1.bf16.msra.mxu0 0
    %5410 = vmatprep.subr.bf16.mxu0 0
    %5411 = vmatpush1.bf16.msra.mxu0 0
    %5412 = vmatprep.subr.bf16.mxu0 0
    %5413 = vmatpush1.bf16.msra.mxu0 0
    %5414 = vmatprep.subr.bf16.mxu0 0
    %5415 = vmatpush1.bf16.msra.mxu0 0
    %5416 = vmatprep.subr.bf16.mxu0 0
    %5417 = vmatpush1.bf16.msra.mxu0 0
    %5418 = vmatprep.subr.bf16.mxu0 0
    %5419 = vmatpush1.bf16.msra.mxu0 0
    %5420 = vmatprep.subr.bf16.mxu0 0
    %5421 = vmatpush1.bf16.msra.mxu0 0
    %5422 = vmatprep.subr.bf16.mxu0 0
    %5423 = vmatpush1.bf16.msra.mxu0 0
    %5424 = vmatprep.subr.bf16.mxu0 0
    %5425 = vmatpush1.bf16.msra.mxu0 0
    %5426 = vmatprep.subr.bf16.mxu0 0
    %5427 = vmatpush1.bf16.msra.mxu0 0
    %5428 = vmatprep.subr.bf16.mxu0 0
    %5429 = vmatpush1.bf16.msra.mxu0 0
    %5430 = vmatprep.mubr.bf16.mxu0 0
    %5431 = vmatmul.mubr.bf16.gmra.mrb[0].mxu0 %v5310
    %v5432 = vpop.f32.mrb[0].mxu0
    %v5433 = vadd.f32 %v4928, %v5432
    %v5434 = vpop.f32.mrb[0].mxu0
    %v5435 = vadd.f32 %v4932, %v5434
    %v5436 = vpop.f32.mrb[0].mxu0
    %v5437 = vadd.f32 %v4928, %v5436
    %v5438 = vpop.f32.mrb[0].mxu0
    %v5439 = vadd.f32 %v4932, %v5438
    %5440 = vdwg.mxu0
    %5441 = vmatprep.subr.bf16.mxu0 %v5188
    %5442 = vmatpush1.bf16.msra.mxu0 %v5187
    %5443 = vmatprep.subr.bf16.mxu0 %v5204
    %5444 = vmatpush1.bf16.msra.mxu0 %v5203
    %5445 = vmatprep.subr.bf16.mxu0 %v5220
    %5446 = vmatpush1.bf16.msra.mxu0 %v5219
    %5447 = vmatprep.subr.bf16.mxu0 %v5236
    %5448 = vmatpush1.bf16.msra.mxu0 %v5235
    %5449 = vmatprep.subr.bf16.mxu0 0
    %5450 = vmatpush1.bf16.msra.mxu0 0
    %5451 = vmatprep.subr.bf16.mxu0 0
    %5452 = vmatpush1.bf16.msra.mxu0 0
    %5453 = vmatprep.subr.bf16.mxu0 0
    %5454 = vmatpush1.bf16.msra.mxu0 0
    %5455 = vmatprep.subr.bf16.mxu0 0
    %5456 = vmatpush1.bf16.msra.mxu0 0
    %5457 = vmatprep.subr.bf16.mxu0 0
    %5458 = vmatpush1.bf16.msra.mxu0 0
    %5459 = vmatprep.subr.bf16.mxu0 0
    %5460 = vmatpush1.bf16.msra.mxu0 0
    %5461 = vmatprep.subr.bf16.mxu0 0
    %5462 = vmatpush1.bf16.msra.mxu0 0
    %5463 = vmatprep.subr.bf16.mxu0 0
    %5464 = vmatpush1.bf16.msra.mxu0 0
    %5465 = vmatprep.subr.bf16.mxu0 0
    %5466 = vmatpush1.bf16.msra.mxu0 0
    %5467 = vmatprep.subr.bf16.mxu0 0
    %5468 = vmatpush1.bf16.msra.mxu0 0
    %5469 = vmatprep.subr.bf16.mxu0 0
    %5470 = vmatpush1.bf16.msra.mxu0 0
    %5471 = vmatprep.subr.bf16.mxu0 0
    %5472 = vmatpush1.bf16.msra.mxu0 0
    %5473 = vmatprep.mubr.bf16.mxu0 0
    %5474 = vmatmul.mubr.bf16.gmra.mrb[0].mxu0 %v5310
    %v5475 = vpop.f32.mrb[0].mxu0
    %v5476 = vadd.f32 %v4936, %v5475
    %v5477 = vpop.f32.mrb[0].mxu0
    %v5478 = vadd.f32 %v4940, %v5477
    %v5479 = vpop.f32.mrb[0].mxu0
    %v5480 = vadd.f32 %v4936, %v5479
    %v5481 = vpop.f32.mrb[0].mxu0
    %v5482 = vadd.f32 %v4940, %v5481
    %5483 = vdwg.mxu0
    %5484 = vmatprep.subr.bf16.mxu0 %v5190
    %5485 = vmatpush1.bf16.msra.mxu0 %v5189
    %5486 = vmatprep.subr.bf16.mxu0 %v5206
    %5487 = vmatpush1.bf16.msra.mxu0 %v5205
    %5488 = vmatprep.subr.bf16.mxu0 %v5222
    %5489 = vmatpush1.bf16.msra.mxu0 %v5221
    %5490 = vmatprep.subr.bf16.mxu0 %v5238
    %5491 = vmatpush1.bf16.msra.mxu0 %v5237
    %5492 = vmatprep.subr.bf16.mxu0 0
    %5493 = vmatpush1.bf16.msra.mxu0 0
    %5494 = vmatprep.subr.bf16.mxu0 0
    %5495 = vmatpush1.bf16.msra.mxu0 0
    %5496 = vmatprep.subr.bf16.mxu0 0
    %5497 = vmatpush1.bf16.msra.mxu0 0
    %5498 = vmatprep.subr.bf16.mxu0 0
    %5499 = vmatpush1.bf16.msra.mxu0 0
    %5500 = vmatprep.subr.bf16.mxu0 0
    %5501 = vmatpush1.bf16.msra.mxu0 0
    %5502 = vmatprep.subr.bf16.mxu0 0
    %5503 = vmatpush1.bf16.msra.mxu0 0
    %5504 = vmatprep.subr.bf16.mxu0 0
    %5505 = vmatpush1.bf16.msra.mxu0 0
    %5506 = vmatprep.subr.bf16.mxu0 0
    %5507 = vmatpush1.bf16.msra.mxu0 0
    %5508 = vmatprep.subr.bf16.mxu0 0
    %5509 = vmatpush1.bf16.msra.mxu0 0
    %5510 = vmatprep.subr.bf16.mxu0 0
    %5511 = vmatpush1.bf16.msra.mxu0 0
    %5512 = vmatprep.subr.bf16.mxu0 0
    %5513 = vmatpush1.bf16.msra.mxu0 0
    %5514 = vmatprep.subr.bf16.mxu0 0
    %5515 = vmatpush1.bf16.msra.mxu0 0
    %5516 = vmatprep.mubr.bf16.mxu0 0
    %5517 = vmatmul.mubr.bf16.gmra.mrb[0].mxu0 %v5310
    %v5518 = vpop.f32.mrb[0].mxu0
    %v5519 = vadd.f32 %v4944, %v5518
    %v5520 = vpop.f32.mrb[0].mxu0
    %v5521 = vadd.f32 %v4948, %v5520
    %v5522 = vpop.f32.mrb[0].mxu0
    %v5523 = vadd.f32 %v4944, %v5522
    %v5524 = vpop.f32.mrb[0].mxu0
    %v5525 = vadd.f32 %v4948, %v5524
    %5526 = vdwg.mxu0
    %5527 = vmatprep.subr.bf16.mxu0 %v5192
    %5528 = vmatpush1.bf16.msra.mxu0 %v5191
    %5529 = vmatprep.subr.bf16.mxu0 %v5208
    %5530 = vmatpush1.bf16.msra.mxu0 %v5207
    %5531 = vmatprep.subr.bf16.mxu0 %v5224
    %5532 = vmatpush1.bf16.msra.mxu0 %v5223
    %5533 = vmatprep.subr.bf16.mxu0 %v5240
    %5534 = vmatpush1.bf16.msra.mxu0 %v5239
    %5535 = vmatprep.subr.bf16.mxu0 0
    %5536 = vmatpush1.bf16.msra.mxu0 0
    %5537 = vmatprep.subr.bf16.mxu0 0
    %5538 = vmatpush1.bf16.msra.mxu0 0
    %5539 = vmatprep.subr.bf16.mxu0 0
    %5540 = vmatpush1.bf16.msra.mxu0 0
    %5541 = vmatprep.subr.bf16.mxu0 0
    %5542 = vmatpush1.bf16.msra.mxu0 0
    %5543 = vmatprep.subr.bf16.mxu0 0
    %5544 = vmatpush1.bf16.msra.mxu0 0
    %5545 = vmatprep.subr.bf16.mxu0 0
    %5546 = vmatpush1.bf16.msra.mxu0 0
    %5547 = vmatprep.subr.bf16.mxu0 0
    %5548 = vmatpush1.bf16.msra.mxu0 0
    %5549 = vmatprep.subr.bf16.mxu0 0
    %5550 = vmatpush1.bf16.msra.mxu0 0
    %5551 = vmatprep.subr.bf16.mxu0 0
    %5552 = vmatpush1.bf16.msra.mxu0 0
    %5553 = vmatprep.subr.bf16.mxu0 0
    %5554 = vmatpush1.bf16.msra.mxu0 0
    %5555 = vmatprep.subr.bf16.mxu0 0
    %5556 = vmatpush1.bf16.msra.mxu0 0
    %5557 = vmatprep.subr.bf16.mxu0 0
    %5558 = vmatpush1.bf16.msra.mxu0 0
    %5559 = vmatprep.mubr.bf16.mxu0 0
    %5560 = vmatmul.mubr.bf16.gmra.mrb[0].mxu0 %v5310
    %v5561 = vpop.f32.mrb[0].mxu0
    %v5562 = vadd.f32 %v4952, %v5561
    %v5563 = vpop.f32.mrb[0].mxu0
    %v5564 = vadd.f32 %v4956, %v5563
    %v5565 = vpop.f32.mrb[0].mxu0
    %v5566 = vadd.f32 %v4952, %v5565
    %v5567 = vpop.f32.mrb[0].mxu0
    %v5568 = vadd.f32 %v4956, %v5567
    %5569 = vdwg.mxu0
    %5570 = vmatprep.subr.bf16.mxu0 %v5194
    %5571 = vmatpush1.bf16.msra.mxu0 %v5193
    %5572 = vmatprep.subr.bf16.mxu0 %v5210
    %5573 = vmatpush1.bf16.msra.mxu0 %v5209
    %5574 = vmatprep.subr.bf16.mxu0 %v5226
    %5575 = vmatpush1.bf16.msra.mxu0 %v5225
    %5576 = vmatprep.subr.bf16.mxu0 %v5242
    %5577 = vmatpush1.bf16.msra.mxu0 %v5241
    %5578 = vmatprep.subr.bf16.mxu0 0
    %5579 = vmatpush1.bf16.msra.mxu0 0
    %5580 = vmatprep.subr.bf16.mxu0 0
    %5581 = vmatpush1.bf16.msra.mxu0 0
    %5582 = vmatprep.subr.bf16.mxu0 0
    %5583 = vmatpush1.bf16.msra.mxu0 0
    %5584 = vmatprep.subr.bf16.mxu0 0
    %5585 = vmatpush1.bf16.msra.mxu0 0
    %5586 = vmatprep.subr.bf16.mxu0 0
    %5587 = vmatpush1.bf16.msra.mxu0 0
    %5588 = vmatprep.subr.bf16.mxu0 0
    %5589 = vmatpush1.bf16.msra.mxu0 0
    %5590 = vmatprep.subr.bf16.mxu0 0
    %5591 = vmatpush1.bf16.msra.mxu0 0
    %5592 = vmatprep.subr.bf16.mxu0 0
    %5593 = vmatpush1.bf16.msra.mxu0 0
    %5594 = vmatprep.subr.bf16.mxu0 0
    %5595 = vmatpush1.bf16.msra.mxu0 0
    %5596 = vmatprep.subr.bf16.mxu0 0
    %5597 = vmatpush1.bf16.msra.mxu0 0
    %5598 = vmatprep.subr.bf16.mxu0 0
    %5599 = vmatpush1.bf16.msra.mxu0 0
    %5600 = vmatprep.subr.bf16.mxu0 0
    %5601 = vmatpush1.bf16.msra.mxu0 0
    %5602 = vmatprep.mubr.bf16.mxu0 0
    %5603 = vmatmul.mubr.bf16.gmra.mrb[0].mxu0 %v5310
    %v5604 = vpop.f32.mrb[0].mxu0
    %v5605 = vadd.f32 %v4960, %v5604
    %v5606 = vpop.f32.mrb[0].mxu0
    %v5607 = vadd.f32 %v4964, %v5606
    %v5608 = vpop.f32.mrb[0].mxu0
    %v5609 = vadd.f32 %v4960, %v5608
    %v5610 = vpop.f32.mrb[0].mxu0
    %v5611 = vadd.f32 %v4964, %v5610
    %5612 = vdwg.mxu0
    %5613 = vmatprep.subr.bf16.mxu0 %v5196
    %5614 = vmatpush1.bf16.msra.mxu0 %v5195
    %5615 = vmatprep.subr.bf16.mxu0 %v5212
    %5616 = vmatpush1.bf16.msra.mxu0 %v5211
    %5617 = vmatprep.subr.bf16.mxu0 %v5228
    %5618 = vmatpush1.bf16.msra.mxu0 %v5227
    %5619 = vmatprep.subr.bf16.mxu0 %v5244
    %5620 = vmatpush1.bf16.msra.mxu0 %v5243
    %5621 = vmatprep.subr.bf16.mxu0 0
    %5622 = vmatpush1.bf16.msra.mxu0 0
    %5623 = vmatprep.subr.bf16.mxu0 0
    %5624 = vmatpush1.bf16.msra.mxu0 0
    %5625 = vmatprep.subr.bf16.mxu0 0
    %5626 = vmatpush1.bf16.msra.mxu0 0
    %5627 = vmatprep.subr.bf16.mxu0 0
    %5628 = vmatpush1.bf16.msra.mxu0 0
    %5629 = vmatprep.subr.bf16.mxu0 0
    %5630 = vmatpush1.bf16.msra.mxu0 0
    %5631 = vmatprep.subr.bf16.mxu0 0
    %5632 = vmatpush1.bf16.msra.mxu0 0
    %5633 = vmatprep.subr.bf16.mxu0 0
    %5634 = vmatpush1.bf16.msra.mxu0 0
    %5635 = vmatprep.subr.bf16.mxu0 0
    %5636 = vmatpush1.bf16.msra.mxu0 0
    %5637 = vmatprep.subr.bf16.mxu0 0
    %5638 = vmatpush1.bf16.msra.mxu0 0
    %5639 = vmatprep.subr.bf16.mxu0 0
    %5640 = vmatpush1.bf16.msra.mxu0 0
    %5641 = vmatprep.subr.bf16.mxu0 0
    %5642 = vmatpush1.bf16.msra.mxu0 0
    %5643 = vmatprep.subr.bf16.mxu0 0
    %5644 = vmatpush1.bf16.msra.mxu0 0
    %5645 = vmatprep.mubr.bf16.mxu0 0
    %5646 = vmatmul.mubr.bf16.gmra.mrb[0].mxu0 %v5310
    %v5647 = vpop.f32.mrb[0].mxu0
    %v5648 = vadd.f32 %v4968, %v5647
    %v5649 = vpop.f32.mrb[0].mxu0
    %v5650 = vadd.f32 %v4972, %v5649
    %v5651 = vpop.f32.mrb[0].mxu0
    %v5652 = vadd.f32 %v4968, %v5651
    %v5653 = vpop.f32.mrb[0].mxu0
    %v5654 = vadd.f32 %v4972, %v5653
    %5655 = vdwg.mxu0
    %v5656 = vmax.f32 %v5347, 0.0
    %v5657 = vmax.f32 %v5349, 0.0
    %v5658 = vmax.f32 %v5390, 0.0
    %v5659 = vmax.f32 %v5392, 0.0
    %v5660 = vmax.f32 %v5433, 0.0
    %v5661 = vmax.f32 %v5435, 0.0
    %v5662 = vmax.f32 %v5476, 0.0
    %v5663 = vmax.f32 %v5478, 0.0
    %v5664 = vmax.f32 %v5519, 0.0
    %v5665 = vmax.f32 %v5521, 0.0
    %v5666 = vmax.f32 %v5562, 0.0
    %v5667 = vmax.f32 %v5564, 0.0
    %v5668 = vmax.f32 %v5605, 0.0
    %v5669 = vmax.f32 %v5607, 0.0
    %v5670 = vmax.f32 %v5648, 0.0
    %v5671 = vmax.f32 %v5650, 0.0
    %v5672 = vmax.f32 %v5351, 0.0
    %v5673 = vmax.f32 %v5353, 0.0
    %v5674 = vmax.f32 %v5394, 0.0
    %v5675 = vmax.f32 %v5396, 0.0
    %v5676 = vmax.f32 %v5437, 0.0
    %v5677 = vmax.f32 %v5439, 0.0
    %v5678 = vmax.f32 %v5480, 0.0
    %v5679 = vmax.f32 %v5482, 0.0
    %v5680 = vmax.f32 %v5523, 0.0
    %v5681 = vmax.f32 %v5525, 0.0
    %v5682 = vmax.f32 %v5566, 0.0
    %v5683 = vmax.f32 %v5568, 0.0
    %v5684 = vmax.f32 %v5609, 0.0
    %v5685 = vmax.f32 %v5611, 0.0
    %v5686 = vmax.f32 %v5652, 0.0
    %v5687 = vmax.f32 %v5654, 0.0
    %v5688 = vpack.c.bf16 %v5672, %v5656
    %v5689 = vpack.c.bf16 %v5673, %v5657
    %v5690 = vpack.c.bf16 %v5674, %v5658
    %v5691 = vpack.c.bf16 %v5675, %v5659
    %v5692 = vpack.c.bf16 %v5676, %v5660
    %v5693 = vpack.c.bf16 %v5677, %v5661
    %v5694 = vpack.c.bf16 %v5678, %v5662
    %v5695 = vpack.c.bf16 %v5679, %v5663
    %v5696 = vpack.c.bf16 %v5680, %v5664
    %v5697 = vpack.c.bf16 %v5681, %v5665
    %v5698 = vpack.c.bf16 %v5682, %v5666
    %v5699 = vpack.c.bf16 %v5683, %v5667
    %v5700 = vpack.c.bf16 %v5684, %v5668
    %v5701 = vpack.c.bf16 %v5685, %v5669
    %v5702 = vpack.c.bf16 %v5686, %v5670
    %v5703 = vpack.c.bf16 %v5687, %v5671
    %v5704 = vld [vmem:[%s55] sm:$0xf]
    %v5705 = vld [vmem:[%s55 + $0x4] sm:$0xf]
    %v5706 = vld [vmem:[%s55 + $0x8] sm:$0xf]
    %v5707 = vld [vmem:[%s55 + $0xc] sm:$0xf]
    %v5708 = vld [vmem:[%s55 + $0x10] sm:$0xf]
    %v5709 = vld [vmem:[%s55 + $0x14] sm:$0xf]
    %v5710 = vld [vmem:[%s55 + $0x18] sm:$0xf]
    %v5711 = vld [vmem:[%s55 + $0x1c] sm:$0xf]
    %v5712 = vld [vmem:[%s55 + $0x20] sm:$0xf]
    %v5713 = vld [vmem:[%s55 + $0x24] sm:$0xf]
    %v5714 = vld [vmem:[%s55 + $0x28] sm:$0xf]
    %v5715 = vld [vmem:[%s55 + $0x2c] sm:$0xf]
    %v5716 = vld [vmem:[%s55 + $0x30] sm:$0xf]
    %v5717 = vld [vmem:[%s55 + $0x34] sm:$0xf]
    %v5718 = vld [vmem:[%s55 + $0x38] sm:$0xf]
    %v5719 = vld [vmem:[%s55 + $0x3c] sm:$0xf]
    %v5720 = vld [vmem:[%s55 + $0x40] sm:$0xf]
    %v5721 = vld [vmem:[%s55 + $0x44] sm:$0xf]
    %v5722 = vld [vmem:[%s55 + $0x48] sm:$0xf]
    %v5723 = vld [vmem:[%s55 + $0x4c] sm:$0xf]
    %v5724 = vld [vmem:[%s55 + $0x50] sm:$0xf]
    %v5725 = vld [vmem:[%s55 + $0x54] sm:$0xf]
    %v5726 = vld [vmem:[%s55 + $0x58] sm:$0xf]
    %v5727 = vld [vmem:[%s55 + $0x5c] sm:$0xf]
    %v5728 = vld [vmem:[%s55 + $0x60] sm:$0xf]
    %v5729 = vld [vmem:[%s55 + $0x64] sm:$0xf]
    %v5730 = vld [vmem:[%s55 + $0x68] sm:$0xf]
    %v5731 = vld [vmem:[%s55 + $0x6c] sm:$0xf]
    %v5732 = vld [vmem:[%s55 + $0x70] sm:$0xf]
    %v5733 = vld [vmem:[%s55 + $0x74] sm:$0xf]
    %v5734 = vld [vmem:[%s55 + $0x78] sm:$0xf]
    %v5735 = vld [vmem:[%s55 + $0x7c] sm:$0xf]
    %v5736 = vld [vmem:[%s55 + $0x80] sm:$0xf]
    %v5737 = vld [vmem:[%s55 + $0x84] sm:$0xf]
    %v5738 = vld [vmem:[%s55 + $0x88] sm:$0xf]
    %v5739 = vld [vmem:[%s55 + $0x8c] sm:$0xf]
    %v5740 = vld [vmem:[%s55 + $0x90] sm:$0xf]
    %v5741 = vld [vmem:[%s55 + $0x94] sm:$0xf]
    %v5742 = vld [vmem:[%s55 + $0x98] sm:$0xf]
    %v5743 = vld [vmem:[%s55 + $0x9c] sm:$0xf]
    %v5744 = vld [vmem:[%s55 + $0xa0] sm:$0xf]
    %v5745 = vld [vmem:[%s55 + $0xa4] sm:$0xf]
    %v5746 = vld [vmem:[%s55 + $0xa8] sm:$0xf]
    %v5747 = vld [vmem:[%s55 + $0xac] sm:$0xf]
    %v5748 = vld [vmem:[%s55 + $0xb0] sm:$0xf]
    %v5749 = vld [vmem:[%s55 + $0xb4] sm:$0xf]
    %v5750 = vld [vmem:[%s55 + $0xb8] sm:$0xf]
    %v5751 = vld [vmem:[%s55 + $0xbc] sm:$0xf]
    %v5752 = vld [vmem:[%s55 + $0xc0] sm:$0xf]
    %v5753 = vld [vmem:[%s55 + $0xc4] sm:$0xf]
    %v5754 = vld [vmem:[%s55 + $0xc8] sm:$0xf]
    %v5755 = vld [vmem:[%s55 + $0xcc] sm:$0xf]
    %v5756 = vld [vmem:[%s55 + $0xd0] sm:$0xf]
    %v5757 = vld [vmem:[%s55 + $0xd4] sm:$0xf]
    %v5758 = vld [vmem:[%s55 + $0xd8] sm:$0xf]
    %v5759 = vld [vmem:[%s55 + $0xdc] sm:$0xf]
    %v5760 = vld [vmem:[%s55 + $0xe0] sm:$0xf]
    %v5761 = vld [vmem:[%s55 + $0xe4] sm:$0xf]
    %v5762 = vld [vmem:[%s55 + $0xe8] sm:$0xf]
    %v5763 = vld [vmem:[%s55 + $0xec] sm:$0xf]
    %v5764 = vld [vmem:[%s55 + $0xf0] sm:$0xf]
    %v5765 = vld [vmem:[%s55 + $0xf4] sm:$0xf]
    %v5766 = vld [vmem:[%s55 + $0xf8] sm:$0xf]
    %v5767 = vld [vmem:[%s55 + $0xfc] sm:$0xf]
    %v5768 = vld [vmem:[%s55 + $0x100] sm:$0xf]
    %v5769 = vld [vmem:[%s55 + $0x104] sm:$0xf]
    %v5770 = vld [vmem:[%s55 + $0x108] sm:$0xf]
    %v5771 = vld [vmem:[%s55 + $0x10c] sm:$0xf]
    %v5772 = vld [vmem:[%s55 + $0x110] sm:$0xf]
    %v5773 = vld [vmem:[%s55 + $0x114] sm:$0xf]
    %v5774 = vld [vmem:[%s55 + $0x118] sm:$0xf]
    %v5775 = vld [vmem:[%s55 + $0x11c] sm:$0xf]
    %v5776 = vld [vmem:[%s55 + $0x120] sm:$0xf]
    %v5777 = vld [vmem:[%s55 + $0x124] sm:$0xf]
    %v5778 = vld [vmem:[%s55 + $0x128] sm:$0xf]
    %v5779 = vld [vmem:[%s55 + $0x12c] sm:$0xf]
    %v5780 = vld [vmem:[%s55 + $0x130] sm:$0xf]
    %v5781 = vld [vmem:[%s55 + $0x134] sm:$0xf]
    %v5782 = vld [vmem:[%s55 + $0x138] sm:$0xf]
    %v5783 = vld [vmem:[%s55 + $0x13c] sm:$0xf]
    %v5784 = vld [vmem:[%s55 + $0x140] sm:$0xf]
    %v5785 = vld [vmem:[%s55 + $0x144] sm:$0xf]
    %v5786 = vld [vmem:[%s55 + $0x148] sm:$0xf]
    %v5787 = vld [vmem:[%s55 + $0x14c] sm:$0xf]
    %v5788 = vld [vmem:[%s55 + $0x150] sm:$0xf]
    %v5789 = vld [vmem:[%s55 + $0x154] sm:$0xf]
    %v5790 = vld [vmem:[%s55 + $0x158] sm:$0xf]
    %v5791 = vld [vmem:[%s55 + $0x15c] sm:$0xf]
    %v5792 = vld [vmem:[%s55 + $0x160] sm:$0xf]
    %v5793 = vld [vmem:[%s55 + $0x164] sm:$0xf]
    %v5794 = vld [vmem:[%s55 + $0x168] sm:$0xf]
    %v5795 = vld [vmem:[%s55 + $0x16c] sm:$0xf]
    %v5796 = vld [vmem:[%s55 + $0x170] sm:$0xf]
    %v5797 = vld [vmem:[%s55 + $0x174] sm:$0xf]
    %v5798 = vld [vmem:[%s55 + $0x178] sm:$0xf]
    %v5799 = vld [vmem:[%s55 + $0x17c] sm:$0xf]
    %v5800 = vld [vmem:[%s55 + $0x180] sm:$0xf]
    %v5801 = vld [vmem:[%s55 + $0x184] sm:$0xf]
    %v5802 = vld [vmem:[%s55 + $0x188] sm:$0xf]
    %v5803 = vld [vmem:[%s55 + $0x18c] sm:$0xf]
    %v5804 = vld [vmem:[%s55 + $0x190] sm:$0xf]
    %v5805 = vld [vmem:[%s55 + $0x194] sm:$0xf]
    %v5806 = vld [vmem:[%s55 + $0x198] sm:$0xf]
    %v5807 = vld [vmem:[%s55 + $0x19c] sm:$0xf]
    %v5808 = vld [vmem:[%s55 + $0x1a0] sm:$0xf]
    %v5809 = vld [vmem:[%s55 + $0x1a4] sm:$0xf]
    %v5810 = vld [vmem:[%s55 + $0x1a8] sm:$0xf]
    %v5811 = vld [vmem:[%s55 + $0x1ac] sm:$0xf]
    %v5812 = vld [vmem:[%s55 + $0x1b0] sm:$0xf]
    %v5813 = vld [vmem:[%s55 + $0x1b4] sm:$0xf]
    %v5814 = vld [vmem:[%s55 + $0x1b8] sm:$0xf]
    %v5815 = vld [vmem:[%s55 + $0x1bc] sm:$0xf]
    %v5816 = vld [vmem:[%s55 + $0x1c0] sm:$0xf]
    %v5817 = vld [vmem:[%s55 + $0x1c4] sm:$0xf]
    %v5818 = vld [vmem:[%s55 + $0x1c8] sm:$0xf]
    %v5819 = vld [vmem:[%s55 + $0x1cc] sm:$0xf]
    %v5820 = vld [vmem:[%s55 + $0x1d0] sm:$0xf]
    %v5821 = vld [vmem:[%s55 + $0x1d4] sm:$0xf]
    %v5822 = vld [vmem:[%s55 + $0x1d8] sm:$0xf]
    %v5823 = vld [vmem:[%s55 + $0x1dc] sm:$0xf]
    %v5824 = vld [vmem:[%s55 + $0x1e0] sm:$0xf]
    %v5825 = vld [vmem:[%s55 + $0x1e4] sm:$0xf]
    %v5826 = vld [vmem:[%s55 + $0x1e8] sm:$0xf]
    %v5827 = vld [vmem:[%s55 + $0x1ec] sm:$0xf]
    %v5828 = vld [vmem:[%s55 + $0x1f0] sm:$0xf]
    %v5829 = vld [vmem:[%s55 + $0x1f4] sm:$0xf]
    %v5830 = vld [vmem:[%s55 + $0x1f8] sm:$0xf]
    %v5831 = vld [vmem:[%s55 + $0x1fc] sm:$0xf]
    %v5832 = vld [vmem:[%s55 + $0x200] sm:$0xf]
    %v5833 = vld [vmem:[%s55 + $0x204] sm:$0xf]
    %v5834 = vld [vmem:[%s55 + $0x208] sm:$0xf]
    %v5835 = vld [vmem:[%s55 + $0x20c] sm:$0xf]
    %v5836 = vld [vmem:[%s55 + $0x210] sm:$0xf]
    %v5837 = vld [vmem:[%s55 + $0x214] sm:$0xf]
    %v5838 = vld [vmem:[%s55 + $0x218] sm:$0xf]
    %v5839 = vld [vmem:[%s55 + $0x21c] sm:$0xf]
    %v5840 = vld [vmem:[%s55 + $0x220] sm:$0xf]
    %v5841 = vld [vmem:[%s55 + $0x224] sm:$0xf]
    %v5842 = vld [vmem:[%s55 + $0x228] sm:$0xf]
    %v5843 = vld [vmem:[%s55 + $0x22c] sm:$0xf]
    %v5844 = vld [vmem:[%s55 + $0x230] sm:$0xf]
    %v5845 = vld [vmem:[%s55 + $0x234] sm:$0xf]
    %v5846 = vld [vmem:[%s55 + $0x238] sm:$0xf]
    %v5847 = vld [vmem:[%s55 + $0x23c] sm:$0xf]
    %v5848 = vld [vmem:[%s55 + $0x240] sm:$0xf]
    %v5849 = vld [vmem:[%s55 + $0x244] sm:$0xf]
    %v5850 = vld [vmem:[%s55 + $0x248] sm:$0xf]
    %v5851 = vld [vmem:[%s55 + $0x24c] sm:$0xf]
    %v5852 = vld [vmem:[%s55 + $0x250] sm:$0xf]
    %v5853 = vld [vmem:[%s55 + $0x254] sm:$0xf]
    %v5854 = vld [vmem:[%s55 + $0x258] sm:$0xf]
    %v5855 = vld [vmem:[%s55 + $0x25c] sm:$0xf]
    %v5856 = vld [vmem:[%s55 + $0x260] sm:$0xf]
    %v5857 = vld [vmem:[%s55 + $0x264] sm:$0xf]
    %v5858 = vld [vmem:[%s55 + $0x268] sm:$0xf]
    %v5859 = vld [vmem:[%s55 + $0x26c] sm:$0xf]
    %v5860 = vld [vmem:[%s55 + $0x270] sm:$0xf]
    %v5861 = vld [vmem:[%s55 + $0x274] sm:$0xf]
    %v5862 = vld [vmem:[%s55 + $0x278] sm:$0xf]
    %v5863 = vld [vmem:[%s55 + $0x27c] sm:$0xf]
    %v5864 = vld [vmem:[%s55 + $0x280] sm:$0xf]
    %v5865 = vld [vmem:[%s55 + $0x284] sm:$0xf]
    %v5866 = vld [vmem:[%s55 + $0x288] sm:$0xf]
    %v5867 = vld [vmem:[%s55 + $0x28c] sm:$0xf]
    %v5868 = vld [vmem:[%s55 + $0x290] sm:$0xf]
    %v5869 = vld [vmem:[%s55 + $0x294] sm:$0xf]
    %v5870 = vld [vmem:[%s55 + $0x298] sm:$0xf]
    %v5871 = vld [vmem:[%s55 + $0x29c] sm:$0xf]
    %v5872 = vld [vmem:[%s55 + $0x2a0] sm:$0xf]
    %v5873 = vld [vmem:[%s55 + $0x2a4] sm:$0xf]
    %v5874 = vld [vmem:[%s55 + $0x2a8] sm:$0xf]
    %v5875 = vld [vmem:[%s55 + $0x2ac] sm:$0xf]
    %v5876 = vld [vmem:[%s55 + $0x2b0] sm:$0xf]
    %v5877 = vld [vmem:[%s55 + $0x2b4] sm:$0xf]
    %v5878 = vld [vmem:[%s55 + $0x2b8] sm:$0xf]
    %v5879 = vld [vmem:[%s55 + $0x2bc] sm:$0xf]
    %v5880 = vld [vmem:[%s55 + $0x2c0] sm:$0xf]
    %v5881 = vld [vmem:[%s55 + $0x2c4] sm:$0xf]
    %v5882 = vld [vmem:[%s55 + $0x2c8] sm:$0xf]
    %v5883 = vld [vmem:[%s55 + $0x2cc] sm:$0xf]
    %v5884 = vld [vmem:[%s55 + $0x2d0] sm:$0xf]
    %v5885 = vld [vmem:[%s55 + $0x2d4] sm:$0xf]
    %v5886 = vld [vmem:[%s55 + $0x2d8] sm:$0xf]
    %v5887 = vld [vmem:[%s55 + $0x2dc] sm:$0xf]
    %v5888 = vld [vmem:[%s55 + $0x2e0] sm:$0xf]
    %v5889 = vld [vmem:[%s55 + $0x2e4] sm:$0xf]
    %v5890 = vld [vmem:[%s55 + $0x2e8] sm:$0xf]
    %v5891 = vld [vmem:[%s55 + $0x2ec] sm:$0xf]
    %v5892 = vld [vmem:[%s55 + $0x2f0] sm:$0xf]
    %v5893 = vld [vmem:[%s55 + $0x2f4] sm:$0xf]
    %v5894 = vld [vmem:[%s55 + $0x2f8] sm:$0xf]
    %v5895 = vld [vmem:[%s55 + $0x2fc] sm:$0xf]
    %v5896 = vld [vmem:[%s55 + $0x300] sm:$0xf]
    %v5897 = vld [vmem:[%s55 + $0x304] sm:$0xf]
    %v5898 = vld [vmem:[%s55 + $0x308] sm:$0xf]
    %v5899 = vld [vmem:[%s55 + $0x30c] sm:$0xf]
    %v5900 = vld [vmem:[%s55 + $0x310] sm:$0xf]
    %v5901 = vld [vmem:[%s55 + $0x314] sm:$0xf]
    %v5902 = vld [vmem:[%s55 + $0x318] sm:$0xf]
    %v5903 = vld [vmem:[%s55 + $0x31c] sm:$0xf]
    %v5904 = vld [vmem:[%s55 + $0x320] sm:$0xf]
    %v5905 = vld [vmem:[%s55 + $0x324] sm:$0xf]
    %v5906 = vld [vmem:[%s55 + $0x328] sm:$0xf]
    %v5907 = vld [vmem:[%s55 + $0x32c] sm:$0xf]
    %v5908 = vld [vmem:[%s55 + $0x330] sm:$0xf]
    %v5909 = vld [vmem:[%s55 + $0x334] sm:$0xf]
    %v5910 = vld [vmem:[%s55 + $0x338] sm:$0xf]
    %v5911 = vld [vmem:[%s55 + $0x33c] sm:$0xf]
    %v5912 = vld [vmem:[%s55 + $0x340] sm:$0xf]
    %v5913 = vld [vmem:[%s55 + $0x344] sm:$0xf]
    %v5914 = vld [vmem:[%s55 + $0x348] sm:$0xf]
    %v5915 = vld [vmem:[%s55 + $0x34c] sm:$0xf]
    %v5916 = vld [vmem:[%s55 + $0x350] sm:$0xf]
    %v5917 = vld [vmem:[%s55 + $0x354] sm:$0xf]
    %v5918 = vld [vmem:[%s55 + $0x358] sm:$0xf]
    %v5919 = vld [vmem:[%s55 + $0x35c] sm:$0xf]
    %v5920 = vld [vmem:[%s55 + $0x360] sm:$0xf]
    %v5921 = vld [vmem:[%s55 + $0x364] sm:$0xf]
    %v5922 = vld [vmem:[%s55 + $0x368] sm:$0xf]
    %v5923 = vld [vmem:[%s55 + $0x36c] sm:$0xf]
    %v5924 = vld [vmem:[%s55 + $0x370] sm:$0xf]
    %v5925 = vld [vmem:[%s55 + $0x374] sm:$0xf]
    %v5926 = vld [vmem:[%s55 + $0x378] sm:$0xf]
    %v5927 = vld [vmem:[%s55 + $0x37c] sm:$0xf]
    %v5928 = vld [vmem:[%s55 + $0x380] sm:$0xf]
    %v5929 = vld [vmem:[%s55 + $0x384] sm:$0xf]
    %v5930 = vld [vmem:[%s55 + $0x388] sm:$0xf]
    %v5931 = vld [vmem:[%s55 + $0x38c] sm:$0xf]
    %v5932 = vld [vmem:[%s55 + $0x390] sm:$0xf]
    %v5933 = vld [vmem:[%s55 + $0x394] sm:$0xf]
    %v5934 = vld [vmem:[%s55 + $0x398] sm:$0xf]
    %v5935 = vld [vmem:[%s55 + $0x39c] sm:$0xf]
    %v5936 = vld [vmem:[%s55 + $0x3a0] sm:$0xf]
    %v5937 = vld [vmem:[%s55 + $0x3a4] sm:$0xf]
    %v5938 = vld [vmem:[%s55 + $0x3a8] sm:$0xf]
    %v5939 = vld [vmem:[%s55 + $0x3ac] sm:$0xf]
    %v5940 = vld [vmem:[%s55 + $0x3b0] sm:$0xf]
    %v5941 = vld [vmem:[%s55 + $0x3b4] sm:$0xf]
    %v5942 = vld [vmem:[%s55 + $0x3b8] sm:$0xf]
    %v5943 = vld [vmem:[%s55 + $0x3bc] sm:$0xf]
    %v5944 = vld [vmem:[%s55 + $0x3c0] sm:$0xf]
    %v5945 = vld [vmem:[%s55 + $0x3c4] sm:$0xf]
    %v5946 = vld [vmem:[%s55 + $0x3c8] sm:$0xf]
    %v5947 = vld [vmem:[%s55 + $0x3cc] sm:$0xf]
    %v5948 = vld [vmem:[%s55 + $0x3d0] sm:$0xf]
    %v5949 = vld [vmem:[%s55 + $0x3d4] sm:$0xf]
    %v5950 = vld [vmem:[%s55 + $0x3d8] sm:$0xf]
    %v5951 = vld [vmem:[%s55 + $0x3dc] sm:$0xf]
    %v5952 = vld [vmem:[%s55 + $0x3e0] sm:$0xf]
    %v5953 = vld [vmem:[%s55 + $0x3e4] sm:$0xf]
    %v5954 = vld [vmem:[%s55 + $0x3e8] sm:$0xf]
    %v5955 = vld [vmem:[%s55 + $0x3ec] sm:$0xf]
    %v5956 = vld [vmem:[%s55 + $0x3f0] sm:$0xf]
    %v5957 = vld [vmem:[%s55 + $0x3f4] sm:$0xf]
    %v5958 = vld [vmem:[%s55 + $0x3f8] sm:$0xf]
    %v5959 = vld [vmem:[%s55 + $0x3fc] sm:$0xf]
    %v5960 = vld [vmem:[%s57] sm:$0x1]
    %v5962 = vlaneseq
    %v5963 = vshrl.u32 %v5962, 7
    %v5964 = vsub.s32 0, %v5963
    %v5965 = vrot.slane %v5960, %v5964
    %v6223 = vunpack.c.l.b16 %v5704
    %v6224 = vunpack.c.l.b16 %v5705
    %v6225 = vunpack.c.l.b16 %v5706
    %v6226 = vunpack.c.l.b16 %v5707
    %v6227 = vunpack.c.l.b16 %v5708
    %v6228 = vunpack.c.l.b16 %v5709
    %v6229 = vunpack.c.l.b16 %v5710
    %v6230 = vunpack.c.l.b16 %v5711
    %v6231 = vunpack.c.l.b16 %v5712
    %v6232 = vunpack.c.l.b16 %v5713
    %v6233 = vunpack.c.l.b16 %v5714
    %v6234 = vunpack.c.l.b16 %v5715
    %v6235 = vunpack.c.l.b16 %v5716
    %v6236 = vunpack.c.l.b16 %v5717
    %v6237 = vunpack.c.l.b16 %v5718
    %v6238 = vunpack.c.l.b16 %v5719
    %v6239 = vunpack.c.l.b16 %v5720
    %v6240 = vunpack.c.l.b16 %v5721
    %v6241 = vunpack.c.l.b16 %v5722
    %v6242 = vunpack.c.l.b16 %v5723
    %v6243 = vunpack.c.l.b16 %v5724
    %v6244 = vunpack.c.l.b16 %v5725
    %v6245 = vunpack.c.l.b16 %v5726
    %v6246 = vunpack.c.l.b16 %v5727
    %v6247 = vunpack.c.l.b16 %v5728
    %v6248 = vunpack.c.l.b16 %v5729
    %v6249 = vunpack.c.l.b16 %v5730
    %v6250 = vunpack.c.l.b16 %v5731
    %v6251 = vunpack.c.l.b16 %v5732
    %v6252 = vunpack.c.l.b16 %v5733
    %v6253 = vunpack.c.l.b16 %v5734
    %v6254 = vunpack.c.l.b16 %v5735
    %v6255 = vunpack.c.l.b16 %v5736
    %v6256 = vunpack.c.l.b16 %v5737
    %v6257 = vunpack.c.l.b16 %v5738
    %v6258 = vunpack.c.l.b16 %v5739
    %v6259 = vunpack.c.l.b16 %v5740
    %v6260 = vunpack.c.l.b16 %v5741
    %v6261 = vunpack.c.l.b16 %v5742
    %v6262 = vunpack.c.l.b16 %v5743
    %v6263 = vunpack.c.l.b16 %v5744
    %v6264 = vunpack.c.l.b16 %v5745
    %v6265 = vunpack.c.l.b16 %v5746
    %v6266 = vunpack.c.l.b16 %v5747
    %v6267 = vunpack.c.l.b16 %v5748
    %v6268 = vunpack.c.l.b16 %v5749
    %v6269 = vunpack.c.l.b16 %v5750
    %v6270 = vunpack.c.l.b16 %v5751
    %v6271 = vunpack.c.l.b16 %v5752
    %v6272 = vunpack.c.l.b16 %v5753
    %v6273 = vunpack.c.l.b16 %v5754
    %v6274 = vunpack.c.l.b16 %v5755
    %v6275 = vunpack.c.l.b16 %v5756
    %v6276 = vunpack.c.l.b16 %v5757
    %v6277 = vunpack.c.l.b16 %v5758
    %v6278 = vunpack.c.l.b16 %v5759
    %v6279 = vunpack.c.l.b16 %v5760
    %v6280 = vunpack.c.l.b16 %v5761
    %v6281 = vunpack.c.l.b16 %v5762
    %v6282 = vunpack.c.l.b16 %v5763
    %v6283 = vunpack.c.l.b16 %v5764
    %v6284 = vunpack.c.l.b16 %v5765
    %v6285 = vunpack.c.l.b16 %v5766
    %v6286 = vunpack.c.l.b16 %v5767
    %v6287 = vunpack.c.l.b16 %v5768
    %v6288 = vunpack.c.l.b16 %v5769
    %v6289 = vunpack.c.l.b16 %v5770
    %v6290 = vunpack.c.l.b16 %v5771
    %v6291 = vunpack.c.l.b16 %v5772
    %v6292 = vunpack.c.l.b16 %v5773
    %v6293 = vunpack.c.l.b16 %v5774
    %v6294 = vunpack.c.l.b16 %v5775
    %v6295 = vunpack.c.l.b16 %v5776
    %v6296 = vunpack.c.l.b16 %v5777
    %v6297 = vunpack.c.l.b16 %v5778
    %v6298 = vunpack.c.l.b16 %v5779
    %v6299 = vunpack.c.l.b16 %v5780
    %v6300 = vunpack.c.l.b16 %v5781
    %v6301 = vunpack.c.l.b16 %v5782
    %v6302 = vunpack.c.l.b16 %v5783
    %v6303 = vunpack.c.l.b16 %v5784
    %v6304 = vunpack.c.l.b16 %v5785
    %v6305 = vunpack.c.l.b16 %v5786
    %v6306 = vunpack.c.l.b16 %v5787
    %v6307 = vunpack.c.l.b16 %v5788
    %v6308 = vunpack.c.l.b16 %v5789
    %v6309 = vunpack.c.l.b16 %v5790
    %v6310 = vunpack.c.l.b16 %v5791
    %v6311 = vunpack.c.l.b16 %v5792
    %v6312 = vunpack.c.l.b16 %v5793
    %v6313 = vunpack.c.l.b16 %v5794
    %v6314 = vunpack.c.l.b16 %v5795
    %v6315 = vunpack.c.l.b16 %v5796
    %v6316 = vunpack.c.l.b16 %v5797
    %v6317 = vunpack.c.l.b16 %v5798
    %v6318 = vunpack.c.l.b16 %v5799
    %v6319 = vunpack.c.l.b16 %v5800
    %v6320 = vunpack.c.l.b16 %v5801
    %v6321 = vunpack.c.l.b16 %v5802
    %v6322 = vunpack.c.l.b16 %v5803
    %v6323 = vunpack.c.l.b16 %v5804
    %v6324 = vunpack.c.l.b16 %v5805
    %v6325 = vunpack.c.l.b16 %v5806
    %v6326 = vunpack.c.l.b16 %v5807
    %v6327 = vunpack.c.l.b16 %v5808
    %v6328 = vunpack.c.l.b16 %v5809
    %v6329 = vunpack.c.l.b16 %v5810
    %v6330 = vunpack.c.l.b16 %v5811
    %v6331 = vunpack.c.l.b16 %v5812
    %v6332 = vunpack.c.l.b16 %v5813
    %v6333 = vunpack.c.l.b16 %v5814
    %v6334 = vunpack.c.l.b16 %v5815
    %v6335 = vunpack.c.l.b16 %v5816
    %v6336 = vunpack.c.l.b16 %v5817
    %v6337 = vunpack.c.l.b16 %v5818
    %v6338 = vunpack.c.l.b16 %v5819
    %v6339 = vunpack.c.l.b16 %v5820
    %v6340 = vunpack.c.l.b16 %v5821
    %v6341 = vunpack.c.l.b16 %v5822
    %v6342 = vunpack.c.l.b16 %v5823
    %v6343 = vunpack.c.l.b16 %v5824
    %v6344 = vunpack.c.l.b16 %v5825
    %v6345 = vunpack.c.l.b16 %v5826
    %v6346 = vunpack.c.l.b16 %v5827
    %v6347 = vunpack.c.l.b16 %v5828
    %v6348 = vunpack.c.l.b16 %v5829
    %v6349 = vunpack.c.l.b16 %v5830
    %v6350 = vunpack.c.l.b16 %v5831
    %v6351 = vunpack.c.l.b16 %v5832
    %v6352 = vunpack.c.l.b16 %v5833
    %v6353 = vunpack.c.l.b16 %v5834
    %v6354 = vunpack.c.l.b16 %v5835
    %v6355 = vunpack.c.l.b16 %v5836
    %v6356 = vunpack.c.l.b16 %v5837
    %v6357 = vunpack.c.l.b16 %v5838
    %v6358 = vunpack.c.l.b16 %v5839
    %v6359 = vunpack.c.l.b16 %v5840
    %v6360 = vunpack.c.l.b16 %v5841
    %v6361 = vunpack.c.l.b16 %v5842
    %v6362 = vunpack.c.l.b16 %v5843
    %v6363 = vunpack.c.l.b16 %v5844
    %v6364 = vunpack.c.l.b16 %v5845
    %v6365 = vunpack.c.l.b16 %v5846
    %v6366 = vunpack.c.l.b16 %v5847
    %v6367 = vunpack.c.l.b16 %v5848
    %v6368 = vunpack.c.l.b16 %v5849
    %v6369 = vunpack.c.l.b16 %v5850
    %v6370 = vunpack.c.l.b16 %v5851
    %v6371 = vunpack.c.l.b16 %v5852
    %v6372 = vunpack.c.l.b16 %v5853
    %v6373 = vunpack.c.l.b16 %v5854
    %v6374 = vunpack.c.l.b16 %v5855
    %v6375 = vunpack.c.l.b16 %v5856
    %v6376 = vunpack.c.l.b16 %v5857
    %v6377 = vunpack.c.l.b16 %v5858
    %v6378 = vunpack.c.l.b16 %v5859
    %v6379 = vunpack.c.l.b16 %v5860
    %v6380 = vunpack.c.l.b16 %v5861
    %v6381 = vunpack.c.l.b16 %v5862
    %v6382 = vunpack.c.l.b16 %v5863
    %v6383 = vunpack.c.l.b16 %v5864
    %v6384 = vunpack.c.l.b16 %v5865
    %v6385 = vunpack.c.l.b16 %v5866
    %v6386 = vunpack.c.l.b16 %v5867
    %v6387 = vunpack.c.l.b16 %v5868
    %v6388 = vunpack.c.l.b16 %v5869
    %v6389 = vunpack.c.l.b16 %v5870
    %v6390 = vunpack.c.l.b16 %v5871
    %v6391 = vunpack.c.l.b16 %v5872
    %v6392 = vunpack.c.l.b16 %v5873
    %v6393 = vunpack.c.l.b16 %v5874
    %v6394 = vunpack.c.l.b16 %v5875
    %v6395 = vunpack.c.l.b16 %v5876
    %v6396 = vunpack.c.l.b16 %v5877
    %v6397 = vunpack.c.l.b16 %v5878
    %v6398 = vunpack.c.l.b16 %v5879
    %v6399 = vunpack.c.l.b16 %v5880
    %v6400 = vunpack.c.l.b16 %v5881
    %v6401 = vunpack.c.l.b16 %v5882
    %v6402 = vunpack.c.l.b16 %v5883
    %v6403 = vunpack.c.l.b16 %v5884
    %v6404 = vunpack.c.l.b16 %v5885
    %v6405 = vunpack.c.l.b16 %v5886
    %v6406 = vunpack.c.l.b16 %v5887
    %v6407 = vunpack.c.l.b16 %v5888
    %v6408 = vunpack.c.l.b16 %v5889
    %v6409 = vunpack.c.l.b16 %v5890
    %v6410 = vunpack.c.l.b16 %v5891
    %v6411 = vunpack.c.l.b16 %v5892
    %v6412 = vunpack.c.l.b16 %v5893
    %v6413 = vunpack.c.l.b16 %v5894
    %v6414 = vunpack.c.l.b16 %v5895
    %v6415 = vunpack.c.l.b16 %v5896
    %v6416 = vunpack.c.l.b16 %v5897
    %v6417 = vunpack.c.l.b16 %v5898
    %v6418 = vunpack.c.l.b16 %v5899
    %v6419 = vunpack.c.l.b16 %v5900
    %v6420 = vunpack.c.l.b16 %v5901
    %v6421 = vunpack.c.l.b16 %v5902
    %v6422 = vunpack.c.l.b16 %v5903
    %v6423 = vunpack.c.l.b16 %v5904
    %v6424 = vunpack.c.l.b16 %v5905
    %v6425 = vunpack.c.l.b16 %v5906
    %v6426 = vunpack.c.l.b16 %v5907
    %v6427 = vunpack.c.l.b16 %v5908
    %v6428 = vunpack.c.l.b16 %v5909
    %v6429 = vunpack.c.l.b16 %v5910
    %v6430 = vunpack.c.l.b16 %v5911
    %v6431 = vunpack.c.l.b16 %v5912
    %v6432 = vunpack.c.l.b16 %v5913
    %v6433 = vunpack.c.l.b16 %v5914
    %v6434 = vunpack.c.l.b16 %v5915
    %v6435 = vunpack.c.l.b16 %v5916
    %v6436 = vunpack.c.l.b16 %v5917
    %v6437 = vunpack.c.l.b16 %v5918
    %v6438 = vunpack.c.l.b16 %v5919
    %v6439 = vunpack.c.l.b16 %v5920
    %v6440 = vunpack.c.l.b16 %v5921
    %v6441 = vunpack.c.l.b16 %v5922
    %v6442 = vunpack.c.l.b16 %v5923
    %v6443 = vunpack.c.l.b16 %v5924
    %v6444 = vunpack.c.l.b16 %v5925
    %v6445 = vunpack.c.l.b16 %v5926
    %v6446 = vunpack.c.l.b16 %v5927
    %v6447 = vunpack.c.l.b16 %v5928
    %v6448 = vunpack.c.l.b16 %v5929
    %v6449 = vunpack.c.l.b16 %v5930
    %v6450 = vunpack.c.l.b16 %v5931
    %v6451 = vunpack.c.l.b16 %v5932
    %v6452 = vunpack.c.l.b16 %v5933
    %v6453 = vunpack.c.l.b16 %v5934
    %v6454 = vunpack.c.l.b16 %v5935
    %v6455 = vunpack.c.l.b16 %v5936
    %v6456 = vunpack.c.l.b16 %v5937
    %v6457 = vunpack.c.l.b16 %v5938
    %v6458 = vunpack.c.l.b16 %v5939
    %v6459 = vunpack.c.l.b16 %v5940
    %v6460 = vunpack.c.l.b16 %v5941
    %v6461 = vunpack.c.l.b16 %v5942
    %v6462 = vunpack.c.l.b16 %v5943
    %v6463 = vunpack.c.l.b16 %v5944
    %v6464 = vunpack.c.l.b16 %v5945
    %v6465 = vunpack.c.l.b16 %v5946
    %v6466 = vunpack.c.l.b16 %v5947
    %v6467 = vunpack.c.l.b16 %v5948
    %v6468 = vunpack.c.l.b16 %v5949
    %v6469 = vunpack.c.l.b16 %v5950
    %v6470 = vunpack.c.l.b16 %v5951
    %v6471 = vunpack.c.l.b16 %v5952
    %v6472 = vunpack.c.l.b16 %v5953
    %v6473 = vunpack.c.l.b16 %v5954
    %v6474 = vunpack.c.l.b16 %v5955
    %v6475 = vunpack.c.l.b16 %v5956
    %v6476 = vunpack.c.l.b16 %v5957
    %v6477 = vunpack.c.l.b16 %v5958
    %v6478 = vunpack.c.l.b16 %v5959
    %v6479 = vpack.c.b16 %v6224, %v6223
    %v6480 = vpack.c.b16 %v6226, %v6225
    %v6481 = vpack.c.b16 %v6228, %v6227
    %v6482 = vpack.c.b16 %v6230, %v6229
    %v6483 = vpack.c.b16 %v6232, %v6231
    %v6484 = vpack.c.b16 %v6234, %v6233
    %v6485 = vpack.c.b16 %v6236, %v6235
    %v6486 = vpack.c.b16 %v6238, %v6237
    %v6487 = vpack.c.b16 %v6240, %v6239
    %v6488 = vpack.c.b16 %v6242, %v6241
    %v6489 = vpack.c.b16 %v6244, %v6243
    %v6490 = vpack.c.b16 %v6246, %v6245
    %v6491 = vpack.c.b16 %v6248, %v6247
    %v6492 = vpack.c.b16 %v6250, %v6249
    %v6493 = vpack.c.b16 %v6252, %v6251
    %v6494 = vpack.c.b16 %v6254, %v6253
    %v6495 = vpack.c.b16 %v6256, %v6255
    %v6496 = vpack.c.b16 %v6258, %v6257
    %v6497 = vpack.c.b16 %v6260, %v6259
    %v6498 = vpack.c.b16 %v6262, %v6261
    %v6499 = vpack.c.b16 %v6264, %v6263
    %v6500 = vpack.c.b16 %v6266, %v6265
    %v6501 = vpack.c.b16 %v6268, %v6267
    %v6502 = vpack.c.b16 %v6270, %v6269
    %v6503 = vpack.c.b16 %v6272, %v6271
    %v6504 = vpack.c.b16 %v6274, %v6273
    %v6505 = vpack.c.b16 %v6276, %v6275
    %v6506 = vpack.c.b16 %v6278, %v6277
    %v6507 = vpack.c.b16 %v6280, %v6279
    %v6508 = vpack.c.b16 %v6282, %v6281
    %v6509 = vpack.c.b16 %v6284, %v6283
    %v6510 = vpack.c.b16 %v6286, %v6285
    %v6511 = vpack.c.b16 %v6288, %v6287
    %v6512 = vpack.c.b16 %v6290, %v6289
    %v6513 = vpack.c.b16 %v6292, %v6291
    %v6514 = vpack.c.b16 %v6294, %v6293
    %v6515 = vpack.c.b16 %v6296, %v6295
    %v6516 = vpack.c.b16 %v6298, %v6297
    %v6517 = vpack.c.b16 %v6300, %v6299
    %v6518 = vpack.c.b16 %v6302, %v6301
    %v6519 = vpack.c.b16 %v6304, %v6303
    %v6520 = vpack.c.b16 %v6306, %v6305
    %v6521 = vpack.c.b16 %v6308, %v6307
    %v6522 = vpack.c.b16 %v6310, %v6309
    %v6523 = vpack.c.b16 %v6312, %v6311
    %v6524 = vpack.c.b16 %v6314, %v6313
    %v6525 = vpack.c.b16 %v6316, %v6315
    %v6526 = vpack.c.b16 %v6318, %v6317
    %v6527 = vpack.c.b16 %v6320, %v6319
    %v6528 = vpack.c.b16 %v6322, %v6321
    %v6529 = vpack.c.b16 %v6324, %v6323
    %v6530 = vpack.c.b16 %v6326, %v6325
    %v6531 = vpack.c.b16 %v6328, %v6327
    %v6532 = vpack.c.b16 %v6330, %v6329
    %v6533 = vpack.c.b16 %v6332, %v6331
    %v6534 = vpack.c.b16 %v6334, %v6333
    %v6535 = vpack.c.b16 %v6336, %v6335
    %v6536 = vpack.c.b16 %v6338, %v6337
    %v6537 = vpack.c.b16 %v6340, %v6339
    %v6538 = vpack.c.b16 %v6342, %v6341
    %v6539 = vpack.c.b16 %v6344, %v6343
    %v6540 = vpack.c.b16 %v6346, %v6345
    %v6541 = vpack.c.b16 %v6348, %v6347
    %v6542 = vpack.c.b16 %v6350, %v6349
    %v6543 = vpack.c.b16 %v6352, %v6351
    %v6544 = vpack.c.b16 %v6354, %v6353
    %v6545 = vpack.c.b16 %v6356, %v6355
    %v6546 = vpack.c.b16 %v6358, %v6357
    %v6547 = vpack.c.b16 %v6360, %v6359
    %v6548 = vpack.c.b16 %v6362, %v6361
    %v6549 = vpack.c.b16 %v6364, %v6363
    %v6550 = vpack.c.b16 %v6366, %v6365
    %v6551 = vpack.c.b16 %v6368, %v6367
    %v6552 = vpack.c.b16 %v6370, %v6369
    %v6553 = vpack.c.b16 %v6372, %v6371
    %v6554 = vpack.c.b16 %v6374, %v6373
    %v6555 = vpack.c.b16 %v6376, %v6375
    %v6556 = vpack.c.b16 %v6378, %v6377
    %v6557 = vpack.c.b16 %v6380, %v6379
    %v6558 = vpack.c.b16 %v6382, %v6381
    %v6559 = vpack.c.b16 %v6384, %v6383
    %v6560 = vpack.c.b16 %v6386, %v6385
    %v6561 = vpack.c.b16 %v6388, %v6387
    %v6562 = vpack.c.b16 %v6390, %v6389
    %v6563 = vpack.c.b16 %v6392, %v6391
    %v6564 = vpack.c.b16 %v6394, %v6393
    %v6565 = vpack.c.b16 %v6396, %v6395
    %v6566 = vpack.c.b16 %v6398, %v6397
    %v6567 = vpack.c.b16 %v6400, %v6399
    %v6568 = vpack.c.b16 %v6402, %v6401
    %v6569 = vpack.c.b16 %v6404, %v6403
    %v6570 = vpack.c.b16 %v6406, %v6405
    %v6571 = vpack.c.b16 %v6408, %v6407
    %v6572 = vpack.c.b16 %v6410, %v6409
    %v6573 = vpack.c.b16 %v6412, %v6411
    %v6574 = vpack.c.b16 %v6414, %v6413
    %v6575 = vpack.c.b16 %v6416, %v6415
    %v6576 = vpack.c.b16 %v6418, %v6417
    %v6577 = vpack.c.b16 %v6420, %v6419
    %v6578 = vpack.c.b16 %v6422, %v6421
    %v6579 = vpack.c.b16 %v6424, %v6423
    %v6580 = vpack.c.b16 %v6426, %v6425
    %v6581 = vpack.c.b16 %v6428, %v6427
    %v6582 = vpack.c.b16 %v6430, %v6429
    %v6583 = vpack.c.b16 %v6432, %v6431
    %v6584 = vpack.c.b16 %v6434, %v6433
    %v6585 = vpack.c.b16 %v6436, %v6435
    %v6586 = vpack.c.b16 %v6438, %v6437
    %v6587 = vpack.c.b16 %v6440, %v6439
    %v6588 = vpack.c.b16 %v6442, %v6441
    %v6589 = vpack.c.b16 %v6444, %v6443
    %v6590 = vpack.c.b16 %v6446, %v6445
    %v6591 = vpack.c.b16 %v6448, %v6447
    %v6592 = vpack.c.b16 %v6450, %v6449
    %v6593 = vpack.c.b16 %v6452, %v6451
    %v6594 = vpack.c.b16 %v6454, %v6453
    %v6595 = vpack.c.b16 %v6456, %v6455
    %v6596 = vpack.c.b16 %v6458, %v6457
    %v6597 = vpack.c.b16 %v6460, %v6459
    %v6598 = vpack.c.b16 %v6462, %v6461
    %v6599 = vpack.c.b16 %v6464, %v6463
    %v6600 = vpack.c.b16 %v6466, %v6465
    %v6601 = vpack.c.b16 %v6468, %v6467
    %v6602 = vpack.c.b16 %v6470, %v6469
    %v6603 = vpack.c.b16 %v6472, %v6471
    %v6604 = vpack.c.b16 %v6474, %v6473
    %v6605 = vpack.c.b16 %v6476, %v6475
    %v6606 = vpack.c.b16 %v6478, %v6477
    %6735 = vmatprep.subr.bf16.mxu0 0
    %6736 = vmatpush1.bf16.msra.mxu0 %v6479
    %6737 = vmatprep.subr.bf16.mxu0 0
    %6738 = vmatpush1.bf16.msra.mxu0 %v6480
    %6739 = vmatprep.subr.bf16.mxu0 0
    %6740 = vmatpush1.bf16.msra.mxu0 %v6481
    %6741 = vmatprep.subr.bf16.mxu0 0
    %6742 = vmatpush1.bf16.msra.mxu0 %v6482
    %6743 = vmatprep.subr.bf16.mxu0 0
    %6744 = vmatpush1.bf16.msra.mxu0 %v6483
    %6745 = vmatprep.subr.bf16.mxu0 0
    %6746 = vmatpush1.bf16.msra.mxu0 %v6484
    %6747 = vmatprep.subr.bf16.mxu0 0
    %6748 = vmatpush1.bf16.msra.mxu0 %v6485
    %6749 = vmatprep.subr.bf16.mxu0 0
    %6750 = vmatpush1.bf16.msra.mxu0 %v6486
    %6751 = vmatprep.subr.bf16.mxu0 0
    %6752 = vmatpush1.bf16.msra.mxu0 %v6487
    %6753 = vmatprep.subr.bf16.mxu0 0
    %6754 = vmatpush1.bf16.msra.mxu0 %v6488
    %6755 = vmatprep.subr.bf16.mxu0 0
    %6756 = vmatpush1.bf16.msra.mxu0 %v6489
    %6757 = vmatprep.subr.bf16.mxu0 0
    %6758 = vmatpush1.bf16.msra.mxu0 %v6490
    %6759 = vmatprep.subr.bf16.mxu0 0
    %6760 = vmatpush1.bf16.msra.mxu0 %v6491
    %6761 = vmatprep.subr.bf16.mxu0 0
    %6762 = vmatpush1.bf16.msra.mxu0 %v6492
    %6763 = vmatprep.subr.bf16.mxu0 0
    %6764 = vmatpush1.bf16.msra.mxu0 %v6493
    %6765 = vmatprep.subr.bf16.mxu0 0
    %6766 = vmatpush1.bf16.msra.mxu0 %v6494
    %6767 = vmatprep.mubr.bf16.mxu0 %v5689
    %6768 = vmatmul.mubr.bf16.gmra.mrb[0].mxu0 %v5688
    %v6769 = vpop.f32.mrb[0].mxu0
    %v6770 = vadd.f32 %v5965, %v6769
    %v6771 = vpop.f32.mrb[0].mxu0
    %v6772 = vpop.f32.mrb[0].mxu0
    %v6773 = vadd.f32 %v5965, %v6772
    %v6774 = vpop.f32.mrb[0].mxu0
    %6775 = vdwg.mxu0
    %6776 = vmatprep.subr.bf16.mxu0 0
    %6777 = vmatpush1.bf16.msra.mxu0 %v6495
    %6778 = vmatprep.subr.bf16.mxu0 0
    %6779 = vmatpush1.bf16.msra.mxu0 %v6496
    %6780 = vmatprep.subr.bf16.mxu0 0
    %6781 = vmatpush1.bf16.msra.mxu0 %v6497
    %6782 = vmatprep.subr.bf16.mxu0 0
    %6783 = vmatpush1.bf16.msra.mxu0 %v6498
    %6784 = vmatprep.subr.bf16.mxu0 0
    %6785 = vmatpush1.bf16.msra.mxu0 %v6499
    %6786 = vmatprep.subr.bf16.mxu0 0
    %6787 = vmatpush1.bf16.msra.mxu0 %v6500
    %6788 = vmatprep.subr.bf16.mxu0 0
    %6789 = vmatpush1.bf16.msra.mxu0 %v6501
    %6790 = vmatprep.subr.bf16.mxu0 0
    %6791 = vmatpush1.bf16.msra.mxu0 %v6502
    %6792 = vmatprep.subr.bf16.mxu0 0
    %6793 = vmatpush1.bf16.msra.mxu0 %v6503
    %6794 = vmatprep.subr.bf16.mxu0 0
    %6795 = vmatpush1.bf16.msra.mxu0 %v6504
    %6796 = vmatprep.subr.bf16.mxu0 0
    %6797 = vmatpush1.bf16.msra.mxu0 %v6505
    %6798 = vmatprep.subr.bf16.mxu0 0
    %6799 = vmatpush1.bf16.msra.mxu0 %v6506
    %6800 = vmatprep.subr.bf16.mxu0 0
    %6801 = vmatpush1.bf16.msra.mxu0 %v6507
    %6802 = vmatprep.subr.bf16.mxu0 0
    %6803 = vmatpush1.bf16.msra.mxu0 %v6508
    %6804 = vmatprep.subr.bf16.mxu0 0
    %6805 = vmatpush1.bf16.msra.mxu0 %v6509
    %6806 = vmatprep.subr.bf16.mxu0 0
    %6807 = vmatpush1.bf16.msra.mxu0 %v6510
    %6808 = vmatprep.mubr.bf16.mxu0 %v5691
    %6809 = vmatmul.mubr.bf16.gmra.mrb[0].mxu0 %v5690
    %v6810 = vpop.f32.mrb[0].mxu0
    %v6811 = vadd.f32 %v6770, %v6810
    %v6812 = vpop.f32.mrb[0].mxu0
    %v6813 = vpop.f32.mrb[0].mxu0
    %v6814 = vadd.f32 %v6773, %v6813
    %v6815 = vpop.f32.mrb[0].mxu0
    %6816 = vdwg.mxu0
    %6817 = vmatprep.subr.bf16.mxu0 0
    %6818 = vmatpush1.bf16.msra.mxu0 %v6511
    %6819 = vmatprep.subr.bf16.mxu0 0
    %6820 = vmatpush1.bf16.msra.mxu0 %v6512
    %6821 = vmatprep.subr.bf16.mxu0 0
    %6822 = vmatpush1.bf16.msra.mxu0 %v6513
    %6823 = vmatprep.subr.bf16.mxu0 0
    %6824 = vmatpush1.bf16.msra.mxu0 %v6514
    %6825 = vmatprep.subr.bf16.mxu0 0
    %6826 = vmatpush1.bf16.msra.mxu0 %v6515
    %6827 = vmatprep.subr.bf16.mxu0 0
    %6828 = vmatpush1.bf16.msra.mxu0 %v6516
    %6829 = vmatprep.subr.bf16.mxu0 0
    %6830 = vmatpush1.bf16.msra.mxu0 %v6517
    %6831 = vmatprep.subr.bf16.mxu0 0
    %6832 = vmatpush1.bf16.msra.mxu0 %v6518
    %6833 = vmatprep.subr.bf16.mxu0 0
    %6834 = vmatpush1.bf16.msra.mxu0 %v6519
    %6835 = vmatprep.subr.bf16.mxu0 0
    %6836 = vmatpush1.bf16.msra.mxu0 %v6520
    %6837 = vmatprep.subr.bf16.mxu0 0
    %6838 = vmatpush1.bf16.msra.mxu0 %v6521
    %6839 = vmatprep.subr.bf16.mxu0 0
    %6840 = vmatpush1.bf16.msra.mxu0 %v6522
    %6841 = vmatprep.subr.bf16.mxu0 0
    %6842 = vmatpush1.bf16.msra.mxu0 %v6523
    %6843 = vmatprep.subr.bf16.mxu0 0
    %6844 = vmatpush1.bf16.msra.mxu0 %v6524
    %6845 = vmatprep.subr.bf16.mxu0 0
    %6846 = vmatpush1.bf16.msra.mxu0 %v6525
    %6847 = vmatprep.subr.bf16.mxu0 0
    %6848 = vmatpush1.bf16.msra.mxu0 %v6526
    %6849 = vmatprep.mubr.bf16.mxu0 %v5693
    %6850 = vmatmul.mubr.bf16.gmra.mrb[0].mxu0 %v5692
    %v6851 = vpop.f32.mrb[0].mxu0
    %v6852 = vadd.f32 %v6811, %v6851
    %v6853 = vpop.f32.mrb[0].mxu0
    %v6854 = vpop.f32.mrb[0].mxu0
    %v6855 = vadd.f32 %v6814, %v6854
    %v6856 = vpop.f32.mrb[0].mxu0
    %6857 = vdwg.mxu0
    %6858 = vmatprep.subr.bf16.mxu0 0
    %6859 = vmatpush1.bf16.msra.mxu0 %v6527
    %6860 = vmatprep.subr.bf16.mxu0 0
    %6861 = vmatpush1.bf16.msra.mxu0 %v6528
    %6862 = vmatprep.subr.bf16.mxu0 0
    %6863 = vmatpush1.bf16.msra.mxu0 %v6529
    %6864 = vmatprep.subr.bf16.mxu0 0
    %6865 = vmatpush1.bf16.msra.mxu0 %v6530
    %6866 = vmatprep.subr.bf16.mxu0 0
    %6867 = vmatpush1.bf16.msra.mxu0 %v6531
    %6868 = vmatprep.subr.bf16.mxu0 0
    %6869 = vmatpush1.bf16.msra.mxu0 %v6532
    %6870 = vmatprep.subr.bf16.mxu0 0
    %6871 = vmatpush1.bf16.msra.mxu0 %v6533
    %6872 = vmatprep.subr.bf16.mxu0 0
    %6873 = vmatpush1.bf16.msra.mxu0 %v6534
    %6874 = vmatprep.subr.bf16.mxu0 0
    %6875 = vmatpush1.bf16.msra.mxu0 %v6535
    %6876 = vmatprep.subr.bf16.mxu0 0
    %6877 = vmatpush1.bf16.msra.mxu0 %v6536
    %6878 = vmatprep.subr.bf16.mxu0 0
    %6879 = vmatpush1.bf16.msra.mxu0 %v6537
    %6880 = vmatprep.subr.bf16.mxu0 0
    %6881 = vmatpush1.bf16.msra.mxu0 %v6538
    %6882 = vmatprep.subr.bf16.mxu0 0
    %6883 = vmatpush1.bf16.msra.mxu0 %v6539
    %6884 = vmatprep.subr.bf16.mxu0 0
    %6885 = vmatpush1.bf16.msra.mxu0 %v6540
    %6886 = vmatprep.subr.bf16.mxu0 0
    %6887 = vmatpush1.bf16.msra.mxu0 %v6541
    %6888 = vmatprep.subr.bf16.mxu0 0
    %6889 = vmatpush1.bf16.msra.mxu0 %v6542
    %6890 = vmatprep.mubr.bf16.mxu0 %v5695
    %6891 = vmatmul.mubr.bf16.gmra.mrb[0].mxu0 %v5694
    %v6892 = vpop.f32.mrb[0].mxu0
    %v6893 = vadd.f32 %v6852, %v6892
    %v6894 = vpop.f32.mrb[0].mxu0
    %v6895 = vpop.f32.mrb[0].mxu0
    %v6896 = vadd.f32 %v6855, %v6895
    %v6897 = vpop.f32.mrb[0].mxu0
    %6898 = vdwg.mxu0
    %6899 = vmatprep.subr.bf16.mxu0 0
    %6900 = vmatpush1.bf16.msra.mxu0 %v6543
    %6901 = vmatprep.subr.bf16.mxu0 0
    %6902 = vmatpush1.bf16.msra.mxu0 %v6544
    %6903 = vmatprep.subr.bf16.mxu0 0
    %6904 = vmatpush1.bf16.msra.mxu0 %v6545
    %6905 = vmatprep.subr.bf16.mxu0 0
    %6906 = vmatpush1.bf16.msra.mxu0 %v6546
    %6907 = vmatprep.subr.bf16.mxu0 0
    %6908 = vmatpush1.bf16.msra.mxu0 %v6547
    %6909 = vmatprep.subr.bf16.mxu0 0
    %6910 = vmatpush1.bf16.msra.mxu0 %v6548
    %6911 = vmatprep.subr.bf16.mxu0 0
    %6912 = vmatpush1.bf16.msra.mxu0 %v6549
    %6913 = vmatprep.subr.bf16.mxu0 0
    %6914 = vmatpush1.bf16.msra.mxu0 %v6550
    %6915 = vmatprep.subr.bf16.mxu0 0
    %6916 = vmatpush1.bf16.msra.mxu0 %v6551
    %6917 = vmatprep.subr.bf16.mxu0 0
    %6918 = vmatpush1.bf16.msra.mxu0 %v6552
    %6919 = vmatprep.subr.bf16.mxu0 0
    %6920 = vmatpush1.bf16.msra.mxu0 %v6553
    %6921 = vmatprep.subr.bf16.mxu0 0
    %6922 = vmatpush1.bf16.msra.mxu0 %v6554
    %6923 = vmatprep.subr.bf16.mxu0 0
    %6924 = vmatpush1.bf16.msra.mxu0 %v6555
    %6925 = vmatprep.subr.bf16.mxu0 0
    %6926 = vmatpush1.bf16.msra.mxu0 %v6556
    %6927 = vmatprep.subr.bf16.mxu0 0
    %6928 = vmatpush1.bf16.msra.mxu0 %v6557
    %6929 = vmatprep.subr.bf16.mxu0 0
    %6930 = vmatpush1.bf16.msra.mxu0 %v6558
    %6931 = vmatprep.mubr.bf16.mxu0 %v5697
    %6932 = vmatmul.mubr.bf16.gmra.mrb[0].mxu0 %v5696
    %v6933 = vpop.f32.mrb[0].mxu0
    %v6934 = vadd.f32 %v6893, %v6933
    %v6935 = vpop.f32.mrb[0].mxu0
    %v6936 = vpop.f32.mrb[0].mxu0
    %v6937 = vadd.f32 %v6896, %v6936
    %v6938 = vpop.f32.mrb[0].mxu0
    %6939 = vdwg.mxu0
    %6940 = vmatprep.subr.bf16.mxu0 0
    %6941 = vmatpush1.bf16.msra.mxu0 %v6559
    %6942 = vmatprep.subr.bf16.mxu0 0
    %6943 = vmatpush1.bf16.msra.mxu0 %v6560
    %6944 = vmatprep.subr.bf16.mxu0 0
    %6945 = vmatpush1.bf16.msra.mxu0 %v6561
    %6946 = vmatprep.subr.bf16.mxu0 0
    %6947 = vmatpush1.bf16.msra.mxu0 %v6562
    %6948 = vmatprep.subr.bf16.mxu0 0
    %6949 = vmatpush1.bf16.msra.mxu0 %v6563
    %6950 = vmatprep.subr.bf16.mxu0 0
    %6951 = vmatpush1.bf16.msra.mxu0 %v6564
    %6952 = vmatprep.subr.bf16.mxu0 0
    %6953 = vmatpush1.bf16.msra.mxu0 %v6565
    %6954 = vmatprep.subr.bf16.mxu0 0
    %6955 = vmatpush1.bf16.msra.mxu0 %v6566
    %6956 = vmatprep.subr.bf16.mxu0 0
    %6957 = vmatpush1.bf16.msra.mxu0 %v6567
    %6958 = vmatprep.subr.bf16.mxu0 0
    %6959 = vmatpush1.bf16.msra.mxu0 %v6568
    %6960 = vmatprep.subr.bf16.mxu0 0
    %6961 = vmatpush1.bf16.msra.mxu0 %v6569
    %6962 = vmatprep.subr.bf16.mxu0 0
    %6963 = vmatpush1.bf16.msra.mxu0 %v6570
    %6964 = vmatprep.subr.bf16.mxu0 0
    %6965 = vmatpush1.bf16.msra.mxu0 %v6571
    %6966 = vmatprep.subr.bf16.mxu0 0
    %6967 = vmatpush1.bf16.msra.mxu0 %v6572
    %6968 = vmatprep.subr.bf16.mxu0 0
    %6969 = vmatpush1.bf16.msra.mxu0 %v6573
    %6970 = vmatprep.subr.bf16.mxu0 0
    %6971 = vmatpush1.bf16.msra.mxu0 %v6574
    %6972 = vmatprep.mubr.bf16.mxu0 %v5699
    %6973 = vmatmul.mubr.bf16.gmra.mrb[0].mxu0 %v5698
    %v6974 = vpop.f32.mrb[0].mxu0
    %v6975 = vadd.f32 %v6934, %v6974
    %v6976 = vpop.f32.mrb[0].mxu0
    %v6977 = vpop.f32.mrb[0].mxu0
    %v6978 = vadd.f32 %v6937, %v6977
    %v6979 = vpop.f32.mrb[0].mxu0
    %6980 = vdwg.mxu0
    %6981 = vmatprep.subr.bf16.mxu0 0
    %6982 = vmatpush1.bf16.msra.mxu0 %v6575
    %6983 = vmatprep.subr.bf16.mxu0 0
    %6984 = vmatpush1.bf16.msra.mxu0 %v6576
    %6985 = vmatprep.subr.bf16.mxu0 0
    %6986 = vmatpush1.bf16.msra.mxu0 %v6577
    %6987 = vmatprep.subr.bf16.mxu0 0
    %6988 = vmatpush1.bf16.msra.mxu0 %v6578
    %6989 = vmatprep.subr.bf16.mxu0 0
    %6990 = vmatpush1.bf16.msra.mxu0 %v6579
    %6991 = vmatprep.subr.bf16.mxu0 0
    %6992 = vmatpush1.bf16.msra.mxu0 %v6580
    %6993 = vmatprep.subr.bf16.mxu0 0
    %6994 = vmatpush1.bf16.msra.mxu0 %v6581
    %6995 = vmatprep.subr.bf16.mxu0 0
    %6996 = vmatpush1.bf16.msra.mxu0 %v6582
    %6997 = vmatprep.subr.bf16.mxu0 0
    %6998 = vmatpush1.bf16.msra.mxu0 %v6583
    %6999 = vmatprep.subr.bf16.mxu0 0
    %7000 = vmatpush1.bf16.msra.mxu0 %v6584
    %7001 = vmatprep.subr.bf16.mxu0 0
    %7002 = vmatpush1.bf16.msra.mxu0 %v6585
    %7003 = vmatprep.subr.bf16.mxu0 0
    %7004 = vmatpush1.bf16.msra.mxu0 %v6586
    %7005 = vmatprep.subr.bf16.mxu0 0
    %7006 = vmatpush1.bf16.msra.mxu0 %v6587
    %7007 = vmatprep.subr.bf16.mxu0 0
    %7008 = vmatpush1.bf16.msra.mxu0 %v6588
    %7009 = vmatprep.subr.bf16.mxu0 0
    %7010 = vmatpush1.bf16.msra.mxu0 %v6589
    %7011 = vmatprep.subr.bf16.mxu0 0
    %7012 = vmatpush1.bf16.msra.mxu0 %v6590
    %7013 = vmatprep.mubr.bf16.mxu0 %v5701
    %7014 = vmatmul.mubr.bf16.gmra.mrb[0].mxu0 %v5700
    %v7015 = vpop.f32.mrb[0].mxu0
    %v7016 = vadd.f32 %v6975, %v7015
    %v7017 = vpop.f32.mrb[0].mxu0
    %v7018 = vpop.f32.mrb[0].mxu0
    %v7019 = vadd.f32 %v6978, %v7018
    %v7020 = vpop.f32.mrb[0].mxu0
    %7021 = vdwg.mxu0
    %7022 = vmatprep.subr.bf16.mxu0 0
    %7023 = vmatpush1.bf16.msra.mxu0 %v6591
    %7024 = vmatprep.subr.bf16.mxu0 0
    %7025 = vmatpush1.bf16.msra.mxu0 %v6592
    %7026 = vmatprep.subr.bf16.mxu0 0
    %7027 = vmatpush1.bf16.msra.mxu0 %v6593
    %7028 = vmatprep.subr.bf16.mxu0 0
    %7029 = vmatpush1.bf16.msra.mxu0 %v6594
    %7030 = vmatprep.subr.bf16.mxu0 0
    %7031 = vmatpush1.bf16.msra.mxu0 %v6595
    %7032 = vmatprep.subr.bf16.mxu0 0
    %7033 = vmatpush1.bf16.msra.mxu0 %v6596
    %7034 = vmatprep.subr.bf16.mxu0 0
    %7035 = vmatpush1.bf16.msra.mxu0 %v6597
    %7036 = vmatprep.subr.bf16.mxu0 0
    %7037 = vmatpush1.bf16.msra.mxu0 %v6598
    %7038 = vmatprep.subr.bf16.mxu0 0
    %7039 = vmatpush1.bf16.msra.mxu0 %v6599
    %7040 = vmatprep.subr.bf16.mxu0 0
    %7041 = vmatpush1.bf16.msra.mxu0 %v6600
    %7042 = vmatprep.subr.bf16.mxu0 0
    %7043 = vmatpush1.bf16.msra.mxu0 %v6601
    %7044 = vmatprep.subr.bf16.mxu0 0
    %7045 = vmatpush1.bf16.msra.mxu0 %v6602
    %7046 = vmatprep.subr.bf16.mxu0 0
    %7047 = vmatpush1.bf16.msra.mxu0 %v6603
    %7048 = vmatprep.subr.bf16.mxu0 0
    %7049 = vmatpush1.bf16.msra.mxu0 %v6604
    %7050 = vmatprep.subr.bf16.mxu0 0
    %7051 = vmatpush1.bf16.msra.mxu0 %v6605
    %7052 = vmatprep.subr.bf16.mxu0 0
    %7053 = vmatpush1.bf16.msra.mxu0 %v6606
    %7054 = vmatprep.mubr.bf16.mxu0 %v5703
    %7055 = vmatmul.mubr.bf16.gmra.mrb[0].mxu0 %v5702
    %v7056 = vpop.f32.mrb[0].mxu0
    %v7057 = vadd.f32 %v7016, %v7056
    %v7058 = vpop.f32.mrb[0].mxu0
    %v7059 = vpop.f32.mrb[0].mxu0
    %v7060 = vadd.f32 %v7019, %v7059
    %v7061 = vpop.f32.mrb[0].mxu0
    %7062 = vdwg.mxu0
    %v7063 = vadd.f32 %v4838, %v7057
    %v7064 = vadd.f32 %v4839, %v7060
    %v7065 = vld [vmem:[%s59] sm:$0x1]
    %v7066 = vld [vmem:[%s61] sm:$0x1]
    %v7067 = vsel %vm332, %v7063, 0.0
    %7068 = vadd.xlane.f32.xlu0 %v7067
    %v7069 = vpop.xlane.xlu0 %7068
    %v7070 = vsel %vm332, %v7064, 0.0
    %7071 = vadd.xlane.f32.xlu0 %v7070
    %v7072 = vpop.xlane.xlu0 %7071
    %v7073 = vmul.f32 %v7069, %v1387
    %v7074 = vmul.f32 %v7072, %v1387
    %v7075 = vsub.f32 %v7063, %v7073
    %v7076 = vsub.f32 %v7064, %v7074
    %v7077 = vmul.f32 %v7075, %v7075
    %v7078 = vmul.f32 %v7076, %v7076
    %v7079 = vsel %vm332, %v7077, 0.0
    %7080 = vadd.xlane.f32.xlu0 %v7079
    %v7081 = vpop.xlane.xlu0 %7080
    %v7082 = vsel %vm332, %v7078, 0.0
    %7083 = vadd.xlane.f32.xlu0 %v7082
    %v7084 = vpop.xlane.xlu0 %7083
    %v7085 = vmul.f32 %v7081, %v1387
    %v7086 = vmul.f32 %v7084, %v1387
    %v7087 = vadd.f32 %v7085, 1e-05
    %v7088 = vadd.f32 %v7086, 1e-05
    %v7089 = vrsqrt.pop %v7087
    %v7090 = vrsqrt.pop %v7088
    %v7091 = vmul.f32 %v7075, %v7089
    %v7092 = vmul.f32 %v7076, %v7090
    %v7094 = vlaneseq
    %v7095 = vshrl.u32 %v7094, 7
    %v7096 = vsub.s32 0, %v7095
    %v7097 = vrot.slane %v7065, %v7096
    %v7099 = vmul.f32 %v7091, %v7097
    %v7100 = vmul.f32 %v7092, %v7097
    %v7102 = vlaneseq
    %v7103 = vshrl.u32 %v7102, 7
    %v7104 = vsub.s32 0, %v7103
    %v7105 = vrot.slane %v7066, %v7104
    %v7107 = vadd.f32 %v7099, %v7105
    %v7108 = vadd.f32 %v7100, %v7105
    %v7109 = vld [vmem:[%s63] sm:$0x3]
    %v7111 = vsel %vm162, %v7109, 0
    %7113 = vmatprep.subr.mxu0 0.0
    %7114 = vmatpush1.msra.mxu0 %v7107
    %7115 = vmatprep.subr.mxu0 0.0
    %7116 = vmatpush1.msra.mxu0 %v7108
    %7117 = vmatprep.subr.mxu0 0.0
    %7118 = vmatpush1.msra.mxu0 0.0
    %7119 = vmatprep.subr.mxu0 0.0
    %7120 = vmatpush1.msra.mxu0 0.0
    %7121 = vmatprep.subr.mxu0 0.0
    %7122 = vmatpush1.msra.mxu0 0.0
    %7123 = vmatprep.subr.mxu0 0.0
    %7124 = vmatpush1.msra.mxu0 0.0
    %7125 = vmatprep.subr.mxu0 0.0
    %7126 = vmatpush1.msra.mxu0 0.0
    %7127 = vmatprep.subr.mxu0 0.0
    %7128 = vmatpush1.msra.mxu0 0.0
    %7129 = vmatprep.subr.mxu0 0.0
    %7130 = vmatpush1.msra.mxu0 0.0
    %7131 = vmatprep.subr.mxu0 0.0
    %7132 = vmatpush1.msra.mxu0 0.0
    %7133 = vmatprep.subr.mxu0 0.0
    %7134 = vmatpush1.msra.mxu0 0.0
    %7135 = vmatprep.subr.mxu0 0.0
    %7136 = vmatpush1.msra.mxu0 0.0
    %7137 = vmatprep.subr.mxu0 0.0
    %7138 = vmatpush1.msra.mxu0 0.0
    %7139 = vmatprep.subr.mxu0 0.0
    %7140 = vmatpush1.msra.mxu0 0.0
    %7141 = vmatprep.subr.mxu0 0.0
    %7142 = vmatpush1.msra.mxu0 0.0
    %7143 = vmatprep.subr.mxu0 0.0
    %7144 = vmatpush1.msra.mxu0 0.0
    %7145 = vmatprep.subr.mxu0 0.0
    %7146 = vmatpush1.msra.mxu0 0.0
    %7147 = vmatprep.subr.mxu0 0.0
    %7148 = vmatpush1.msra.mxu0 0.0
    %7149 = vmatprep.subr.mxu0 0.0
    %7150 = vmatpush1.msra.mxu0 0.0
    %7151 = vmatprep.subr.mxu0 0.0
    %7152 = vmatpush1.msra.mxu0 0.0
    %7153 = vmatprep.subr.mxu0 0.0
    %7154 = vmatpush1.msra.mxu0 0.0
    %7155 = vmatprep.subr.mxu0 0.0
    %7156 = vmatpush1.msra.mxu0 0.0
    %7157 = vmatprep.subr.mxu0 0.0
    %7158 = vmatpush1.msra.mxu0 0.0
    %7159 = vmatprep.subr.mxu0 0.0
    %7160 = vmatpush1.msra.mxu0 0.0
    %7161 = vmatprep.subr.mxu0 0.0
    %7162 = vmatpush1.msra.mxu0 0.0
    %7163 = vmatprep.subr.mxu0 0.0
    %7164 = vmatpush1.msra.mxu0 0.0
    %7165 = vmatprep.subr.mxu0 0.0
    %7166 = vmatpush1.msra.mxu0 0.0
    %7167 = vmatprep.subr.mxu0 0.0
    %7168 = vmatpush1.msra.mxu0 0.0
    %7169 = vmatprep.subr.mxu0 0.0
    %7170 = vmatpush1.msra.mxu0 0.0
    %7171 = vmatprep.subr.mxu0 0.0
    %7172 = vmatpush1.msra.mxu0 0.0
    %7173 = vmatprep.subr.mxu0 0.0
    %7174 = vmatpush1.msra.mxu0 0.0
    %7175 = vmatprep.subr.mxu0 0.0
    %7176 = vmatpush1.msra.mxu0 0.0
    %7177 = vmatprep.mubr.f32.mxu0 0.0
    %7178 = vmatmul.mubr.f32.gmra.mrb[0].mxu0 %v7111
    %v7179 = vpop.f32.mrb[0].mxu0
    %v7180 = vadd.f32 0.0, %v7179
    %v7181 = vpop.f32.mrb[0].mxu0
    %7182 = vdwg.mxu0
    %v7183 = vpack.c.bf16 %v7180, %v7180
    %v7184 = vld [vmem:[%s65] sm:$0xf]
    %v7185 = vld [vmem:[%s65 + $0x4] sm:$0xf]
    %v7186 = vld [vmem:[%s65 + $0x8] sm:$0xf]
    %v7187 = vld [vmem:[%s65 + $0xc] sm:$0xf]
    %v7188 = vld [vmem:[%s65 + $0x10] sm:$0xf]
    %v7189 = vld [vmem:[%s65 + $0x14] sm:$0xf]
    %v7190 = vld [vmem:[%s65 + $0x18] sm:$0xf]
    %v7191 = vld [vmem:[%s65 + $0x1c] sm:$0xf]
    %v7192 = vld [vmem:[%s67] sm:$0x1]
    %v7194 = vlaneseq
    %v7195 = vshrl.u32 %v7194, 7
    %v7196 = vsub.s32 0, %v7195
    %v7197 = vrot.slane %v7192, %v7196
    %v7207 = vunpack.c.l.b16 %v7184
    %v7208 = vunpack.c.l.b16 %v7185
    %v7209 = vunpack.c.l.b16 %v7186
    %v7210 = vunpack.c.l.b16 %v7187
    %v7211 = vunpack.c.l.b16 %v7188
    %v7212 = vunpack.c.l.b16 %v7189
    %v7213 = vunpack.c.l.b16 %v7190
    %v7214 = vunpack.c.l.b16 %v7191
    %v7215 = vpack.c.b16 %v7208, %v7207
    %v7216 = vpack.c.b16 %v7210, %v7209
    %v7217 = vpack.c.b16 %v7212, %v7211
    %v7218 = vpack.c.b16 %v7214, %v7213
    %v7224 = vsel %vm332, %v7183, 0
    %7226 = vmatprep.subr.bf16.mxu0 0
    %7227 = vmatpush1.bf16.msra.mxu0 %v7215
    %7228 = vmatprep.subr.bf16.mxu0 0
    %7229 = vmatpush1.bf16.msra.mxu0 %v7216
    %7230 = vmatprep.subr.bf16.mxu0 0
    %7231 = vmatpush1.bf16.msra.mxu0 %v7217
    %7232 = vmatprep.subr.bf16.mxu0 0
    %7233 = vmatpush1.bf16.msra.mxu0 %v7218
    %7234 = vmatprep.subr.bf16.mxu0 0
    %7235 = vmatpush1.bf16.msra.mxu0 0
    %7236 = vmatprep.subr.bf16.mxu0 0
    %7237 = vmatpush1.bf16.msra.mxu0 0
    %7238 = vmatprep.subr.bf16.mxu0 0
    %7239 = vmatpush1.bf16.msra.mxu0 0
    %7240 = vmatprep.subr.bf16.mxu0 0
    %7241 = vmatpush1.bf16.msra.mxu0 0
    %7242 = vmatprep.subr.bf16.mxu0 0
    %7243 = vmatpush1.bf16.msra.mxu0 0
    %7244 = vmatprep.subr.bf16.mxu0 0
    %7245 = vmatpush1.bf16.msra.mxu0 0
    %7246 = vmatprep.subr.bf16.mxu0 0
    %7247 = vmatpush1.bf16.msra.mxu0 0
    %7248 = vmatprep.subr.bf16.mxu0 0
    %7249 = vmatpush1.bf16.msra.mxu0 0
    %7250 = vmatprep.subr.bf16.mxu0 0
    %7251 = vmatpush1.bf16.msra.mxu0 0
    %7252 = vmatprep.subr.bf16.mxu0 0
    %7253 = vmatpush1.bf16.msra.mxu0 0
    %7254 = vmatprep.subr.bf16.mxu0 0
    %7255 = vmatpush1.bf16.msra.mxu0 0
    %7256 = vmatprep.subr.bf16.mxu0 0
    %7257 = vmatpush1.bf16.msra.mxu0 0
    %7258 = vmatprep.mubr.bf16.mxu0 0
    %7259 = vmatmul.mubr.bf16.gmra.mrb[0].mxu0 %v7224
    %v7260 = vpop.f32.mrb[0].mxu0
    %v7261 = vadd.f32 %v7197, %v7260
    %v7262 = vpop.f32.mrb[0].mxu0
    %v7263 = vpop.f32.mrb[0].mxu0
    %v7264 = vpop.f32.mrb[0].mxu0
    %7265 = vdwg.mxu0
    %vm7266 = vcmask 9216
    %7267 = vst.msk [vmem:[#allocation2] sm:$0x3] %vm7266, %v7261
    // Predicated region
    $region138: #{fraud_transformer_forward.1} parent=1 // pred_check
      _
    $region139: #{fraud_transformer_forward.1} parent=1 // pred_check_branch
      %7269 = sbr.rel (0) target = $region141
    $region140: #{fraud_transformer_forward.1} parent=1 // pred_region
      %s7271 = ssub.s32 32, 32
      %7272 = vsyncadd [#allocation3], %s7271
      %s7274 = sshll.u32 [#allocation2], 4
      %s7275 = int_to_ptr.vmem [resolvable:$true] %s7274
      %7277 = dma.vmem_to_hbm [thread:$0]  %s7275, 32, %s69, [#allocation3]
    $region141: #{fraud_transformer_forward.1} parent=1 // pred_fallthru
      _
    // Predicated region
    $region142: #{fraud_transformer_forward.1} parent=1 // pred_check
      _
    $region143: #{fraud_transformer_forward.1} parent=1 // pred_check_branch
      %7279 = sbr.rel (0) target = $region145
    $region144: #{fraud_transformer_forward.1} parent=1 // pred_region
      %7280 = dma.done [#allocation3], 32
    $region145: #{fraud_transformer_forward.1} parent=1 // pred_fallthru
      _
    %7281 = vsyncpa [#allocation3], 1

</llo_original>
